<compile_context>
chip_gen: v6e
topology: v6e:2x2x1
jax: 0.10.0
libtpu: 0.0.40
codegen_flags: <defaults>
</compile_context>

<pallas_src>
import functools
import math

import jax
import jax.numpy as jnp
from jax.experimental import pallas as pl
from jax.experimental.pallas import tpu as pltpu

_LN_EPS = 1e-5


# ----------------------------- shared math ----------------------------------

def _gelu(x):
    # tanh-approximate GELU (EUP tanh slot); used identically in kernels and reference.
    c = 0.7978845608028654  # sqrt(2/pi)
    return 0.5 * x * (1.0 + jnp.tanh(c * (x + 0.044715 * x * x * x)))


def _layernorm(x, g, b):
    m = jnp.mean(x, axis=-1, keepdims=True)
    xc = x - m
    v = jnp.mean(xc * xc, axis=-1, keepdims=True)
    return xc * jax.lax.rsqrt(v + _LN_EPS) * g + b


# ------------------------------- kernels -------------------------------------

def _linear_kernel(x_ref, w_ref, b_ref, o_ref):
    """Input projection: o = x @ W + b (row-block tiled)."""
    x = x_ref[...].astype(jnp.bfloat16)
    y = jnp.dot(x, w_ref[...], preferred_element_type=jnp.float32) + b_ref[...]
    o_ref[...] = y.astype(o_ref.dtype)


def _ff_mhsa_kernel(x_ref, pe_ref,
                    f_g, f_b, f_w1, f_b1, f_w2, f_b2,
                    a_g, a_b, wqkv_ref, bqkv_ref, wout_ref, bout_ref,
                    o_ref, *, num_heads, dim_heads, sm_scale):
    """Fused FF1 (0.5-scaled residual) + MHSA module (+ residual) for one batch element.

    MHSA: LN -> +PE -> single fused QKV matmul -> per-head softmax attention ->
    concat heads -> single fused out-projection -> + residual.
    """
    x = x_ref[...]                                            # (S, D) f32

    # ---- FF1 (scale 0.5 residual) ----
    y = _layernorm(x, f_g[...], f_b[...]).astype(jnp.bfloat16)
    h = _gelu(jnp.dot(y, f_w1[...], preferred_element_type=jnp.float32) + f_b1[...])
    x = x + 0.5 * (jnp.dot(h.astype(jnp.bfloat16), f_w2[...],
                           preferred_element_type=jnp.float32) + f_b2[...])

    # ---- MHSA module ----
    y = (_layernorm(x, a_g[...], a_b[...]) + pe_ref[...]).astype(jnp.bfloat16)
    qkv = jnp.dot(y, wqkv_ref[...], preferred_element_type=jnp.float32) + bqkv_ref[...]
    d_inner = num_heads * dim_heads
    q = (qkv[:, :d_inner] * sm_scale).astype(jnp.bfloat16)    # fold sm_scale into q
    k = qkv[:, d_inner:2 * d_inner].astype(jnp.bfloat16)
    v = qkv[:, 2 * d_inner:].astype(jnp.bfloat16)

    head_outs = []
    for hd in range(num_heads):                               # static unroll over heads
        sl = slice(hd * dim_heads, (hd + 1) * dim_heads)
        s = jax.lax.dot_general(q[:, sl], k[:, sl],           # (S, S) f32 scores
                                (((1,), (1,)), ((), ())),
                                preferred_element_type=jnp.float32)
        s = s - jnp.max(s, axis=-1, keepdims=True)
        e = jnp.exp(s)
        p = e * pl.reciprocal(jnp.sum(e, axis=-1, keepdims=True), approx=True)
        head_outs.append(jnp.dot(p.astype(jnp.bfloat16), v[:, sl],
                                 preferred_element_type=jnp.float32))
    o_cat = jnp.concatenate(head_outs, axis=-1).astype(jnp.bfloat16)   # (S, H*DH)
    attn = jnp.dot(o_cat, wout_ref[...], preferred_element_type=jnp.float32) + bout_ref[...]
    o_ref[...] = (x + attn).astype(o_ref.dtype)


def _conv_ff_ln_kernel(x_ref,
                       c_g, c_b, c_w1, c_b1, c_s, c_t, c_w2, c_b2,
                       f_g, f_b, f_w1, f_b1, f_w2, f_b2,
                       l_g, l_b, o_ref):
    """Fused ConvModule (+residual) + FF2 (0.5-scaled residual) + trailing block LayerNorm.

    ConvModule: LN -> pointwise conv1 -> GELU -> [k=1 depthwise conv folded with eval-mode
    BatchNorm into per-channel scale/shift] -> GELU -> pointwise conv2 -> +x.
    """
    x = x_ref[...]

    # ---- ConvModule ----
    y = _layernorm(x, c_g[...], c_b[...]).astype(jnp.bfloat16)
    h = _gelu(jnp.dot(y, c_w1[...], preferred_element_type=jnp.float32) + c_b1[...])
    h = _gelu(h * c_s[...] + c_t[...])
    x = x + jnp.dot(h.astype(jnp.bfloat16), c_w2[...],
                    preferred_element_type=jnp.float32) + c_b2[...]

    # ---- FF2 (scale 0.5 residual) ----
    y = _layernorm(x, f_g[...], f_b[...]).astype(jnp.bfloat16)
    h = _gelu(jnp.dot(y, f_w1[...], preferred_element_type=jnp.float32) + f_b1[...])
    x = x + 0.5 * (jnp.dot(h.astype(jnp.bfloat16), f_w2[...],
                           preferred_element_type=jnp.float32) + f_b2[...])

    # ---- trailing block LayerNorm ----
    o_ref[...] = _layernorm(x, l_g[...], l_b[...]).astype(o_ref.dtype)


# ----------------------------- pallas wrappers --------------------------------

@functools.lru_cache(maxsize=None)
def _vmem_limit_bytes():
    """~3/4 of VMEM capacity, capped at 96 MiB (=> ~96 MiB on v5e/v6e, ~48 MiB on v7x)."""
    cap = None
    try:
        cap = getattr(pltpu.get_tpu_info(), "vmem_capacity_bytes", None)
    except Exception:
        cap = None
    if not cap:
        cap = 64 * 1024 * 1024
    return int(max(32 * 1024 * 1024, min((cap * 3) // 4, 96 * 1024 * 1024)))


def _bcast_spec(shape):
    nd = len(shape)
    return pl.BlockSpec(shape, lambda *_: (0,) * nd)


def _cparams(n_grid_axes):
    return pltpu.CompilerParams(
        dimension_semantics=("parallel",) * n_grid_axes,
        vmem_limit_bytes=_vmem_limit_bytes())


def _pick_bm(n, cap=512):
    """Row-block size: as large as possible (<=cap), divisible into n, and (when the
    row count allows) giving at least 2 grid steps for megacore / pipelining."""
    bm = min(cap, n)
    if bm == n and n % 16 == 0:          # prefer >=2 grid steps (8-row aligned halves)
        bm = n // 2
    while bm > 8 and n % bm != 0:
        bm -= 8
    return bm if (bm > 0 and n % bm == 0) else n


def _cost(args, out_shape, flops, transcendentals):
    nbytes = sum(int(a.size) * a.dtype.itemsize for a in args)
    nbytes += math.prod(out_shape.shape) * jnp.dtype(out_shape.dtype).itemsize
    return pl.CostEstimate(flops=int(flops), transcendentals=int(transcendentals),
                           bytes_accessed=int(nbytes))


def linear_in(x2d, p):
    n, d_in = x2d.shape
    d_out = p["w"].shape[1]
    bm = _pick_bm(n)
    args = (x2d, p["w"], p["b"])
    out_shape = jax.ShapeDtypeStruct((n, d_out), x2d.dtype)
    return pl.pallas_call(
        _linear_kernel,
        out_shape=out_shape,
        grid=(n // bm,),
        in_specs=[
            pl.BlockSpec((bm, d_in), lambda i: (i, 0)),
            _bcast_spec((d_in, d_out)),
            _bcast_spec((1, d_out)),
        ],
        out_specs=pl.BlockSpec((bm, d_out), lambda i: (i, 0)),
        compiler_params=_cparams(1),
        cost_estimate=_cost(args, out_shape, 2 * n * d_in * d_out, 0),
    )(*args)


def ff_mhsa_module(x, pe, bp, *, num_heads, dim_heads):
    bsz, s, d = x.shape
    f, a = bp["ff1"], bp["mhsa"]
    d_ffn = f["w1"].shape[1]
    d_inner = num_heads * dim_heads
    sm_scale = dim_heads ** -0.5
    kern = functools.partial(_ff_mhsa_kernel, num_heads=num_heads,
                             dim_heads=dim_heads, sm_scale=sm_scale)
    args = (x, pe, f["ln_g"], f["ln_b"], f["w1"], f["b1"], f["w2"], f["b2"],
            a["ln_g"], a["ln_b"], a["w_qkv"], a["b_qkv"], a["w_out"], a["b_out"])
    flops = bsz * (4 * s * d * d_ffn                 # FF1
                   + 2 * s * d * 3 * d_inner         # fused QKV projection
                   + 4 * s * s * d_inner             # scores + AV over all heads
                   + 2 * s * d_inner * d)            # fused out-projection
    transc = bsz * (s * d_ffn + num_heads * s * s + s)
    out_shape = jax.ShapeDtypeStruct((bsz, s, d), x.dtype)
    return pl.pallas_call(
        kern,
        out_shape=out_shape,
        grid=(bsz,),
        in_specs=[
            pl.BlockSpec((None, s, d), lambda b: (b, 0, 0)),
            _bcast_spec((s, d)),
            _bcast_spec((1, d)), _bcast_spec((1, d)),
            _bcast_spec((d, d_ffn)), _bcast_spec((1, d_ffn)),
            _bcast_spec((d_ffn, d)), _bcast_spec((1, d)),
            _bcast_spec((1, d)), _bcast_spec((1, d)),
            _bcast_spec((d, 3 * d_inner)), _bcast_spec((1, 3 * d_inner)),
            _bcast_spec((d_inner, d)), _bcast_spec((1, d)),
        ],
        out_specs=pl.BlockSpec((None, s, d), lambda b: (b, 0, 0)),
        compiler_params=_cparams(1),
        cost_estimate=_cost(args, out_shape, flops, transc),
    )(*args)


def conv_ff_ln_module(x2d, bp):
    n, d = x2d.shape
    c, f = bp["conv"], bp["ff2"]
    d_conv = c["w1"].shape[1]
    d_ffn = f["w1"].shape[1]
    bm = _pick_bm(n)
    args = (x2d, c["ln_g"], c["ln_b"], c["w1"], c["b1"], c["eff_scale"], c["eff_bias"],
            c["w2"], c["b2"], f["ln_g"], f["ln_b"], f["w1"], f["b1"], f["w2"], f["b2"],
            bp["ln_g"], bp["ln_b"])
    flops = n * (4 * d * d_conv + 4 * d * d_ffn)
    transc = n * (2 * d_conv + d_ffn)
    out_shape = jax.ShapeDtypeStruct((n, d), x2d.dtype)
    return pl.pallas_call(
        _conv_ff_ln_kernel,
        out_shape=out_shape,
        grid=(n // bm,),
        in_specs=[
            pl.BlockSpec((bm, d), lambda i: (i, 0)),
            _bcast_spec((1, d)), _bcast_spec((1, d)),
            _bcast_spec((d, d_conv)), _bcast_spec((1, d_conv)),
            _bcast_spec((1, d_conv)), _bcast_spec((1, d_conv)),
            _bcast_spec((d_conv, d)), _bcast_spec((1, d)),
            _bcast_spec((1, d)), _bcast_spec((1, d)),
            _bcast_spec((d, d_ffn)), _bcast_spec((1, d_ffn)),
            _bcast_spec((d_ffn, d)), _bcast_spec((1, d)),
            _bcast_spec((1, d)), _bcast_spec((1, d)),
        ],
        out_specs=pl.BlockSpec((bm, d), lambda i: (i, 0)),
        compiler_params=_cparams(1),
        cost_estimate=_cost(args, out_shape, flops, transc),
    )(*args)


def contrastive_module(x, params, *, num_heads, dim_heads):
    bsz, s, d_in = x.shape
    x2 = linear_in(x.reshape(bsz * s, d_in), params["lin_in"])
    d = params["lin_in"]["w"].shape[1]
    x = x2.reshape(bsz, s, d)
    pe = params["pe"][:s]
    for bp in params["blocks"]:
        # Kernel B: FF1 + MHSA module (2 residuals) fused, grid over batch.
        x = ff_mhsa_module(x, pe, bp, num_heads=num_heads, dim_heads=dim_heads)
        # Kernel C: ConvModule + FF2 + trailing LayerNorm fused, row-tiled.
        x = conv_ff_ln_module(x.reshape(bsz * s, d), bp).reshape(bsz, s, d)
    return x


# --------------------------------- params -------------------------------------

def _sinusoid_pe(max_len, d):
    pos = jnp.arange(max_len, dtype=jnp.float32)[:, None]
    div = jnp.exp(jnp.arange(0, d, 2, dtype=jnp.float32) * (-math.log(10000.0) / d))
    pe = jnp.zeros((max_len, d), jnp.float32)
    pe = pe.at[:, 0::2].set(jnp.sin(pos * div))
    pe = pe.at[:, 1::2].set(jnp.cos(pos * div))
    return pe


def init_params(key, *, dim_model, dim_ffn, dim_conv, num_heads, dim_heads,
                num_blocks, max_seq_len=64):
    d = dim_model
    d_inner = num_heads * dim_heads
    key_iter = iter(jax.random.split(key, 4096))

    def nrm(shape, scale=0.05, dtype=jnp.float32):
        return (scale * jax.random.normal(next(key_iter), shape, jnp.float32)).astype(dtype)

    def ffn_p():
        return {"ln_g": 1.0 + nrm((1, d)), "ln_b": nrm((1, d)),
                "w1": nrm((d, dim_ffn), 0.05, jnp.bfloat16), "b1": nrm((1, dim_ffn)),
                "w2": nrm((dim_ffn, d), 0.05, jnp.bfloat16), "b2": nrm((1, d))}

    def mhsa_p():
        # Fused QKV / out-projection layout (matches the spec's single w_qkv Linear).
        return {"ln_g": 1.0 + nrm((1, d)), "ln_b": nrm((1, d)),
                "w_qkv": nrm((d, 3 * d_inner), 0.05, jnp.bfloat16),
                "b_qkv": nrm((1, 3 * d_inner)),
                "w_out": nrm((d_inner, d), 0.05, jnp.bfloat16),
                "b_out": nrm((1, d))}

    def conv_p():
        dw_w = 1.0 + nrm((1, dim_conv), 0.1)
        dw_b = nrm((1, dim_conv), 0.1)
        bn_g = 1.0 + nrm((1, dim_conv), 0.1)
        bn_b = nrm((1, dim_conv), 0.1)
        bn_mean = nrm((1, dim_conv), 0.1)
        bn_var = 1.0 + jnp.abs(nrm((1, dim_conv), 0.1))
        inv = bn_g / jnp.sqrt(bn_var + _LN_EPS)
        return {"ln_g": 1.0 + nrm((1, d)), "ln_b": nrm((1, d)),
                "w1": nrm((d, dim_conv), 0.05, jnp.bfloat16), "b1": nrm((1, dim_conv)),
                "eff_scale": dw_w * inv,
                "eff_bias": (dw_b - bn_mean) * inv + bn_b,
                "w2": nrm((dim_conv, d), 0.05, jnp.bfloat16), "b2": nrm((1, d))}

    blocks = []
    for _ in range(num_blocks):
        blocks.append({"ff1": ffn_p(), "mhsa": mhsa_p(), "conv": conv_p(),
                       "ff2": ffn_p(),
                       "ln_g": 1.0 + nrm((1, d)), "ln_b": nrm((1, d))})

    return {"lin_in": {"w": nrm((d, d), 0.05, jnp.bfloat16), "b": nrm((1, d))},
            "blocks": blocks,
            "pe": _sinusoid_pe(max_seq_len, d)}


# ------------------------------ pure-JAX reference ----------------------------

def _ref_ffn(x, p, scale):
    y = _layernorm(x, p["ln_g"], p["ln_b"]).astype(jnp.bfloat16)
    h = _gelu(jnp.dot(y, p["w1"], preferred_element_type=jnp.float32) + p["b1"])
    z = jnp.dot(h.astype(jnp.bfloat16), p["w2"], preferred_element_type=jnp.float32) + p["b2"]
    return x + scale * z


def _ref_mhsa(x, pe, p, *, num_heads, dim_heads, sm_scale):
    b, s, _ = x.shape
    d_inner = num_heads * dim_heads
    y = (_layernorm(x, p["ln_g"], p["ln_b"]) + pe).astype(jnp.bfloat16)
    qkv = jnp.dot(y, p["w_qkv"], preferred_element_type=jnp.float32) + p["b_qkv"]
    q = (qkv[..., :d_inner] * sm_scale).reshape(b, s, num_heads, dim_heads)
    k = qkv[..., d_inner:2 * d_inner].reshape(b, s, num_heads, dim_heads)
    v = qkv[..., 2 * d_inner:].reshape(b, s, num_heads, dim_heads)
    sc = jnp.einsum("bqhd,bkhd->bhqk", q.astype(jnp.bfloat16), k.astype(jnp.bfloat16),
                    preferred_element_type=jnp.float32)
    sc = sc - jnp.max(sc, axis=-1, keepdims=True)
    e = jnp.exp(sc)
    w = e / jnp.sum(e, axis=-1, keepdims=True)
    o = jnp.einsum("bhqk,bkhd->bqhd", w.astype(jnp.bfloat16), v.astype(jnp.bfloat16),
                   preferred_element_type=jnp.float32).reshape(b, s, d_inner)
    return x + jnp.dot(o.astype(jnp.bfloat16), p["w_out"],
                       preferred_element_type=jnp.float32) + p["b_out"]


def _ref_convmod(x, p):
    y = _layernorm(x, p["ln_g"], p["ln_b"]).astype(jnp.bfloat16)
    h = _gelu(jnp.dot(y, p["w1"], preferred_element_type=jnp.float32) + p["b1"])
    h = _gelu(h * p["eff_scale"] + p["eff_bias"])
    z = jnp.dot(h.astype(jnp.bfloat16), p["w2"], preferred_element_type=jnp.float32) + p["b2"]
    return x + z


def _ref_model(x, params, *, num_heads, dim_heads):
    sm_scale = dim_heads ** -0.5
    _, s, _ = x.shape
    x = jnp.dot(x.astype(jnp.bfloat16), params["lin_in"]["w"],
                preferred_element_type=jnp.float32) + params["lin_in"]["b"]
    pe = params["pe"][:s]
    for bp in params["blocks"]:
        x = _ref_ffn(x, bp["ff1"], 0.5)
        x = _ref_mhsa(x, pe, bp["mhsa"], num_heads=num_heads, dim_heads=dim_heads,
                      sm_scale=sm_scale)
        x = _ref_convmod(x, bp["conv"])
        x = _ref_ffn(x, bp["ff2"], 0.5)
        x = _layernorm(x, bp["ln_g"], bp["ln_b"])
    return x


# ----------------------------------- main --------------------------------------

if __name__ == "__main__":
    key = jax.random.PRNGKey(0)
    kx, kp = jax.random.split(key)

    # Small demo shapes (scaled-down Conformer: 128 model dim, 4 heads x 32, 2 blocks).
    B, S = 2, 16
    D, D_FFN, D_CONV = 128, 256, 256
    H, DH = 4, 32
    NUM_BLOCKS = 2

    x = jax.random.normal(kx, (B, S, D), jnp.float32)
    params = init_params(kp, dim_model=D, dim_ffn=D_FFN, dim_conv=D_CONV,
                         num_heads=H, dim_heads=DH, num_blocks=NUM_BLOCKS,
                         max_seq_len=64)

    fwd = jax.jit(functools.partial(contrastive_module, num_heads=H, dim_heads=DH))
    out = jax.block_until_ready(fwd(x, params))
    assert out.shape == (B, S, D), out.shape
    assert bool(jnp.isfinite(out).all())

    ref = _ref_model(x, params, num_heads=H, dim_heads=DH)
    err = float(jnp.max(jnp.abs(out - ref)))
    assert jnp.allclose(out, ref, atol=2e-2, rtol=2e-2), err

    print("KERNEL_OK")
</pallas_src>

<mosaic_0001>
module attributes {stable_mosaic.version = 11 : i64} {
  func.func @_linear_kernel(%arg0: i32, %arg1: memref<16x128xf32, #tpu.memory_space<vmem>>, %arg2: memref<128x128xbf16, #tpu.memory_space<vmem>>, %arg3: memref<1x128xf32, #tpu.memory_space<vmem>>, %arg4: memref<16x128xf32, #tpu.memory_space<vmem>>) attributes {dimension_semantics = [#tpu.dimension_semantics<parallel>], iteration_bounds = array<i64: 2>, scalar_prefetch = 0 : i64, scratch_operands = 0 : i64, tpu.core_type = #tpu.core_type<tc>, window_params = [{transform_indices = @transform_0, window_bounds = array<i64: 16, 128>}, {pipeline_mode = #tpu.pipeline_mode<synchronous>, transform_indices = @transform_1, window_bounds = array<i64: 128, 128>}, {pipeline_mode = #tpu.pipeline_mode<synchronous>, transform_indices = @transform_2, window_bounds = array<i64: 1, 128>}, {transform_indices = @transform_3, window_bounds = array<i64: 16, 128>}]} {
    %c0 = arith.constant 0 : index
    %c0_0 = arith.constant 0 : index
    %0 = vector.load %arg1[%c0, %c0_0] : memref<16x128xf32, #tpu.memory_space<vmem>>, vector<16x128xf32>
    %1 = arith.truncf %0 : vector<16x128xf32> to vector<16x128xbf16>
    %c0_1 = arith.constant 0 : index
    %c0_2 = arith.constant 0 : index
    %2 = vector.load %arg2[%c0_1, %c0_2] : memref<128x128xbf16, #tpu.memory_space<vmem>>, vector<128x128xbf16>
    %cst = arith.constant dense<0.000000e+00> : vector<16x128xf32>
    %3 = tpu.matmul %1, %2, %cst {dimension_numbers = #tpu.dot_dimension_numbers<[1], [0], [0], [1], [0, 0, 1, 1], [], []>} : vector<16x128xbf16>, vector<128x128xbf16>, vector<16x128xf32> -> vector<16x128xf32>
    %c0_3 = arith.constant 0 : index
    %c0_4 = arith.constant 0 : index
    %4 = vector.load %arg3[%c0_3, %c0_4] : memref<1x128xf32, #tpu.memory_space<vmem>>, vector<1x128xf32>
    %5 = vector.broadcast %4 : vector<1x128xf32> to vector<16x128xf32>
    %6 = arith.addf %3, %5 : vector<16x128xf32>
    %c0_5 = arith.constant 0 : index
    %c0_6 = arith.constant 0 : index
    %7 = vector.load %arg4[%c0_5, %c0_6] : memref<16x128xf32, #tpu.memory_space<vmem>>, vector<16x128xf32>
    tpu.vector_store %arg4[%c0_5, %c0_6], %6 {strides = array<i32>} : memref<16x128xf32, #tpu.memory_space<vmem>>, vector<16x128xf32>,
    return
  }
  func.func @transform_0(%arg0: i32) -> (i32, i32) {
    %c0_i32 = arith.constant 0 : i32
    %c0_i32_0 = arith.constant 0 : i32
    return %arg0, %c0_i32 : i32, i32
  }
  func.func @transform_1(%arg0: i32) -> (i32, i32) {
    %c0_i32 = arith.constant 0 : i32
    %c0_i32_0 = arith.constant 0 : i32
    %c0_i32_1 = arith.constant 0 : i32
    return %c0_i32, %c0_i32_0 : i32, i32
  }
  func.func @transform_2(%arg0: i32) -> (i32, i32) {
    %c0_i32 = arith.constant 0 : i32
    %c0_i32_0 = arith.constant 0 : i32
    %c0_i32_1 = arith.constant 0 : i32
    return %c0_i32, %c0_i32_0 : i32, i32
  }
  func.func @transform_3(%arg0: i32) -> (i32, i32) {
    %c0_i32 = arith.constant 0 : i32
    %c0_i32_0 = arith.constant 0 : i32
    return %arg0, %c0_i32 : i32, i32
  }
}

module attributes {stable_mosaic.version = 11 : i64} {
  func.func @_conv_ff_ln_kernel(%arg0: i32, %arg1: memref<16x128xf32, #tpu.memory_space<vmem>>, %arg2: memref<1x128xf32, #tpu.memory_space<vmem>>, %arg3: memref<1x128xf32, #tpu.memory_space<vmem>>, %arg4: memref<128x256xbf16, #tpu.memory_space<vmem>>, %arg5: memref<1x256xf32, #tpu.memory_space<vmem>>, %arg6: memref<1x256xf32, #tpu.memory_space<vmem>>, %arg7: memref<1x256xf32, #tpu.memory_space<vmem>>, %arg8: memref<256x128xbf16, #tpu.memory_space<vmem>>, %arg9: memref<1x128xf32, #tpu.memory_space<vmem>>, %arg10: memref<1x128xf32, #tpu.memory_space<vmem>>, %arg11: memref<1x128xf32, #tpu.memory_space<vmem>>, %arg12: memref<128x256xbf16, #tpu.memory_space<vmem>>, %arg13: memref<1x256xf32, #tpu.memory_space<vmem>>, %arg14: memref<256x128xbf16, #tpu.memory_space<vmem>>, %arg15: memref<1x128xf32, #tpu.memory_space<vmem>>, %arg16: memref<1x128xf32, #tpu.memory_space<vmem>>, %arg17: memref<1x128xf32, #tpu.memory_space<vmem>>, %arg18: memref<16x128xf32, #tpu.memory_space<vmem>>) attributes {dimension_semantics = [#tpu.dimension_semantics<parallel>], iteration_bounds = array<i64: 2>, scalar_prefetch = 0 : i64, scratch_operands = 0 : i64, tpu.core_type = #tpu.core_type<tc>, window_params = [{transform_indices = @transform_0, window_bounds = array<i64: 16, 128>}, {pipeline_mode = #tpu.pipeline_mode<synchronous>, transform_indices = @transform_1, window_bounds = array<i64: 1, 128>}, {pipeline_mode = #tpu.pipeline_mode<synchronous>, transform_indices = @transform_2, window_bounds = array<i64: 1, 128>}, {pipeline_mode = #tpu.pipeline_mode<synchronous>, transform_indices = @transform_3, window_bounds = array<i64: 128, 256>}, {pipeline_mode = #tpu.pipeline_mode<synchronous>, transform_indices = @transform_4, window_bounds = array<i64: 1, 256>}, {pipeline_mode = #tpu.pipeline_mode<synchronous>, transform_indices = @transform_5, window_bounds = array<i64: 1, 256>}, {pipeline_mode = #tpu.pipeline_mode<synchronous>, transform_indices = @transform_6, window_bounds = array<i64: 1, 256>}, {pipeline_mode = #tpu.pipeline_mode<synchronous>, transform_indices = @transform_7, window_bounds = array<i64: 256, 128>}, {pipeline_mode = #tpu.pipeline_mode<synchronous>, transform_indices = @transform_8, window_bounds = array<i64: 1, 128>}, {pipeline_mode = #tpu.pipeline_mode<synchronous>, transform_indices = @transform_9, window_bounds = array<i64: 1, 128>}, {pipeline_mode = #tpu.pipeline_mode<synchronous>, transform_indices = @transform_10, window_bounds = array<i64: 1, 128>}, {pipeline_mode = #tpu.pipeline_mode<synchronous>, transform_indices = @transform_11, window_bounds = array<i64: 128, 256>}, {pipeline_mode = #tpu.pipeline_mode<synchronous>, transform_indices = @transform_12, window_bounds = array<i64: 1, 256>}, {pipeline_mode = #tpu.pipeline_mode<synchronous>, transform_indices = @transform_13, window_bounds = array<i64: 256, 128>}, {pipeline_mode = #tpu.pipeline_mode<synchronous>, transform_indices = @transform_14, window_bounds = array<i64: 1, 128>}, {pipeline_mode = #tpu.pipeline_mode<synchronous>, transform_indices = @transform_15, window_bounds = array<i64: 1, 128>}, {pipeline_mode = #tpu.pipeline_mode<synchronous>, transform_indices = @transform_16, window_bounds = array<i64: 1, 128>}, {transform_indices = @transform_17, window_bounds = array<i64: 16, 128>}]} {
    %c0 = arith.constant 0 : index
    %c0_0 = arith.constant 0 : index
    %0 = vector.load %arg1[%c0, %c0_0] : memref<16x128xf32, #tpu.memory_space<vmem>>, vector<16x128xf32>
    %c0_1 = arith.constant 0 : index
    %c0_2 = arith.constant 0 : index
    %1 = vector.load %arg2[%c0_1, %c0_2] : memref<1x128xf32, #tpu.memory_space<vmem>>, vector<1x128xf32>
    %c0_3 = arith.constant 0 : index
    %c0_4 = arith.constant 0 : index
    %2 = vector.load %arg3[%c0_3, %c0_4] : memref<1x128xf32, #tpu.memory_space<vmem>>, vector<1x128xf32>
    %cst = arith.constant dense<0.000000e+00> : vector<16xf32>
    %3 = vector.multi_reduction <add>, %0, %cst [1] : vector<16x128xf32> to vector<16xf32>
    %4 = vector.shape_cast %3 : vector<16xf32> to vector<16x1xf32>
    %cst_5 = arith.constant 1.280000e+02 : f32
    %5 = vector.broadcast %cst_5 : f32 to vector<16x1xf32>
    %6 = arith.divf %4, %5 : vector<16x1xf32>
    %7 = vector.broadcast %6 : vector<16x1xf32> to vector<16x128xf32>
    %8 = arith.subf %0, %7 : vector<16x128xf32>
    %9 = arith.mulf %8, %8 : vector<16x128xf32>
    %cst_6 = arith.constant dense<0.000000e+00> : vector<16xf32>
    %10 = vector.multi_reduction <add>, %9, %cst_6 [1] : vector<16x128xf32> to vector<16xf32>
    %11 = vector.shape_cast %10 : vector<16xf32> to vector<16x1xf32>
    %cst_7 = arith.constant 1.280000e+02 : f32
    %12 = vector.broadcast %cst_7 : f32 to vector<16x1xf32>
    %13 = arith.divf %11, %12 : vector<16x1xf32>
    %cst_8 = arith.constant 9.99999974E-6 : f32
    %14 = vector.broadcast %cst_8 : f32 to vector<16x1xf32>
    %15 = arith.addf %13, %14 : vector<16x1xf32>
    %16 = math.rsqrt %15 : vector<16x1xf32>
    %17 = vector.broadcast %16 : vector<16x1xf32> to vector<16x128xf32>
    %18 = arith.mulf %8, %17 : vector<16x128xf32>
    %19 = vector.broadcast %1 : vector<1x128xf32> to vector<16x128xf32>
    %20 = arith.mulf %18, %19 : vector<16x128xf32>
    %21 = vector.broadcast %2 : vector<1x128xf32> to vector<16x128xf32>
    %22 = arith.addf %20, %21 : vector<16x128xf32>
    %23 = arith.truncf %22 : vector<16x128xf32> to vector<16x128xbf16>
    %c0_9 = arith.constant 0 : index
    %c0_10 = arith.constant 0 : index
    %24 = vector.load %arg4[%c0_9, %c0_10] : memref<128x256xbf16, #tpu.memory_space<vmem>>, vector<128x256xbf16>
    %cst_11 = arith.constant dense<0.000000e+00> : vector<16x256xf32>
    %25 = tpu.matmul %23, %24, %cst_11 {dimension_numbers = #tpu.dot_dimension_numbers<[1], [0], [0], [1], [0, 0, 1, 1], [], []>} : vector<16x128xbf16>, vector<128x256xbf16>, vector<16x256xf32> -> vector<16x256xf32>
    %c0_12 = arith.constant 0 : index
    %c0_13 = arith.constant 0 : index
    %26 = vector.load %arg5[%c0_12, %c0_13] : memref<1x256xf32, #tpu.memory_space<vmem>>, vector<1x256xf32>
    %27 = vector.broadcast %26 : vector<1x256xf32> to vector<16x256xf32>
    %28 = arith.addf %25, %27 : vector<16x256xf32>
    %cst_14 = arith.constant 5.000000e-01 : f32
    %29 = vector.broadcast %cst_14 : f32 to vector<16x256xf32>
    %30 = arith.mulf %29, %28 : vector<16x256xf32>
    %cst_15 = arith.constant 4.471500e-02 : f32
    %31 = vector.broadcast %cst_15 : f32 to vector<16x256xf32>
    %32 = arith.mulf %31, %28 : vector<16x256xf32>
    %33 = arith.mulf %32, %28 : vector<16x256xf32>
    %34 = arith.mulf %33, %28 : vector<16x256xf32>
    %35 = arith.addf %28, %34 : vector<16x256xf32>
    %cst_16 = arith.constant 0.797884583 : f32
    %36 = vector.broadcast %cst_16 : f32 to vector<16x256xf32>
    %37 = arith.mulf %36, %35 : vector<16x256xf32>
    %38 = math.tanh %37 : vector<16x256xf32>
    %cst_17 = arith.constant 1.000000e+00 : f32
    %39 = vector.broadcast %cst_17 : f32 to vector<16x256xf32>
    %40 = arith.addf %39, %38 : vector<16x256xf32>
    %41 = arith.mulf %30, %40 : vector<16x256xf32>
    %c0_18 = arith.constant 0 : index
    %c0_19 = arith.constant 0 : index
    %42 = vector.load %arg6[%c0_18, %c0_19] : memref<1x256xf32, #tpu.memory_space<vmem>>, vector<1x256xf32>
    %43 = vector.broadcast %42 : vector<1x256xf32> to vector<16x256xf32>
    %44 = arith.mulf %41, %43 : vector<16x256xf32>
    %c0_20 = arith.constant 0 : index
    %c0_21 = arith.constant 0 : index
    %45 = vector.load %arg7[%c0_20, %c0_21] : memref<1x256xf32, #tpu.memory_space<vmem>>, vector<1x256xf32>
    %46 = vector.broadcast %45 : vector<1x256xf32> to vector<16x256xf32>
    %47 = arith.addf %44, %46 : vector<16x256xf32>
    %cst_22 = arith.constant 5.000000e-01 : f32
    %48 = vector.broadcast %cst_22 : f32 to vector<16x256xf32>
    %49 = arith.mulf %48, %47 : vector<16x256xf32>
    %cst_23 = arith.constant 4.471500e-02 : f32
    %50 = vector.broadcast %cst_23 : f32 to vector<16x256xf32>
    %51 = arith.mulf %50, %47 : vector<16x256xf32>
    %52 = arith.mulf %51, %47 : vector<16x256xf32>
    %53 = arith.mulf %52, %47 : vector<16x256xf32>
    %54 = arith.addf %47, %53 : vector<16x256xf32>
    %cst_24 = arith.constant 0.797884583 : f32
    %55 = vector.broadcast %cst_24 : f32 to vector<16x256xf32>
    %56 = arith.mulf %55, %54 : vector<16x256xf32>
    %57 = math.tanh %56 : vector<16x256xf32>
    %cst_25 = arith.constant 1.000000e+00 : f32
    %58 = vector.broadcast %cst_25 : f32 to vector<16x256xf32>
    %59 = arith.addf %58, %57 : vector<16x256xf32>
    %60 = arith.mulf %49, %59 : vector<16x256xf32>
    %61 = arith.truncf %60 : vector<16x256xf32> to vector<16x256xbf16>
    %c0_26 = arith.constant 0 : index
    %c0_27 = arith.constant 0 : index
    %62 = vector.load %arg8[%c0_26, %c0_27] : memref<256x128xbf16, #tpu.memory_space<vmem>>, vector<256x128xbf16>
    %cst_28 = arith.constant dense<0.000000e+00> : vector<16x128xf32>
    %63 = tpu.matmul %61, %62, %cst_28 {dimension_numbers = #tpu.dot_dimension_numbers<[1], [0], [0], [1], [0, 0, 1, 1], [], []>} : vector<16x256xbf16>, vector<256x128xbf16>, vector<16x128xf32> -> vector<16x128xf32>
    %64 = arith.addf %0, %63 : vector<16x128xf32>
    %c0_29 = arith.constant 0 : index
    %c0_30 = arith.constant 0 : index
    %65 = vector.load %arg9[%c0_29, %c0_30] : memref<1x128xf32, #tpu.memory_space<vmem>>, vector<1x128xf32>
    %66 = vector.broadcast %65 : vector<1x128xf32> to vector<16x128xf32>
    %67 = arith.addf %64, %66 : vector<16x128xf32>
    %c0_31 = arith.constant 0 : index
    %c0_32 = arith.constant 0 : index
    %68 = vector.load %arg10[%c0_31, %c0_32] : memref<1x128xf32, #tpu.memory_space<vmem>>, vector<1x128xf32>
    %c0_33 = arith.constant 0 : index
    %c0_34 = arith.constant 0 : index
    %69 = vector.load %arg11[%c0_33, %c0_34] : memref<1x128xf32, #tpu.memory_space<vmem>>, vector<1x128xf32>
    %cst_35 = arith.constant dense<0.000000e+00> : vector<16xf32>
    %70 = vector.multi_reduction <add>, %67, %cst_35 [1] : vector<16x128xf32> to vector<16xf32>
    %71 = vector.shape_cast %70 : vector<16xf32> to vector<16x1xf32>
    %cst_36 = arith.constant 1.280000e+02 : f32
    %72 = vector.broadcast %cst_36 : f32 to vector<16x1xf32>
    %73 = arith.divf %71, %72 : vector<16x1xf32>
    %74 = vector.broadcast %73 : vector<16x1xf32> to vector<16x128xf32>
    %75 = arith.subf %67, %74 : vector<16x128xf32>
    %76 = arith.mulf %75, %75 : vector<16x128xf32>
    %cst_37 = arith.constant dense<0.000000e+00> : vector<16xf32>
    %77 = vector.multi_reduction <add>, %76, %cst_37 [1] : vector<16x128xf32> to vector<16xf32>
    %78 = vector.shape_cast %77 : vector<16xf32> to vector<16x1xf32>
    %cst_38 = arith.constant 1.280000e+02 : f32
    %79 = vector.broadcast %cst_38 : f32 to vector<16x1xf32>
    %80 = arith.divf %78, %79 : vector<16x1xf32>
    %cst_39 = arith.constant 9.99999974E-6 : f32
    %81 = vector.broadcast %cst_39 : f32 to vector<16x1xf32>
    %82 = arith.addf %80, %81 : vector<16x1xf32>
    %83 = math.rsqrt %82 : vector<16x1xf32>
    %84 = vector.broadcast %83 : vector<16x1xf32> to vector<16x128xf32>
    %85 = arith.mulf %75, %84 : vector<16x128xf32>
    %86 = vector.broadcast %68 : vector<1x128xf32> to vector<16x128xf32>
    %87 = arith.mulf %85, %86 : vector<16x128xf32>
    %88 = vector.broadcast %69 : vector<1x128xf32> to vector<16x128xf32>
    %89 = arith.addf %87, %88 : vector<16x128xf32>
    %90 = arith.truncf %89 : vector<16x128xf32> to vector<16x128xbf16>
    %c0_40 = arith.constant 0 : index
    %c0_41 = arith.constant 0 : index
    %91 = vector.load %arg12[%c0_40, %c0_41] : memref<128x256xbf16, #tpu.memory_space<vmem>>, vector<128x256xbf16>
    %cst_42 = arith.constant dense<0.000000e+00> : vector<16x256xf32>
    %92 = tpu.matmul %90, %91, %cst_42 {dimension_numbers = #tpu.dot_dimension_numbers<[1], [0], [0], [1], [0, 0, 1, 1], [], []>} : vector<16x128xbf16>, vector<128x256xbf16>, vector<16x256xf32> -> vector<16x256xf32>
    %c0_43 = arith.constant 0 : index
    %c0_44 = arith.constant 0 : index
    %93 = vector.load %arg13[%c0_43, %c0_44] : memref<1x256xf32, #tpu.memory_space<vmem>>, vector<1x256xf32>
    %94 = vector.broadcast %93 : vector<1x256xf32> to vector<16x256xf32>
    %95 = arith.addf %92, %94 : vector<16x256xf32>
    %cst_45 = arith.constant 5.000000e-01 : f32
    %96 = vector.broadcast %cst_45 : f32 to vector<16x256xf32>
    %97 = arith.mulf %96, %95 : vector<16x256xf32>
    %cst_46 = arith.constant 4.471500e-02 : f32
    %98 = vector.broadcast %cst_46 : f32 to vector<16x256xf32>
    %99 = arith.mulf %98, %95 : vector<16x256xf32>
    %100 = arith.mulf %99, %95 : vector<16x256xf32>
    %101 = arith.mulf %100, %95 : vector<16x256xf32>
    %102 = arith.addf %95, %101 : vector<16x256xf32>
    %cst_47 = arith.constant 0.797884583 : f32
    %103 = vector.broadcast %cst_47 : f32 to vector<16x256xf32>
    %104 = arith.mulf %103, %102 : vector<16x256xf32>
    %105 = math.tanh %104 : vector<16x256xf32>
    %cst_48 = arith.constant 1.000000e+00 : f32
    %106 = vector.broadcast %cst_48 : f32 to vector<16x256xf32>
    %107 = arith.addf %106, %105 : vector<16x256xf32>
    %108 = arith.mulf %97, %107 : vector<16x256xf32>
    %109 = arith.truncf %108 : vector<16x256xf32> to vector<16x256xbf16>
    %c0_49 = arith.constant 0 : index
    %c0_50 = arith.constant 0 : index
    %110 = vector.load %arg14[%c0_49, %c0_50] : memref<256x128xbf16, #tpu.memory_space<vmem>>, vector<256x128xbf16>
    %cst_51 = arith.constant dense<0.000000e+00> : vector<16x128xf32>
    %111 = tpu.matmul %109, %110, %cst_51 {dimension_numbers = #tpu.dot_dimension_numbers<[1], [0], [0], [1], [0, 0, 1, 1], [], []>} : vector<16x256xbf16>, vector<256x128xbf16>, vector<16x128xf32> -> vector<16x128xf32>
    %c0_52 = arith.constant 0 : index
    %c0_53 = arith.constant 0 : index
    %112 = vector.load %arg15[%c0_52, %c0_53] : memref<1x128xf32, #tpu.memory_space<vmem>>, vector<1x128xf32>
    %113 = vector.broadcast %112 : vector<1x128xf32> to vector<16x128xf32>
    %114 = arith.addf %111, %113 : vector<16x128xf32>
    %cst_54 = arith.constant 5.000000e-01 : f32
    %115 = vector.broadcast %cst_54 : f32 to vector<16x128xf32>
    %116 = arith.mulf %115, %114 : vector<16x128xf32>
    %117 = arith.addf %67, %116 : vector<16x128xf32>
    %c0_55 = arith.constant 0 : index
    %c0_56 = arith.constant 0 : index
    %118 = vector.load %arg16[%c0_55, %c0_56] : memref<1x128xf32, #tpu.memory_space<vmem>>, vector<1x128xf32>
    %c0_57 = arith.constant 0 : index
    %c0_58 = arith.constant 0 : index
    %119 = vector.load %arg17[%c0_57, %c0_58] : memref<1x128xf32, #tpu.memory_space<vmem>>, vector<1x128xf32>
    %cst_59 = arith.constant dense<0.000000e+00> : vector<16xf32>
    %120 = vector.multi_reduction <add>, %117, %cst_59 [1] : vector<16x128xf32> to vector<16xf32>
    %121 = vector.shape_cast %120 : vector<16xf32> to vector<16x1xf32>
    %cst_60 = arith.constant 1.280000e+02 : f32
    %122 = vector.broadcast %cst_60 : f32 to vector<16x1xf32>
    %123 = arith.divf %121, %122 : vector<16x1xf32>
    %124 = vector.broadcast %123 : vector<16x1xf32> to vector<16x128xf32>
    %125 = arith.subf %117, %124 : vector<16x128xf32>
    %126 = arith.mulf %125, %125 : vector<16x128xf32>
    %cst_61 = arith.constant dense<0.000000e+00> : vector<16xf32>
    %127 = vector.multi_reduction <add>, %126, %cst_61 [1] : vector<16x128xf32> to vector<16xf32>
    %128 = vector.shape_cast %127 : vector<16xf32> to vector<16x1xf32>
    %cst_62 = arith.constant 1.280000e+02 : f32
    %129 = vector.broadcast %cst_62 : f32 to vector<16x1xf32>
    %130 = arith.divf %128, %129 : vector<16x1xf32>
    %cst_63 = arith.constant 9.99999974E-6 : f32
    %131 = vector.broadcast %cst_63 : f32 to vector<16x1xf32>
    %132 = arith.addf %130, %131 : vector<16x1xf32>
    %133 = math.rsqrt %132 : vector<16x1xf32>
    %134 = vector.broadcast %133 : vector<16x1xf32> to vector<16x128xf32>
    %135 = arith.mulf %125, %134 : vector<16x128xf32>
    %136 = vector.broadcast %118 : vector<1x128xf32> to vector<16x128xf32>
    %137 = arith.mulf %135, %136 : vector<16x128xf32>
    %138 = vector.broadcast %119 : vector<1x128xf32> to vector<16x128xf32>
    %139 = arith.addf %137, %138 : vector<16x128xf32>
    %c0_64 = arith.constant 0 : index
    %c0_65 = arith.constant 0 : index
    %140 = vector.load %arg18[%c0_64, %c0_65] : memref<16x128xf32, #tpu.memory_space<vmem>>, vector<16x128xf32>
    tpu.vector_store %arg18[%c0_64, %c0_65], %139 {strides = array<i32>} : memref<16x128xf32, #tpu.memory_space<vmem>>, vector<16x128xf32>,
    return
  }
  func.func @transform_0(%arg0: i32) -> (i32, i32) {
    %c0_i32 = arith.constant 0 : i32
    %c0_i32_0 = arith.constant 0 : i32
    return %arg0, %c0_i32 : i32, i32
  }
  func.func @transform_1(%arg0: i32) -> (i32, i32) {
    %c0_i32 = arith.constant 0 : i32
    %c0_i32_0 = arith.constant 0 : i32
    %c0_i32_1 = arith.constant 0 : i32
    return %c0_i32, %c0_i32_0 : i32, i32
  }
  func.func @transform_2(%arg0: i32) -> (i32, i32) {
    %c0_i32 = arith.constant 0 : i32
    %c0_i32_0 = arith.constant 0 : i32
    %c0_i32_1 = arith.constant 0 : i32
    return %c0_i32, %c0_i32_0 : i32, i32
  }
  func.func @transform_3(%arg0: i32) -> (i32, i32) {
    %c0_i32 = arith.constant 0 : i32
    %c0_i32_0 = arith.constant 0 : i32
    %c0_i32_1 = arith.constant 0 : i32
    return %c0_i32, %c0_i32_0 : i32, i32
  }
  func.func @transform_4(%arg0: i32) -> (i32, i32) {
    %c0_i32 = arith.constant 0 : i32
    %c0_i32_0 = arith.constant 0 : i32
    %c0_i32_1 = arith.constant 0 : i32
    return %c0_i32, %c0_i32_0 : i32, i32
  }
  func.func @transform_5(%arg0: i32) -> (i32, i32) {
    %c0_i32 = arith.constant 0 : i32
    %c0_i32_0 = arith.constant 0 : i32
    %c0_i32_1 = arith.constant 0 : i32
    return %c0_i32, %c0_i32_0 : i32, i32
  }
  func.func @transform_6(%arg0: i32) -> (i32, i32) {
    %c0_i32 = arith.constant 0 : i32
    %c0_i32_0 = arith.constant 0 : i32
    %c0_i32_1 = arith.constant 0 : i32
    return %c0_i32, %c0_i32_0 : i32, i32
  }
  func.func @transform_7(%arg0: i32) -> (i32, i32) {
    %c0_i32 = arith.constant 0 : i32
    %c0_i32_0 = arith.constant 0 : i32
    %c0_i32_1 = arith.constant 0 : i32
    return %c0_i32, %c0_i32_0 : i32, i32
  }
  func.func @transform_8(%arg0: i32) -> (i32, i32) {
    %c0_i32 = arith.constant 0 : i32
    %c0_i32_0 = arith.constant 0 : i32
    %c0_i32_1 = arith.constant 0 : i32
    return %c0_i32, %c0_i32_0 : i32, i32
  }
  func.func @transform_9(%arg0: i32) -> (i32, i32) {
    %c0_i32 = arith.constant 0 : i32
    %c0_i32_0 = arith.constant 0 : i32
    %c0_i32_1 = arith.constant 0 : i32
    return %c0_i32, %c0_i32_0 : i32, i32
  }
  func.func @transform_10(%arg0: i32) -> (i32, i32) {
    %c0_i32 = arith.constant 0 : i32
    %c0_i32_0 = arith.constant 0 : i32
    %c0_i32_1 = arith.constant 0 : i32
    return %c0_i32, %c0_i32_0 : i32, i32
  }
  func.func @transform_11(%arg0: i32) -> (i32, i32) {
    %c0_i32 = arith.constant 0 : i32
    %c0_i32_0 = arith.constant 0 : i32
    %c0_i32_1 = arith.constant 0 : i32
    return %c0_i32, %c0_i32_0 : i32, i32
  }
  func.func @transform_12(%arg0: i32) -> (i32, i32) {
    %c0_i32 = arith.constant 0 : i32
    %c0_i32_0 = arith.constant 0 : i32
    %c0_i32_1 = arith.constant 0 : i32
    return %c0_i32, %c0_i32_0 : i32, i32
  }
  func.func @transform_13(%arg0: i32) -> (i32, i32) {
    %c0_i32 = arith.constant 0 : i32
    %c0_i32_0 = arith.constant 0 : i32
    %c0_i32_1 = arith.constant 0 : i32
    return %c0_i32, %c0_i32_0 : i32, i32
  }
  func.func @transform_14(%arg0: i32) -> (i32, i32) {
    %c0_i32 = arith.constant 0 : i32
    %c0_i32_0 = arith.constant 0 : i32
    %c0_i32_1 = arith.constant 0 : i32
    return %c0_i32, %c0_i32_0 : i32, i32
  }
  func.func @transform_15(%arg0: i32) -> (i32, i32) {
    %c0_i32 = arith.constant 0 : i32
    %c0_i32_0 = arith.constant 0 : i32
    %c0_i32_1 = arith.constant 0 : i32
    return %c0_i32, %c0_i32_0 : i32, i32
  }
  func.func @transform_16(%arg0: i32) -> (i32, i32) {
    %c0_i32 = arith.constant 0 : i32
    %c0_i32_0 = arith.constant 0 : i32
    %c0_i32_1 = arith.constant 0 : i32
    return %c0_i32, %c0_i32_0 : i32, i32
  }
  func.func @transform_17(%arg0: i32) -> (i32, i32) {
    %c0_i32 = arith.constant 0 : i32
    %c0_i32_0 = arith.constant 0 : i32
    return %arg0, %c0_i32 : i32, i32
  }
}

module attributes {stable_mosaic.version = 11 : i64} {
  func.func @_ff_mhsa_kernel(%arg0: i32, %arg1: memref<1x16x128xf32, #tpu.memory_space<vmem>>, %arg2: memref<16x128xf32, #tpu.memory_space<vmem>>, %arg3: memref<1x128xf32, #tpu.memory_space<vmem>>, %arg4: memref<1x128xf32, #tpu.memory_space<vmem>>, %arg5: memref<128x256xbf16, #tpu.memory_space<vmem>>, %arg6: memref<1x256xf32, #tpu.memory_space<vmem>>, %arg7: memref<256x128xbf16, #tpu.memory_space<vmem>>, %arg8: memref<1x128xf32, #tpu.memory_space<vmem>>, %arg9: memref<1x128xf32, #tpu.memory_space<vmem>>, %arg10: memref<1x128xf32, #tpu.memory_space<vmem>>, %arg11: memref<128x384xbf16, #tpu.memory_space<vmem>>, %arg12: memref<1x384xf32, #tpu.memory_space<vmem>>, %arg13: memref<128x128xbf16, #tpu.memory_space<vmem>>, %arg14: memref<1x128xf32, #tpu.memory_space<vmem>>, %arg15: memref<1x16x128xf32, #tpu.memory_space<vmem>>) attributes {dimension_semantics = [#tpu.dimension_semantics<parallel>], iteration_bounds = array<i64: 2>, scalar_prefetch = 0 : i64, scratch_operands = 0 : i64, tpu.core_type = #tpu.core_type<tc>, window_params = [{transform_indices = @transform_0, window_bounds = array<i64: 1, 16, 128>}, {pipeline_mode = #tpu.pipeline_mode<synchronous>, transform_indices = @transform_1, window_bounds = array<i64: 16, 128>}, {pipeline_mode = #tpu.pipeline_mode<synchronous>, transform_indices = @transform_2, window_bounds = array<i64: 1, 128>}, {pipeline_mode = #tpu.pipeline_mode<synchronous>, transform_indices = @transform_3, window_bounds = array<i64: 1, 128>}, {pipeline_mode = #tpu.pipeline_mode<synchronous>, transform_indices = @transform_4, window_bounds = array<i64: 128, 256>}, {pipeline_mode = #tpu.pipeline_mode<synchronous>, transform_indices = @transform_5, window_bounds = array<i64: 1, 256>}, {pipeline_mode = #tpu.pipeline_mode<synchronous>, transform_indices = @transform_6, window_bounds = array<i64: 256, 128>}, {pipeline_mode = #tpu.pipeline_mode<synchronous>, transform_indices = @transform_7, window_bounds = array<i64: 1, 128>}, {pipeline_mode = #tpu.pipeline_mode<synchronous>, transform_indices = @transform_8, window_bounds = array<i64: 1, 128>}, {pipeline_mode = #tpu.pipeline_mode<synchronous>, transform_indices = @transform_9, window_bounds = array<i64: 1, 128>}, {pipeline_mode = #tpu.pipeline_mode<synchronous>, transform_indices = @transform_10, window_bounds = array<i64: 128, 384>}, {pipeline_mode = #tpu.pipeline_mode<synchronous>, transform_indices = @transform_11, window_bounds = array<i64: 1, 384>}, {pipeline_mode = #tpu.pipeline_mode<synchronous>, transform_indices = @transform_12, window_bounds = array<i64: 128, 128>}, {pipeline_mode = #tpu.pipeline_mode<synchronous>, transform_indices = @transform_13, window_bounds = array<i64: 1, 128>}, {transform_indices = @transform_14, window_bounds = array<i64: 1, 16, 128>}]} {
    %c0 = arith.constant 0 : index
    %c0_0 = arith.constant 0 : index
    %c0_1 = arith.constant 0 : index
    %0 = vector.load %arg1[%c0, %c0_0, %c0_1] : memref<1x16x128xf32, #tpu.memory_space<vmem>>, vector<1x16x128xf32>
    %1 = vector.shape_cast %0 : vector<1x16x128xf32> to vector<16x128xf32>
    %c0_2 = arith.constant 0 : index
    %c0_3 = arith.constant 0 : index
    %2 = vector.load %arg3[%c0_2, %c0_3] : memref<1x128xf32, #tpu.memory_space<vmem>>, vector<1x128xf32>
    %c0_4 = arith.constant 0 : index
    %c0_5 = arith.constant 0 : index
    %3 = vector.load %arg4[%c0_4, %c0_5] : memref<1x128xf32, #tpu.memory_space<vmem>>, vector<1x128xf32>
    %cst = arith.constant dense<0.000000e+00> : vector<16xf32>
    %4 = vector.multi_reduction <add>, %1, %cst [1] : vector<16x128xf32> to vector<16xf32>
    %5 = vector.shape_cast %4 : vector<16xf32> to vector<16x1xf32>
    %cst_6 = arith.constant 1.280000e+02 : f32
    %6 = vector.broadcast %cst_6 : f32 to vector<16x1xf32>
    %7 = arith.divf %5, %6 : vector<16x1xf32>
    %8 = vector.broadcast %7 : vector<16x1xf32> to vector<16x128xf32>
    %9 = arith.subf %1, %8 : vector<16x128xf32>
    %10 = arith.mulf %9, %9 : vector<16x128xf32>
    %cst_7 = arith.constant dense<0.000000e+00> : vector<16xf32>
    %11 = vector.multi_reduction <add>, %10, %cst_7 [1] : vector<16x128xf32> to vector<16xf32>
    %12 = vector.shape_cast %11 : vector<16xf32> to vector<16x1xf32>
    %cst_8 = arith.constant 1.280000e+02 : f32
    %13 = vector.broadcast %cst_8 : f32 to vector<16x1xf32>
    %14 = arith.divf %12, %13 : vector<16x1xf32>
    %cst_9 = arith.constant 9.99999974E-6 : f32
    %15 = vector.broadcast %cst_9 : f32 to vector<16x1xf32>
    %16 = arith.addf %14, %15 : vector<16x1xf32>
    %17 = math.rsqrt %16 : vector<16x1xf32>
    %18 = vector.broadcast %17 : vector<16x1xf32> to vector<16x128xf32>
    %19 = arith.mulf %9, %18 : vector<16x128xf32>
    %20 = vector.broadcast %2 : vector<1x128xf32> to vector<16x128xf32>
    %21 = arith.mulf %19, %20 : vector<16x128xf32>
    %22 = vector.broadcast %3 : vector<1x128xf32> to vector<16x128xf32>
    %23 = arith.addf %21, %22 : vector<16x128xf32>
    %24 = arith.truncf %23 : vector<16x128xf32> to vector<16x128xbf16>
    %c0_10 = arith.constant 0 : index
    %c0_11 = arith.constant 0 : index
    %25 = vector.load %arg5[%c0_10, %c0_11] : memref<128x256xbf16, #tpu.memory_space<vmem>>, vector<128x256xbf16>
    %cst_12 = arith.constant dense<0.000000e+00> : vector<16x256xf32>
    %26 = tpu.matmul %24, %25, %cst_12 {dimension_numbers = #tpu.dot_dimension_numbers<[1], [0], [0], [1], [0, 0, 1, 1], [], []>} : vector<16x128xbf16>, vector<128x256xbf16>, vector<16x256xf32> -> vector<16x256xf32>
    %c0_13 = arith.constant 0 : index
    %c0_14 = arith.constant 0 : index
    %27 = vector.load %arg6[%c0_13, %c0_14] : memref<1x256xf32, #tpu.memory_space<vmem>>, vector<1x256xf32>
    %28 = vector.broadcast %27 : vector<1x256xf32> to vector<16x256xf32>
    %29 = arith.addf %26, %28 : vector<16x256xf32>
    %cst_15 = arith.constant 5.000000e-01 : f32
    %30 = vector.broadcast %cst_15 : f32 to vector<16x256xf32>
    %31 = arith.mulf %30, %29 : vector<16x256xf32>
    %cst_16 = arith.constant 4.471500e-02 : f32
    %32 = vector.broadcast %cst_16 : f32 to vector<16x256xf32>
    %33 = arith.mulf %32, %29 : vector<16x256xf32>
    %34 = arith.mulf %33, %29 : vector<16x256xf32>
    %35 = arith.mulf %34, %29 : vector<16x256xf32>
    %36 = arith.addf %29, %35 : vector<16x256xf32>
    %cst_17 = arith.constant 0.797884583 : f32
    %37 = vector.broadcast %cst_17 : f32 to vector<16x256xf32>
    %38 = arith.mulf %37, %36 : vector<16x256xf32>
    %39 = math.tanh %38 : vector<16x256xf32>
    %cst_18 = arith.constant 1.000000e+00 : f32
    %40 = vector.broadcast %cst_18 : f32 to vector<16x256xf32>
    %41 = arith.addf %40, %39 : vector<16x256xf32>
    %42 = arith.mulf %31, %41 : vector<16x256xf32>
    %43 = arith.truncf %42 : vector<16x256xf32> to vector<16x256xbf16>
    %c0_19 = arith.constant 0 : index
    %c0_20 = arith.constant 0 : index
    %44 = vector.load %arg7[%c0_19, %c0_20] : memref<256x128xbf16, #tpu.memory_space<vmem>>, vector<256x128xbf16>
    %cst_21 = arith.constant dense<0.000000e+00> : vector<16x128xf32>
    %45 = tpu.matmul %43, %44, %cst_21 {dimension_numbers = #tpu.dot_dimension_numbers<[1], [0], [0], [1], [0, 0, 1, 1], [], []>} : vector<16x256xbf16>, vector<256x128xbf16>, vector<16x128xf32> -> vector<16x128xf32>
    %c0_22 = arith.constant 0 : index
    %c0_23 = arith.constant 0 : index
    %46 = vector.load %arg8[%c0_22, %c0_23] : memref<1x128xf32, #tpu.memory_space<vmem>>, vector<1x128xf32>
    %47 = vector.broadcast %46 : vector<1x128xf32> to vector<16x128xf32>
    %48 = arith.addf %45, %47 : vector<16x128xf32>
    %cst_24 = arith.constant 5.000000e-01 : f32
    %49 = vector.broadcast %cst_24 : f32 to vector<16x128xf32>
    %50 = arith.mulf %49, %48 : vector<16x128xf32>
    %51 = arith.addf %1, %50 : vector<16x128xf32>
    %c0_25 = arith.constant 0 : index
    %c0_26 = arith.constant 0 : index
    %52 = vector.load %arg9[%c0_25, %c0_26] : memref<1x128xf32, #tpu.memory_space<vmem>>, vector<1x128xf32>
    %c0_27 = arith.constant 0 : index
    %c0_28 = arith.constant 0 : index
    %53 = vector.load %arg10[%c0_27, %c0_28] : memref<1x128xf32, #tpu.memory_space<vmem>>, vector<1x128xf32>
    %cst_29 = arith.constant dense<0.000000e+00> : vector<16xf32>
    %54 = vector.multi_reduction <add>, %51, %cst_29 [1] : vector<16x128xf32> to vector<16xf32>
    %55 = vector.shape_cast %54 : vector<16xf32> to vector<16x1xf32>
    %cst_30 = arith.constant 1.280000e+02 : f32
    %56 = vector.broadcast %cst_30 : f32 to vector<16x1xf32>
    %57 = arith.divf %55, %56 : vector<16x1xf32>
    %58 = vector.broadcast %57 : vector<16x1xf32> to vector<16x128xf32>
    %59 = arith.subf %51, %58 : vector<16x128xf32>
    %60 = arith.mulf %59, %59 : vector<16x128xf32>
    %cst_31 = arith.constant dense<0.000000e+00> : vector<16xf32>
    %61 = vector.multi_reduction <add>, %60, %cst_31 [1] : vector<16x128xf32> to vector<16xf32>
    %62 = vector.shape_cast %61 : vector<16xf32> to vector<16x1xf32>
    %cst_32 = arith.constant 1.280000e+02 : f32
    %63 = vector.broadcast %cst_32 : f32 to vector<16x1xf32>
    %64 = arith.divf %62, %63 : vector<16x1xf32>
    %cst_33 = arith.constant 9.99999974E-6 : f32
    %65 = vector.broadcast %cst_33 : f32 to vector<16x1xf32>
    %66 = arith.addf %64, %65 : vector<16x1xf32>
    %67 = math.rsqrt %66 : vector<16x1xf32>
    %68 = vector.broadcast %67 : vector<16x1xf32> to vector<16x128xf32>
    %69 = arith.mulf %59, %68 : vector<16x128xf32>
    %70 = vector.broadcast %52 : vector<1x128xf32> to vector<16x128xf32>
    %71 = arith.mulf %69, %70 : vector<16x128xf32>
    %72 = vector.broadcast %53 : vector<1x128xf32> to vector<16x128xf32>
    %73 = arith.addf %71, %72 : vector<16x128xf32>
    %c0_34 = arith.constant 0 : index
    %c0_35 = arith.constant 0 : index
    %74 = vector.load %arg2[%c0_34, %c0_35] : memref<16x128xf32, #tpu.memory_space<vmem>>, vector<16x128xf32>
    %75 = arith.addf %73, %74 : vector<16x128xf32>
    %76 = arith.truncf %75 : vector<16x128xf32> to vector<16x128xbf16>
    %c0_36 = arith.constant 0 : index
    %c0_37 = arith.constant 0 : index
    %77 = vector.load %arg11[%c0_36, %c0_37] : memref<128x384xbf16, #tpu.memory_space<vmem>>, vector<128x384xbf16>
    %cst_38 = arith.constant dense<0.000000e+00> : vector<16x384xf32>
    %78 = tpu.matmul %76, %77, %cst_38 {dimension_numbers = #tpu.dot_dimension_numbers<[1], [0], [0], [1], [0, 0, 1, 1], [], []>} : vector<16x128xbf16>, vector<128x384xbf16>, vector<16x384xf32> -> vector<16x384xf32>
    %c0_39 = arith.constant 0 : index
    %c0_40 = arith.constant 0 : index
    %79 = vector.load %arg12[%c0_39, %c0_40] : memref<1x384xf32, #tpu.memory_space<vmem>>, vector<1x384xf32>
    %80 = vector.broadcast %79 : vector<1x384xf32> to vector<16x384xf32>
    %81 = arith.addf %78, %80 : vector<16x384xf32>
    %82 = vector.extract_strided_slice %81 {offsets = [0, 0], sizes = [16, 128], strides = [1, 1]} : vector<16x384xf32> to vector<16x128xf32>
    %cst_41 = arith.constant 0.176776692 : f32
    %83 = vector.broadcast %cst_41 : f32 to vector<16x128xf32>
    %84 = arith.mulf %82, %83 : vector<16x128xf32>
    %85 = arith.truncf %84 : vector<16x128xf32> to vector<16x128xbf16>
    %86 = vector.extract_strided_slice %81 {offsets = [0, 128], sizes = [16, 128], strides = [1, 1]} : vector<16x384xf32> to vector<16x128xf32>
    %87 = arith.truncf %86 : vector<16x128xf32> to vector<16x128xbf16>
    %88 = vector.extract_strided_slice %81 {offsets = [0, 256], sizes = [16, 128], strides = [1, 1]} : vector<16x384xf32> to vector<16x128xf32>
    %89 = arith.truncf %88 : vector<16x128xf32> to vector<16x128xbf16>
    %90 = vector.extract_strided_slice %85 {offsets = [0, 0], sizes = [16, 32], strides = [1, 1]} : vector<16x128xbf16> to vector<16x32xbf16>
    %91 = vector.extract_strided_slice %87 {offsets = [0, 0], sizes = [16, 32], strides = [1, 1]} : vector<16x128xbf16> to vector<16x32xbf16>
    %cst_42 = arith.constant dense<0.000000e+00> : vector<16x16xf32>
    %92 = tpu.matmul %90, %91, %cst_42 {dimension_numbers = #tpu.dot_dimension_numbers<[1], [1], [0], [0], [0, 0, 1, 0], [], []>} : vector<16x32xbf16>, vector<16x32xbf16>, vector<16x16xf32> -> vector<16x16xf32>
    %cst_43 = arith.constant dense<0xFF800000> : vector<16xf32>
    %93 = vector.multi_reduction <maximumf>, %92, %cst_43 [1] : vector<16x16xf32> to vector<16xf32>
    %94 = vector.shape_cast %93 : vector<16xf32> to vector<16x1xf32>
    %95 = vector.broadcast %94 : vector<16x1xf32> to vector<16x16xf32>
    %96 = arith.subf %92, %95 : vector<16x16xf32>
    %97 = math.exp %96 : vector<16x16xf32>
    %cst_44 = arith.constant dense<0.000000e+00> : vector<16xf32>
    %98 = vector.multi_reduction <add>, %97, %cst_44 [1] : vector<16x16xf32> to vector<16xf32>
    %99 = vector.shape_cast %98 : vector<16xf32> to vector<16x1xf32>
    %100 = tpu.reciprocal %99 {approx = true} : vector<16x1xf32> -> vector<16x1xf32>
    %101 = vector.broadcast %100 : vector<16x1xf32> to vector<16x16xf32>
    %102 = arith.mulf %97, %101 : vector<16x16xf32>
    %103 = arith.truncf %102 : vector<16x16xf32> to vector<16x16xbf16>
    %104 = vector.extract_strided_slice %89 {offsets = [0, 0], sizes = [16, 32], strides = [1, 1]} : vector<16x128xbf16> to vector<16x32xbf16>
    %cst_45 = arith.constant dense<0.000000e+00> : vector<16x32xf32>
    %105 = tpu.matmul %103, %104, %cst_45 {dimension_numbers = #tpu.dot_dimension_numbers<[1], [0], [0], [1], [0, 0, 1, 1], [], []>} : vector<16x16xbf16>, vector<16x32xbf16>, vector<16x32xf32> -> vector<16x32xf32>
    %106 = vector.extract_strided_slice %85 {offsets = [0, 32], sizes = [16, 32], strides = [1, 1]} : vector<16x128xbf16> to vector<16x32xbf16>
    %107 = vector.extract_strided_slice %87 {offsets = [0, 32], sizes = [16, 32], strides = [1, 1]} : vector<16x128xbf16> to vector<16x32xbf16>
    %cst_46 = arith.constant dense<0.000000e+00> : vector<16x16xf32>
    %108 = tpu.matmul %106, %107, %cst_46 {dimension_numbers = #tpu.dot_dimension_numbers<[1], [1], [0], [0], [0, 0, 1, 0], [], []>} : vector<16x32xbf16>, vector<16x32xbf16>, vector<16x16xf32> -> vector<16x16xf32>
    %cst_47 = arith.constant dense<0xFF800000> : vector<16xf32>
    %109 = vector.multi_reduction <maximumf>, %108, %cst_47 [1] : vector<16x16xf32> to vector<16xf32>
    %110 = vector.shape_cast %109 : vector<16xf32> to vector<16x1xf32>
    %111 = vector.broadcast %110 : vector<16x1xf32> to vector<16x16xf32>
    %112 = arith.subf %108, %111 : vector<16x16xf32>
    %113 = math.exp %112 : vector<16x16xf32>
    %cst_48 = arith.constant dense<0.000000e+00> : vector<16xf32>
    %114 = vector.multi_reduction <add>, %113, %cst_48 [1] : vector<16x16xf32> to vector<16xf32>
    %115 = vector.shape_cast %114 : vector<16xf32> to vector<16x1xf32>
    %116 = tpu.reciprocal %115 {approx = true} : vector<16x1xf32> -> vector<16x1xf32>
    %117 = vector.broadcast %116 : vector<16x1xf32> to vector<16x16xf32>
    %118 = arith.mulf %113, %117 : vector<16x16xf32>
    %119 = arith.truncf %118 : vector<16x16xf32> to vector<16x16xbf16>
    %120 = vector.extract_strided_slice %89 {offsets = [0, 32], sizes = [16, 32], strides = [1, 1]} : vector<16x128xbf16> to vector<16x32xbf16>
    %cst_49 = arith.constant dense<0.000000e+00> : vector<16x32xf32>
    %121 = tpu.matmul %119, %120, %cst_49 {dimension_numbers = #tpu.dot_dimension_numbers<[1], [0], [0], [1], [0, 0, 1, 1], [], []>} : vector<16x16xbf16>, vector<16x32xbf16>, vector<16x32xf32> -> vector<16x32xf32>
    %122 = vector.extract_strided_slice %85 {offsets = [0, 64], sizes = [16, 32], strides = [1, 1]} : vector<16x128xbf16> to vector<16x32xbf16>
    %123 = vector.extract_strided_slice %87 {offsets = [0, 64], sizes = [16, 32], strides = [1, 1]} : vector<16x128xbf16> to vector<16x32xbf16>
    %cst_50 = arith.constant dense<0.000000e+00> : vector<16x16xf32>
    %124 = tpu.matmul %122, %123, %cst_50 {dimension_numbers = #tpu.dot_dimension_numbers<[1], [1], [0], [0], [0, 0, 1, 0], [], []>} : vector<16x32xbf16>, vector<16x32xbf16>, vector<16x16xf32> -> vector<16x16xf32>
    %cst_51 = arith.constant dense<0xFF800000> : vector<16xf32>
    %125 = vector.multi_reduction <maximumf>, %124, %cst_51 [1] : vector<16x16xf32> to vector<16xf32>
    %126 = vector.shape_cast %125 : vector<16xf32> to vector<16x1xf32>
    %127 = vector.broadcast %126 : vector<16x1xf32> to vector<16x16xf32>
    %128 = arith.subf %124, %127 : vector<16x16xf32>
    %129 = math.exp %128 : vector<16x16xf32>
    %cst_52 = arith.constant dense<0.000000e+00> : vector<16xf32>
    %130 = vector.multi_reduction <add>, %129, %cst_52 [1] : vector<16x16xf32> to vector<16xf32>
    %131 = vector.shape_cast %130 : vector<16xf32> to vector<16x1xf32>
    %132 = tpu.reciprocal %131 {approx = true} : vector<16x1xf32> -> vector<16x1xf32>
    %133 = vector.broadcast %132 : vector<16x1xf32> to vector<16x16xf32>
    %134 = arith.mulf %129, %133 : vector<16x16xf32>
    %135 = arith.truncf %134 : vector<16x16xf32> to vector<16x16xbf16>
    %136 = vector.extract_strided_slice %89 {offsets = [0, 64], sizes = [16, 32], strides = [1, 1]} : vector<16x128xbf16> to vector<16x32xbf16>
    %cst_53 = arith.constant dense<0.000000e+00> : vector<16x32xf32>
    %137 = tpu.matmul %135, %136, %cst_53 {dimension_numbers = #tpu.dot_dimension_numbers<[1], [0], [0], [1], [0, 0, 1, 1], [], []>} : vector<16x16xbf16>, vector<16x32xbf16>, vector<16x32xf32> -> vector<16x32xf32>
    %138 = vector.extract_strided_slice %85 {offsets = [0, 96], sizes = [16, 32], strides = [1, 1]} : vector<16x128xbf16> to vector<16x32xbf16>
    %139 = vector.extract_strided_slice %87 {offsets = [0, 96], sizes = [16, 32], strides = [1, 1]} : vector<16x128xbf16> to vector<16x32xbf16>
    %cst_54 = arith.constant dense<0.000000e+00> : vector<16x16xf32>
    %140 = tpu.matmul %138, %139, %cst_54 {dimension_numbers = #tpu.dot_dimension_numbers<[1], [1], [0], [0], [0, 0, 1, 0], [], []>} : vector<16x32xbf16>, vector<16x32xbf16>, vector<16x16xf32> -> vector<16x16xf32>
    %cst_55 = arith.constant dense<0xFF800000> : vector<16xf32>
    %141 = vector.multi_reduction <maximumf>, %140, %cst_55 [1] : vector<16x16xf32> to vector<16xf32>
    %142 = vector.shape_cast %141 : vector<16xf32> to vector<16x1xf32>
    %143 = vector.broadcast %142 : vector<16x1xf32> to vector<16x16xf32>
    %144 = arith.subf %140, %143 : vector<16x16xf32>
    %145 = math.exp %144 : vector<16x16xf32>
    %cst_56 = arith.constant dense<0.000000e+00> : vector<16xf32>
    %146 = vector.multi_reduction <add>, %145, %cst_56 [1] : vector<16x16xf32> to vector<16xf32>
    %147 = vector.shape_cast %146 : vector<16xf32> to vector<16x1xf32>
    %148 = tpu.reciprocal %147 {approx = true} : vector<16x1xf32> -> vector<16x1xf32>
    %149 = vector.broadcast %148 : vector<16x1xf32> to vector<16x16xf32>
    %150 = arith.mulf %145, %149 : vector<16x16xf32>
    %151 = arith.truncf %150 : vector<16x16xf32> to vector<16x16xbf16>
    %152 = vector.extract_strided_slice %89 {offsets = [0, 96], sizes = [16, 32], strides = [1, 1]} : vector<16x128xbf16> to vector<16x32xbf16>
    %cst_57 = arith.constant dense<0.000000e+00> : vector<16x32xf32>
    %153 = tpu.matmul %151, %152, %cst_57 {dimension_numbers = #tpu.dot_dimension_numbers<[1], [0], [0], [1], [0, 0, 1, 1], [], []>} : vector<16x16xbf16>, vector<16x32xbf16>, vector<16x32xf32> -> vector<16x32xf32>
    %154 = tpu.concatenate %105, %121, %137, %153 in 1 : vector<16x32xf32>, vector<16x32xf32>, vector<16x32xf32>, vector<16x32xf32> -> vector<16x128xf32>
    %155 = arith.truncf %154 : vector<16x128xf32> to vector<16x128xbf16>
    %c0_58 = arith.constant 0 : index
    %c0_59 = arith.constant 0 : index
    %156 = vector.load %arg13[%c0_58, %c0_59] : memref<128x128xbf16, #tpu.memory_space<vmem>>, vector<128x128xbf16>
    %cst_60 = arith.constant dense<0.000000e+00> : vector<16x128xf32>
    %157 = tpu.matmul %155, %156, %cst_60 {dimension_numbers = #tpu.dot_dimension_numbers<[1], [0], [0], [1], [0, 0, 1, 1], [], []>} : vector<16x128xbf16>, vector<128x128xbf16>, vector<16x128xf32> -> vector<16x128xf32>
    %c0_61 = arith.constant 0 : index
    %c0_62 = arith.constant 0 : index
    %158 = vector.load %arg14[%c0_61, %c0_62] : memref<1x128xf32, #tpu.memory_space<vmem>>, vector<1x128xf32>
    %159 = vector.broadcast %158 : vector<1x128xf32> to vector<16x128xf32>
    %160 = arith.addf %157, %159 : vector<16x128xf32>
    %161 = arith.addf %51, %160 : vector<16x128xf32>
    %c0_63 = arith.constant 0 : index
    %c0_64 = arith.constant 0 : index
    %c0_65 = arith.constant 0 : index
    %162 = vector.load %arg15[%c0_63, %c0_64, %c0_65] : memref<1x16x128xf32, #tpu.memory_space<vmem>>, vector<1x16x128xf32>
    %163 = vector.shape_cast %162 : vector<1x16x128xf32> to vector<16x128xf32>
    %164 = vector.shape_cast %161 : vector<16x128xf32> to vector<1x16x128xf32>
    tpu.vector_store %arg15[%c0_63, %c0_64, %c0_65], %164 {strides = array<i32>} : memref<1x16x128xf32, #tpu.memory_space<vmem>>, vector<1x16x128xf32>,
    return
  }
  func.func @transform_0(%arg0: i32) -> (i32, i32, i32) {
    %c0_i32 = arith.constant 0 : i32
    %c0_i32_0 = arith.constant 0 : i32
    %c0_i32_1 = arith.constant 0 : i32
    return %arg0, %c0_i32, %c0_i32_0 : i32, i32, i32
  }
  func.func @transform_1(%arg0: i32) -> (i32, i32) {
    %c0_i32 = arith.constant 0 : i32
    %c0_i32_0 = arith.constant 0 : i32
    %c0_i32_1 = arith.constant 0 : i32
    return %c0_i32, %c0_i32_0 : i32, i32
  }
  func.func @transform_2(%arg0: i32) -> (i32, i32) {
    %c0_i32 = arith.constant 0 : i32
    %c0_i32_0 = arith.constant 0 : i32
    %c0_i32_1 = arith.constant 0 : i32
    return %c0_i32, %c0_i32_0 : i32, i32
  }
  func.func @transform_3(%arg0: i32) -> (i32, i32) {
    %c0_i32 = arith.constant 0 : i32
    %c0_i32_0 = arith.constant 0 : i32
    %c0_i32_1 = arith.constant 0 : i32
    return %c0_i32, %c0_i32_0 : i32, i32
  }
  func.func @transform_4(%arg0: i32) -> (i32, i32) {
    %c0_i32 = arith.constant 0 : i32
    %c0_i32_0 = arith.constant 0 : i32
    %c0_i32_1 = arith.constant 0 : i32
    return %c0_i32, %c0_i32_0 : i32, i32
  }
  func.func @transform_5(%arg0: i32) -> (i32, i32) {
    %c0_i32 = arith.constant 0 : i32
    %c0_i32_0 = arith.constant 0 : i32
    %c0_i32_1 = arith.constant 0 : i32
    return %c0_i32, %c0_i32_0 : i32, i32
  }
  func.func @transform_6(%arg0: i32) -> (i32, i32) {
    %c0_i32 = arith.constant 0 : i32
    %c0_i32_0 = arith.constant 0 : i32
    %c0_i32_1 = arith.constant 0 : i32
    return %c0_i32, %c0_i32_0 : i32, i32
  }
  func.func @transform_7(%arg0: i32) -> (i32, i32) {
    %c0_i32 = arith.constant 0 : i32
    %c0_i32_0 = arith.constant 0 : i32
    %c0_i32_1 = arith.constant 0 : i32
    return %c0_i32, %c0_i32_0 : i32, i32
  }
  func.func @transform_8(%arg0: i32) -> (i32, i32) {
    %c0_i32 = arith.constant 0 : i32
    %c0_i32_0 = arith.constant 0 : i32
    %c0_i32_1 = arith.constant 0 : i32
    return %c0_i32, %c0_i32_0 : i32, i32
  }
  func.func @transform_9(%arg0: i32) -> (i32, i32) {
    %c0_i32 = arith.constant 0 : i32
    %c0_i32_0 = arith.constant 0 : i32
    %c0_i32_1 = arith.constant 0 : i32
    return %c0_i32, %c0_i32_0 : i32, i32
  }
  func.func @transform_10(%arg0: i32) -> (i32, i32) {
    %c0_i32 = arith.constant 0 : i32
    %c0_i32_0 = arith.constant 0 : i32
    %c0_i32_1 = arith.constant 0 : i32
    return %c0_i32, %c0_i32_0 : i32, i32
  }
  func.func @transform_11(%arg0: i32) -> (i32, i32) {
    %c0_i32 = arith.constant 0 : i32
    %c0_i32_0 = arith.constant 0 : i32
    %c0_i32_1 = arith.constant 0 : i32
    return %c0_i32, %c0_i32_0 : i32, i32
  }
  func.func @transform_12(%arg0: i32) -> (i32, i32) {
    %c0_i32 = arith.constant 0 : i32
    %c0_i32_0 = arith.constant 0 : i32
    %c0_i32_1 = arith.constant 0 : i32
    return %c0_i32, %c0_i32_0 : i32, i32
  }
  func.func @transform_13(%arg0: i32) -> (i32, i32) {
    %c0_i32 = arith.constant 0 : i32
    %c0_i32_0 = arith.constant 0 : i32
    %c0_i32_1 = arith.constant 0 : i32
    return %c0_i32, %c0_i32_0 : i32, i32
  }
  func.func @transform_14(%arg0: i32) -> (i32, i32, i32) {
    %c0_i32 = arith.constant 0 : i32
    %c0_i32_0 = arith.constant 0 : i32
    %c0_i32_1 = arith.constant 0 : i32
    return %arg0, %c0_i32, %c0_i32_0 : i32, i32, i32
  }
}

module attributes {stable_mosaic.version = 11 : i64} {
  func.func @_ff_mhsa_kernel(%arg0: i32, %arg1: memref<1x16x128xf32, #tpu.memory_space<vmem>>, %arg2: memref<16x128xf32, #tpu.memory_space<vmem>>, %arg3: memref<1x128xf32, #tpu.memory_space<vmem>>, %arg4: memref<1x128xf32, #tpu.memory_space<vmem>>, %arg5: memref<128x256xbf16, #tpu.memory_space<vmem>>, %arg6: memref<1x256xf32, #tpu.memory_space<vmem>>, %arg7: memref<256x128xbf16, #tpu.memory_space<vmem>>, %arg8: memref<1x128xf32, #tpu.memory_space<vmem>>, %arg9: memref<1x128xf32, #tpu.memory_space<vmem>>, %arg10: memref<1x128xf32, #tpu.memory_space<vmem>>, %arg11: memref<128x384xbf16, #tpu.memory_space<vmem>>, %arg12: memref<1x384xf32, #tpu.memory_space<vmem>>, %arg13: memref<128x128xbf16, #tpu.memory_space<vmem>>, %arg14: memref<1x128xf32, #tpu.memory_space<vmem>>, %arg15: memref<1x16x128xf32, #tpu.memory_space<vmem>>) attributes {dimension_semantics = [#tpu.dimension_semantics<parallel>], iteration_bounds = array<i64: 2>, scalar_prefetch = 0 : i64, scratch_operands = 0 : i64, tpu.core_type = #tpu.core_type<tc>, window_params = [{transform_indices = @transform_0, window_bounds = array<i64: 1, 16, 128>}, {pipeline_mode = #tpu.pipeline_mode<synchronous>, transform_indices = @transform_1, window_bounds = array<i64: 16, 128>}, {pipeline_mode = #tpu.pipeline_mode<synchronous>, transform_indices = @transform_2, window_bounds = array<i64: 1, 128>}, {pipeline_mode = #tpu.pipeline_mode<synchronous>, transform_indices = @transform_3, window_bounds = array<i64: 1, 128>}, {pipeline_mode = #tpu.pipeline_mode<synchronous>, transform_indices = @transform_4, window_bounds = array<i64: 128, 256>}, {pipeline_mode = #tpu.pipeline_mode<synchronous>, transform_indices = @transform_5, window_bounds = array<i64: 1, 256>}, {pipeline_mode = #tpu.pipeline_mode<synchronous>, transform_indices = @transform_6, window_bounds = array<i64: 256, 128>}, {pipeline_mode = #tpu.pipeline_mode<synchronous>, transform_indices = @transform_7, window_bounds = array<i64: 1, 128>}, {pipeline_mode = #tpu.pipeline_mode<synchronous>, transform_indices = @transform_8, window_bounds = array<i64: 1, 128>}, {pipeline_mode = #tpu.pipeline_mode<synchronous>, transform_indices = @transform_9, window_bounds = array<i64: 1, 128>}, {pipeline_mode = #tpu.pipeline_mode<synchronous>, transform_indices = @transform_10, window_bounds = array<i64: 128, 384>}, {pipeline_mode = #tpu.pipeline_mode<synchronous>, transform_indices = @transform_11, window_bounds = array<i64: 1, 384>}, {pipeline_mode = #tpu.pipeline_mode<synchronous>, transform_indices = @transform_12, window_bounds = array<i64: 128, 128>}, {pipeline_mode = #tpu.pipeline_mode<synchronous>, transform_indices = @transform_13, window_bounds = array<i64: 1, 128>}, {transform_indices = @transform_14, window_bounds = array<i64: 1, 16, 128>}]} {
    %c0 = arith.constant 0 : index
    %c0_0 = arith.constant 0 : index
    %c0_1 = arith.constant 0 : index
    %0 = vector.load %arg1[%c0, %c0_0, %c0_1] : memref<1x16x128xf32, #tpu.memory_space<vmem>>, vector<1x16x128xf32>
    %1 = vector.shape_cast %0 : vector<1x16x128xf32> to vector<16x128xf32>
    %c0_2 = arith.constant 0 : index
    %c0_3 = arith.constant 0 : index
    %2 = vector.load %arg3[%c0_2, %c0_3] : memref<1x128xf32, #tpu.memory_space<vmem>>, vector<1x128xf32>
    %c0_4 = arith.constant 0 : index
    %c0_5 = arith.constant 0 : index
    %3 = vector.load %arg4[%c0_4, %c0_5] : memref<1x128xf32, #tpu.memory_space<vmem>>, vector<1x128xf32>
    %cst = arith.constant dense<0.000000e+00> : vector<16xf32>
    %4 = vector.multi_reduction <add>, %1, %cst [1] : vector<16x128xf32> to vector<16xf32>
    %5 = vector.shape_cast %4 : vector<16xf32> to vector<16x1xf32>
    %cst_6 = arith.constant 1.280000e+02 : f32
    %6 = vector.broadcast %cst_6 : f32 to vector<16x1xf32>
    %7 = arith.divf %5, %6 : vector<16x1xf32>
    %8 = vector.broadcast %7 : vector<16x1xf32> to vector<16x128xf32>
    %9 = arith.subf %1, %8 : vector<16x128xf32>
    %10 = arith.mulf %9, %9 : vector<16x128xf32>
    %cst_7 = arith.constant dense<0.000000e+00> : vector<16xf32>
    %11 = vector.multi_reduction <add>, %10, %cst_7 [1] : vector<16x128xf32> to vector<16xf32>
    %12 = vector.shape_cast %11 : vector<16xf32> to vector<16x1xf32>
    %cst_8 = arith.constant 1.280000e+02 : f32
    %13 = vector.broadcast %cst_8 : f32 to vector<16x1xf32>
    %14 = arith.divf %12, %13 : vector<16x1xf32>
    %cst_9 = arith.constant 9.99999974E-6 : f32
    %15 = vector.broadcast %cst_9 : f32 to vector<16x1xf32>
    %16 = arith.addf %14, %15 : vector<16x1xf32>
    %17 = math.rsqrt %16 : vector<16x1xf32>
    %18 = vector.broadcast %17 : vector<16x1xf32> to vector<16x128xf32>
    %19 = arith.mulf %9, %18 : vector<16x128xf32>
    %20 = vector.broadcast %2 : vector<1x128xf32> to vector<16x128xf32>
    %21 = arith.mulf %19, %20 : vector<16x128xf32>
    %22 = vector.broadcast %3 : vector<1x128xf32> to vector<16x128xf32>
    %23 = arith.addf %21, %22 : vector<16x128xf32>
    %24 = arith.truncf %23 : vector<16x128xf32> to vector<16x128xbf16>
    %c0_10 = arith.constant 0 : index
    %c0_11 = arith.constant 0 : index
    %25 = vector.load %arg5[%c0_10, %c0_11] : memref<128x256xbf16, #tpu.memory_space<vmem>>, vector<128x256xbf16>
    %cst_12 = arith.constant dense<0.000000e+00> : vector<16x256xf32>
    %26 = tpu.matmul %24, %25, %cst_12 {dimension_numbers = #tpu.dot_dimension_numbers<[1], [0], [0], [1], [0, 0, 1, 1], [], []>} : vector<16x128xbf16>, vector<128x256xbf16>, vector<16x256xf32> -> vector<16x256xf32>
    %c0_13 = arith.constant 0 : index
    %c0_14 = arith.constant 0 : index
    %27 = vector.load %arg6[%c0_13, %c0_14] : memref<1x256xf32, #tpu.memory_space<vmem>>, vector<1x256xf32>
    %28 = vector.broadcast %27 : vector<1x256xf32> to vector<16x256xf32>
    %29 = arith.addf %26, %28 : vector<16x256xf32>
    %cst_15 = arith.constant 5.000000e-01 : f32
    %30 = vector.broadcast %cst_15 : f32 to vector<16x256xf32>
    %31 = arith.mulf %30, %29 : vector<16x256xf32>
    %cst_16 = arith.constant 4.471500e-02 : f32
    %32 = vector.broadcast %cst_16 : f32 to vector<16x256xf32>
    %33 = arith.mulf %32, %29 : vector<16x256xf32>
    %34 = arith.mulf %33, %29 : vector<16x256xf32>
    %35 = arith.mulf %34, %29 : vector<16x256xf32>
    %36 = arith.addf %29, %35 : vector<16x256xf32>
    %cst_17 = arith.constant 0.797884583 : f32
    %37 = vector.broadcast %cst_17 : f32 to vector<16x256xf32>
    %38 = arith.mulf %37, %36 : vector<16x256xf32>
    %39 = math.tanh %38 : vector<16x256xf32>
    %cst_18 = arith.constant 1.000000e+00 : f32
    %40 = vector.broadcast %cst_18 : f32 to vector<16x256xf32>
    %41 = arith.addf %40, %39 : vector<16x256xf32>
    %42 = arith.mulf %31, %41 : vector<16x256xf32>
    %43 = arith.truncf %42 : vector<16x256xf32> to vector<16x256xbf16>
    %c0_19 = arith.constant 0 : index
    %c0_20 = arith.constant 0 : index
    %44 = vector.load %arg7[%c0_19, %c0_20] : memref<256x128xbf16, #tpu.memory_space<vmem>>, vector<256x128xbf16>
    %cst_21 = arith.constant dense<0.000000e+00> : vector<16x128xf32>
    %45 = tpu.matmul %43, %44, %cst_21 {dimension_numbers = #tpu.dot_dimension_numbers<[1], [0], [0], [1], [0, 0, 1, 1], [], []>} : vector<16x256xbf16>, vector<256x128xbf16>, vector<16x128xf32> -> vector<16x128xf32>
    %c0_22 = arith.constant 0 : index
    %c0_23 = arith.constant 0 : index
    %46 = vector.load %arg8[%c0_22, %c0_23] : memref<1x128xf32, #tpu.memory_space<vmem>>, vector<1x128xf32>
    %47 = vector.broadcast %46 : vector<1x128xf32> to vector<16x128xf32>
    %48 = arith.addf %45, %47 : vector<16x128xf32>
    %cst_24 = arith.constant 5.000000e-01 : f32
    %49 = vector.broadcast %cst_24 : f32 to vector<16x128xf32>
    %50 = arith.mulf %49, %48 : vector<16x128xf32>
    %51 = arith.addf %1, %50 : vector<16x128xf32>
    %c0_25 = arith.constant 0 : index
    %c0_26 = arith.constant 0 : index
    %52 = vector.load %arg9[%c0_25, %c0_26] : memref<1x128xf32, #tpu.memory_space<vmem>>, vector<1x128xf32>
    %c0_27 = arith.constant 0 : index
    %c0_28 = arith.constant 0 : index
    %53 = vector.load %arg10[%c0_27, %c0_28] : memref<1x128xf32, #tpu.memory_space<vmem>>, vector<1x128xf32>
    %cst_29 = arith.constant dense<0.000000e+00> : vector<16xf32>
    %54 = vector.multi_reduction <add>, %51, %cst_29 [1] : vector<16x128xf32> to vector<16xf32>
    %55 = vector.shape_cast %54 : vector<16xf32> to vector<16x1xf32>
    %cst_30 = arith.constant 1.280000e+02 : f32
    %56 = vector.broadcast %cst_30 : f32 to vector<16x1xf32>
    %57 = arith.divf %55, %56 : vector<16x1xf32>
    %58 = vector.broadcast %57 : vector<16x1xf32> to vector<16x128xf32>
    %59 = arith.subf %51, %58 : vector<16x128xf32>
    %60 = arith.mulf %59, %59 : vector<16x128xf32>
    %cst_31 = arith.constant dense<0.000000e+00> : vector<16xf32>
    %61 = vector.multi_reduction <add>, %60, %cst_31 [1] : vector<16x128xf32> to vector<16xf32>
    %62 = vector.shape_cast %61 : vector<16xf32> to vector<16x1xf32>
    %cst_32 = arith.constant 1.280000e+02 : f32
    %63 = vector.broadcast %cst_32 : f32 to vector<16x1xf32>
    %64 = arith.divf %62, %63 : vector<16x1xf32>
    %cst_33 = arith.constant 9.99999974E-6 : f32
    %65 = vector.broadcast %cst_33 : f32 to vector<16x1xf32>
    %66 = arith.addf %64, %65 : vector<16x1xf32>
    %67 = math.rsqrt %66 : vector<16x1xf32>
    %68 = vector.broadcast %67 : vector<16x1xf32> to vector<16x128xf32>
    %69 = arith.mulf %59, %68 : vector<16x128xf32>
    %70 = vector.broadcast %52 : vector<1x128xf32> to vector<16x128xf32>
    %71 = arith.mulf %69, %70 : vector<16x128xf32>
    %72 = vector.broadcast %53 : vector<1x128xf32> to vector<16x128xf32>
    %73 = arith.addf %71, %72 : vector<16x128xf32>
    %c0_34 = arith.constant 0 : index
    %c0_35 = arith.constant 0 : index
    %74 = vector.load %arg2[%c0_34, %c0_35] : memref<16x128xf32, #tpu.memory_space<vmem>>, vector<16x128xf32>
    %75 = arith.addf %73, %74 : vector<16x128xf32>
    %76 = arith.truncf %75 : vector<16x128xf32> to vector<16x128xbf16>
    %c0_36 = arith.constant 0 : index
    %c0_37 = arith.constant 0 : index
    %77 = vector.load %arg11[%c0_36, %c0_37] : memref<128x384xbf16, #tpu.memory_space<vmem>>, vector<128x384xbf16>
    %cst_38 = arith.constant dense<0.000000e+00> : vector<16x384xf32>
    %78 = tpu.matmul %76, %77, %cst_38 {dimension_numbers = #tpu.dot_dimension_numbers<[1], [0], [0], [1], [0, 0, 1, 1], [], []>} : vector<16x128xbf16>, vector<128x384xbf16>, vector<16x384xf32> -> vector<16x384xf32>
    %c0_39 = arith.constant 0 : index
    %c0_40 = arith.constant 0 : index
    %79 = vector.load %arg12[%c0_39, %c0_40] : memref<1x384xf32, #tpu.memory_space<vmem>>, vector<1x384xf32>
    %80 = vector.broadcast %79 : vector<1x384xf32> to vector<16x384xf32>
    %81 = arith.addf %78, %80 : vector<16x384xf32>
    %82 = vector.extract_strided_slice %81 {offsets = [0, 0], sizes = [16, 128], strides = [1, 1]} : vector<16x384xf32> to vector<16x128xf32>
    %cst_41 = arith.constant 0.176776692 : f32
    %83 = vector.broadcast %cst_41 : f32 to vector<16x128xf32>
    %84 = arith.mulf %82, %83 : vector<16x128xf32>
    %85 = arith.truncf %84 : vector<16x128xf32> to vector<16x128xbf16>
    %86 = vector.extract_strided_slice %81 {offsets = [0, 128], sizes = [16, 128], strides = [1, 1]} : vector<16x384xf32> to vector<16x128xf32>
    %87 = arith.truncf %86 : vector<16x128xf32> to vector<16x128xbf16>
    %88 = vector.extract_strided_slice %81 {offsets = [0, 256], sizes = [16, 128], strides = [1, 1]} : vector<16x384xf32> to vector<16x128xf32>
    %89 = arith.truncf %88 : vector<16x128xf32> to vector<16x128xbf16>
    %90 = vector.extract_strided_slice %85 {offsets = [0, 0], sizes = [16, 32], strides = [1, 1]} : vector<16x128xbf16> to vector<16x32xbf16>
    %91 = vector.extract_strided_slice %87 {offsets = [0, 0], sizes = [16, 32], strides = [1, 1]} : vector<16x128xbf16> to vector<16x32xbf16>
    %cst_42 = arith.constant dense<0.000000e+00> : vector<16x16xf32>
    %92 = tpu.matmul %90, %91, %cst_42 {dimension_numbers = #tpu.dot_dimension_numbers<[1], [1], [0], [0], [0, 0, 1, 0], [], []>} : vector<16x32xbf16>, vector<16x32xbf16>, vector<16x16xf32> -> vector<16x16xf32>
    %cst_43 = arith.constant dense<0xFF800000> : vector<16xf32>
    %93 = vector.multi_reduction <maximumf>, %92, %cst_43 [1] : vector<16x16xf32> to vector<16xf32>
    %94 = vector.shape_cast %93 : vector<16xf32> to vector<16x1xf32>
    %95 = vector.broadcast %94 : vector<16x1xf32> to vector<16x16xf32>
    %96 = arith.subf %92, %95 : vector<16x16xf32>
    %97 = math.exp %96 : vector<16x16xf32>
    %cst_44 = arith.constant dense<0.000000e+00> : vector<16xf32>
    %98 = vector.multi_reduction <add>, %97, %cst_44 [1] : vector<16x16xf32> to vector<16xf32>
    %99 = vector.shape_cast %98 : vector<16xf32> to vector<16x1xf32>
    %100 = tpu.reciprocal %99 {approx = true} : vector<16x1xf32> -> vector<16x1xf32>
    %101 = vector.broadcast %100 : vector<16x1xf32> to vector<16x16xf32>
    %102 = arith.mulf %97, %101 : vector<16x16xf32>
    %103 = arith.truncf %102 : vector<16x16xf32> to vector<16x16xbf16>
    %104 = vector.extract_strided_slice %89 {offsets = [0, 0], sizes = [16, 32], strides = [1, 1]} : vector<16x128xbf16> to vector<16x32xbf16>
    %cst_45 = arith.constant dense<0.000000e+00> : vector<16x32xf32>
    %105 = tpu.matmul %103, %104, %cst_45 {dimension_numbers = #tpu.dot_dimension_numbers<[1], [0], [0], [1], [0, 0, 1, 1], [], []>} : vector<16x16xbf16>, vector<16x32xbf16>, vector<16x32xf32> -> vector<16x32xf32>
    %106 = vector.extract_strided_slice %85 {offsets = [0, 32], sizes = [16, 32], strides = [1, 1]} : vector<16x128xbf16> to vector<16x32xbf16>
    %107 = vector.extract_strided_slice %87 {offsets = [0, 32], sizes = [16, 32], strides = [1, 1]} : vector<16x128xbf16> to vector<16x32xbf16>
    %cst_46 = arith.constant dense<0.000000e+00> : vector<16x16xf32>
    %108 = tpu.matmul %106, %107, %cst_46 {dimension_numbers = #tpu.dot_dimension_numbers<[1], [1], [0], [0], [0, 0, 1, 0], [], []>} : vector<16x32xbf16>, vector<16x32xbf16>, vector<16x16xf32> -> vector<16x16xf32>
    %cst_47 = arith.constant dense<0xFF800000> : vector<16xf32>
    %109 = vector.multi_reduction <maximumf>, %108, %cst_47 [1] : vector<16x16xf32> to vector<16xf32>
    %110 = vector.shape_cast %109 : vector<16xf32> to vector<16x1xf32>
    %111 = vector.broadcast %110 : vector<16x1xf32> to vector<16x16xf32>
    %112 = arith.subf %108, %111 : vector<16x16xf32>
    %113 = math.exp %112 : vector<16x16xf32>
    %cst_48 = arith.constant dense<0.000000e+00> : vector<16xf32>
    %114 = vector.multi_reduction <add>, %113, %cst_48 [1] : vector<16x16xf32> to vector<16xf32>
    %115 = vector.shape_cast %114 : vector<16xf32> to vector<16x1xf32>
    %116 = tpu.reciprocal %115 {approx = true} : vector<16x1xf32> -> vector<16x1xf32>
    %117 = vector.broadcast %116 : vector<16x1xf32> to vector<16x16xf32>
    %118 = arith.mulf %113, %117 : vector<16x16xf32>
    %119 = arith.truncf %118 : vector<16x16xf32> to vector<16x16xbf16>
    %120 = vector.extract_strided_slice %89 {offsets = [0, 32], sizes = [16, 32], strides = [1, 1]} : vector<16x128xbf16> to vector<16x32xbf16>
    %cst_49 = arith.constant dense<0.000000e+00> : vector<16x32xf32>
    %121 = tpu.matmul %119, %120, %cst_49 {dimension_numbers = #tpu.dot_dimension_numbers<[1], [0], [0], [1], [0, 0, 1, 1], [], []>} : vector<16x16xbf16>, vector<16x32xbf16>, vector<16x32xf32> -> vector<16x32xf32>
    %122 = vector.extract_strided_slice %85 {offsets = [0, 64], sizes = [16, 32], strides = [1, 1]} : vector<16x128xbf16> to vector<16x32xbf16>
    %123 = vector.extract_strided_slice %87 {offsets = [0, 64], sizes = [16, 32], strides = [1, 1]} : vector<16x128xbf16> to vector<16x32xbf16>
    %cst_50 = arith.constant dense<0.000000e+00> : vector<16x16xf32>
    %124 = tpu.matmul %122, %123, %cst_50 {dimension_numbers = #tpu.dot_dimension_numbers<[1], [1], [0], [0], [0, 0, 1, 0], [], []>} : vector<16x32xbf16>, vector<16x32xbf16>, vector<16x16xf32> -> vector<16x16xf32>
    %cst_51 = arith.constant dense<0xFF800000> : vector<16xf32>
    %125 = vector.multi_reduction <maximumf>, %124, %cst_51 [1] : vector<16x16xf32> to vector<16xf32>
    %126 = vector.shape_cast %125 : vector<16xf32> to vector<16x1xf32>
    %127 = vector.broadcast %126 : vector<16x1xf32> to vector<16x16xf32>
    %128 = arith.subf %124, %127 : vector<16x16xf32>
    %129 = math.exp %128 : vector<16x16xf32>
    %cst_52 = arith.constant dense<0.000000e+00> : vector<16xf32>
    %130 = vector.multi_reduction <add>, %129, %cst_52 [1] : vector<16x16xf32> to vector<16xf32>
    %131 = vector.shape_cast %130 : vector<16xf32> to vector<16x1xf32>
    %132 = tpu.reciprocal %131 {approx = true} : vector<16x1xf32> -> vector<16x1xf32>
    %133 = vector.broadcast %132 : vector<16x1xf32> to vector<16x16xf32>
    %134 = arith.mulf %129, %133 : vector<16x16xf32>
    %135 = arith.truncf %134 : vector<16x16xf32> to vector<16x16xbf16>
    %136 = vector.extract_strided_slice %89 {offsets = [0, 64], sizes = [16, 32], strides = [1, 1]} : vector<16x128xbf16> to vector<16x32xbf16>
    %cst_53 = arith.constant dense<0.000000e+00> : vector<16x32xf32>
    %137 = tpu.matmul %135, %136, %cst_53 {dimension_numbers = #tpu.dot_dimension_numbers<[1], [0], [0], [1], [0, 0, 1, 1], [], []>} : vector<16x16xbf16>, vector<16x32xbf16>, vector<16x32xf32> -> vector<16x32xf32>
    %138 = vector.extract_strided_slice %85 {offsets = [0, 96], sizes = [16, 32], strides = [1, 1]} : vector<16x128xbf16> to vector<16x32xbf16>
    %139 = vector.extract_strided_slice %87 {offsets = [0, 96], sizes = [16, 32], strides = [1, 1]} : vector<16x128xbf16> to vector<16x32xbf16>
    %cst_54 = arith.constant dense<0.000000e+00> : vector<16x16xf32>
    %140 = tpu.matmul %138, %139, %cst_54 {dimension_numbers = #tpu.dot_dimension_numbers<[1], [1], [0], [0], [0, 0, 1, 0], [], []>} : vector<16x32xbf16>, vector<16x32xbf16>, vector<16x16xf32> -> vector<16x16xf32>
    %cst_55 = arith.constant dense<0xFF800000> : vector<16xf32>
    %141 = vector.multi_reduction <maximumf>, %140, %cst_55 [1] : vector<16x16xf32> to vector<16xf32>
    %142 = vector.shape_cast %141 : vector<16xf32> to vector<16x1xf32>
    %143 = vector.broadcast %142 : vector<16x1xf32> to vector<16x16xf32>
    %144 = arith.subf %140, %143 : vector<16x16xf32>
    %145 = math.exp %144 : vector<16x16xf32>
    %cst_56 = arith.constant dense<0.000000e+00> : vector<16xf32>
    %146 = vector.multi_reduction <add>, %145, %cst_56 [1] : vector<16x16xf32> to vector<16xf32>
    %147 = vector.shape_cast %146 : vector<16xf32> to vector<16x1xf32>
    %148 = tpu.reciprocal %147 {approx = true} : vector<16x1xf32> -> vector<16x1xf32>
    %149 = vector.broadcast %148 : vector<16x1xf32> to vector<16x16xf32>
    %150 = arith.mulf %145, %149 : vector<16x16xf32>
    %151 = arith.truncf %150 : vector<16x16xf32> to vector<16x16xbf16>
    %152 = vector.extract_strided_slice %89 {offsets = [0, 96], sizes = [16, 32], strides = [1, 1]} : vector<16x128xbf16> to vector<16x32xbf16>
    %cst_57 = arith.constant dense<0.000000e+00> : vector<16x32xf32>
    %153 = tpu.matmul %151, %152, %cst_57 {dimension_numbers = #tpu.dot_dimension_numbers<[1], [0], [0], [1], [0, 0, 1, 1], [], []>} : vector<16x16xbf16>, vector<16x32xbf16>, vector<16x32xf32> -> vector<16x32xf32>
    %154 = tpu.concatenate %105, %121, %137, %153 in 1 : vector<16x32xf32>, vector<16x32xf32>, vector<16x32xf32>, vector<16x32xf32> -> vector<16x128xf32>
    %155 = arith.truncf %154 : vector<16x128xf32> to vector<16x128xbf16>
    %c0_58 = arith.constant 0 : index
    %c0_59 = arith.constant 0 : index
    %156 = vector.load %arg13[%c0_58, %c0_59] : memref<128x128xbf16, #tpu.memory_space<vmem>>, vector<128x128xbf16>
    %cst_60 = arith.constant dense<0.000000e+00> : vector<16x128xf32>
    %157 = tpu.matmul %155, %156, %cst_60 {dimension_numbers = #tpu.dot_dimension_numbers<[1], [0], [0], [1], [0, 0, 1, 1], [], []>} : vector<16x128xbf16>, vector<128x128xbf16>, vector<16x128xf32> -> vector<16x128xf32>
    %c0_61 = arith.constant 0 : index
    %c0_62 = arith.constant 0 : index
    %158 = vector.load %arg14[%c0_61, %c0_62] : memref<1x128xf32, #tpu.memory_space<vmem>>, vector<1x128xf32>
    %159 = vector.broadcast %158 : vector<1x128xf32> to vector<16x128xf32>
    %160 = arith.addf %157, %159 : vector<16x128xf32>
    %161 = arith.addf %51, %160 : vector<16x128xf32>
    %c0_63 = arith.constant 0 : index
    %c0_64 = arith.constant 0 : index
    %c0_65 = arith.constant 0 : index
    %162 = vector.load %arg15[%c0_63, %c0_64, %c0_65] : memref<1x16x128xf32, #tpu.memory_space<vmem>>, vector<1x16x128xf32>
    %163 = vector.shape_cast %162 : vector<1x16x128xf32> to vector<16x128xf32>
    %164 = vector.shape_cast %161 : vector<16x128xf32> to vector<1x16x128xf32>
    tpu.vector_store %arg15[%c0_63, %c0_64, %c0_65], %164 {strides = array<i32>} : memref<1x16x128xf32, #tpu.memory_space<vmem>>, vector<1x16x128xf32>,
    return
  }
  func.func @transform_0(%arg0: i32) -> (i32, i32, i32) {
    %c0_i32 = arith.constant 0 : i32
    %c0_i32_0 = arith.constant 0 : i32
    %c0_i32_1 = arith.constant 0 : i32
    return %arg0, %c0_i32, %c0_i32_0 : i32, i32, i32
  }
  func.func @transform_1(%arg0: i32) -> (i32, i32) {
    %c0_i32 = arith.constant 0 : i32
    %c0_i32_0 = arith.constant 0 : i32
    %c0_i32_1 = arith.constant 0 : i32
    return %c0_i32, %c0_i32_0 : i32, i32
  }
  func.func @transform_2(%arg0: i32) -> (i32, i32) {
    %c0_i32 = arith.constant 0 : i32
    %c0_i32_0 = arith.constant 0 : i32
    %c0_i32_1 = arith.constant 0 : i32
    return %c0_i32, %c0_i32_0 : i32, i32
  }
  func.func @transform_3(%arg0: i32) -> (i32, i32) {
    %c0_i32 = arith.constant 0 : i32
    %c0_i32_0 = arith.constant 0 : i32
    %c0_i32_1 = arith.constant 0 : i32
    return %c0_i32, %c0_i32_0 : i32, i32
  }
  func.func @transform_4(%arg0: i32) -> (i32, i32) {
    %c0_i32 = arith.constant 0 : i32
    %c0_i32_0 = arith.constant 0 : i32
    %c0_i32_1 = arith.constant 0 : i32
    return %c0_i32, %c0_i32_0 : i32, i32
  }
  func.func @transform_5(%arg0: i32) -> (i32, i32) {
    %c0_i32 = arith.constant 0 : i32
    %c0_i32_0 = arith.constant 0 : i32
    %c0_i32_1 = arith.constant 0 : i32
    return %c0_i32, %c0_i32_0 : i32, i32
  }
  func.func @transform_6(%arg0: i32) -> (i32, i32) {
    %c0_i32 = arith.constant 0 : i32
    %c0_i32_0 = arith.constant 0 : i32
    %c0_i32_1 = arith.constant 0 : i32
    return %c0_i32, %c0_i32_0 : i32, i32
  }
  func.func @transform_7(%arg0: i32) -> (i32, i32) {
    %c0_i32 = arith.constant 0 : i32
    %c0_i32_0 = arith.constant 0 : i32
    %c0_i32_1 = arith.constant 0 : i32
    return %c0_i32, %c0_i32_0 : i32, i32
  }
  func.func @transform_8(%arg0: i32) -> (i32, i32) {
    %c0_i32 = arith.constant 0 : i32
    %c0_i32_0 = arith.constant 0 : i32
    %c0_i32_1 = arith.constant 0 : i32
    return %c0_i32, %c0_i32_0 : i32, i32
  }
  func.func @transform_9(%arg0: i32) -> (i32, i32) {
    %c0_i32 = arith.constant 0 : i32
    %c0_i32_0 = arith.constant 0 : i32
    %c0_i32_1 = arith.constant 0 : i32
    return %c0_i32, %c0_i32_0 : i32, i32
  }
  func.func @transform_10(%arg0: i32) -> (i32, i32) {
    %c0_i32 = arith.constant 0 : i32
    %c0_i32_0 = arith.constant 0 : i32
    %c0_i32_1 = arith.constant 0 : i32
    return %c0_i32, %c0_i32_0 : i32, i32
  }
  func.func @transform_11(%arg0: i32) -> (i32, i32) {
    %c0_i32 = arith.constant 0 : i32
    %c0_i32_0 = arith.constant 0 : i32
    %c0_i32_1 = arith.constant 0 : i32
    return %c0_i32, %c0_i32_0 : i32, i32
  }
  func.func @transform_12(%arg0: i32) -> (i32, i32) {
    %c0_i32 = arith.constant 0 : i32
    %c0_i32_0 = arith.constant 0 : i32
    %c0_i32_1 = arith.constant 0 : i32
    return %c0_i32, %c0_i32_0 : i32, i32
  }
  func.func @transform_13(%arg0: i32) -> (i32, i32) {
    %c0_i32 = arith.constant 0 : i32
    %c0_i32_0 = arith.constant 0 : i32
    %c0_i32_1 = arith.constant 0 : i32
    return %c0_i32, %c0_i32_0 : i32, i32
  }
  func.func @transform_14(%arg0: i32) -> (i32, i32, i32) {
    %c0_i32 = arith.constant 0 : i32
    %c0_i32_0 = arith.constant 0 : i32
    %c0_i32_1 = arith.constant 0 : i32
    return %arg0, %c0_i32, %c0_i32_0 : i32, i32, i32
  }
}

module attributes {stable_mosaic.version = 11 : i64} {
  func.func @_conv_ff_ln_kernel(%arg0: i32, %arg1: memref<16x128xf32, #tpu.memory_space<vmem>>, %arg2: memref<1x128xf32, #tpu.memory_space<vmem>>, %arg3: memref<1x128xf32, #tpu.memory_space<vmem>>, %arg4: memref<128x256xbf16, #tpu.memory_space<vmem>>, %arg5: memref<1x256xf32, #tpu.memory_space<vmem>>, %arg6: memref<1x256xf32, #tpu.memory_space<vmem>>, %arg7: memref<1x256xf32, #tpu.memory_space<vmem>>, %arg8: memref<256x128xbf16, #tpu.memory_space<vmem>>, %arg9: memref<1x128xf32, #tpu.memory_space<vmem>>, %arg10: memref<1x128xf32, #tpu.memory_space<vmem>>, %arg11: memref<1x128xf32, #tpu.memory_space<vmem>>, %arg12: memref<128x256xbf16, #tpu.memory_space<vmem>>, %arg13: memref<1x256xf32, #tpu.memory_space<vmem>>, %arg14: memref<256x128xbf16, #tpu.memory_space<vmem>>, %arg15: memref<1x128xf32, #tpu.memory_space<vmem>>, %arg16: memref<1x128xf32, #tpu.memory_space<vmem>>, %arg17: memref<1x128xf32, #tpu.memory_space<vmem>>, %arg18: memref<16x128xf32, #tpu.memory_space<vmem>>) attributes {dimension_semantics = [#tpu.dimension_semantics<parallel>], iteration_bounds = array<i64: 2>, scalar_prefetch = 0 : i64, scratch_operands = 0 : i64, tpu.core_type = #tpu.core_type<tc>, window_params = [{transform_indices = @transform_0, window_bounds = array<i64: 16, 128>}, {pipeline_mode = #tpu.pipeline_mode<synchronous>, transform_indices = @transform_1, window_bounds = array<i64: 1, 128>}, {pipeline_mode = #tpu.pipeline_mode<synchronous>, transform_indices = @transform_2, window_bounds = array<i64: 1, 128>}, {pipeline_mode = #tpu.pipeline_mode<synchronous>, transform_indices = @transform_3, window_bounds = array<i64: 128, 256>}, {pipeline_mode = #tpu.pipeline_mode<synchronous>, transform_indices = @transform_4, window_bounds = array<i64: 1, 256>}, {pipeline_mode = #tpu.pipeline_mode<synchronous>, transform_indices = @transform_5, window_bounds = array<i64: 1, 256>}, {pipeline_mode = #tpu.pipeline_mode<synchronous>, transform_indices = @transform_6, window_bounds = array<i64: 1, 256>}, {pipeline_mode = #tpu.pipeline_mode<synchronous>, transform_indices = @transform_7, window_bounds = array<i64: 256, 128>}, {pipeline_mode = #tpu.pipeline_mode<synchronous>, transform_indices = @transform_8, window_bounds = array<i64: 1, 128>}, {pipeline_mode = #tpu.pipeline_mode<synchronous>, transform_indices = @transform_9, window_bounds = array<i64: 1, 128>}, {pipeline_mode = #tpu.pipeline_mode<synchronous>, transform_indices = @transform_10, window_bounds = array<i64: 1, 128>}, {pipeline_mode = #tpu.pipeline_mode<synchronous>, transform_indices = @transform_11, window_bounds = array<i64: 128, 256>}, {pipeline_mode = #tpu.pipeline_mode<synchronous>, transform_indices = @transform_12, window_bounds = array<i64: 1, 256>}, {pipeline_mode = #tpu.pipeline_mode<synchronous>, transform_indices = @transform_13, window_bounds = array<i64: 256, 128>}, {pipeline_mode = #tpu.pipeline_mode<synchronous>, transform_indices = @transform_14, window_bounds = array<i64: 1, 128>}, {pipeline_mode = #tpu.pipeline_mode<synchronous>, transform_indices = @transform_15, window_bounds = array<i64: 1, 128>}, {pipeline_mode = #tpu.pipeline_mode<synchronous>, transform_indices = @transform_16, window_bounds = array<i64: 1, 128>}, {transform_indices = @transform_17, window_bounds = array<i64: 16, 128>}]} {
    %c0 = arith.constant 0 : index
    %c0_0 = arith.constant 0 : index
    %0 = vector.load %arg1[%c0, %c0_0] : memref<16x128xf32, #tpu.memory_space<vmem>>, vector<16x128xf32>
    %c0_1 = arith.constant 0 : index
    %c0_2 = arith.constant 0 : index
    %1 = vector.load %arg2[%c0_1, %c0_2] : memref<1x128xf32, #tpu.memory_space<vmem>>, vector<1x128xf32>
    %c0_3 = arith.constant 0 : index
    %c0_4 = arith.constant 0 : index
    %2 = vector.load %arg3[%c0_3, %c0_4] : memref<1x128xf32, #tpu.memory_space<vmem>>, vector<1x128xf32>
    %cst = arith.constant dense<0.000000e+00> : vector<16xf32>
    %3 = vector.multi_reduction <add>, %0, %cst [1] : vector<16x128xf32> to vector<16xf32>
    %4 = vector.shape_cast %3 : vector<16xf32> to vector<16x1xf32>
    %cst_5 = arith.constant 1.280000e+02 : f32
    %5 = vector.broadcast %cst_5 : f32 to vector<16x1xf32>
    %6 = arith.divf %4, %5 : vector<16x1xf32>
    %7 = vector.broadcast %6 : vector<16x1xf32> to vector<16x128xf32>
    %8 = arith.subf %0, %7 : vector<16x128xf32>
    %9 = arith.mulf %8, %8 : vector<16x128xf32>
    %cst_6 = arith.constant dense<0.000000e+00> : vector<16xf32>
    %10 = vector.multi_reduction <add>, %9, %cst_6 [1] : vector<16x128xf32> to vector<16xf32>
    %11 = vector.shape_cast %10 : vector<16xf32> to vector<16x1xf32>
    %cst_7 = arith.constant 1.280000e+02 : f32
    %12 = vector.broadcast %cst_7 : f32 to vector<16x1xf32>
    %13 = arith.divf %11, %12 : vector<16x1xf32>
    %cst_8 = arith.constant 9.99999974E-6 : f32
    %14 = vector.broadcast %cst_8 : f32 to vector<16x1xf32>
    %15 = arith.addf %13, %14 : vector<16x1xf32>
    %16 = math.rsqrt %15 : vector<16x1xf32>
    %17 = vector.broadcast %16 : vector<16x1xf32> to vector<16x128xf32>
    %18 = arith.mulf %8, %17 : vector<16x128xf32>
    %19 = vector.broadcast %1 : vector<1x128xf32> to vector<16x128xf32>
    %20 = arith.mulf %18, %19 : vector<16x128xf32>
    %21 = vector.broadcast %2 : vector<1x128xf32> to vector<16x128xf32>
    %22 = arith.addf %20, %21 : vector<16x128xf32>
    %23 = arith.truncf %22 : vector<16x128xf32> to vector<16x128xbf16>
    %c0_9 = arith.constant 0 : index
    %c0_10 = arith.constant 0 : index
    %24 = vector.load %arg4[%c0_9, %c0_10] : memref<128x256xbf16, #tpu.memory_space<vmem>>, vector<128x256xbf16>
    %cst_11 = arith.constant dense<0.000000e+00> : vector<16x256xf32>
    %25 = tpu.matmul %23, %24, %cst_11 {dimension_numbers = #tpu.dot_dimension_numbers<[1], [0], [0], [1], [0, 0, 1, 1], [], []>} : vector<16x128xbf16>, vector<128x256xbf16>, vector<16x256xf32> -> vector<16x256xf32>
    %c0_12 = arith.constant 0 : index
    %c0_13 = arith.constant 0 : index
    %26 = vector.load %arg5[%c0_12, %c0_13] : memref<1x256xf32, #tpu.memory_space<vmem>>, vector<1x256xf32>
    %27 = vector.broadcast %26 : vector<1x256xf32> to vector<16x256xf32>
    %28 = arith.addf %25, %27 : vector<16x256xf32>
    %cst_14 = arith.constant 5.000000e-01 : f32
    %29 = vector.broadcast %cst_14 : f32 to vector<16x256xf32>
    %30 = arith.mulf %29, %28 : vector<16x256xf32>
    %cst_15 = arith.constant 4.471500e-02 : f32
    %31 = vector.broadcast %cst_15 : f32 to vector<16x256xf32>
    %32 = arith.mulf %31, %28 : vector<16x256xf32>
    %33 = arith.mulf %32, %28 : vector<16x256xf32>
    %34 = arith.mulf %33, %28 : vector<16x256xf32>
    %35 = arith.addf %28, %34 : vector<16x256xf32>
    %cst_16 = arith.constant 0.797884583 : f32
    %36 = vector.broadcast %cst_16 : f32 to vector<16x256xf32>
    %37 = arith.mulf %36, %35 : vector<16x256xf32>
    %38 = math.tanh %37 : vector<16x256xf32>
    %cst_17 = arith.constant 1.000000e+00 : f32
    %39 = vector.broadcast %cst_17 : f32 to vector<16x256xf32>
    %40 = arith.addf %39, %38 : vector<16x256xf32>
    %41 = arith.mulf %30, %40 : vector<16x256xf32>
    %c0_18 = arith.constant 0 : index
    %c0_19 = arith.constant 0 : index
    %42 = vector.load %arg6[%c0_18, %c0_19] : memref<1x256xf32, #tpu.memory_space<vmem>>, vector<1x256xf32>
    %43 = vector.broadcast %42 : vector<1x256xf32> to vector<16x256xf32>
    %44 = arith.mulf %41, %43 : vector<16x256xf32>
    %c0_20 = arith.constant 0 : index
    %c0_21 = arith.constant 0 : index
    %45 = vector.load %arg7[%c0_20, %c0_21] : memref<1x256xf32, #tpu.memory_space<vmem>>, vector<1x256xf32>
    %46 = vector.broadcast %45 : vector<1x256xf32> to vector<16x256xf32>
    %47 = arith.addf %44, %46 : vector<16x256xf32>
    %cst_22 = arith.constant 5.000000e-01 : f32
    %48 = vector.broadcast %cst_22 : f32 to vector<16x256xf32>
    %49 = arith.mulf %48, %47 : vector<16x256xf32>
    %cst_23 = arith.constant 4.471500e-02 : f32
    %50 = vector.broadcast %cst_23 : f32 to vector<16x256xf32>
    %51 = arith.mulf %50, %47 : vector<16x256xf32>
    %52 = arith.mulf %51, %47 : vector<16x256xf32>
    %53 = arith.mulf %52, %47 : vector<16x256xf32>
    %54 = arith.addf %47, %53 : vector<16x256xf32>
    %cst_24 = arith.constant 0.797884583 : f32
    %55 = vector.broadcast %cst_24 : f32 to vector<16x256xf32>
    %56 = arith.mulf %55, %54 : vector<16x256xf32>
    %57 = math.tanh %56 : vector<16x256xf32>
    %cst_25 = arith.constant 1.000000e+00 : f32
    %58 = vector.broadcast %cst_25 : f32 to vector<16x256xf32>
    %59 = arith.addf %58, %57 : vector<16x256xf32>
    %60 = arith.mulf %49, %59 : vector<16x256xf32>
    %61 = arith.truncf %60 : vector<16x256xf32> to vector<16x256xbf16>
    %c0_26 = arith.constant 0 : index
    %c0_27 = arith.constant 0 : index
    %62 = vector.load %arg8[%c0_26, %c0_27] : memref<256x128xbf16, #tpu.memory_space<vmem>>, vector<256x128xbf16>
    %cst_28 = arith.constant dense<0.000000e+00> : vector<16x128xf32>
    %63 = tpu.matmul %61, %62, %cst_28 {dimension_numbers = #tpu.dot_dimension_numbers<[1], [0], [0], [1], [0, 0, 1, 1], [], []>} : vector<16x256xbf16>, vector<256x128xbf16>, vector<16x128xf32> -> vector<16x128xf32>
    %64 = arith.addf %0, %63 : vector<16x128xf32>
    %c0_29 = arith.constant 0 : index
    %c0_30 = arith.constant 0 : index
    %65 = vector.load %arg9[%c0_29, %c0_30] : memref<1x128xf32, #tpu.memory_space<vmem>>, vector<1x128xf32>
    %66 = vector.broadcast %65 : vector<1x128xf32> to vector<16x128xf32>
    %67 = arith.addf %64, %66 : vector<16x128xf32>
    %c0_31 = arith.constant 0 : index
    %c0_32 = arith.constant 0 : index
    %68 = vector.load %arg10[%c0_31, %c0_32] : memref<1x128xf32, #tpu.memory_space<vmem>>, vector<1x128xf32>
    %c0_33 = arith.constant 0 : index
    %c0_34 = arith.constant 0 : index
    %69 = vector.load %arg11[%c0_33, %c0_34] : memref<1x128xf32, #tpu.memory_space<vmem>>, vector<1x128xf32>
    %cst_35 = arith.constant dense<0.000000e+00> : vector<16xf32>
    %70 = vector.multi_reduction <add>, %67, %cst_35 [1] : vector<16x128xf32> to vector<16xf32>
    %71 = vector.shape_cast %70 : vector<16xf32> to vector<16x1xf32>
    %cst_36 = arith.constant 1.280000e+02 : f32
    %72 = vector.broadcast %cst_36 : f32 to vector<16x1xf32>
    %73 = arith.divf %71, %72 : vector<16x1xf32>
    %74 = vector.broadcast %73 : vector<16x1xf32> to vector<16x128xf32>
    %75 = arith.subf %67, %74 : vector<16x128xf32>
    %76 = arith.mulf %75, %75 : vector<16x128xf32>
    %cst_37 = arith.constant dense<0.000000e+00> : vector<16xf32>
    %77 = vector.multi_reduction <add>, %76, %cst_37 [1] : vector<16x128xf32> to vector<16xf32>
    %78 = vector.shape_cast %77 : vector<16xf32> to vector<16x1xf32>
    %cst_38 = arith.constant 1.280000e+02 : f32
    %79 = vector.broadcast %cst_38 : f32 to vector<16x1xf32>
    %80 = arith.divf %78, %79 : vector<16x1xf32>
    %cst_39 = arith.constant 9.99999974E-6 : f32
    %81 = vector.broadcast %cst_39 : f32 to vector<16x1xf32>
    %82 = arith.addf %80, %81 : vector<16x1xf32>
    %83 = math.rsqrt %82 : vector<16x1xf32>
    %84 = vector.broadcast %83 : vector<16x1xf32> to vector<16x128xf32>
    %85 = arith.mulf %75, %84 : vector<16x128xf32>
    %86 = vector.broadcast %68 : vector<1x128xf32> to vector<16x128xf32>
    %87 = arith.mulf %85, %86 : vector<16x128xf32>
    %88 = vector.broadcast %69 : vector<1x128xf32> to vector<16x128xf32>
    %89 = arith.addf %87, %88 : vector<16x128xf32>
    %90 = arith.truncf %89 : vector<16x128xf32> to vector<16x128xbf16>
    %c0_40 = arith.constant 0 : index
    %c0_41 = arith.constant 0 : index
    %91 = vector.load %arg12[%c0_40, %c0_41] : memref<128x256xbf16, #tpu.memory_space<vmem>>, vector<128x256xbf16>
    %cst_42 = arith.constant dense<0.000000e+00> : vector<16x256xf32>
    %92 = tpu.matmul %90, %91, %cst_42 {dimension_numbers = #tpu.dot_dimension_numbers<[1], [0], [0], [1], [0, 0, 1, 1], [], []>} : vector<16x128xbf16>, vector<128x256xbf16>, vector<16x256xf32> -> vector<16x256xf32>
    %c0_43 = arith.constant 0 : index
    %c0_44 = arith.constant 0 : index
    %93 = vector.load %arg13[%c0_43, %c0_44] : memref<1x256xf32, #tpu.memory_space<vmem>>, vector<1x256xf32>
    %94 = vector.broadcast %93 : vector<1x256xf32> to vector<16x256xf32>
    %95 = arith.addf %92, %94 : vector<16x256xf32>
    %cst_45 = arith.constant 5.000000e-01 : f32
    %96 = vector.broadcast %cst_45 : f32 to vector<16x256xf32>
    %97 = arith.mulf %96, %95 : vector<16x256xf32>
    %cst_46 = arith.constant 4.471500e-02 : f32
    %98 = vector.broadcast %cst_46 : f32 to vector<16x256xf32>
    %99 = arith.mulf %98, %95 : vector<16x256xf32>
    %100 = arith.mulf %99, %95 : vector<16x256xf32>
    %101 = arith.mulf %100, %95 : vector<16x256xf32>
    %102 = arith.addf %95, %101 : vector<16x256xf32>
    %cst_47 = arith.constant 0.797884583 : f32
    %103 = vector.broadcast %cst_47 : f32 to vector<16x256xf32>
    %104 = arith.mulf %103, %102 : vector<16x256xf32>
    %105 = math.tanh %104 : vector<16x256xf32>
    %cst_48 = arith.constant 1.000000e+00 : f32
    %106 = vector.broadcast %cst_48 : f32 to vector<16x256xf32>
    %107 = arith.addf %106, %105 : vector<16x256xf32>
    %108 = arith.mulf %97, %107 : vector<16x256xf32>
    %109 = arith.truncf %108 : vector<16x256xf32> to vector<16x256xbf16>
    %c0_49 = arith.constant 0 : index
    %c0_50 = arith.constant 0 : index
    %110 = vector.load %arg14[%c0_49, %c0_50] : memref<256x128xbf16, #tpu.memory_space<vmem>>, vector<256x128xbf16>
    %cst_51 = arith.constant dense<0.000000e+00> : vector<16x128xf32>
    %111 = tpu.matmul %109, %110, %cst_51 {dimension_numbers = #tpu.dot_dimension_numbers<[1], [0], [0], [1], [0, 0, 1, 1], [], []>} : vector<16x256xbf16>, vector<256x128xbf16>, vector<16x128xf32> -> vector<16x128xf32>
    %c0_52 = arith.constant 0 : index
    %c0_53 = arith.constant 0 : index
    %112 = vector.load %arg15[%c0_52, %c0_53] : memref<1x128xf32, #tpu.memory_space<vmem>>, vector<1x128xf32>
    %113 = vector.broadcast %112 : vector<1x128xf32> to vector<16x128xf32>
    %114 = arith.addf %111, %113 : vector<16x128xf32>
    %cst_54 = arith.constant 5.000000e-01 : f32
    %115 = vector.broadcast %cst_54 : f32 to vector<16x128xf32>
    %116 = arith.mulf %115, %114 : vector<16x128xf32>
    %117 = arith.addf %67, %116 : vector<16x128xf32>
    %c0_55 = arith.constant 0 : index
    %c0_56 = arith.constant 0 : index
    %118 = vector.load %arg16[%c0_55, %c0_56] : memref<1x128xf32, #tpu.memory_space<vmem>>, vector<1x128xf32>
    %c0_57 = arith.constant 0 : index
    %c0_58 = arith.constant 0 : index
    %119 = vector.load %arg17[%c0_57, %c0_58] : memref<1x128xf32, #tpu.memory_space<vmem>>, vector<1x128xf32>
    %cst_59 = arith.constant dense<0.000000e+00> : vector<16xf32>
    %120 = vector.multi_reduction <add>, %117, %cst_59 [1] : vector<16x128xf32> to vector<16xf32>
    %121 = vector.shape_cast %120 : vector<16xf32> to vector<16x1xf32>
    %cst_60 = arith.constant 1.280000e+02 : f32
    %122 = vector.broadcast %cst_60 : f32 to vector<16x1xf32>
    %123 = arith.divf %121, %122 : vector<16x1xf32>
    %124 = vector.broadcast %123 : vector<16x1xf32> to vector<16x128xf32>
    %125 = arith.subf %117, %124 : vector<16x128xf32>
    %126 = arith.mulf %125, %125 : vector<16x128xf32>
    %cst_61 = arith.constant dense<0.000000e+00> : vector<16xf32>
    %127 = vector.multi_reduction <add>, %126, %cst_61 [1] : vector<16x128xf32> to vector<16xf32>
    %128 = vector.shape_cast %127 : vector<16xf32> to vector<16x1xf32>
    %cst_62 = arith.constant 1.280000e+02 : f32
    %129 = vector.broadcast %cst_62 : f32 to vector<16x1xf32>
    %130 = arith.divf %128, %129 : vector<16x1xf32>
    %cst_63 = arith.constant 9.99999974E-6 : f32
    %131 = vector.broadcast %cst_63 : f32 to vector<16x1xf32>
    %132 = arith.addf %130, %131 : vector<16x1xf32>
    %133 = math.rsqrt %132 : vector<16x1xf32>
    %134 = vector.broadcast %133 : vector<16x1xf32> to vector<16x128xf32>
    %135 = arith.mulf %125, %134 : vector<16x128xf32>
    %136 = vector.broadcast %118 : vector<1x128xf32> to vector<16x128xf32>
    %137 = arith.mulf %135, %136 : vector<16x128xf32>
    %138 = vector.broadcast %119 : vector<1x128xf32> to vector<16x128xf32>
    %139 = arith.addf %137, %138 : vector<16x128xf32>
    %c0_64 = arith.constant 0 : index
    %c0_65 = arith.constant 0 : index
    %140 = vector.load %arg18[%c0_64, %c0_65] : memref<16x128xf32, #tpu.memory_space<vmem>>, vector<16x128xf32>
    tpu.vector_store %arg18[%c0_64, %c0_65], %139 {strides = array<i32>} : memref<16x128xf32, #tpu.memory_space<vmem>>, vector<16x128xf32>,
    return
  }
  func.func @transform_0(%arg0: i32) -> (i32, i32) {
    %c0_i32 = arith.constant 0 : i32
    %c0_i32_0 = arith.constant 0 : i32
    return %arg0, %c0_i32 : i32, i32
  }
  func.func @transform_1(%arg0: i32) -> (i32, i32) {
    %c0_i32 = arith.constant 0 : i32
    %c0_i32_0 = arith.constant 0 : i32
    %c0_i32_1 = arith.constant 0 : i32
    return %c0_i32, %c0_i32_0 : i32, i32
  }
  func.func @transform_2(%arg0: i32) -> (i32, i32) {
    %c0_i32 = arith.constant 0 : i32
    %c0_i32_0 = arith.constant 0 : i32
    %c0_i32_1 = arith.constant 0 : i32
    return %c0_i32, %c0_i32_0 : i32, i32
  }
  func.func @transform_3(%arg0: i32) -> (i32, i32) {
    %c0_i32 = arith.constant 0 : i32
    %c0_i32_0 = arith.constant 0 : i32
    %c0_i32_1 = arith.constant 0 : i32
    return %c0_i32, %c0_i32_0 : i32, i32
  }
  func.func @transform_4(%arg0: i32) -> (i32, i32) {
    %c0_i32 = arith.constant 0 : i32
    %c0_i32_0 = arith.constant 0 : i32
    %c0_i32_1 = arith.constant 0 : i32
    return %c0_i32, %c0_i32_0 : i32, i32
  }
  func.func @transform_5(%arg0: i32) -> (i32, i32) {
    %c0_i32 = arith.constant 0 : i32
    %c0_i32_0 = arith.constant 0 : i32
    %c0_i32_1 = arith.constant 0 : i32
    return %c0_i32, %c0_i32_0 : i32, i32
  }
  func.func @transform_6(%arg0: i32) -> (i32, i32) {
    %c0_i32 = arith.constant 0 : i32
    %c0_i32_0 = arith.constant 0 : i32
    %c0_i32_1 = arith.constant 0 : i32
    return %c0_i32, %c0_i32_0 : i32, i32
  }
  func.func @transform_7(%arg0: i32) -> (i32, i32) {
    %c0_i32 = arith.constant 0 : i32
    %c0_i32_0 = arith.constant 0 : i32
    %c0_i32_1 = arith.constant 0 : i32
    return %c0_i32, %c0_i32_0 : i32, i32
  }
  func.func @transform_8(%arg0: i32) -> (i32, i32) {
    %c0_i32 = arith.constant 0 : i32
    %c0_i32_0 = arith.constant 0 : i32
    %c0_i32_1 = arith.constant 0 : i32
    return %c0_i32, %c0_i32_0 : i32, i32
  }
  func.func @transform_9(%arg0: i32) -> (i32, i32) {
    %c0_i32 = arith.constant 0 : i32
    %c0_i32_0 = arith.constant 0 : i32
    %c0_i32_1 = arith.constant 0 : i32
    return %c0_i32, %c0_i32_0 : i32, i32
  }
  func.func @transform_10(%arg0: i32) -> (i32, i32) {
    %c0_i32 = arith.constant 0 : i32
    %c0_i32_0 = arith.constant 0 : i32
    %c0_i32_1 = arith.constant 0 : i32
    return %c0_i32, %c0_i32_0 : i32, i32
  }
  func.func @transform_11(%arg0: i32) -> (i32, i32) {
    %c0_i32 = arith.constant 0 : i32
    %c0_i32_0 = arith.constant 0 : i32
    %c0_i32_1 = arith.constant 0 : i32
    return %c0_i32, %c0_i32_0 : i32, i32
  }
  func.func @transform_12(%arg0: i32) -> (i32, i32) {
    %c0_i32 = arith.constant 0 : i32
    %c0_i32_0 = arith.constant 0 : i32
    %c0_i32_1 = arith.constant 0 : i32
    return %c0_i32, %c0_i32_0 : i32, i32
  }
  func.func @transform_13(%arg0: i32) -> (i32, i32) {
    %c0_i32 = arith.constant 0 : i32
    %c0_i32_0 = arith.constant 0 : i32
    %c0_i32_1 = arith.constant 0 : i32
    return %c0_i32, %c0_i32_0 : i32, i32
  }
  func.func @transform_14(%arg0: i32) -> (i32, i32) {
    %c0_i32 = arith.constant 0 : i32
    %c0_i32_0 = arith.constant 0 : i32
    %c0_i32_1 = arith.constant 0 : i32
    return %c0_i32, %c0_i32_0 : i32, i32
  }
  func.func @transform_15(%arg0: i32) -> (i32, i32) {
    %c0_i32 = arith.constant 0 : i32
    %c0_i32_0 = arith.constant 0 : i32
    %c0_i32_1 = arith.constant 0 : i32
    return %c0_i32, %c0_i32_0 : i32, i32
  }
  func.func @transform_16(%arg0: i32) -> (i32, i32) {
    %c0_i32 = arith.constant 0 : i32
    %c0_i32_0 = arith.constant 0 : i32
    %c0_i32_1 = arith.constant 0 : i32
    return %c0_i32, %c0_i32_0 : i32, i32
  }
  func.func @transform_17(%arg0: i32) -> (i32, i32) {
    %c0_i32 = arith.constant 0 : i32
    %c0_i32_0 = arith.constant 0 : i32
    return %arg0, %c0_i32 : i32, i32
  }
}

</mosaic_0001>

<llo_original>
// kernel: contrastive_module.5
$region0: #{contrastive_module.5}
  #allocation0 [shape = 'u32[]', space=smem, size = 0x4, offset = 0x4, fixed_abs, tag = 'smem constant byte address 0x4 - core index']
  #allocation1 [shape = 'u32[144,128]{1,0:T(1,128)}', space=vmem, size = 0x12000, scoped, tag = 'internal scratch']
  %s0 = inlined_call_operand.hbm [shape: f32[32,128], index: 0, kind: input, shape index: {}]
  %s1 = inlined_call_operand.vmem [shape: bf16[128,128], index: 1, kind: input, shape index: {}]
  %s2 = inlined_call_operand.vmem [shape: f32[1,128], index: 2, kind: input, shape index: {}]
  %s3 = inlined_call_operand.vmem [shape: f32[32,128], index: 3, kind: output, shape index: {}]
  %s4 = sld [smem:[#allocation0]]
  $region49: #{contrastive_module.5} parent=0
    _
  %s6 = ssub.s32 1, %s4
  %s7 = scalar_select 0, %s6, %s4
  $region1: #{contrastive_module.5} parent=0
    #allocation2 [shape = 'u8[16384]{0}', space=vmem, size = 0x4000, scoped, tag = 'input window, operand 0']
    #allocation3 [shape = 's32[2]{0}', space=sflag, size = 0x8, scoped, tag = 'scoped memory for contrastive_module.5']
    %8 = vsyncpa [#allocation3], 0
    %s9 = scalar_lea.sflag [#allocation3], 1
    %10 = vsyncpa %s9, 0
    loop: start=0, step=1, limit=4
    $region2: #{contrastive_module.5} parent=1 // loop_pre_header
      _
    $region3: #{contrastive_module.5} parent=1 // loop_header
      %s12 = sphi 0, %s16
      %p13 = scmp.ge.s32.totalorder %s12, 4
      %s22 = sphi 0, %s24
      %s25 = sphi 0, %s22
      %s26 = sphi 0, %s25
      %s42 = sphi 0, %s26
      %s46 = sphi 0, %s46
      %s48 = sphi 0, %s46
      %s49 = sphi 0, %s48
      %s63 = sphi 0, %s49
      %s67 = sphi 0, %s67
      %s69 = sphi 0, %s67
      %s70 = sphi 0, %s69
      %s84 = sphi 0, %s70
      %s90 = sphi 0, %s92
      %s93 = sphi 0, %s90
      %s94 = sphi 0, %s93
      %s110 = sphi 0, %s94
    $region4: #{contrastive_module.5} parent=1 // loop_header_branch
      %15 = sbr.rel (%p13) target = $region8
    $region5: #{contrastive_module.5} parent=1 // loop_body
      %s17 = ssub.s32 %s12, 1
      %s18 = ssub.s32 %s12, 2
      %s19 = sadd.s32 %s12, 1
      %s20 = ssub.s32 %s12, %s19
      %p21 = scmp.eq.s32.totalorder %s20, 0
      %s23 = sadd.s32 %s22, 1
      %s24 = scalar_select %p21, %s22, %s23
      %p27 = pneg %p21
      %p28 = scmp.eq.s32.totalorder %s12, 1
      %p29 = por %p27, %p28
      %p30 = scmp.ne.s32.totalorder %s22, %s25
      %p31 = scmp.eq.s32.totalorder %s12, 0
      %p32 = por %p30, %p31
      %p33 = scmp.ne.s32.totalorder %s22, %s25
      %p34 = scmp.eq.s32.totalorder %s17, 1
      %p35 = por %p33, %p34
      %p36 = scmp.ne.s32.totalorder %s25, %s26
      %p37 = scmp.eq.s32.totalorder %s17, 0
      %p38 = por %p36, %p37
      %p39 = scmp.ne.s32.totalorder %s25, %s26
      %p40 = scmp.eq.s32.totalorder %s18, 1
      %p41 = por %p39, %p40
      %p43 = scmp.ne.s32.totalorder %s26, %s42
      %p44 = scmp.eq.s32.totalorder %s18, 0
      %p45 = por %p43, %p44
      %s47 = sadd.s32 %s46, 1
      %p50 = scmp.eq.s32.totalorder %s12, 1
      %p51 = scmp.ne.s32.totalorder %s46, %s48
      %p52 = scmp.eq.s32.totalorder %s12, 0
      %p53 = por %p51, %p52
      %p54 = scmp.ne.s32.totalorder %s46, %s48
      %p55 = scmp.eq.s32.totalorder %s17, 1
      %p56 = por %p54, %p55
      %p57 = scmp.ne.s32.totalorder %s48, %s49
      %p58 = scmp.eq.s32.totalorder %s17, 0
      %p59 = por %p57, %p58
      %p60 = scmp.ne.s32.totalorder %s48, %s49
      %p61 = scmp.eq.s32.totalorder %s18, 1
      %p62 = por %p60, %p61
      %p64 = scmp.ne.s32.totalorder %s49, %s63
      %p65 = scmp.eq.s32.totalorder %s18, 0
      %p66 = por %p64, %p65
      %s68 = sadd.s32 %s67, 1
      %p71 = scmp.eq.s32.totalorder %s12, 1
      %p72 = scmp.ne.s32.totalorder %s67, %s69
      %p73 = scmp.eq.s32.totalorder %s12, 0
      %p74 = por %p72, %p73
      %p75 = scmp.ne.s32.totalorder %s67, %s69
      %p76 = scmp.eq.s32.totalorder %s17, 1
      %p77 = por %p75, %p76
      %p78 = scmp.ne.s32.totalorder %s69, %s70
      %p79 = scmp.eq.s32.totalorder %s17, 0
      %p80 = por %p78, %p79
      %p81 = scmp.ne.s32.totalorder %s69, %s70
      %p82 = scmp.eq.s32.totalorder %s18, 1
      %p83 = por %p81, %p82
      %p85 = scmp.ne.s32.totalorder %s70, %s84
      %p86 = scmp.eq.s32.totalorder %s18, 0
      %p87 = por %p85, %p86
      %s88 = ssub.s32 %s12, %s19
      %p89 = scmp.eq.s32.totalorder %s88, 0
      %s91 = sadd.s32 %s90, 1
      %s92 = scalar_select %p89, %s90, %s91
      %p95 = pneg %p89
      %p96 = scmp.eq.s32.totalorder %s12, 1
      %p97 = por %p95, %p96
      %p98 = scmp.ne.s32.totalorder %s90, %s93
      %p99 = scmp.eq.s32.totalorder %s12, 0
      %p100 = por %p98, %p99
      %p101 = scmp.ne.s32.totalorder %s90, %s93
      %p102 = scmp.eq.s32.totalorder %s17, 1
      %p103 = por %p101, %p102
      %p104 = scmp.ne.s32.totalorder %s93, %s94
      %p105 = scmp.eq.s32.totalorder %s17, 0
      %p106 = por %p104, %p105
      %p107 = scmp.ne.s32.totalorder %s93, %s94
      %p108 = scmp.eq.s32.totalorder %s18, 1
      %p109 = por %p107, %p108
      %p111 = scmp.ne.s32.totalorder %s94, %s110
      %p112 = scmp.eq.s32.totalorder %s18, 0
      %p113 = por %p111, %p112
      %p114 = scmp.le.s32.totalorder 1, %s12
      %p115 = scmp.lt.s32.totalorder %s12, 3
      %p116 = pnand %p114, %p115
      %p117 = pneg %p116
      // Predicated region
      $region9: #{contrastive_module.5} parent=5 // pred_check
        _
      $region10: #{contrastive_module.5} parent=5 // pred_check_branch
        %119 = sbr.rel (%p116) target = $region12
      $region11: #{contrastive_module.5} parent=5 // pred_region
        %s120 = ssub.s32 %s12, 1
        // Predicated region
        $region13: #{contrastive_module.5} parent=11 // pred_check
          %p121 = pneg %p59
        $region14: #{contrastive_module.5} parent=11 // pred_check_branch
          %123 = sbr.rel (%p121) target = $region16
        $region15: #{contrastive_module.5} parent=11 // pred_region
          _
        $region16: #{contrastive_module.5} parent=11 // pred_fallthru
          _
        // Predicated region
        $region17: #{contrastive_module.5} parent=11 // pred_check
          %p124 = pneg %p80
        $region18: #{contrastive_module.5} parent=11 // pred_check_branch
          %126 = sbr.rel (%p124) target = $region20
        $region19: #{contrastive_module.5} parent=11 // pred_region
          _
        $region20: #{contrastive_module.5} parent=11 // pred_fallthru
          _
      $region12: #{contrastive_module.5} parent=5 // pred_fallthru
        _
      %p127 = scmp.lt.s32.totalorder %s12, 2
      // Predicated region
      $region21: #{contrastive_module.5} parent=5 // pred_check
        %p128 = pneg %p127
      $region22: #{contrastive_module.5} parent=5 // pred_check_branch
        %130 = sbr.rel (%p128) target = $region24
      $region23: #{contrastive_module.5} parent=5 // pred_region
        // Predicated region
        $region25: #{contrastive_module.5} parent=23 // pred_check
          %p131 = pneg %p32
        $region26: #{contrastive_module.5} parent=23 // pred_check_branch
          %133 = sbr.rel (%p131) target = $region28
        $region27: #{contrastive_module.5} parent=23 // pred_region
          %s134 = sand.u32 %s22, 1
          %s135 = scalar_lea.sflag [#allocation3], %s134
          %s136 = sand.u32 %s22, 1
          %s137 = smul.addr %s136, 16
          %s138 = scalar_lea.vmem [#allocation2], %s137
          %s139 = smul.u32 2, %s12
          %s141 = ssub.s32 256, 256
          %142 = vsyncadd %s135, %s141
          %s143 = smul.addr %s139, 128
          %s144 = scalar_lea.hbm %s0, %s143
          %s145 = sshll.u32 %s138, 4
          %s146 = int_to_ptr.vmem [resolvable:$true] %s145
          %151 = dma.hbm_to_vmem [thread:$0]  %s144, 256, %s146, %s135, 128, 128, 8
        $region28: #{contrastive_module.5} parent=23 // pred_fallthru
          _
      $region24: #{contrastive_module.5} parent=5 // pred_fallthru
        _
      %p152 = scmp.le.s32.totalorder 1, %s12
      %p153 = scmp.lt.s32.totalorder %s12, 3
      %p154 = pnand %p152, %p153
      %p155 = pneg %p154
      // Predicated region
      $region29: #{contrastive_module.5} parent=5 // pred_check
        _
      $region30: #{contrastive_module.5} parent=5 // pred_check_branch
        %157 = sbr.rel (%p154) target = $region32
      $region31: #{contrastive_module.5} parent=5 // pred_region
        %s158 = ssub.s32 %s12, 1
        %s159 = sand.u32 %s25, 1
        %s160 = scalar_lea.sflag [#allocation3], %s159
        %s161 = sand.u32 %s25, 1
        %s162 = smul.addr %s161, 16
        %s163 = scalar_lea.vmem [#allocation2], %s162
        // Predicated region
        $region33: #{contrastive_module.5} parent=31 // pred_check
          %p164 = pneg %p38
        $region34: #{contrastive_module.5} parent=31 // pred_check_branch
          %166 = sbr.rel (%p164) target = $region36
        $region35: #{contrastive_module.5} parent=31 // pred_region
          %167 = dma.done %s160, 256
        $region36: #{contrastive_module.5} parent=31 // pred_fallthru
          _
        %s168 = sand.u32 %s25, 1
        %s169 = scalar_lea.sflag [#allocation3], %s168
        %s170 = sand.u32 %s25, 1
        %s171 = smul.addr %s170, 16
        %s172 = scalar_lea.vmem [#allocation2], %s171
        %p173 = pneg %p38
        %p174 = pneg %p35
        %p175 = pneg %p59
        %p176 = pneg %p56
        %p177 = pneg %p80
        %p178 = pneg %p77
        %p179 = pneg %p106
        %p180 = pneg %p103
        %s181 = smul.u32 2, %s17
        %p182 = scmp.lt.s32.totalorder %s181, 3
        %s183 = scalar_select %p182, %s181, 3
        %s184 = smul.addr %s183, 8
        %s185 = scalar_lea.vmem %s3, %s184
        %s186 = smul.u32 2, %s17
        %s187 = smul.u32 2, %s17
        %p188 = scmp.lt.s32.totalorder %s187, 3
        %s189 = scalar_select %p188, %s187, 3
        %s190 = smul.addr %s189, 8
        %s191 = scalar_lea.vmem %s3, %s190
        %s192 = smul.u32 2, %s17
        %v194 = vld [vmem:[%s163] sm:$0xff]
        %v195 = vld [vmem:[%s163 + $0x8] sm:$0xff]
        %v196 = vpack.c.bf16 %v195, %v194
        %v197 = vld [vmem:[%s1] sm:$0xf]
        %v198 = vld [vmem:[%s1 + $0x4] sm:$0xf]
        %v199 = vld [vmem:[%s1 + $0x8] sm:$0xf]
        %v200 = vld [vmem:[%s1 + $0xc] sm:$0xf]
        %v201 = vld [vmem:[%s1 + $0x10] sm:$0xf]
        %v202 = vld [vmem:[%s1 + $0x14] sm:$0xf]
        %v203 = vld [vmem:[%s1 + $0x18] sm:$0xf]
        %v204 = vld [vmem:[%s1 + $0x1c] sm:$0xf]
        %v205 = vld [vmem:[%s1 + $0x20] sm:$0xf]
        %v206 = vld [vmem:[%s1 + $0x24] sm:$0xf]
        %v207 = vld [vmem:[%s1 + $0x28] sm:$0xf]
        %v208 = vld [vmem:[%s1 + $0x2c] sm:$0xf]
        %v209 = vld [vmem:[%s1 + $0x30] sm:$0xf]
        %v210 = vld [vmem:[%s1 + $0x34] sm:$0xf]
        %v211 = vld [vmem:[%s1 + $0x38] sm:$0xf]
        %v212 = vld [vmem:[%s1 + $0x3c] sm:$0xf]
        %v213 = vld [vmem:[%s2] sm:$0x1]
        %v215 = vlaneseq
        %v216 = vshrl.u32 %v215, 7
        %v217 = vsub.s32 0, %v216
        %v218 = vrot.slane %v213, %v217
        %v236 = vunpack.c.l.b16 %v197
        %v237 = vunpack.c.l.b16 %v198
        %v238 = vunpack.c.l.b16 %v199
        %v239 = vunpack.c.l.b16 %v200
        %v240 = vunpack.c.l.b16 %v201
        %v241 = vunpack.c.l.b16 %v202
        %v242 = vunpack.c.l.b16 %v203
        %v243 = vunpack.c.l.b16 %v204
        %v244 = vunpack.c.l.b16 %v205
        %v245 = vunpack.c.l.b16 %v206
        %v246 = vunpack.c.l.b16 %v207
        %v247 = vunpack.c.l.b16 %v208
        %v248 = vunpack.c.l.b16 %v209
        %v249 = vunpack.c.l.b16 %v210
        %v250 = vunpack.c.l.b16 %v211
        %v251 = vunpack.c.l.b16 %v212
        %v252 = vpack.c.b16 %v237, %v236
        %v253 = vpack.c.b16 %v239, %v238
        %v254 = vpack.c.b16 %v241, %v240
        %v255 = vpack.c.b16 %v243, %v242
        %v256 = vpack.c.b16 %v245, %v244
        %v257 = vpack.c.b16 %v247, %v246
        %v258 = vpack.c.b16 %v249, %v248
        %v259 = vpack.c.b16 %v251, %v250
        %268 = vmatprep.subr.bf16.mxu0 0
        %269 = vmatpush1.bf16.msra.mxu0 %v259
        %270 = vmatprep.subr.bf16.mxu0 0
        %271 = vmatpush1.bf16.msra.mxu0 %v258
        %272 = vmatprep.subr.bf16.mxu0 0
        %273 = vmatpush1.bf16.msra.mxu0 %v257
        %274 = vmatprep.subr.bf16.mxu0 0
        %275 = vmatpush1.bf16.msra.mxu0 %v256
        %276 = vmatprep.subr.bf16.mxu0 0
        %277 = vmatpush1.bf16.msra.mxu0 %v255
        %278 = vmatprep.subr.bf16.mxu0 0
        %279 = vmatpush1.bf16.msra.mxu0 %v254
        %280 = vmatprep.subr.bf16.mxu0 0
        %281 = vmatpush1.bf16.msra.mxu0 %v253
        %282 = vmatprep.subr.bf16.mxu0 0
        %283 = vmatpush1.bf16.msra.mxu0 %v252
        %284 = vmatprep.subr.bf16.mxu0 0
        %285 = vmatpush2.bf16.msra.mxu0 0
        %286 = vmatprep.subr.bf16.mxu0 0
        %287 = vmatpush2.bf16.msra.mxu0 0
        %288 = vmatprep.subr.bf16.mxu0 0
        %289 = vmatpush2.bf16.msra.mxu0 0
        %290 = vmatprep.subr.bf16.mxu0 0
        %291 = vmatpush2.bf16.msra.mxu0 0
        %292 = vmatprep.subr.bf16.mxu0 0
        %293 = vmatpush2.bf16.msra.mxu0 0
        %294 = vmatprep.subr.bf16.mxu0 0
        %295 = vmatpush2.bf16.msra.mxu0 0
        %296 = vmatprep.subr.bf16.mxu0 0
        %297 = vmatpush2.bf16.msra.mxu0 0
        %298 = vmatprep.subr.bf16.mxu0 0
        %299 = vmatpush2.bf16.msra.mxu0 0
        %300 = vmatprep.mubr.bf16.mxu0 0
        %301 = vmatmul.mubr.bf16.gmra.mxu0 %v196
        %v302 = vpop.f32.mrf.mxu0
        %v303 = vadd.f32 %v218, %v302
        %v304 = vpop.f32.mrf.mxu0
        %v305 = vpop.f32.mrf.mxu0
        %v306 = vadd.f32 %v218, %v305
        %v307 = vpop.f32.mrf.mxu0
        %308 = vdwg.mxu0
        %309 = vst [vmem:[%s191] sm:$0xff] %v303
        %310 = vst [vmem:[%s191 + $0x8] sm:$0xff] %v306
        %s311 = smul.u32 2, %s17
        %p312 = scmp.lt.s32.totalorder %s311, 3
        %s313 = scalar_select %p312, %s311, 3
        %s314 = smul.addr %s313, 8
        %s315 = scalar_lea.vmem %s3, %s314
        // Predicated region
        $region37: #{contrastive_module.5} parent=31 // pred_check
          %p316 = pneg %p103
        $region38: #{contrastive_module.5} parent=31 // pred_check_branch
          %318 = sbr.rel (%p316) target = $region40
        $region39: #{contrastive_module.5} parent=31 // pred_region
          %s319 = smul.u32 2, %s17
        $region40: #{contrastive_module.5} parent=31 // pred_fallthru
          _
      $region32: #{contrastive_module.5} parent=5 // pred_fallthru
        _
      %p320 = scmp.le.s32.totalorder 2, %s12
      // Predicated region
      $region41: #{contrastive_module.5} parent=5 // pred_check
        %p321 = pneg %p320
      $region42: #{contrastive_module.5} parent=5 // pred_check_branch
        %323 = sbr.rel (%p321) target = $region44
      $region43: #{contrastive_module.5} parent=5 // pred_region
        %s324 = ssub.s32 %s12, 2
        // Predicated region
        $region45: #{contrastive_module.5} parent=43 // pred_check
          %p325 = pneg %p109
        $region46: #{contrastive_module.5} parent=43 // pred_check_branch
          %327 = sbr.rel (%p325) target = $region48
        $region47: #{contrastive_module.5} parent=43 // pred_region
          %s328 = smul.u32 2, %s18
          %p329 = scmp.lt.s32.totalorder %s328, 3
          %s330 = scalar_select %p329, %s328, 3
          %s331 = smul.addr %s330, 8
          %s332 = scalar_lea.vmem %s3, %s331
        $region48: #{contrastive_module.5} parent=43 // pred_fallthru
          _
      $region44: #{contrastive_module.5} parent=5 // pred_fallthru
        _
    $region6: #{contrastive_module.5} parent=1 // loop_footer
      %s16 = sadd.s32 1, %s12
    $region7: #{contrastive_module.5} parent=1 // loop_footer_branch
      %11 = sbr.rel target = $region3
    $region8: #{contrastive_module.5} parent=1 // loop_exit
      _
    %333 = vsyncpa [#allocation3], 1
    %s334 = scalar_lea.sflag [#allocation3], 1
    %335 = vsyncpa %s334, 1

// kernel: contrastive_module.7
$region0: #{contrastive_module.7}
  #allocation0 [shape = 'u32[]', space=smem, size = 0x4, offset = 0x4, fixed_abs, tag = 'smem constant byte address 0x4 - core index']
  #allocation1 [shape = 'u32[144,128]{1,0:T(1,128)}', space=vmem, size = 0x12000, scoped, tag = 'internal scratch']
  %s0 = inlined_call_operand.vmem [shape: f32[32,128], index: 0, kind: input, shape index: {}]
  %s1 = inlined_call_operand.vmem [shape: f32[1,128], index: 1, kind: input, shape index: {}]
  %s2 = inlined_call_operand.vmem [shape: f32[1,128], index: 2, kind: input, shape index: {}]
  %s3 = inlined_call_operand.vmem [shape: bf16[128,256], index: 3, kind: input, shape index: {}]
  %s4 = inlined_call_operand.vmem [shape: f32[1,256], index: 4, kind: input, shape index: {}]
  %s5 = inlined_call_operand.vmem [shape: f32[1,256], index: 5, kind: input, shape index: {}]
  %s6 = inlined_call_operand.vmem [shape: f32[1,256], index: 6, kind: input, shape index: {}]
  %s7 = inlined_call_operand.vmem [shape: bf16[256,128], index: 7, kind: input, shape index: {}]
  %s8 = inlined_call_operand.vmem [shape: f32[1,128], index: 8, kind: input, shape index: {}]
  %s9 = inlined_call_operand.vmem [shape: f32[1,128], index: 9, kind: input, shape index: {}]
  %s10 = inlined_call_operand.vmem [shape: f32[1,128], index: 10, kind: input, shape index: {}]
  %s11 = inlined_call_operand.vmem [shape: bf16[128,256], index: 11, kind: input, shape index: {}]
  %s12 = inlined_call_operand.vmem [shape: f32[1,256], index: 12, kind: input, shape index: {}]
  %s13 = inlined_call_operand.vmem [shape: bf16[256,128], index: 13, kind: input, shape index: {}]
  %s14 = inlined_call_operand.vmem [shape: f32[1,128], index: 14, kind: input, shape index: {}]
  %s15 = inlined_call_operand.vmem [shape: f32[1,128], index: 15, kind: input, shape index: {}]
  %s16 = inlined_call_operand.vmem [shape: f32[1,128], index: 16, kind: input, shape index: {}]
  %s17 = inlined_call_operand.vmem [shape: f32[32,128], index: 17, kind: output, shape index: {}]
  %s18 = sld [smem:[#allocation0]]
  $region101: #{contrastive_module.7} parent=0
    _
  %s20 = ssub.s32 1, %s18
  %s21 = scalar_select 0, %s20, %s18
  loop: start=0, step=1, limit=4
  $region2: #{contrastive_module.7} parent=0 // loop_pre_header
    _
  $region3: #{contrastive_module.7} parent=0 // loop_header
    %s23 = sphi 0, %s27
    %p24 = scmp.ge.s32.totalorder %s23, 4
    %s33 = sphi 0, %s35
    %s36 = sphi 0, %s33
    %s37 = sphi 0, %s36
    %s53 = sphi 0, %s37
    %s57 = sphi 0, %s57
    %s59 = sphi 0, %s57
    %s60 = sphi 0, %s59
    %s74 = sphi 0, %s60
    %s78 = sphi 0, %s78
    %s80 = sphi 0, %s78
    %s81 = sphi 0, %s80
    %s95 = sphi 0, %s81
    %s99 = sphi 0, %s99
    %s101 = sphi 0, %s99
    %s102 = sphi 0, %s101
    %s116 = sphi 0, %s102
    %s120 = sphi 0, %s120
    %s122 = sphi 0, %s120
    %s123 = sphi 0, %s122
    %s137 = sphi 0, %s123
    %s141 = sphi 0, %s141
    %s143 = sphi 0, %s141
    %s144 = sphi 0, %s143
    %s158 = sphi 0, %s144
    %s162 = sphi 0, %s162
    %s164 = sphi 0, %s162
    %s165 = sphi 0, %s164
    %s179 = sphi 0, %s165
    %s183 = sphi 0, %s183
    %s185 = sphi 0, %s183
    %s186 = sphi 0, %s185
    %s200 = sphi 0, %s186
    %s204 = sphi 0, %s204
    %s206 = sphi 0, %s204
    %s207 = sphi 0, %s206
    %s221 = sphi 0, %s207
    %s225 = sphi 0, %s225
    %s227 = sphi 0, %s225
    %s228 = sphi 0, %s227
    %s242 = sphi 0, %s228
    %s246 = sphi 0, %s246
    %s248 = sphi 0, %s246
    %s249 = sphi 0, %s248
    %s263 = sphi 0, %s249
    %s267 = sphi 0, %s267
    %s269 = sphi 0, %s267
    %s270 = sphi 0, %s269
    %s284 = sphi 0, %s270
    %s288 = sphi 0, %s288
    %s290 = sphi 0, %s288
    %s291 = sphi 0, %s290
    %s305 = sphi 0, %s291
    %s309 = sphi 0, %s309
    %s311 = sphi 0, %s309
    %s312 = sphi 0, %s311
    %s326 = sphi 0, %s312
    %s330 = sphi 0, %s330
    %s332 = sphi 0, %s330
    %s333 = sphi 0, %s332
    %s347 = sphi 0, %s333
    %s351 = sphi 0, %s351
    %s353 = sphi 0, %s351
    %s354 = sphi 0, %s353
    %s368 = sphi 0, %s354
    %s372 = sphi 0, %s372
    %s374 = sphi 0, %s372
    %s375 = sphi 0, %s374
    %s389 = sphi 0, %s375
    %s395 = sphi 0, %s397
    %s398 = sphi 0, %s395
    %s399 = sphi 0, %s398
    %s415 = sphi 0, %s399
  $region4: #{contrastive_module.7} parent=0 // loop_header_branch
    %26 = sbr.rel (%p24) target = $region8
  $region5: #{contrastive_module.7} parent=0 // loop_body
    %s28 = ssub.s32 %s23, 1
    %s29 = ssub.s32 %s23, 2
    %s30 = sadd.s32 %s23, 1
    %s31 = ssub.s32 %s23, %s30
    %p32 = scmp.eq.s32.totalorder %s31, 0
    %s34 = sadd.s32 %s33, 1
    %s35 = scalar_select %p32, %s33, %s34
    %p38 = pneg %p32
    %p39 = scmp.eq.s32.totalorder %s23, 1
    %p40 = por %p38, %p39
    %p41 = scmp.ne.s32.totalorder %s33, %s36
    %p42 = scmp.eq.s32.totalorder %s23, 0
    %p43 = por %p41, %p42
    %p44 = scmp.ne.s32.totalorder %s33, %s36
    %p45 = scmp.eq.s32.totalorder %s28, 1
    %p46 = por %p44, %p45
    %p47 = scmp.ne.s32.totalorder %s36, %s37
    %p48 = scmp.eq.s32.totalorder %s28, 0
    %p49 = por %p47, %p48
    %p50 = scmp.ne.s32.totalorder %s36, %s37
    %p51 = scmp.eq.s32.totalorder %s29, 1
    %p52 = por %p50, %p51
    %p54 = scmp.ne.s32.totalorder %s37, %s53
    %p55 = scmp.eq.s32.totalorder %s29, 0
    %p56 = por %p54, %p55
    %s58 = sadd.s32 %s57, 1
    %p61 = scmp.eq.s32.totalorder %s23, 1
    %p62 = scmp.ne.s32.totalorder %s57, %s59
    %p63 = scmp.eq.s32.totalorder %s23, 0
    %p64 = por %p62, %p63
    %p65 = scmp.ne.s32.totalorder %s57, %s59
    %p66 = scmp.eq.s32.totalorder %s28, 1
    %p67 = por %p65, %p66
    %p68 = scmp.ne.s32.totalorder %s59, %s60
    %p69 = scmp.eq.s32.totalorder %s28, 0
    %p70 = por %p68, %p69
    %p71 = scmp.ne.s32.totalorder %s59, %s60
    %p72 = scmp.eq.s32.totalorder %s29, 1
    %p73 = por %p71, %p72
    %p75 = scmp.ne.s32.totalorder %s60, %s74
    %p76 = scmp.eq.s32.totalorder %s29, 0
    %p77 = por %p75, %p76
    %s79 = sadd.s32 %s78, 1
    %p82 = scmp.eq.s32.totalorder %s23, 1
    %p83 = scmp.ne.s32.totalorder %s78, %s80
    %p84 = scmp.eq.s32.totalorder %s23, 0
    %p85 = por %p83, %p84
    %p86 = scmp.ne.s32.totalorder %s78, %s80
    %p87 = scmp.eq.s32.totalorder %s28, 1
    %p88 = por %p86, %p87
    %p89 = scmp.ne.s32.totalorder %s80, %s81
    %p90 = scmp.eq.s32.totalorder %s28, 0
    %p91 = por %p89, %p90
    %p92 = scmp.ne.s32.totalorder %s80, %s81
    %p93 = scmp.eq.s32.totalorder %s29, 1
    %p94 = por %p92, %p93
    %p96 = scmp.ne.s32.totalorder %s81, %s95
    %p97 = scmp.eq.s32.totalorder %s29, 0
    %p98 = por %p96, %p97
    %s100 = sadd.s32 %s99, 1
    %p103 = scmp.eq.s32.totalorder %s23, 1
    %p104 = scmp.ne.s32.totalorder %s99, %s101
    %p105 = scmp.eq.s32.totalorder %s23, 0
    %p106 = por %p104, %p105
    %p107 = scmp.ne.s32.totalorder %s99, %s101
    %p108 = scmp.eq.s32.totalorder %s28, 1
    %p109 = por %p107, %p108
    %p110 = scmp.ne.s32.totalorder %s101, %s102
    %p111 = scmp.eq.s32.totalorder %s28, 0
    %p112 = por %p110, %p111
    %p113 = scmp.ne.s32.totalorder %s101, %s102
    %p114 = scmp.eq.s32.totalorder %s29, 1
    %p115 = por %p113, %p114
    %p117 = scmp.ne.s32.totalorder %s102, %s116
    %p118 = scmp.eq.s32.totalorder %s29, 0
    %p119 = por %p117, %p118
    %s121 = sadd.s32 %s120, 1
    %p124 = scmp.eq.s32.totalorder %s23, 1
    %p125 = scmp.ne.s32.totalorder %s120, %s122
    %p126 = scmp.eq.s32.totalorder %s23, 0
    %p127 = por %p125, %p126
    %p128 = scmp.ne.s32.totalorder %s120, %s122
    %p129 = scmp.eq.s32.totalorder %s28, 1
    %p130 = por %p128, %p129
    %p131 = scmp.ne.s32.totalorder %s122, %s123
    %p132 = scmp.eq.s32.totalorder %s28, 0
    %p133 = por %p131, %p132
    %p134 = scmp.ne.s32.totalorder %s122, %s123
    %p135 = scmp.eq.s32.totalorder %s29, 1
    %p136 = por %p134, %p135
    %p138 = scmp.ne.s32.totalorder %s123, %s137
    %p139 = scmp.eq.s32.totalorder %s29, 0
    %p140 = por %p138, %p139
    %s142 = sadd.s32 %s141, 1
    %p145 = scmp.eq.s32.totalorder %s23, 1
    %p146 = scmp.ne.s32.totalorder %s141, %s143
    %p147 = scmp.eq.s32.totalorder %s23, 0
    %p148 = por %p146, %p147
    %p149 = scmp.ne.s32.totalorder %s141, %s143
    %p150 = scmp.eq.s32.totalorder %s28, 1
    %p151 = por %p149, %p150
    %p152 = scmp.ne.s32.totalorder %s143, %s144
    %p153 = scmp.eq.s32.totalorder %s28, 0
    %p154 = por %p152, %p153
    %p155 = scmp.ne.s32.totalorder %s143, %s144
    %p156 = scmp.eq.s32.totalorder %s29, 1
    %p157 = por %p155, %p156
    %p159 = scmp.ne.s32.totalorder %s144, %s158
    %p160 = scmp.eq.s32.totalorder %s29, 0
    %p161 = por %p159, %p160
    %s163 = sadd.s32 %s162, 1
    %p166 = scmp.eq.s32.totalorder %s23, 1
    %p167 = scmp.ne.s32.totalorder %s162, %s164
    %p168 = scmp.eq.s32.totalorder %s23, 0
    %p169 = por %p167, %p168
    %p170 = scmp.ne.s32.totalorder %s162, %s164
    %p171 = scmp.eq.s32.totalorder %s28, 1
    %p172 = por %p170, %p171
    %p173 = scmp.ne.s32.totalorder %s164, %s165
    %p174 = scmp.eq.s32.totalorder %s28, 0
    %p175 = por %p173, %p174
    %p176 = scmp.ne.s32.totalorder %s164, %s165
    %p177 = scmp.eq.s32.totalorder %s29, 1
    %p178 = por %p176, %p177
    %p180 = scmp.ne.s32.totalorder %s165, %s179
    %p181 = scmp.eq.s32.totalorder %s29, 0
    %p182 = por %p180, %p181
    %s184 = sadd.s32 %s183, 1
    %p187 = scmp.eq.s32.totalorder %s23, 1
    %p188 = scmp.ne.s32.totalorder %s183, %s185
    %p189 = scmp.eq.s32.totalorder %s23, 0
    %p190 = por %p188, %p189
    %p191 = scmp.ne.s32.totalorder %s183, %s185
    %p192 = scmp.eq.s32.totalorder %s28, 1
    %p193 = por %p191, %p192
    %p194 = scmp.ne.s32.totalorder %s185, %s186
    %p195 = scmp.eq.s32.totalorder %s28, 0
    %p196 = por %p194, %p195
    %p197 = scmp.ne.s32.totalorder %s185, %s186
    %p198 = scmp.eq.s32.totalorder %s29, 1
    %p199 = por %p197, %p198
    %p201 = scmp.ne.s32.totalorder %s186, %s200
    %p202 = scmp.eq.s32.totalorder %s29, 0
    %p203 = por %p201, %p202
    %s205 = sadd.s32 %s204, 1
    %p208 = scmp.eq.s32.totalorder %s23, 1
    %p209 = scmp.ne.s32.totalorder %s204, %s206
    %p210 = scmp.eq.s32.totalorder %s23, 0
    %p211 = por %p209, %p210
    %p212 = scmp.ne.s32.totalorder %s204, %s206
    %p213 = scmp.eq.s32.totalorder %s28, 1
    %p214 = por %p212, %p213
    %p215 = scmp.ne.s32.totalorder %s206, %s207
    %p216 = scmp.eq.s32.totalorder %s28, 0
    %p217 = por %p215, %p216
    %p218 = scmp.ne.s32.totalorder %s206, %s207
    %p219 = scmp.eq.s32.totalorder %s29, 1
    %p220 = por %p218, %p219
    %p222 = scmp.ne.s32.totalorder %s207, %s221
    %p223 = scmp.eq.s32.totalorder %s29, 0
    %p224 = por %p222, %p223
    %s226 = sadd.s32 %s225, 1
    %p229 = scmp.eq.s32.totalorder %s23, 1
    %p230 = scmp.ne.s32.totalorder %s225, %s227
    %p231 = scmp.eq.s32.totalorder %s23, 0
    %p232 = por %p230, %p231
    %p233 = scmp.ne.s32.totalorder %s225, %s227
    %p234 = scmp.eq.s32.totalorder %s28, 1
    %p235 = por %p233, %p234
    %p236 = scmp.ne.s32.totalorder %s227, %s228
    %p237 = scmp.eq.s32.totalorder %s28, 0
    %p238 = por %p236, %p237
    %p239 = scmp.ne.s32.totalorder %s227, %s228
    %p240 = scmp.eq.s32.totalorder %s29, 1
    %p241 = por %p239, %p240
    %p243 = scmp.ne.s32.totalorder %s228, %s242
    %p244 = scmp.eq.s32.totalorder %s29, 0
    %p245 = por %p243, %p244
    %s247 = sadd.s32 %s246, 1
    %p250 = scmp.eq.s32.totalorder %s23, 1
    %p251 = scmp.ne.s32.totalorder %s246, %s248
    %p252 = scmp.eq.s32.totalorder %s23, 0
    %p253 = por %p251, %p252
    %p254 = scmp.ne.s32.totalorder %s246, %s248
    %p255 = scmp.eq.s32.totalorder %s28, 1
    %p256 = por %p254, %p255
    %p257 = scmp.ne.s32.totalorder %s248, %s249
    %p258 = scmp.eq.s32.totalorder %s28, 0
    %p259 = por %p257, %p258
    %p260 = scmp.ne.s32.totalorder %s248, %s249
    %p261 = scmp.eq.s32.totalorder %s29, 1
    %p262 = por %p260, %p261
    %p264 = scmp.ne.s32.totalorder %s249, %s263
    %p265 = scmp.eq.s32.totalorder %s29, 0
    %p266 = por %p264, %p265
    %s268 = sadd.s32 %s267, 1
    %p271 = scmp.eq.s32.totalorder %s23, 1
    %p272 = scmp.ne.s32.totalorder %s267, %s269
    %p273 = scmp.eq.s32.totalorder %s23, 0
    %p274 = por %p272, %p273
    %p275 = scmp.ne.s32.totalorder %s267, %s269
    %p276 = scmp.eq.s32.totalorder %s28, 1
    %p277 = por %p275, %p276
    %p278 = scmp.ne.s32.totalorder %s269, %s270
    %p279 = scmp.eq.s32.totalorder %s28, 0
    %p280 = por %p278, %p279
    %p281 = scmp.ne.s32.totalorder %s269, %s270
    %p282 = scmp.eq.s32.totalorder %s29, 1
    %p283 = por %p281, %p282
    %p285 = scmp.ne.s32.totalorder %s270, %s284
    %p286 = scmp.eq.s32.totalorder %s29, 0
    %p287 = por %p285, %p286
    %s289 = sadd.s32 %s288, 1
    %p292 = scmp.eq.s32.totalorder %s23, 1
    %p293 = scmp.ne.s32.totalorder %s288, %s290
    %p294 = scmp.eq.s32.totalorder %s23, 0
    %p295 = por %p293, %p294
    %p296 = scmp.ne.s32.totalorder %s288, %s290
    %p297 = scmp.eq.s32.totalorder %s28, 1
    %p298 = por %p296, %p297
    %p299 = scmp.ne.s32.totalorder %s290, %s291
    %p300 = scmp.eq.s32.totalorder %s28, 0
    %p301 = por %p299, %p300
    %p302 = scmp.ne.s32.totalorder %s290, %s291
    %p303 = scmp.eq.s32.totalorder %s29, 1
    %p304 = por %p302, %p303
    %p306 = scmp.ne.s32.totalorder %s291, %s305
    %p307 = scmp.eq.s32.totalorder %s29, 0
    %p308 = por %p306, %p307
    %s310 = sadd.s32 %s309, 1
    %p313 = scmp.eq.s32.totalorder %s23, 1
    %p314 = scmp.ne.s32.totalorder %s309, %s311
    %p315 = scmp.eq.s32.totalorder %s23, 0
    %p316 = por %p314, %p315
    %p317 = scmp.ne.s32.totalorder %s309, %s311
    %p318 = scmp.eq.s32.totalorder %s28, 1
    %p319 = por %p317, %p318
    %p320 = scmp.ne.s32.totalorder %s311, %s312
    %p321 = scmp.eq.s32.totalorder %s28, 0
    %p322 = por %p320, %p321
    %p323 = scmp.ne.s32.totalorder %s311, %s312
    %p324 = scmp.eq.s32.totalorder %s29, 1
    %p325 = por %p323, %p324
    %p327 = scmp.ne.s32.totalorder %s312, %s326
    %p328 = scmp.eq.s32.totalorder %s29, 0
    %p329 = por %p327, %p328
    %s331 = sadd.s32 %s330, 1
    %p334 = scmp.eq.s32.totalorder %s23, 1
    %p335 = scmp.ne.s32.totalorder %s330, %s332
    %p336 = scmp.eq.s32.totalorder %s23, 0
    %p337 = por %p335, %p336
    %p338 = scmp.ne.s32.totalorder %s330, %s332
    %p339 = scmp.eq.s32.totalorder %s28, 1
    %p340 = por %p338, %p339
    %p341 = scmp.ne.s32.totalorder %s332, %s333
    %p342 = scmp.eq.s32.totalorder %s28, 0
    %p343 = por %p341, %p342
    %p344 = scmp.ne.s32.totalorder %s332, %s333
    %p345 = scmp.eq.s32.totalorder %s29, 1
    %p346 = por %p344, %p345
    %p348 = scmp.ne.s32.totalorder %s333, %s347
    %p349 = scmp.eq.s32.totalorder %s29, 0
    %p350 = por %p348, %p349
    %s352 = sadd.s32 %s351, 1
    %p355 = scmp.eq.s32.totalorder %s23, 1
    %p356 = scmp.ne.s32.totalorder %s351, %s353
    %p357 = scmp.eq.s32.totalorder %s23, 0
    %p358 = por %p356, %p357
    %p359 = scmp.ne.s32.totalorder %s351, %s353
    %p360 = scmp.eq.s32.totalorder %s28, 1
    %p361 = por %p359, %p360
    %p362 = scmp.ne.s32.totalorder %s353, %s354
    %p363 = scmp.eq.s32.totalorder %s28, 0
    %p364 = por %p362, %p363
    %p365 = scmp.ne.s32.totalorder %s353, %s354
    %p366 = scmp.eq.s32.totalorder %s29, 1
    %p367 = por %p365, %p366
    %p369 = scmp.ne.s32.totalorder %s354, %s368
    %p370 = scmp.eq.s32.totalorder %s29, 0
    %p371 = por %p369, %p370
    %s373 = sadd.s32 %s372, 1
    %p376 = scmp.eq.s32.totalorder %s23, 1
    %p377 = scmp.ne.s32.totalorder %s372, %s374
    %p378 = scmp.eq.s32.totalorder %s23, 0
    %p379 = por %p377, %p378
    %p380 = scmp.ne.s32.totalorder %s372, %s374
    %p381 = scmp.eq.s32.totalorder %s28, 1
    %p382 = por %p380, %p381
    %p383 = scmp.ne.s32.totalorder %s374, %s375
    %p384 = scmp.eq.s32.totalorder %s28, 0
    %p385 = por %p383, %p384
    %p386 = scmp.ne.s32.totalorder %s374, %s375
    %p387 = scmp.eq.s32.totalorder %s29, 1
    %p388 = por %p386, %p387
    %p390 = scmp.ne.s32.totalorder %s375, %s389
    %p391 = scmp.eq.s32.totalorder %s29, 0
    %p392 = por %p390, %p391
    %s393 = ssub.s32 %s23, %s30
    %p394 = scmp.eq.s32.totalorder %s393, 0
    %s396 = sadd.s32 %s395, 1
    %s397 = scalar_select %p394, %s395, %s396
    %p400 = pneg %p394
    %p401 = scmp.eq.s32.totalorder %s23, 1
    %p402 = por %p400, %p401
    %p403 = scmp.ne.s32.totalorder %s395, %s398
    %p404 = scmp.eq.s32.totalorder %s23, 0
    %p405 = por %p403, %p404
    %p406 = scmp.ne.s32.totalorder %s395, %s398
    %p407 = scmp.eq.s32.totalorder %s28, 1
    %p408 = por %p406, %p407
    %p409 = scmp.ne.s32.totalorder %s398, %s399
    %p410 = scmp.eq.s32.totalorder %s28, 0
    %p411 = por %p409, %p410
    %p412 = scmp.ne.s32.totalorder %s398, %s399
    %p413 = scmp.eq.s32.totalorder %s29, 1
    %p414 = por %p412, %p413
    %p416 = scmp.ne.s32.totalorder %s399, %s415
    %p417 = scmp.eq.s32.totalorder %s29, 0
    %p418 = por %p416, %p417
    %p419 = scmp.le.s32.totalorder 1, %s23
    %p420 = scmp.lt.s32.totalorder %s23, 3
    %p421 = pnand %p419, %p420
    %p422 = pneg %p421
    // Predicated region
    $region9: #{contrastive_module.7} parent=5 // pred_check
      _
    $region10: #{contrastive_module.7} parent=5 // pred_check_branch
      %424 = sbr.rel (%p421) target = $region12
    $region11: #{contrastive_module.7} parent=5 // pred_region
      %s425 = ssub.s32 %s23, 1
      // Predicated region
      $region13: #{contrastive_module.7} parent=11 // pred_check
        %p426 = pneg %p70
      $region14: #{contrastive_module.7} parent=11 // pred_check_branch
        %428 = sbr.rel (%p426) target = $region16
      $region15: #{contrastive_module.7} parent=11 // pred_region
        _
      $region16: #{contrastive_module.7} parent=11 // pred_fallthru
        _
      // Predicated region
      $region17: #{contrastive_module.7} parent=11 // pred_check
        %p429 = pneg %p91
      $region18: #{contrastive_module.7} parent=11 // pred_check_branch
        %431 = sbr.rel (%p429) target = $region20
      $region19: #{contrastive_module.7} parent=11 // pred_region
        _
      $region20: #{contrastive_module.7} parent=11 // pred_fallthru
        _
      // Predicated region
      $region21: #{contrastive_module.7} parent=11 // pred_check
        %p432 = pneg %p112
      $region22: #{contrastive_module.7} parent=11 // pred_check_branch
        %434 = sbr.rel (%p432) target = $region24
      $region23: #{contrastive_module.7} parent=11 // pred_region
        _
      $region24: #{contrastive_module.7} parent=11 // pred_fallthru
        _
      // Predicated region
      $region25: #{contrastive_module.7} parent=11 // pred_check
        %p435 = pneg %p133
      $region26: #{contrastive_module.7} parent=11 // pred_check_branch
        %437 = sbr.rel (%p435) target = $region28
      $region27: #{contrastive_module.7} parent=11 // pred_region
        _
      $region28: #{contrastive_module.7} parent=11 // pred_fallthru
        _
      // Predicated region
      $region29: #{contrastive_module.7} parent=11 // pred_check
        %p438 = pneg %p154
      $region30: #{contrastive_module.7} parent=11 // pred_check_branch
        %440 = sbr.rel (%p438) target = $region32
      $region31: #{contrastive_module.7} parent=11 // pred_region
        _
      $region32: #{contrastive_module.7} parent=11 // pred_fallthru
        _
      // Predicated region
      $region33: #{contrastive_module.7} parent=11 // pred_check
        %p441 = pneg %p175
      $region34: #{contrastive_module.7} parent=11 // pred_check_branch
        %443 = sbr.rel (%p441) target = $region36
      $region35: #{contrastive_module.7} parent=11 // pred_region
        _
      $region36: #{contrastive_module.7} parent=11 // pred_fallthru
        _
      // Predicated region
      $region37: #{contrastive_module.7} parent=11 // pred_check
        %p444 = pneg %p196
      $region38: #{contrastive_module.7} parent=11 // pred_check_branch
        %446 = sbr.rel (%p444) target = $region40
      $region39: #{contrastive_module.7} parent=11 // pred_region
        _
      $region40: #{contrastive_module.7} parent=11 // pred_fallthru
        _
      // Predicated region
      $region41: #{contrastive_module.7} parent=11 // pred_check
        %p447 = pneg %p217
      $region42: #{contrastive_module.7} parent=11 // pred_check_branch
        %449 = sbr.rel (%p447) target = $region44
      $region43: #{contrastive_module.7} parent=11 // pred_region
        _
      $region44: #{contrastive_module.7} parent=11 // pred_fallthru
        _
      // Predicated region
      $region45: #{contrastive_module.7} parent=11 // pred_check
        %p450 = pneg %p238
      $region46: #{contrastive_module.7} parent=11 // pred_check_branch
        %452 = sbr.rel (%p450) target = $region48
      $region47: #{contrastive_module.7} parent=11 // pred_region
        _
      $region48: #{contrastive_module.7} parent=11 // pred_fallthru
        _
      // Predicated region
      $region49: #{contrastive_module.7} parent=11 // pred_check
        %p453 = pneg %p259
      $region50: #{contrastive_module.7} parent=11 // pred_check_branch
        %455 = sbr.rel (%p453) target = $region52
      $region51: #{contrastive_module.7} parent=11 // pred_region
        _
      $region52: #{contrastive_module.7} parent=11 // pred_fallthru
        _
      // Predicated region
      $region53: #{contrastive_module.7} parent=11 // pred_check
        %p456 = pneg %p280
      $region54: #{contrastive_module.7} parent=11 // pred_check_branch
        %458 = sbr.rel (%p456) target = $region56
      $region55: #{contrastive_module.7} parent=11 // pred_region
        _
      $region56: #{contrastive_module.7} parent=11 // pred_fallthru
        _
      // Predicated region
      $region57: #{contrastive_module.7} parent=11 // pred_check
        %p459 = pneg %p301
      $region58: #{contrastive_module.7} parent=11 // pred_check_branch
        %461 = sbr.rel (%p459) target = $region60
      $region59: #{contrastive_module.7} parent=11 // pred_region
        _
      $region60: #{contrastive_module.7} parent=11 // pred_fallthru
        _
      // Predicated region
      $region61: #{contrastive_module.7} parent=11 // pred_check
        %p462 = pneg %p322
      $region62: #{contrastive_module.7} parent=11 // pred_check_branch
        %464 = sbr.rel (%p462) target = $region64
      $region63: #{contrastive_module.7} parent=11 // pred_region
        _
      $region64: #{contrastive_module.7} parent=11 // pred_fallthru
        _
      // Predicated region
      $region65: #{contrastive_module.7} parent=11 // pred_check
        %p465 = pneg %p343
      $region66: #{contrastive_module.7} parent=11 // pred_check_branch
        %467 = sbr.rel (%p465) target = $region68
      $region67: #{contrastive_module.7} parent=11 // pred_region
        _
      $region68: #{contrastive_module.7} parent=11 // pred_fallthru
        _
      // Predicated region
      $region69: #{contrastive_module.7} parent=11 // pred_check
        %p468 = pneg %p364
      $region70: #{contrastive_module.7} parent=11 // pred_check_branch
        %470 = sbr.rel (%p468) target = $region72
      $region71: #{contrastive_module.7} parent=11 // pred_region
        _
      $region72: #{contrastive_module.7} parent=11 // pred_fallthru
        _
      // Predicated region
      $region73: #{contrastive_module.7} parent=11 // pred_check
        %p471 = pneg %p385
      $region74: #{contrastive_module.7} parent=11 // pred_check_branch
        %473 = sbr.rel (%p471) target = $region76
      $region75: #{contrastive_module.7} parent=11 // pred_region
        _
      $region76: #{contrastive_module.7} parent=11 // pred_fallthru
        _
    $region12: #{contrastive_module.7} parent=5 // pred_fallthru
      _
    %p474 = scmp.lt.s32.totalorder %s23, 2
    // Predicated region
    $region77: #{contrastive_module.7} parent=5 // pred_check
      %p475 = pneg %p474
    $region78: #{contrastive_module.7} parent=5 // pred_check_branch
      %477 = sbr.rel (%p475) target = $region80
    $region79: #{contrastive_module.7} parent=5 // pred_region
      // Predicated region
      $region81: #{contrastive_module.7} parent=79 // pred_check
        %p478 = pneg %p43
      $region82: #{contrastive_module.7} parent=79 // pred_check_branch
        %480 = sbr.rel (%p478) target = $region84
      $region83: #{contrastive_module.7} parent=79 // pred_region
        %s481 = smul.u32 2, %s23
        %p482 = scmp.lt.s32.totalorder %s481, 3
        %s483 = scalar_select %p482, %s481, 3
        %s484 = smul.addr %s483, 8
        %s485 = scalar_lea.vmem %s0, %s484
        %s486 = smul.u32 2, %s23
      $region84: #{contrastive_module.7} parent=79 // pred_fallthru
        _
    $region80: #{contrastive_module.7} parent=5 // pred_fallthru
      _
    %p487 = scmp.le.s32.totalorder 1, %s23
    %p488 = scmp.lt.s32.totalorder %s23, 3
    %p489 = pnand %p487, %p488
    %p490 = pneg %p489
    // Predicated region
    $region85: #{contrastive_module.7} parent=5 // pred_check
      _
    $region86: #{contrastive_module.7} parent=5 // pred_check_branch
      %492 = sbr.rel (%p489) target = $region88
    $region87: #{contrastive_module.7} parent=5 // pred_region
      %s493 = ssub.s32 %s23, 1
      %s494 = smul.u32 2, %s28
      %p495 = scmp.lt.s32.totalorder %s494, 3
      %s496 = scalar_select %p495, %s494, 3
      %s497 = smul.addr %s496, 8
      %s498 = scalar_lea.vmem %s0, %s497
      %p499 = pneg %p49
      %p500 = pneg %p46
      %p501 = pneg %p70
      %p502 = pneg %p67
      %p503 = pneg %p91
      %p504 = pneg %p88
      %p505 = pneg %p112
      %p506 = pneg %p109
      %p507 = pneg %p133
      %p508 = pneg %p130
      %p509 = pneg %p154
      %p510 = pneg %p151
      %p511 = pneg %p175
      %p512 = pneg %p172
      %p513 = pneg %p196
      %p514 = pneg %p193
      %p515 = pneg %p217
      %p516 = pneg %p214
      %p517 = pneg %p238
      %p518 = pneg %p235
      %p519 = pneg %p259
      %p520 = pneg %p256
      %p521 = pneg %p280
      %p522 = pneg %p277
      %p523 = pneg %p301
      %p524 = pneg %p298
      %p525 = pneg %p322
      %p526 = pneg %p319
      %p527 = pneg %p343
      %p528 = pneg %p340
      %p529 = pneg %p364
      %p530 = pneg %p361
      %p531 = pneg %p385
      %p532 = pneg %p382
      %p533 = pneg %p411
      %p534 = pneg %p408
      %s535 = smul.u32 2, %s28
      %p536 = scmp.lt.s32.totalorder %s535, 3
      %s537 = scalar_select %p536, %s535, 3
      %s538 = smul.addr %s537, 8
      %s539 = scalar_lea.vmem %s17, %s538
      %s540 = smul.u32 2, %s28
      %p541 = scmp.lt.s32.totalorder %s540, 3
      %s542 = scalar_select %p541, %s540, 3
      %s543 = smul.addr %s542, 8
      %s544 = scalar_lea.vmem %s0, %s543
      %s545 = smul.u32 2, %s28
      %s546 = smul.u32 2, %s28
      %p547 = scmp.lt.s32.totalorder %s546, 3
      %s548 = scalar_select %p547, %s546, 3
      %s549 = smul.addr %s548, 8
      %s550 = scalar_lea.vmem %s17, %s549
      %s551 = smul.u32 2, %s28
      %v553 = vld [vmem:[%s544] sm:$0xff]
      %v554 = vld [vmem:[%s544 + $0x8] sm:$0xff]
      %v555 = vld [vmem:[%s1] sm:$0x1]
      %v556 = vld [vmem:[%s2] sm:$0x1]
      %557 = vadd.xlane.f32.xlu0 %v553
      %v558 = vpop.xlane.xlu0 %557
      %559 = vadd.xlane.f32.xlu0 %v554
      %v560 = vpop.xlane.xlu0 %559
      %v561 = vrcp.pop 128.0
      %v562 = vmul.f32 %v558, %v561
      %v563 = vmul.f32 %v560, %v561
      %v564 = vsub.f32 %v553, %v562
      %v565 = vsub.f32 %v554, %v563
      %v566 = vmul.f32 %v564, %v564
      %v567 = vmul.f32 %v565, %v565
      %568 = vadd.xlane.f32.xlu0 %v566
      %v569 = vpop.xlane.xlu0 %568
      %570 = vadd.xlane.f32.xlu0 %v567
      %v571 = vpop.xlane.xlu0 %570
      %v572 = vmul.f32 %v569, %v561
      %v573 = vmul.f32 %v571, %v561
      %v574 = vadd.f32 %v572, 1e-05
      %v575 = vadd.f32 %v573, 1e-05
      %v576 = vrsqrt.pop %v574
      %v577 = vrsqrt.pop %v575
      %v578 = vmul.f32 %v564, %v576
      %v579 = vmul.f32 %v565, %v577
      %v581 = vlaneseq
      %v582 = vshrl.u32 %v581, 7
      %v583 = vsub.s32 0, %v582
      %v584 = vrot.slane %v555, %v583
      %v586 = vmul.f32 %v578, %v584
      %v587 = vmul.f32 %v579, %v584
      %v589 = vlaneseq
      %v590 = vshrl.u32 %v589, 7
      %v591 = vsub.s32 0, %v590
      %v592 = vrot.slane %v556, %v591
      %v594 = vadd.f32 %v586, %v592
      %v595 = vadd.f32 %v587, %v592
      %v596 = vpack.c.bf16 %v595, %v594
      %v597 = vld [vmem:[%s3] sm:$0xff]
      %v598 = vld [vmem:[%s3 + $0x8] sm:$0xff]
      %v599 = vld [vmem:[%s3 + $0x10] sm:$0xff]
      %v600 = vld [vmem:[%s3 + $0x18] sm:$0xff]
      %v601 = vld [vmem:[%s3 + $0x20] sm:$0xff]
      %v602 = vld [vmem:[%s3 + $0x28] sm:$0xff]
      %v603 = vld [vmem:[%s3 + $0x30] sm:$0xff]
      %v604 = vld [vmem:[%s3 + $0x38] sm:$0xff]
      %v605 = vld [vmem:[%s3 + $0x40] sm:$0xff]
      %v606 = vld [vmem:[%s3 + $0x48] sm:$0xff]
      %v607 = vld [vmem:[%s3 + $0x50] sm:$0xff]
      %v608 = vld [vmem:[%s3 + $0x58] sm:$0xff]
      %v609 = vld [vmem:[%s3 + $0x60] sm:$0xff]
      %v610 = vld [vmem:[%s3 + $0x68] sm:$0xff]
      %v611 = vld [vmem:[%s3 + $0x70] sm:$0xff]
      %v612 = vld [vmem:[%s3 + $0x78] sm:$0xff]
      %v613 = vld [vmem:[%s4] sm:$0x3]
      %v615 = vlaneseq
      %v616 = vshrl.u32 %v615, 7
      %v617 = vsub.s32 0, %v616
      %v618 = vrot.slane %v613, %v617
      %v619 = vlaneseq
      %v620 = vshrl.u32 %v619, 7
      %v621 = vsub.s32 1, %v620
      %v622 = vrot.slane %v613, %v621
      %v641 = vunpack.c.l.b16 %v597
      %v642 = vunpack.c.h.b16 %v597
      %v643 = vunpack.c.l.b16 %v598
      %v644 = vunpack.c.h.b16 %v598
      %v645 = vunpack.c.l.b16 %v599
      %v646 = vunpack.c.h.b16 %v599
      %v647 = vunpack.c.l.b16 %v600
      %v648 = vunpack.c.h.b16 %v600
      %v649 = vunpack.c.l.b16 %v601
      %v650 = vunpack.c.h.b16 %v601
      %v651 = vunpack.c.l.b16 %v602
      %v652 = vunpack.c.h.b16 %v602
      %v653 = vunpack.c.l.b16 %v603
      %v654 = vunpack.c.h.b16 %v603
      %v655 = vunpack.c.l.b16 %v604
      %v656 = vunpack.c.h.b16 %v604
      %v657 = vunpack.c.l.b16 %v605
      %v658 = vunpack.c.h.b16 %v605
      %v659 = vunpack.c.l.b16 %v606
      %v660 = vunpack.c.h.b16 %v606
      %v661 = vunpack.c.l.b16 %v607
      %v662 = vunpack.c.h.b16 %v607
      %v663 = vunpack.c.l.b16 %v608
      %v664 = vunpack.c.h.b16 %v608
      %v665 = vunpack.c.l.b16 %v609
      %v666 = vunpack.c.h.b16 %v609
      %v667 = vunpack.c.l.b16 %v610
      %v668 = vunpack.c.h.b16 %v610
      %v669 = vunpack.c.l.b16 %v611
      %v670 = vunpack.c.h.b16 %v611
      %v671 = vunpack.c.l.b16 %v612
      %v672 = vunpack.c.h.b16 %v612
      %v673 = vpack.c.b16 %v643, %v641
      %v674 = vpack.c.b16 %v644, %v642
      %v675 = vpack.c.b16 %v647, %v645
      %v676 = vpack.c.b16 %v648, %v646
      %v677 = vpack.c.b16 %v651, %v649
      %v678 = vpack.c.b16 %v652, %v650
      %v679 = vpack.c.b16 %v655, %v653
      %v680 = vpack.c.b16 %v656, %v654
      %v681 = vpack.c.b16 %v659, %v657
      %v682 = vpack.c.b16 %v660, %v658
      %v683 = vpack.c.b16 %v663, %v661
      %v684 = vpack.c.b16 %v664, %v662
      %v685 = vpack.c.b16 %v667, %v665
      %v686 = vpack.c.b16 %v668, %v666
      %v687 = vpack.c.b16 %v671, %v669
      %v688 = vpack.c.b16 %v672, %v670
      %705 = vmatprep.subr.bf16.mxu0 %v688
      %706 = vmatpush1.bf16.msra.mxu0 %v687
      %707 = vmatprep.subr.bf16.mxu0 %v686
      %708 = vmatpush1.bf16.msra.mxu0 %v685
      %709 = vmatprep.subr.bf16.mxu0 %v684
      %710 = vmatpush1.bf16.msra.mxu0 %v683
      %711 = vmatprep.subr.bf16.mxu0 %v682
      %712 = vmatpush1.bf16.msra.mxu0 %v681
      %713 = vmatprep.subr.bf16.mxu0 %v680
      %714 = vmatpush1.bf16.msra.mxu0 %v679
      %715 = vmatprep.subr.bf16.mxu0 %v678
      %716 = vmatpush1.bf16.msra.mxu0 %v677
      %717 = vmatprep.subr.bf16.mxu0 %v676
      %718 = vmatpush1.bf16.msra.mxu0 %v675
      %719 = vmatprep.subr.bf16.mxu0 %v674
      %720 = vmatpush1.bf16.msra.mxu0 %v673
      %721 = vmatprep.subr.bf16.mxu0 0
      %722 = vmatpush2.bf16.msra.mxu0 0
      %723 = vmatprep.subr.bf16.mxu0 0
      %724 = vmatpush2.bf16.msra.mxu0 0
      %725 = vmatprep.subr.bf16.mxu0 0
      %726 = vmatpush2.bf16.msra.mxu0 0
      %727 = vmatprep.subr.bf16.mxu0 0
      %728 = vmatpush2.bf16.msra.mxu0 0
      %729 = vmatprep.subr.bf16.mxu0 0
      %730 = vmatpush2.bf16.msra.mxu0 0
      %731 = vmatprep.subr.bf16.mxu0 0
      %732 = vmatpush2.bf16.msra.mxu0 0
      %733 = vmatprep.subr.bf16.mxu0 0
      %734 = vmatpush2.bf16.msra.mxu0 0
      %735 = vmatprep.subr.bf16.mxu0 0
      %736 = vmatpush2.bf16.msra.mxu0 0
      %737 = vmatprep.mubr.bf16.mxu0 0
      %738 = vmatmul.mubr.bf16.gmra.mxu0 %v596
      %v739 = vpop.f32.mrf.mxu0
      %v740 = vadd.f32 %v618, %v739
      %v741 = vpop.f32.mrf.mxu0
      %v742 = vadd.f32 %v622, %v741
      %v743 = vpop.f32.mrf.mxu0
      %v744 = vadd.f32 %v618, %v743
      %v745 = vpop.f32.mrf.mxu0
      %v746 = vadd.f32 %v622, %v745
      %747 = vdwg.mxu0
      %v748 = vmul.f32 %v740, 0.5
      %v749 = vmul.f32 %v742, 0.5
      %v750 = vmul.f32 %v744, 0.5
      %v751 = vmul.f32 %v746, 0.5
      %v752 = vmul.f32 %v740, 0.044715
      %v753 = vmul.f32 %v742, 0.044715
      %v754 = vmul.f32 %v744, 0.044715
      %v755 = vmul.f32 %v746, 0.044715
      %v756 = vmul.f32 %v752, %v740
      %v757 = vmul.f32 %v753, %v742
      %v758 = vmul.f32 %v754, %v744
      %v759 = vmul.f32 %v755, %v746
      %v760 = vmul.f32 %v756, %v740
      %v761 = vmul.f32 %v757, %v742
      %v762 = vmul.f32 %v758, %v744
      %v763 = vmul.f32 %v759, %v746
      %v764 = vadd.f32 %v740, %v760
      %v765 = vadd.f32 %v742, %v761
      %v766 = vadd.f32 %v744, %v762
      %v767 = vadd.f32 %v746, %v763
      %v768 = vmul.f32 %v764, 0.7978846
      %v769 = vmul.f32 %v765, 0.7978846
      %v770 = vmul.f32 %v766, 0.7978846
      %v771 = vmul.f32 %v767, 0.7978846
      %v772 = vtanh.pop %v768
      %v773 = vtanh.pop %v769
      %v774 = vtanh.pop %v770
      %v775 = vtanh.pop %v771
      %v776 = vadd.f32 %v772, 1.0
      %v777 = vadd.f32 %v773, 1.0
      %v778 = vadd.f32 %v774, 1.0
      %v779 = vadd.f32 %v775, 1.0
      %v780 = vmul.f32 %v748, %v776
      %v781 = vmul.f32 %v749, %v777
      %v782 = vmul.f32 %v750, %v778
      %v783 = vmul.f32 %v751, %v779
      %v784 = vld [vmem:[%s5] sm:$0x3]
      %v786 = vlaneseq
      %v787 = vshrl.u32 %v786, 7
      %v788 = vsub.s32 0, %v787
      %v789 = vrot.slane %v784, %v788
      %v790 = vlaneseq
      %v791 = vshrl.u32 %v790, 7
      %v792 = vsub.s32 1, %v791
      %v793 = vrot.slane %v784, %v792
      %v796 = vmul.f32 %v780, %v789
      %v797 = vmul.f32 %v781, %v793
      %v798 = vmul.f32 %v782, %v789
      %v799 = vmul.f32 %v783, %v793
      %v800 = vld [vmem:[%s6] sm:$0x3]
      %v802 = vlaneseq
      %v803 = vshrl.u32 %v802, 7
      %v804 = vsub.s32 0, %v803
      %v805 = vrot.slane %v800, %v804
      %v806 = vlaneseq
      %v807 = vshrl.u32 %v806, 7
      %v808 = vsub.s32 1, %v807
      %v809 = vrot.slane %v800, %v808
      %v812 = vadd.f32 %v796, %v805
      %v813 = vadd.f32 %v797, %v809
      %v814 = vadd.f32 %v798, %v805
      %v815 = vadd.f32 %v799, %v809
      %v816 = vmul.f32 %v812, 0.5
      %v817 = vmul.f32 %v813, 0.5
      %v818 = vmul.f32 %v814, 0.5
      %v819 = vmul.f32 %v815, 0.5
      %v820 = vmul.f32 %v812, 0.044715
      %v821 = vmul.f32 %v813, 0.044715
      %v822 = vmul.f32 %v814, 0.044715
      %v823 = vmul.f32 %v815, 0.044715
      %v824 = vmul.f32 %v820, %v812
      %v825 = vmul.f32 %v821, %v813
      %v826 = vmul.f32 %v822, %v814
      %v827 = vmul.f32 %v823, %v815
      %v828 = vmul.f32 %v824, %v812
      %v829 = vmul.f32 %v825, %v813
      %v830 = vmul.f32 %v826, %v814
      %v831 = vmul.f32 %v827, %v815
      %v832 = vadd.f32 %v812, %v828
      %v833 = vadd.f32 %v813, %v829
      %v834 = vadd.f32 %v814, %v830
      %v835 = vadd.f32 %v815, %v831
      %v836 = vmul.f32 %v832, 0.7978846
      %v837 = vmul.f32 %v833, 0.7978846
      %v838 = vmul.f32 %v834, 0.7978846
      %v839 = vmul.f32 %v835, 0.7978846
      %v840 = vtanh.pop %v836
      %v841 = vtanh.pop %v837
      %v842 = vtanh.pop %v838
      %v843 = vtanh.pop %v839
      %v844 = vadd.f32 %v840, 1.0
      %v845 = vadd.f32 %v841, 1.0
      %v846 = vadd.f32 %v842, 1.0
      %v847 = vadd.f32 %v843, 1.0
      %v848 = vmul.f32 %v816, %v844
      %v849 = vmul.f32 %v817, %v845
      %v850 = vmul.f32 %v818, %v846
      %v851 = vmul.f32 %v819, %v847
      %v852 = vpack.c.bf16 %v850, %v848
      %v853 = vpack.c.bf16 %v851, %v849
      %v854 = vld [vmem:[%s7] sm:$0xf]
      %v855 = vld [vmem:[%s7 + $0x4] sm:$0xf]
      %v856 = vld [vmem:[%s7 + $0x8] sm:$0xf]
      %v857 = vld [vmem:[%s7 + $0xc] sm:$0xf]
      %v858 = vld [vmem:[%s7 + $0x10] sm:$0xf]
      %v859 = vld [vmem:[%s7 + $0x14] sm:$0xf]
      %v860 = vld [vmem:[%s7 + $0x18] sm:$0xf]
      %v861 = vld [vmem:[%s7 + $0x1c] sm:$0xf]
      %v862 = vld [vmem:[%s7 + $0x20] sm:$0xf]
      %v863 = vld [vmem:[%s7 + $0x24] sm:$0xf]
      %v864 = vld [vmem:[%s7 + $0x28] sm:$0xf]
      %v865 = vld [vmem:[%s7 + $0x2c] sm:$0xf]
      %v866 = vld [vmem:[%s7 + $0x30] sm:$0xf]
      %v867 = vld [vmem:[%s7 + $0x34] sm:$0xf]
      %v868 = vld [vmem:[%s7 + $0x38] sm:$0xf]
      %v869 = vld [vmem:[%s7 + $0x3c] sm:$0xf]
      %v870 = vld [vmem:[%s7 + $0x40] sm:$0xf]
      %v871 = vld [vmem:[%s7 + $0x44] sm:$0xf]
      %v872 = vld [vmem:[%s7 + $0x48] sm:$0xf]
      %v873 = vld [vmem:[%s7 + $0x4c] sm:$0xf]
      %v874 = vld [vmem:[%s7 + $0x50] sm:$0xf]
      %v875 = vld [vmem:[%s7 + $0x54] sm:$0xf]
      %v876 = vld [vmem:[%s7 + $0x58] sm:$0xf]
      %v877 = vld [vmem:[%s7 + $0x5c] sm:$0xf]
      %v878 = vld [vmem:[%s7 + $0x60] sm:$0xf]
      %v879 = vld [vmem:[%s7 + $0x64] sm:$0xf]
      %v880 = vld [vmem:[%s7 + $0x68] sm:$0xf]
      %v881 = vld [vmem:[%s7 + $0x6c] sm:$0xf]
      %v882 = vld [vmem:[%s7 + $0x70] sm:$0xf]
      %v883 = vld [vmem:[%s7 + $0x74] sm:$0xf]
      %v884 = vld [vmem:[%s7 + $0x78] sm:$0xf]
      %v885 = vld [vmem:[%s7 + $0x7c] sm:$0xf]
      %v918 = vunpack.c.l.b16 %v854
      %v919 = vunpack.c.l.b16 %v855
      %v920 = vunpack.c.l.b16 %v856
      %v921 = vunpack.c.l.b16 %v857
      %v922 = vunpack.c.l.b16 %v858
      %v923 = vunpack.c.l.b16 %v859
      %v924 = vunpack.c.l.b16 %v860
      %v925 = vunpack.c.l.b16 %v861
      %v926 = vunpack.c.l.b16 %v862
      %v927 = vunpack.c.l.b16 %v863
      %v928 = vunpack.c.l.b16 %v864
      %v929 = vunpack.c.l.b16 %v865
      %v930 = vunpack.c.l.b16 %v866
      %v931 = vunpack.c.l.b16 %v867
      %v932 = vunpack.c.l.b16 %v868
      %v933 = vunpack.c.l.b16 %v869
      %v934 = vunpack.c.l.b16 %v870
      %v935 = vunpack.c.l.b16 %v871
      %v936 = vunpack.c.l.b16 %v872
      %v937 = vunpack.c.l.b16 %v873
      %v938 = vunpack.c.l.b16 %v874
      %v939 = vunpack.c.l.b16 %v875
      %v940 = vunpack.c.l.b16 %v876
      %v941 = vunpack.c.l.b16 %v877
      %v942 = vunpack.c.l.b16 %v878
      %v943 = vunpack.c.l.b16 %v879
      %v944 = vunpack.c.l.b16 %v880
      %v945 = vunpack.c.l.b16 %v881
      %v946 = vunpack.c.l.b16 %v882
      %v947 = vunpack.c.l.b16 %v883
      %v948 = vunpack.c.l.b16 %v884
      %v949 = vunpack.c.l.b16 %v885
      %v950 = vpack.c.b16 %v919, %v918
      %v951 = vpack.c.b16 %v921, %v920
      %v952 = vpack.c.b16 %v923, %v922
      %v953 = vpack.c.b16 %v925, %v924
      %v954 = vpack.c.b16 %v927, %v926
      %v955 = vpack.c.b16 %v929, %v928
      %v956 = vpack.c.b16 %v931, %v930
      %v957 = vpack.c.b16 %v933, %v932
      %v958 = vpack.c.b16 %v935, %v934
      %v959 = vpack.c.b16 %v937, %v936
      %v960 = vpack.c.b16 %v939, %v938
      %v961 = vpack.c.b16 %v941, %v940
      %v962 = vpack.c.b16 %v943, %v942
      %v963 = vpack.c.b16 %v945, %v944
      %v964 = vpack.c.b16 %v947, %v946
      %v965 = vpack.c.b16 %v949, %v948
      %982 = vmatprep.subr.bf16.mxu0 0
      %983 = vmatpush1.bf16.msra.mxu0 %v957
      %984 = vmatprep.subr.bf16.mxu0 0
      %985 = vmatpush1.bf16.msra.mxu0 %v956
      %986 = vmatprep.subr.bf16.mxu0 0
      %987 = vmatpush1.bf16.msra.mxu0 %v955
      %988 = vmatprep.subr.bf16.mxu0 0
      %989 = vmatpush1.bf16.msra.mxu0 %v954
      %990 = vmatprep.subr.bf16.mxu0 0
      %991 = vmatpush1.bf16.msra.mxu0 %v953
      %992 = vmatprep.subr.bf16.mxu0 0
      %993 = vmatpush1.bf16.msra.mxu0 %v952
      %994 = vmatprep.subr.bf16.mxu0 0
      %995 = vmatpush1.bf16.msra.mxu0 %v951
      %996 = vmatprep.subr.bf16.mxu0 0
      %997 = vmatpush1.bf16.msra.mxu0 %v950
      %998 = vmatprep.subr.bf16.mxu0 0
      %999 = vmatpush2.bf16.msra.mxu0 %v965
      %1000 = vmatprep.subr.bf16.mxu0 0
      %1001 = vmatpush2.bf16.msra.mxu0 %v964
      %1002 = vmatprep.subr.bf16.mxu0 0
      %1003 = vmatpush2.bf16.msra.mxu0 %v963
      %1004 = vmatprep.subr.bf16.mxu0 0
      %1005 = vmatpush2.bf16.msra.mxu0 %v962
      %1006 = vmatprep.subr.bf16.mxu0 0
      %1007 = vmatpush2.bf16.msra.mxu0 %v961
      %1008 = vmatprep.subr.bf16.mxu0 0
      %1009 = vmatpush2.bf16.msra.mxu0 %v960
      %1010 = vmatprep.subr.bf16.mxu0 0
      %1011 = vmatpush2.bf16.msra.mxu0 %v959
      %1012 = vmatprep.subr.bf16.mxu0 0
      %1013 = vmatpush2.bf16.msra.mxu0 %v958
      %1014 = vmatprep.mubr.bf16.mxu0 %v853
      %1015 = vmatmul.mubr.bf16.gmra.mxu0 %v852
      %v1016 = vpop.f32.mrf.mxu0
      %v1017 = vadd.f32 0.0, %v1016
      %v1018 = vpop.f32.mrf.mxu0
      %v1019 = vpop.f32.mrf.mxu0
      %v1020 = vadd.f32 0.0, %v1019
      %v1021 = vpop.f32.mrf.mxu0
      %1022 = vdwg.mxu0
      %v1023 = vadd.f32 %v553, %v1017
      %v1024 = vadd.f32 %v554, %v1020
      %v1025 = vld [vmem:[%s8] sm:$0x1]
      %v1027 = vlaneseq
      %v1028 = vshrl.u32 %v1027, 7
      %v1029 = vsub.s32 0, %v1028
      %v1030 = vrot.slane %v1025, %v1029
      %v1032 = vadd.f32 %v1023, %v1030
      %v1033 = vadd.f32 %v1024, %v1030
      %v1034 = vld [vmem:[%s9] sm:$0x1]
      %v1035 = vld [vmem:[%s10] sm:$0x1]
      %1036 = vadd.xlane.f32.xlu0 %v1032
      %v1037 = vpop.xlane.xlu0 %1036
      %1038 = vadd.xlane.f32.xlu0 %v1033
      %v1039 = vpop.xlane.xlu0 %1038
      %v1040 = vmul.f32 %v1037, %v561
      %v1041 = vmul.f32 %v1039, %v561
      %v1042 = vsub.f32 %v1032, %v1040
      %v1043 = vsub.f32 %v1033, %v1041
      %v1044 = vmul.f32 %v1042, %v1042
      %v1045 = vmul.f32 %v1043, %v1043
      %1046 = vadd.xlane.f32.xlu0 %v1044
      %v1047 = vpop.xlane.xlu0 %1046
      %1048 = vadd.xlane.f32.xlu0 %v1045
      %v1049 = vpop.xlane.xlu0 %1048
      %v1050 = vmul.f32 %v1047, %v561
      %v1051 = vmul.f32 %v1049, %v561
      %v1052 = vadd.f32 %v1050, 1e-05
      %v1053 = vadd.f32 %v1051, 1e-05
      %v1054 = vrsqrt.pop %v1052
      %v1055 = vrsqrt.pop %v1053
      %v1056 = vmul.f32 %v1042, %v1054
      %v1057 = vmul.f32 %v1043, %v1055
      %v1059 = vlaneseq
      %v1060 = vshrl.u32 %v1059, 7
      %v1061 = vsub.s32 0, %v1060
      %v1062 = vrot.slane %v1034, %v1061
      %v1064 = vmul.f32 %v1056, %v1062
      %v1065 = vmul.f32 %v1057, %v1062
      %v1067 = vlaneseq
      %v1068 = vshrl.u32 %v1067, 7
      %v1069 = vsub.s32 0, %v1068
      %v1070 = vrot.slane %v1035, %v1069
      %v1072 = vadd.f32 %v1064, %v1070
      %v1073 = vadd.f32 %v1065, %v1070
      %v1074 = vpack.c.bf16 %v1073, %v1072
      %v1075 = vld [vmem:[%s11] sm:$0xff]
      %v1076 = vld [vmem:[%s11 + $0x8] sm:$0xff]
      %v1077 = vld [vmem:[%s11 + $0x10] sm:$0xff]
      %v1078 = vld [vmem:[%s11 + $0x18] sm:$0xff]
      %v1079 = vld [vmem:[%s11 + $0x20] sm:$0xff]
      %v1080 = vld [vmem:[%s11 + $0x28] sm:$0xff]
      %v1081 = vld [vmem:[%s11 + $0x30] sm:$0xff]
      %v1082 = vld [vmem:[%s11 + $0x38] sm:$0xff]
      %v1083 = vld [vmem:[%s11 + $0x40] sm:$0xff]
      %v1084 = vld [vmem:[%s11 + $0x48] sm:$0xff]
      %v1085 = vld [vmem:[%s11 + $0x50] sm:$0xff]
      %v1086 = vld [vmem:[%s11 + $0x58] sm:$0xff]
      %v1087 = vld [vmem:[%s11 + $0x60] sm:$0xff]
      %v1088 = vld [vmem:[%s11 + $0x68] sm:$0xff]
      %v1089 = vld [vmem:[%s11 + $0x70] sm:$0xff]
      %v1090 = vld [vmem:[%s11 + $0x78] sm:$0xff]
      %v1091 = vld [vmem:[%s12] sm:$0x3]
      %v1093 = vlaneseq
      %v1094 = vshrl.u32 %v1093, 7
      %v1095 = vsub.s32 0, %v1094
      %v1096 = vrot.slane %v1091, %v1095
      %v1097 = vlaneseq
      %v1098 = vshrl.u32 %v1097, 7
      %v1099 = vsub.s32 1, %v1098
      %v1100 = vrot.slane %v1091, %v1099
      %v1119 = vunpack.c.l.b16 %v1075
      %v1120 = vunpack.c.h.b16 %v1075
      %v1121 = vunpack.c.l.b16 %v1076
      %v1122 = vunpack.c.h.b16 %v1076
      %v1123 = vunpack.c.l.b16 %v1077
      %v1124 = vunpack.c.h.b16 %v1077
      %v1125 = vunpack.c.l.b16 %v1078
      %v1126 = vunpack.c.h.b16 %v1078
      %v1127 = vunpack.c.l.b16 %v1079
      %v1128 = vunpack.c.h.b16 %v1079
      %v1129 = vunpack.c.l.b16 %v1080
      %v1130 = vunpack.c.h.b16 %v1080
      %v1131 = vunpack.c.l.b16 %v1081
      %v1132 = vunpack.c.h.b16 %v1081
      %v1133 = vunpack.c.l.b16 %v1082
      %v1134 = vunpack.c.h.b16 %v1082
      %v1135 = vunpack.c.l.b16 %v1083
      %v1136 = vunpack.c.h.b16 %v1083
      %v1137 = vunpack.c.l.b16 %v1084
      %v1138 = vunpack.c.h.b16 %v1084
      %v1139 = vunpack.c.l.b16 %v1085
      %v1140 = vunpack.c.h.b16 %v1085
      %v1141 = vunpack.c.l.b16 %v1086
      %v1142 = vunpack.c.h.b16 %v1086
      %v1143 = vunpack.c.l.b16 %v1087
      %v1144 = vunpack.c.h.b16 %v1087
      %v1145 = vunpack.c.l.b16 %v1088
      %v1146 = vunpack.c.h.b16 %v1088
      %v1147 = vunpack.c.l.b16 %v1089
      %v1148 = vunpack.c.h.b16 %v1089
      %v1149 = vunpack.c.l.b16 %v1090
      %v1150 = vunpack.c.h.b16 %v1090
      %v1151 = vpack.c.b16 %v1121, %v1119
      %v1152 = vpack.c.b16 %v1122, %v1120
      %v1153 = vpack.c.b16 %v1125, %v1123
      %v1154 = vpack.c.b16 %v1126, %v1124
      %v1155 = vpack.c.b16 %v1129, %v1127
      %v1156 = vpack.c.b16 %v1130, %v1128
      %v1157 = vpack.c.b16 %v1133, %v1131
      %v1158 = vpack.c.b16 %v1134, %v1132
      %v1159 = vpack.c.b16 %v1137, %v1135
      %v1160 = vpack.c.b16 %v1138, %v1136
      %v1161 = vpack.c.b16 %v1141, %v1139
      %v1162 = vpack.c.b16 %v1142, %v1140
      %v1163 = vpack.c.b16 %v1145, %v1143
      %v1164 = vpack.c.b16 %v1146, %v1144
      %v1165 = vpack.c.b16 %v1149, %v1147
      %v1166 = vpack.c.b16 %v1150, %v1148
      %1183 = vmatprep.subr.bf16.mxu0 %v1166
      %1184 = vmatpush1.bf16.msra.mxu0 %v1165
      %1185 = vmatprep.subr.bf16.mxu0 %v1164
      %1186 = vmatpush1.bf16.msra.mxu0 %v1163
      %1187 = vmatprep.subr.bf16.mxu0 %v1162
      %1188 = vmatpush1.bf16.msra.mxu0 %v1161
      %1189 = vmatprep.subr.bf16.mxu0 %v1160
      %1190 = vmatpush1.bf16.msra.mxu0 %v1159
      %1191 = vmatprep.subr.bf16.mxu0 %v1158
      %1192 = vmatpush1.bf16.msra.mxu0 %v1157
      %1193 = vmatprep.subr.bf16.mxu0 %v1156
      %1194 = vmatpush1.bf16.msra.mxu0 %v1155
      %1195 = vmatprep.subr.bf16.mxu0 %v1154
      %1196 = vmatpush1.bf16.msra.mxu0 %v1153
      %1197 = vmatprep.subr.bf16.mxu0 %v1152
      %1198 = vmatpush1.bf16.msra.mxu0 %v1151
      %1199 = vmatprep.subr.bf16.mxu0 0
      %1200 = vmatpush2.bf16.msra.mxu0 0
      %1201 = vmatprep.subr.bf16.mxu0 0
      %1202 = vmatpush2.bf16.msra.mxu0 0
      %1203 = vmatprep.subr.bf16.mxu0 0
      %1204 = vmatpush2.bf16.msra.mxu0 0
      %1205 = vmatprep.subr.bf16.mxu0 0
      %1206 = vmatpush2.bf16.msra.mxu0 0
      %1207 = vmatprep.subr.bf16.mxu0 0
      %1208 = vmatpush2.bf16.msra.mxu0 0
      %1209 = vmatprep.subr.bf16.mxu0 0
      %1210 = vmatpush2.bf16.msra.mxu0 0
      %1211 = vmatprep.subr.bf16.mxu0 0
      %1212 = vmatpush2.bf16.msra.mxu0 0
      %1213 = vmatprep.subr.bf16.mxu0 0
      %1214 = vmatpush2.bf16.msra.mxu0 0
      %1215 = vmatprep.mubr.bf16.mxu0 0
      %1216 = vmatmul.mubr.bf16.gmra.mxu0 %v1074
      %v1217 = vpop.f32.mrf.mxu0
      %v1218 = vadd.f32 %v1096, %v1217
      %v1219 = vpop.f32.mrf.mxu0
      %v1220 = vadd.f32 %v1100, %v1219
      %v1221 = vpop.f32.mrf.mxu0
      %v1222 = vadd.f32 %v1096, %v1221
      %v1223 = vpop.f32.mrf.mxu0
      %v1224 = vadd.f32 %v1100, %v1223
      %1225 = vdwg.mxu0
      %v1226 = vmul.f32 %v1218, 0.5
      %v1227 = vmul.f32 %v1220, 0.5
      %v1228 = vmul.f32 %v1222, 0.5
      %v1229 = vmul.f32 %v1224, 0.5
      %v1230 = vmul.f32 %v1218, 0.044715
      %v1231 = vmul.f32 %v1220, 0.044715
      %v1232 = vmul.f32 %v1222, 0.044715
      %v1233 = vmul.f32 %v1224, 0.044715
      %v1234 = vmul.f32 %v1230, %v1218
      %v1235 = vmul.f32 %v1231, %v1220
      %v1236 = vmul.f32 %v1232, %v1222
      %v1237 = vmul.f32 %v1233, %v1224
      %v1238 = vmul.f32 %v1234, %v1218
      %v1239 = vmul.f32 %v1235, %v1220
      %v1240 = vmul.f32 %v1236, %v1222
      %v1241 = vmul.f32 %v1237, %v1224
      %v1242 = vadd.f32 %v1218, %v1238
      %v1243 = vadd.f32 %v1220, %v1239
      %v1244 = vadd.f32 %v1222, %v1240
      %v1245 = vadd.f32 %v1224, %v1241
      %v1246 = vmul.f32 %v1242, 0.7978846
      %v1247 = vmul.f32 %v1243, 0.7978846
      %v1248 = vmul.f32 %v1244, 0.7978846
      %v1249 = vmul.f32 %v1245, 0.7978846
      %v1250 = vtanh.pop %v1246
      %v1251 = vtanh.pop %v1247
      %v1252 = vtanh.pop %v1248
      %v1253 = vtanh.pop %v1249
      %v1254 = vadd.f32 %v1250, 1.0
      %v1255 = vadd.f32 %v1251, 1.0
      %v1256 = vadd.f32 %v1252, 1.0
      %v1257 = vadd.f32 %v1253, 1.0
      %v1258 = vmul.f32 %v1226, %v1254
      %v1259 = vmul.f32 %v1227, %v1255
      %v1260 = vmul.f32 %v1228, %v1256
      %v1261 = vmul.f32 %v1229, %v1257
      %v1262 = vpack.c.bf16 %v1260, %v1258
      %v1263 = vpack.c.bf16 %v1261, %v1259
      %v1264 = vld [vmem:[%s13] sm:$0xf]
      %v1265 = vld [vmem:[%s13 + $0x4] sm:$0xf]
      %v1266 = vld [vmem:[%s13 + $0x8] sm:$0xf]
      %v1267 = vld [vmem:[%s13 + $0xc] sm:$0xf]
      %v1268 = vld [vmem:[%s13 + $0x10] sm:$0xf]
      %v1269 = vld [vmem:[%s13 + $0x14] sm:$0xf]
      %v1270 = vld [vmem:[%s13 + $0x18] sm:$0xf]
      %v1271 = vld [vmem:[%s13 + $0x1c] sm:$0xf]
      %v1272 = vld [vmem:[%s13 + $0x20] sm:$0xf]
      %v1273 = vld [vmem:[%s13 + $0x24] sm:$0xf]
      %v1274 = vld [vmem:[%s13 + $0x28] sm:$0xf]
      %v1275 = vld [vmem:[%s13 + $0x2c] sm:$0xf]
      %v1276 = vld [vmem:[%s13 + $0x30] sm:$0xf]
      %v1277 = vld [vmem:[%s13 + $0x34] sm:$0xf]
      %v1278 = vld [vmem:[%s13 + $0x38] sm:$0xf]
      %v1279 = vld [vmem:[%s13 + $0x3c] sm:$0xf]
      %v1280 = vld [vmem:[%s13 + $0x40] sm:$0xf]
      %v1281 = vld [vmem:[%s13 + $0x44] sm:$0xf]
      %v1282 = vld [vmem:[%s13 + $0x48] sm:$0xf]
      %v1283 = vld [vmem:[%s13 + $0x4c] sm:$0xf]
      %v1284 = vld [vmem:[%s13 + $0x50] sm:$0xf]
      %v1285 = vld [vmem:[%s13 + $0x54] sm:$0xf]
      %v1286 = vld [vmem:[%s13 + $0x58] sm:$0xf]
      %v1287 = vld [vmem:[%s13 + $0x5c] sm:$0xf]
      %v1288 = vld [vmem:[%s13 + $0x60] sm:$0xf]
      %v1289 = vld [vmem:[%s13 + $0x64] sm:$0xf]
      %v1290 = vld [vmem:[%s13 + $0x68] sm:$0xf]
      %v1291 = vld [vmem:[%s13 + $0x6c] sm:$0xf]
      %v1292 = vld [vmem:[%s13 + $0x70] sm:$0xf]
      %v1293 = vld [vmem:[%s13 + $0x74] sm:$0xf]
      %v1294 = vld [vmem:[%s13 + $0x78] sm:$0xf]
      %v1295 = vld [vmem:[%s13 + $0x7c] sm:$0xf]
      %v1296 = vld [vmem:[%s14] sm:$0x1]
      %v1298 = vlaneseq
      %v1299 = vshrl.u32 %v1298, 7
      %v1300 = vsub.s32 0, %v1299
      %v1301 = vrot.slane %v1296, %v1300
      %v1335 = vunpack.c.l.b16 %v1264
      %v1336 = vunpack.c.l.b16 %v1265
      %v1337 = vunpack.c.l.b16 %v1266
      %v1338 = vunpack.c.l.b16 %v1267
      %v1339 = vunpack.c.l.b16 %v1268
      %v1340 = vunpack.c.l.b16 %v1269
      %v1341 = vunpack.c.l.b16 %v1270
      %v1342 = vunpack.c.l.b16 %v1271
      %v1343 = vunpack.c.l.b16 %v1272
      %v1344 = vunpack.c.l.b16 %v1273
      %v1345 = vunpack.c.l.b16 %v1274
      %v1346 = vunpack.c.l.b16 %v1275
      %v1347 = vunpack.c.l.b16 %v1276
      %v1348 = vunpack.c.l.b16 %v1277
      %v1349 = vunpack.c.l.b16 %v1278
      %v1350 = vunpack.c.l.b16 %v1279
      %v1351 = vunpack.c.l.b16 %v1280
      %v1352 = vunpack.c.l.b16 %v1281
      %v1353 = vunpack.c.l.b16 %v1282
      %v1354 = vunpack.c.l.b16 %v1283
      %v1355 = vunpack.c.l.b16 %v1284
      %v1356 = vunpack.c.l.b16 %v1285
      %v1357 = vunpack.c.l.b16 %v1286
      %v1358 = vunpack.c.l.b16 %v1287
      %v1359 = vunpack.c.l.b16 %v1288
      %v1360 = vunpack.c.l.b16 %v1289
      %v1361 = vunpack.c.l.b16 %v1290
      %v1362 = vunpack.c.l.b16 %v1291
      %v1363 = vunpack.c.l.b16 %v1292
      %v1364 = vunpack.c.l.b16 %v1293
      %v1365 = vunpack.c.l.b16 %v1294
      %v1366 = vunpack.c.l.b16 %v1295
      %v1367 = vpack.c.b16 %v1336, %v1335
      %v1368 = vpack.c.b16 %v1338, %v1337
      %v1369 = vpack.c.b16 %v1340, %v1339
      %v1370 = vpack.c.b16 %v1342, %v1341
      %v1371 = vpack.c.b16 %v1344, %v1343
      %v1372 = vpack.c.b16 %v1346, %v1345
      %v1373 = vpack.c.b16 %v1348, %v1347
      %v1374 = vpack.c.b16 %v1350, %v1349
      %v1375 = vpack.c.b16 %v1352, %v1351
      %v1376 = vpack.c.b16 %v1354, %v1353
      %v1377 = vpack.c.b16 %v1356, %v1355
      %v1378 = vpack.c.b16 %v1358, %v1357
      %v1379 = vpack.c.b16 %v1360, %v1359
      %v1380 = vpack.c.b16 %v1362, %v1361
      %v1381 = vpack.c.b16 %v1364, %v1363
      %v1382 = vpack.c.b16 %v1366, %v1365
      %1399 = vmatprep.subr.bf16.mxu0 0
      %1400 = vmatpush1.bf16.msra.mxu0 %v1374
      %1401 = vmatprep.subr.bf16.mxu0 0
      %1402 = vmatpush1.bf16.msra.mxu0 %v1373
      %1403 = vmatprep.subr.bf16.mxu0 0
      %1404 = vmatpush1.bf16.msra.mxu0 %v1372
      %1405 = vmatprep.subr.bf16.mxu0 0
      %1406 = vmatpush1.bf16.msra.mxu0 %v1371
      %1407 = vmatprep.subr.bf16.mxu0 0
      %1408 = vmatpush1.bf16.msra.mxu0 %v1370
      %1409 = vmatprep.subr.bf16.mxu0 0
      %1410 = vmatpush1.bf16.msra.mxu0 %v1369
      %1411 = vmatprep.subr.bf16.mxu0 0
      %1412 = vmatpush1.bf16.msra.mxu0 %v1368
      %1413 = vmatprep.subr.bf16.mxu0 0
      %1414 = vmatpush1.bf16.msra.mxu0 %v1367
      %1415 = vmatprep.subr.bf16.mxu0 0
      %1416 = vmatpush2.bf16.msra.mxu0 %v1382
      %1417 = vmatprep.subr.bf16.mxu0 0
      %1418 = vmatpush2.bf16.msra.mxu0 %v1381
      %1419 = vmatprep.subr.bf16.mxu0 0
      %1420 = vmatpush2.bf16.msra.mxu0 %v1380
      %1421 = vmatprep.subr.bf16.mxu0 0
      %1422 = vmatpush2.bf16.msra.mxu0 %v1379
      %1423 = vmatprep.subr.bf16.mxu0 0
      %1424 = vmatpush2.bf16.msra.mxu0 %v1378
      %1425 = vmatprep.subr.bf16.mxu0 0
      %1426 = vmatpush2.bf16.msra.mxu0 %v1377
      %1427 = vmatprep.subr.bf16.mxu0 0
      %1428 = vmatpush2.bf16.msra.mxu0 %v1376
      %1429 = vmatprep.subr.bf16.mxu0 0
      %1430 = vmatpush2.bf16.msra.mxu0 %v1375
      %1431 = vmatprep.mubr.bf16.mxu0 %v1263
      %1432 = vmatmul.mubr.bf16.gmra.mxu0 %v1262
      %v1433 = vpop.f32.mrf.mxu0
      %v1434 = vadd.f32 %v1301, %v1433
      %v1435 = vpop.f32.mrf.mxu0
      %v1436 = vpop.f32.mrf.mxu0
      %v1437 = vadd.f32 %v1301, %v1436
      %v1438 = vpop.f32.mrf.mxu0
      %1439 = vdwg.mxu0
      %v1440 = vmul.f32 %v1434, 0.5
      %v1441 = vmul.f32 %v1437, 0.5
      %v1442 = vadd.f32 %v1032, %v1440
      %v1443 = vadd.f32 %v1033, %v1441
      %v1444 = vld [vmem:[%s15] sm:$0x1]
      %v1445 = vld [vmem:[%s16] sm:$0x1]
      %1446 = vadd.xlane.f32.xlu0 %v1442
      %v1447 = vpop.xlane.xlu0 %1446
      %1448 = vadd.xlane.f32.xlu0 %v1443
      %v1449 = vpop.xlane.xlu0 %1448
      %v1450 = vmul.f32 %v1447, %v561
      %v1451 = vmul.f32 %v1449, %v561
      %v1452 = vsub.f32 %v1442, %v1450
      %v1453 = vsub.f32 %v1443, %v1451
      %v1454 = vmul.f32 %v1452, %v1452
      %v1455 = vmul.f32 %v1453, %v1453
      %1456 = vadd.xlane.f32.xlu0 %v1454
      %v1457 = vpop.xlane.xlu0 %1456
      %1458 = vadd.xlane.f32.xlu0 %v1455
      %v1459 = vpop.xlane.xlu0 %1458
      %v1460 = vmul.f32 %v1457, %v561
      %v1461 = vmul.f32 %v1459, %v561
      %v1462 = vadd.f32 %v1460, 1e-05
      %v1463 = vadd.f32 %v1461, 1e-05
      %v1464 = vrsqrt.pop %v1462
      %v1465 = vrsqrt.pop %v1463
      %v1466 = vmul.f32 %v1452, %v1464
      %v1467 = vmul.f32 %v1453, %v1465
      %v1469 = vlaneseq
      %v1470 = vshrl.u32 %v1469, 7
      %v1471 = vsub.s32 0, %v1470
      %v1472 = vrot.slane %v1444, %v1471
      %v1474 = vmul.f32 %v1466, %v1472
      %v1475 = vmul.f32 %v1467, %v1472
      %v1477 = vlaneseq
      %v1478 = vshrl.u32 %v1477, 7
      %v1479 = vsub.s32 0, %v1478
      %v1480 = vrot.slane %v1445, %v1479
      %v1482 = vadd.f32 %v1474, %v1480
      %v1483 = vadd.f32 %v1475, %v1480
      %1484 = vst [vmem:[%s550] sm:$0xff] %v1482
      %1485 = vst [vmem:[%s550 + $0x8] sm:$0xff] %v1483
      %s1486 = smul.u32 2, %s28
      %p1487 = scmp.lt.s32.totalorder %s1486, 3
      %s1488 = scalar_select %p1487, %s1486, 3
      %s1489 = smul.addr %s1488, 8
      %s1490 = scalar_lea.vmem %s17, %s1489
      // Predicated region
      $region89: #{contrastive_module.7} parent=87 // pred_check
        %p1491 = pneg %p408
      $region90: #{contrastive_module.7} parent=87 // pred_check_branch
        %1493 = sbr.rel (%p1491) target = $region92
      $region91: #{contrastive_module.7} parent=87 // pred_region
        %s1494 = smul.u32 2, %s28
      $region92: #{contrastive_module.7} parent=87 // pred_fallthru
        _
    $region88: #{contrastive_module.7} parent=5 // pred_fallthru
      _
    %p1495 = scmp.le.s32.totalorder 2, %s23
    // Predicated region
    $region93: #{contrastive_module.7} parent=5 // pred_check
      %p1496 = pneg %p1495
    $region94: #{contrastive_module.7} parent=5 // pred_check_branch
      %1498 = sbr.rel (%p1496) target = $region96
    $region95: #{contrastive_module.7} parent=5 // pred_region
      %s1499 = ssub.s32 %s23, 2
      // Predicated region
      $region97: #{contrastive_module.7} parent=95 // pred_check
        %p1500 = pneg %p414
      $region98: #{contrastive_module.7} parent=95 // pred_check_branch
        %1502 = sbr.rel (%p1500) target = $region100
      $region99: #{contrastive_module.7} parent=95 // pred_region
        %s1503 = smul.u32 2, %s29
        %p1504 = scmp.lt.s32.totalorder %s1503, 3
        %s1505 = scalar_select %p1504, %s1503, 3
        %s1506 = smul.addr %s1505, 8
        %s1507 = scalar_lea.vmem %s17, %s1506
      $region100: #{contrastive_module.7} parent=95 // pred_fallthru
        _
    $region96: #{contrastive_module.7} parent=5 // pred_fallthru
      _
  $region6: #{contrastive_module.7} parent=0 // loop_footer
    %s27 = sadd.s32 1, %s23
  $region7: #{contrastive_module.7} parent=0 // loop_footer_branch
    %22 = sbr.rel target = $region3
  $region8: #{contrastive_module.7} parent=0 // loop_exit
    _

// kernel: contrastive_module.6
$region0: #{contrastive_module.6}
  #allocation0 [shape = 'u32[]', space=smem, size = 0x4, offset = 0x4, fixed_abs, tag = 'smem constant byte address 0x4 - core index']
  #allocation1 [shape = 'u32[144,128]{1,0:T(1,128)}', space=vmem, size = 0x12000, scoped, tag = 'internal scratch']
  %s0 = inlined_call_operand.vmem [shape: f32[2,16,128], index: 0, kind: input, shape index: {}]
  %s1 = inlined_call_operand.vmem [shape: f32[16,128], index: 1, kind: input, shape index: {}]
  %s2 = inlined_call_operand.hbm [shape: f32[1,128], index: 2, kind: input, shape index: {}]
  %s3 = inlined_call_operand.hbm [shape: f32[1,128], index: 3, kind: input, shape index: {}]
  %s4 = inlined_call_operand.hbm [shape: bf16[128,256], index: 4, kind: input, shape index: {}]
  %s5 = inlined_call_operand.hbm [shape: f32[1,256], index: 5, kind: input, shape index: {}]
  %s6 = inlined_call_operand.hbm [shape: bf16[256,128], index: 6, kind: input, shape index: {}]
  %s7 = inlined_call_operand.hbm [shape: f32[1,128], index: 7, kind: input, shape index: {}]
  %s8 = inlined_call_operand.hbm [shape: f32[1,128], index: 8, kind: input, shape index: {}]
  %s9 = inlined_call_operand.hbm [shape: f32[1,128], index: 9, kind: input, shape index: {}]
  %s10 = inlined_call_operand.vmem [shape: bf16[128,384], index: 10, kind: input, shape index: {}]
  %s11 = inlined_call_operand.vmem [shape: f32[1,384], index: 11, kind: input, shape index: {}]
  %s12 = inlined_call_operand.hbm [shape: bf16[128,128], index: 12, kind: input, shape index: {}]
  %s13 = inlined_call_operand.hbm [shape: f32[1,128], index: 13, kind: input, shape index: {}]
  %s14 = inlined_call_operand.vmem [shape: f32[2,16,128], index: 14, kind: output, shape index: {}]
  %s15 = sld [smem:[#allocation0]]
  $region129: #{contrastive_module.6} parent=0
    _
  %s17 = ssub.s32 1, %s15
  %s18 = scalar_select 0, %s17, %s15
  $region1: #{contrastive_module.6} parent=0
    #allocation2 [shape = 'u8[512]{0}', space=vmem, size = 0x400, scoped, tag = 'input window, operand 2, single buffered']
    #allocation3 [shape = 's32[2]{0}', space=sflag, size = 0x8, scoped, tag = 'scoped memory for contrastive_module.6']
    #allocation4 [shape = 'u8[512]{0}', space=vmem, size = 0x400, scoped, tag = 'input window, operand 3, single buffered']
    #allocation5 [shape = 's32[1]{0}', space=sflag, size = 0x4, scoped, tag = 'scoped memory for contrastive_module.6']
    #allocation6 [shape = 'u8[65536]{0}', space=vmem, size = 0x10000, scoped, tag = 'input window, operand 4, single buffered']
    #allocation7 [shape = 'u8[1024]{0}', space=vmem, size = 0x400, scoped, tag = 'input window, operand 5, single buffered']
    #allocation8 [shape = 's32[1]{0}', space=sflag, size = 0x4, scoped, tag = 'scoped memory for contrastive_module.6']
    #allocation9 [shape = 'u8[65536]{0}', space=vmem, size = 0x10000, scoped, tag = 'input window, operand 6, single buffered']
    #allocation10 [shape = 'u8[512]{0}', space=vmem, size = 0x400, scoped, tag = 'input window, operand 7, single buffered']
    #allocation11 [shape = 's32[1]{0}', space=sflag, size = 0x4, scoped, tag = 'scoped memory for contrastive_module.6']
    #allocation12 [shape = 'u8[512]{0}', space=vmem, size = 0x400, scoped, tag = 'input window, operand 8, single buffered']
    #allocation13 [shape = 'u8[512]{0}', space=vmem, size = 0x400, scoped, tag = 'input window, operand 9, single buffered']
    #allocation14 [shape = 's32[1]{0}', space=sflag, size = 0x4, scoped, tag = 'scoped memory for contrastive_module.6']
    #allocation15 [shape = 'u8[32768]{0}', space=vmem, size = 0x8000, scoped, tag = 'input window, operand 12, single buffered']
    #allocation16 [shape = 'u8[512]{0}', space=vmem, size = 0x400, scoped, tag = 'input window, operand 13, single buffered']
    #allocation17 [shape = 's32[1]{0}', space=sflag, size = 0x4, scoped, tag = 'scoped memory for contrastive_module.6']
    %19 = vsyncpa [#allocation3], 0
    %20 = vsyncpa [#allocation5], 0
    %21 = vsyncpa [#allocation8], 0
    %22 = vsyncpa [#allocation11], 0
    %23 = vsyncpa [#allocation14], 0
    %24 = vsyncpa [#allocation17], 0
    loop: start=0, step=1, limit=4
    $region2: #{contrastive_module.6} parent=1 // loop_pre_header
      _
    $region3: #{contrastive_module.6} parent=1 // loop_header
      %s26 = sphi 0, %s30
      %p27 = scmp.ge.s32.totalorder %s26, 4
      %s36 = sphi 0, %s38
      %s39 = sphi 0, %s36
      %s40 = sphi 0, %s39
      %s56 = sphi 0, %s40
      %s60 = sphi 0, %s60
      %s62 = sphi 0, %s60
      %s63 = sphi 0, %s62
      %s77 = sphi 0, %s63
      %s81 = sphi 0, %s81
      %s83 = sphi 0, %s81
      %s84 = sphi 0, %s83
      %s98 = sphi 0, %s84
      %s102 = sphi 0, %s102
      %s104 = sphi 0, %s102
      %s105 = sphi 0, %s104
      %s119 = sphi 0, %s105
      %s123 = sphi 0, %s123
      %s125 = sphi 0, %s123
      %s126 = sphi 0, %s125
      %s140 = sphi 0, %s126
      %s144 = sphi 0, %s144
      %s146 = sphi 0, %s144
      %s147 = sphi 0, %s146
      %s161 = sphi 0, %s147
      %s165 = sphi 0, %s165
      %s167 = sphi 0, %s165
      %s168 = sphi 0, %s167
      %s182 = sphi 0, %s168
      %s186 = sphi 0, %s186
      %s188 = sphi 0, %s186
      %s189 = sphi 0, %s188
      %s203 = sphi 0, %s189
      %s207 = sphi 0, %s207
      %s209 = sphi 0, %s207
      %s210 = sphi 0, %s209
      %s224 = sphi 0, %s210
      %s228 = sphi 0, %s228
      %s230 = sphi 0, %s228
      %s231 = sphi 0, %s230
      %s245 = sphi 0, %s231
      %s249 = sphi 0, %s249
      %s251 = sphi 0, %s249
      %s252 = sphi 0, %s251
      %s266 = sphi 0, %s252
      %s270 = sphi 0, %s270
      %s272 = sphi 0, %s270
      %s273 = sphi 0, %s272
      %s287 = sphi 0, %s273
      %s291 = sphi 0, %s291
      %s293 = sphi 0, %s291
      %s294 = sphi 0, %s293
      %s308 = sphi 0, %s294
      %s312 = sphi 0, %s312
      %s314 = sphi 0, %s312
      %s315 = sphi 0, %s314
      %s329 = sphi 0, %s315
      %s335 = sphi 0, %s337
      %s338 = sphi 0, %s335
      %s339 = sphi 0, %s338
      %s355 = sphi 0, %s339
    $region4: #{contrastive_module.6} parent=1 // loop_header_branch
      %29 = sbr.rel (%p27) target = $region8
    $region5: #{contrastive_module.6} parent=1 // loop_body
      %s31 = ssub.s32 %s26, 1
      %s32 = ssub.s32 %s26, 2
      %s33 = sadd.s32 %s26, 1
      %s34 = ssub.s32 %s26, %s33
      %p35 = scmp.eq.s32.totalorder %s34, 0
      %s37 = sadd.s32 %s36, 1
      %s38 = scalar_select %p35, %s36, %s37
      %p41 = pneg %p35
      %p42 = scmp.eq.s32.totalorder %s26, 1
      %p43 = por %p41, %p42
      %p44 = scmp.ne.s32.totalorder %s36, %s39
      %p45 = scmp.eq.s32.totalorder %s26, 0
      %p46 = por %p44, %p45
      %p47 = scmp.ne.s32.totalorder %s36, %s39
      %p48 = scmp.eq.s32.totalorder %s31, 1
      %p49 = por %p47, %p48
      %p50 = scmp.ne.s32.totalorder %s39, %s40
      %p51 = scmp.eq.s32.totalorder %s31, 0
      %p52 = por %p50, %p51
      %p53 = scmp.ne.s32.totalorder %s39, %s40
      %p54 = scmp.eq.s32.totalorder %s32, 1
      %p55 = por %p53, %p54
      %p57 = scmp.ne.s32.totalorder %s40, %s56
      %p58 = scmp.eq.s32.totalorder %s32, 0
      %p59 = por %p57, %p58
      %s61 = sadd.s32 %s60, 1
      %p64 = scmp.eq.s32.totalorder %s26, 1
      %p65 = scmp.ne.s32.totalorder %s60, %s62
      %p66 = scmp.eq.s32.totalorder %s26, 0
      %p67 = por %p65, %p66
      %p68 = scmp.ne.s32.totalorder %s60, %s62
      %p69 = scmp.eq.s32.totalorder %s31, 1
      %p70 = por %p68, %p69
      %p71 = scmp.ne.s32.totalorder %s62, %s63
      %p72 = scmp.eq.s32.totalorder %s31, 0
      %p73 = por %p71, %p72
      %p74 = scmp.ne.s32.totalorder %s62, %s63
      %p75 = scmp.eq.s32.totalorder %s32, 1
      %p76 = por %p74, %p75
      %p78 = scmp.ne.s32.totalorder %s63, %s77
      %p79 = scmp.eq.s32.totalorder %s32, 0
      %p80 = por %p78, %p79
      %s82 = sadd.s32 %s81, 1
      %p85 = scmp.eq.s32.totalorder %s26, 1
      %p86 = scmp.ne.s32.totalorder %s81, %s83
      %p87 = scmp.eq.s32.totalorder %s26, 0
      %p88 = por %p86, %p87
      %p89 = scmp.ne.s32.totalorder %s81, %s83
      %p90 = scmp.eq.s32.totalorder %s31, 1
      %p91 = por %p89, %p90
      %p92 = scmp.ne.s32.totalorder %s83, %s84
      %p93 = scmp.eq.s32.totalorder %s31, 0
      %p94 = por %p92, %p93
      %p95 = scmp.ne.s32.totalorder %s83, %s84
      %p96 = scmp.eq.s32.totalorder %s32, 1
      %p97 = por %p95, %p96
      %p99 = scmp.ne.s32.totalorder %s84, %s98
      %p100 = scmp.eq.s32.totalorder %s32, 0
      %p101 = por %p99, %p100
      %s103 = sadd.s32 %s102, 1
      %p106 = scmp.eq.s32.totalorder %s26, 1
      %p107 = scmp.ne.s32.totalorder %s102, %s104
      %p108 = scmp.eq.s32.totalorder %s26, 0
      %p109 = por %p107, %p108
      %p110 = scmp.ne.s32.totalorder %s102, %s104
      %p111 = scmp.eq.s32.totalorder %s31, 1
      %p112 = por %p110, %p111
      %p113 = scmp.ne.s32.totalorder %s104, %s105
      %p114 = scmp.eq.s32.totalorder %s31, 0
      %p115 = por %p113, %p114
      %p116 = scmp.ne.s32.totalorder %s104, %s105
      %p117 = scmp.eq.s32.totalorder %s32, 1
      %p118 = por %p116, %p117
      %p120 = scmp.ne.s32.totalorder %s105, %s119
      %p121 = scmp.eq.s32.totalorder %s32, 0
      %p122 = por %p120, %p121
      %s124 = sadd.s32 %s123, 1
      %p127 = scmp.eq.s32.totalorder %s26, 1
      %p128 = scmp.ne.s32.totalorder %s123, %s125
      %p129 = scmp.eq.s32.totalorder %s26, 0
      %p130 = por %p128, %p129
      %p131 = scmp.ne.s32.totalorder %s123, %s125
      %p132 = scmp.eq.s32.totalorder %s31, 1
      %p133 = por %p131, %p132
      %p134 = scmp.ne.s32.totalorder %s125, %s126
      %p135 = scmp.eq.s32.totalorder %s31, 0
      %p136 = por %p134, %p135
      %p137 = scmp.ne.s32.totalorder %s125, %s126
      %p138 = scmp.eq.s32.totalorder %s32, 1
      %p139 = por %p137, %p138
      %p141 = scmp.ne.s32.totalorder %s126, %s140
      %p142 = scmp.eq.s32.totalorder %s32, 0
      %p143 = por %p141, %p142
      %s145 = sadd.s32 %s144, 1
      %p148 = scmp.eq.s32.totalorder %s26, 1
      %p149 = scmp.ne.s32.totalorder %s144, %s146
      %p150 = scmp.eq.s32.totalorder %s26, 0
      %p151 = por %p149, %p150
      %p152 = scmp.ne.s32.totalorder %s144, %s146
      %p153 = scmp.eq.s32.totalorder %s31, 1
      %p154 = por %p152, %p153
      %p155 = scmp.ne.s32.totalorder %s146, %s147
      %p156 = scmp.eq.s32.totalorder %s31, 0
      %p157 = por %p155, %p156
      %p158 = scmp.ne.s32.totalorder %s146, %s147
      %p159 = scmp.eq.s32.totalorder %s32, 1
      %p160 = por %p158, %p159
      %p162 = scmp.ne.s32.totalorder %s147, %s161
      %p163 = scmp.eq.s32.totalorder %s32, 0
      %p164 = por %p162, %p163
      %s166 = sadd.s32 %s165, 1
      %p169 = scmp.eq.s32.totalorder %s26, 1
      %p170 = scmp.ne.s32.totalorder %s165, %s167
      %p171 = scmp.eq.s32.totalorder %s26, 0
      %p172 = por %p170, %p171
      %p173 = scmp.ne.s32.totalorder %s165, %s167
      %p174 = scmp.eq.s32.totalorder %s31, 1
      %p175 = por %p173, %p174
      %p176 = scmp.ne.s32.totalorder %s167, %s168
      %p177 = scmp.eq.s32.totalorder %s31, 0
      %p178 = por %p176, %p177
      %p179 = scmp.ne.s32.totalorder %s167, %s168
      %p180 = scmp.eq.s32.totalorder %s32, 1
      %p181 = por %p179, %p180
      %p183 = scmp.ne.s32.totalorder %s168, %s182
      %p184 = scmp.eq.s32.totalorder %s32, 0
      %p185 = por %p183, %p184
      %s187 = sadd.s32 %s186, 1
      %p190 = scmp.eq.s32.totalorder %s26, 1
      %p191 = scmp.ne.s32.totalorder %s186, %s188
      %p192 = scmp.eq.s32.totalorder %s26, 0
      %p193 = por %p191, %p192
      %p194 = scmp.ne.s32.totalorder %s186, %s188
      %p195 = scmp.eq.s32.totalorder %s31, 1
      %p196 = por %p194, %p195
      %p197 = scmp.ne.s32.totalorder %s188, %s189
      %p198 = scmp.eq.s32.totalorder %s31, 0
      %p199 = por %p197, %p198
      %p200 = scmp.ne.s32.totalorder %s188, %s189
      %p201 = scmp.eq.s32.totalorder %s32, 1
      %p202 = por %p200, %p201
      %p204 = scmp.ne.s32.totalorder %s189, %s203
      %p205 = scmp.eq.s32.totalorder %s32, 0
      %p206 = por %p204, %p205
      %s208 = sadd.s32 %s207, 1
      %p211 = scmp.eq.s32.totalorder %s26, 1
      %p212 = scmp.ne.s32.totalorder %s207, %s209
      %p213 = scmp.eq.s32.totalorder %s26, 0
      %p214 = por %p212, %p213
      %p215 = scmp.ne.s32.totalorder %s207, %s209
      %p216 = scmp.eq.s32.totalorder %s31, 1
      %p217 = por %p215, %p216
      %p218 = scmp.ne.s32.totalorder %s209, %s210
      %p219 = scmp.eq.s32.totalorder %s31, 0
      %p220 = por %p218, %p219
      %p221 = scmp.ne.s32.totalorder %s209, %s210
      %p222 = scmp.eq.s32.totalorder %s32, 1
      %p223 = por %p221, %p222
      %p225 = scmp.ne.s32.totalorder %s210, %s224
      %p226 = scmp.eq.s32.totalorder %s32, 0
      %p227 = por %p225, %p226
      %s229 = sadd.s32 %s228, 1
      %p232 = scmp.eq.s32.totalorder %s26, 1
      %p233 = scmp.ne.s32.totalorder %s228, %s230
      %p234 = scmp.eq.s32.totalorder %s26, 0
      %p235 = por %p233, %p234
      %p236 = scmp.ne.s32.totalorder %s228, %s230
      %p237 = scmp.eq.s32.totalorder %s31, 1
      %p238 = por %p236, %p237
      %p239 = scmp.ne.s32.totalorder %s230, %s231
      %p240 = scmp.eq.s32.totalorder %s31, 0
      %p241 = por %p239, %p240
      %p242 = scmp.ne.s32.totalorder %s230, %s231
      %p243 = scmp.eq.s32.totalorder %s32, 1
      %p244 = por %p242, %p243
      %p246 = scmp.ne.s32.totalorder %s231, %s245
      %p247 = scmp.eq.s32.totalorder %s32, 0
      %p248 = por %p246, %p247
      %s250 = sadd.s32 %s249, 1
      %p253 = scmp.eq.s32.totalorder %s26, 1
      %p254 = scmp.ne.s32.totalorder %s249, %s251
      %p255 = scmp.eq.s32.totalorder %s26, 0
      %p256 = por %p254, %p255
      %p257 = scmp.ne.s32.totalorder %s249, %s251
      %p258 = scmp.eq.s32.totalorder %s31, 1
      %p259 = por %p257, %p258
      %p260 = scmp.ne.s32.totalorder %s251, %s252
      %p261 = scmp.eq.s32.totalorder %s31, 0
      %p262 = por %p260, %p261
      %p263 = scmp.ne.s32.totalorder %s251, %s252
      %p264 = scmp.eq.s32.totalorder %s32, 1
      %p265 = por %p263, %p264
      %p267 = scmp.ne.s32.totalorder %s252, %s266
      %p268 = scmp.eq.s32.totalorder %s32, 0
      %p269 = por %p267, %p268
      %s271 = sadd.s32 %s270, 1
      %p274 = scmp.eq.s32.totalorder %s26, 1
      %p275 = scmp.ne.s32.totalorder %s270, %s272
      %p276 = scmp.eq.s32.totalorder %s26, 0
      %p277 = por %p275, %p276
      %p278 = scmp.ne.s32.totalorder %s270, %s272
      %p279 = scmp.eq.s32.totalorder %s31, 1
      %p280 = por %p278, %p279
      %p281 = scmp.ne.s32.totalorder %s272, %s273
      %p282 = scmp.eq.s32.totalorder %s31, 0
      %p283 = por %p281, %p282
      %p284 = scmp.ne.s32.totalorder %s272, %s273
      %p285 = scmp.eq.s32.totalorder %s32, 1
      %p286 = por %p284, %p285
      %p288 = scmp.ne.s32.totalorder %s273, %s287
      %p289 = scmp.eq.s32.totalorder %s32, 0
      %p290 = por %p288, %p289
      %s292 = sadd.s32 %s291, 1
      %p295 = scmp.eq.s32.totalorder %s26, 1
      %p296 = scmp.ne.s32.totalorder %s291, %s293
      %p297 = scmp.eq.s32.totalorder %s26, 0
      %p298 = por %p296, %p297
      %p299 = scmp.ne.s32.totalorder %s291, %s293
      %p300 = scmp.eq.s32.totalorder %s31, 1
      %p301 = por %p299, %p300
      %p302 = scmp.ne.s32.totalorder %s293, %s294
      %p303 = scmp.eq.s32.totalorder %s31, 0
      %p304 = por %p302, %p303
      %p305 = scmp.ne.s32.totalorder %s293, %s294
      %p306 = scmp.eq.s32.totalorder %s32, 1
      %p307 = por %p305, %p306
      %p309 = scmp.ne.s32.totalorder %s294, %s308
      %p310 = scmp.eq.s32.totalorder %s32, 0
      %p311 = por %p309, %p310
      %s313 = sadd.s32 %s312, 1
      %p316 = scmp.eq.s32.totalorder %s26, 1
      %p317 = scmp.ne.s32.totalorder %s312, %s314
      %p318 = scmp.eq.s32.totalorder %s26, 0
      %p319 = por %p317, %p318
      %p320 = scmp.ne.s32.totalorder %s312, %s314
      %p321 = scmp.eq.s32.totalorder %s31, 1
      %p322 = por %p320, %p321
      %p323 = scmp.ne.s32.totalorder %s314, %s315
      %p324 = scmp.eq.s32.totalorder %s31, 0
      %p325 = por %p323, %p324
      %p326 = scmp.ne.s32.totalorder %s314, %s315
      %p327 = scmp.eq.s32.totalorder %s32, 1
      %p328 = por %p326, %p327
      %p330 = scmp.ne.s32.totalorder %s315, %s329
      %p331 = scmp.eq.s32.totalorder %s32, 0
      %p332 = por %p330, %p331
      %s333 = ssub.s32 %s26, %s33
      %p334 = scmp.eq.s32.totalorder %s333, 0
      %s336 = sadd.s32 %s335, 1
      %s337 = scalar_select %p334, %s335, %s336
      %p340 = pneg %p334
      %p341 = scmp.eq.s32.totalorder %s26, 1
      %p342 = por %p340, %p341
      %p343 = scmp.ne.s32.totalorder %s335, %s338
      %p344 = scmp.eq.s32.totalorder %s26, 0
      %p345 = por %p343, %p344
      %p346 = scmp.ne.s32.totalorder %s335, %s338
      %p347 = scmp.eq.s32.totalorder %s31, 1
      %p348 = por %p346, %p347
      %p349 = scmp.ne.s32.totalorder %s338, %s339
      %p350 = scmp.eq.s32.totalorder %s31, 0
      %p351 = por %p349, %p350
      %p352 = scmp.ne.s32.totalorder %s338, %s339
      %p353 = scmp.eq.s32.totalorder %s32, 1
      %p354 = por %p352, %p353
      %p356 = scmp.ne.s32.totalorder %s339, %s355
      %p357 = scmp.eq.s32.totalorder %s32, 0
      %p358 = por %p356, %p357
      %p359 = scmp.le.s32.totalorder 1, %s26
      %p360 = scmp.lt.s32.totalorder %s26, 3
      %p361 = pnand %p359, %p360
      %p362 = pneg %p361
      // Predicated region
      $region9: #{contrastive_module.6} parent=5 // pred_check
        _
      $region10: #{contrastive_module.6} parent=5 // pred_check_branch
        %364 = sbr.rel (%p361) target = $region12
      $region11: #{contrastive_module.6} parent=5 // pred_region
        %s365 = ssub.s32 %s26, 1
        // Predicated region
        $region13: #{contrastive_module.6} parent=11 // pred_check
          %p366 = pneg %p73
        $region14: #{contrastive_module.6} parent=11 // pred_check_branch
          %368 = sbr.rel (%p366) target = $region16
        $region15: #{contrastive_module.6} parent=11 // pred_region
          _
        $region16: #{contrastive_module.6} parent=11 // pred_fallthru
          _
        // Predicated region
        $region17: #{contrastive_module.6} parent=11 // pred_check
          %p369 = pneg %p94
        $region18: #{contrastive_module.6} parent=11 // pred_check_branch
          %371 = sbr.rel (%p369) target = $region20
        $region19: #{contrastive_module.6} parent=11 // pred_region
          %s373 = ssub.s32 16, 16
          %374 = vsyncadd [#allocation3], %s373
          %s376 = sshll.u32 [#allocation2], 4
          %s377 = int_to_ptr.vmem [resolvable:$true] %s376
          %379 = dma.hbm_to_vmem [thread:$0]  %s2, 16, %s377, [#allocation3]
        $region20: #{contrastive_module.6} parent=11 // pred_fallthru
          _
        // Predicated region
        $region21: #{contrastive_module.6} parent=11 // pred_check
          %p380 = pneg %p115
        $region22: #{contrastive_module.6} parent=11 // pred_check_branch
          %382 = sbr.rel (%p380) target = $region24
        $region23: #{contrastive_module.6} parent=11 // pred_region
          %s384 = ssub.s32 16, 16
          %385 = vsyncadd [#allocation5], %s384
          %s387 = sshll.u32 [#allocation4], 4
          %s388 = int_to_ptr.vmem [resolvable:$true] %s387
          %390 = dma.hbm_to_vmem [thread:$0]  %s3, 16, %s388, [#allocation5]
        $region24: #{contrastive_module.6} parent=11 // pred_fallthru
          _
        // Predicated region
        $region25: #{contrastive_module.6} parent=11 // pred_check
          %p391 = pneg %p136
        $region26: #{contrastive_module.6} parent=11 // pred_check_branch
          %393 = sbr.rel (%p391) target = $region28
        $region27: #{contrastive_module.6} parent=11 // pred_region
          %s395 = ssub.s32 2048, 2048
          %396 = vsyncadd [#allocation5], %s395
          %s397 = sshll.u32 [#allocation6], 4
          %s398 = int_to_ptr.vmem [resolvable:$true] %s397
          %403 = dma.hbm_to_vmem [thread:$0]  %s4, 2048, %s398, [#allocation5], 128, 128, 8
        $region28: #{contrastive_module.6} parent=11 // pred_fallthru
          _
        // Predicated region
        $region29: #{contrastive_module.6} parent=11 // pred_check
          %p404 = pneg %p157
        $region30: #{contrastive_module.6} parent=11 // pred_check_branch
          %406 = sbr.rel (%p404) target = $region32
        $region31: #{contrastive_module.6} parent=11 // pred_region
          %s408 = ssub.s32 32, 32
          %409 = vsyncadd [#allocation8], %s408
          %s411 = sshll.u32 [#allocation7], 4
          %s412 = int_to_ptr.vmem [resolvable:$true] %s411
          %414 = dma.hbm_to_vmem [thread:$0]  %s5, 32, %s412, [#allocation8]
        $region32: #{contrastive_module.6} parent=11 // pred_fallthru
          _
        // Predicated region
        $region33: #{contrastive_module.6} parent=11 // pred_check
          %p415 = pneg %p178
        $region34: #{contrastive_module.6} parent=11 // pred_check_branch
          %417 = sbr.rel (%p415) target = $region36
        $region35: #{contrastive_module.6} parent=11 // pred_region
          %s419 = ssub.s32 2048, 2048
          %420 = vsyncadd [#allocation8], %s419
          %s421 = sshll.u32 [#allocation9], 4
          %s422 = int_to_ptr.vmem [resolvable:$true] %s421
          %427 = dma.hbm_to_vmem [thread:$0]  %s6, 2048, %s422, [#allocation8], 64, 64, 4
        $region36: #{contrastive_module.6} parent=11 // pred_fallthru
          _
        // Predicated region
        $region37: #{contrastive_module.6} parent=11 // pred_check
          %p428 = pneg %p199
        $region38: #{contrastive_module.6} parent=11 // pred_check_branch
          %430 = sbr.rel (%p428) target = $region40
        $region39: #{contrastive_module.6} parent=11 // pred_region
          %s432 = ssub.s32 16, 16
          %433 = vsyncadd [#allocation11], %s432
          %s435 = sshll.u32 [#allocation10], 4
          %s436 = int_to_ptr.vmem [resolvable:$true] %s435
          %438 = dma.hbm_to_vmem [thread:$0]  %s7, 16, %s436, [#allocation11]
        $region40: #{contrastive_module.6} parent=11 // pred_fallthru
          _
        // Predicated region
        $region41: #{contrastive_module.6} parent=11 // pred_check
          %p439 = pneg %p220
        $region42: #{contrastive_module.6} parent=11 // pred_check_branch
          %441 = sbr.rel (%p439) target = $region44
        $region43: #{contrastive_module.6} parent=11 // pred_region
          %s443 = ssub.s32 16, 16
          %444 = vsyncadd [#allocation11], %s443
          %s446 = sshll.u32 [#allocation12], 4
          %s447 = int_to_ptr.vmem [resolvable:$true] %s446
          %449 = dma.hbm_to_vmem [thread:$0]  %s8, 16, %s447, [#allocation11]
        $region44: #{contrastive_module.6} parent=11 // pred_fallthru
          _
        // Predicated region
        $region45: #{contrastive_module.6} parent=11 // pred_check
          %p450 = pneg %p241
        $region46: #{contrastive_module.6} parent=11 // pred_check_branch
          %452 = sbr.rel (%p450) target = $region48
        $region47: #{contrastive_module.6} parent=11 // pred_region
          %s454 = ssub.s32 16, 16
          %455 = vsyncadd [#allocation14], %s454
          %s457 = sshll.u32 [#allocation13], 4
          %s458 = int_to_ptr.vmem [resolvable:$true] %s457
          %460 = dma.hbm_to_vmem [thread:$0]  %s9, 16, %s458, [#allocation14]
        $region48: #{contrastive_module.6} parent=11 // pred_fallthru
          _
        // Predicated region
        $region49: #{contrastive_module.6} parent=11 // pred_check
          %p461 = pneg %p262
        $region50: #{contrastive_module.6} parent=11 // pred_check_branch
          %463 = sbr.rel (%p461) target = $region52
        $region51: #{contrastive_module.6} parent=11 // pred_region
          _
        $region52: #{contrastive_module.6} parent=11 // pred_fallthru
          _
        // Predicated region
        $region53: #{contrastive_module.6} parent=11 // pred_check
          %p464 = pneg %p283
        $region54: #{contrastive_module.6} parent=11 // pred_check_branch
          %466 = sbr.rel (%p464) target = $region56
        $region55: #{contrastive_module.6} parent=11 // pred_region
          _
        $region56: #{contrastive_module.6} parent=11 // pred_fallthru
          _
        // Predicated region
        $region57: #{contrastive_module.6} parent=11 // pred_check
          %p467 = pneg %p304
        $region58: #{contrastive_module.6} parent=11 // pred_check_branch
          %469 = sbr.rel (%p467) target = $region60
        $region59: #{contrastive_module.6} parent=11 // pred_region
          %s471 = ssub.s32 1024, 1024
          %472 = vsyncadd [#allocation14], %s471
          %s473 = sshll.u32 [#allocation15], 4
          %s474 = int_to_ptr.vmem [resolvable:$true] %s473
          %479 = dma.hbm_to_vmem [thread:$0]  %s12, 1024, %s474, [#allocation14], 64, 64, 4
        $region60: #{contrastive_module.6} parent=11 // pred_fallthru
          _
        // Predicated region
        $region61: #{contrastive_module.6} parent=11 // pred_check
          %p480 = pneg %p325
        $region62: #{contrastive_module.6} parent=11 // pred_check_branch
          %482 = sbr.rel (%p480) target = $region64
        $region63: #{contrastive_module.6} parent=11 // pred_region
          %s484 = ssub.s32 16, 16
          %485 = vsyncadd [#allocation17], %s484
          %s487 = sshll.u32 [#allocation16], 4
          %s488 = int_to_ptr.vmem [resolvable:$true] %s487
          %490 = dma.hbm_to_vmem [thread:$0]  %s13, 16, %s488, [#allocation17]
        $region64: #{contrastive_module.6} parent=11 // pred_fallthru
          _
      $region12: #{contrastive_module.6} parent=5 // pred_fallthru
        _
      %p491 = scmp.lt.s32.totalorder %s26, 2
      // Predicated region
      $region65: #{contrastive_module.6} parent=5 // pred_check
        %p492 = pneg %p491
      $region66: #{contrastive_module.6} parent=5 // pred_check_branch
        %494 = sbr.rel (%p492) target = $region68
      $region67: #{contrastive_module.6} parent=5 // pred_region
        // Predicated region
        $region69: #{contrastive_module.6} parent=67 // pred_check
          %p495 = pneg %p46
        $region70: #{contrastive_module.6} parent=67 // pred_check_branch
          %497 = sbr.rel (%p495) target = $region72
        $region71: #{contrastive_module.6} parent=67 // pred_region
          %p498 = scmp.lt.s32.totalorder %s26, 1
          %s499 = scalar_select %p498, %s26, 1
          %s500 = smul.addr %s499, 2
          %s501 = smul.addr %s500, 8
          %s502 = scalar_lea.vmem %s0, %s501
        $region72: #{contrastive_module.6} parent=67 // pred_fallthru
          _
      $region68: #{contrastive_module.6} parent=5 // pred_fallthru
        _
      %p503 = scmp.le.s32.totalorder 1, %s26
      %p504 = scmp.lt.s32.totalorder %s26, 3
      %p505 = pnand %p503, %p504
      %p506 = pneg %p505
      // Predicated region
      $region73: #{contrastive_module.6} parent=5 // pred_check
        _
      $region74: #{contrastive_module.6} parent=5 // pred_check_branch
        %508 = sbr.rel (%p505) target = $region76
      $region75: #{contrastive_module.6} parent=5 // pred_region
        %s509 = ssub.s32 %s26, 1
        // Predicated region
        $region77: #{contrastive_module.6} parent=75 // pred_check
          %p510 = pneg %p94
        $region78: #{contrastive_module.6} parent=75 // pred_check_branch
          %512 = sbr.rel (%p510) target = $region80
        $region79: #{contrastive_module.6} parent=75 // pred_region
          %513 = dma.done [#allocation3], 16
        $region80: #{contrastive_module.6} parent=75 // pred_fallthru
          _
        // Predicated region
        $region81: #{contrastive_module.6} parent=75 // pred_check
          %p514 = pneg %p115
        $region82: #{contrastive_module.6} parent=75 // pred_check_branch
          %516 = sbr.rel (%p514) target = $region84
        $region83: #{contrastive_module.6} parent=75 // pred_region
          %517 = dma.done [#allocation5], 16
        $region84: #{contrastive_module.6} parent=75 // pred_fallthru
          _
        // Predicated region
        $region85: #{contrastive_module.6} parent=75 // pred_check
          %p518 = pneg %p136
        $region86: #{contrastive_module.6} parent=75 // pred_check_branch
          %520 = sbr.rel (%p518) target = $region88
        $region87: #{contrastive_module.6} parent=75 // pred_region
          %521 = dma.done [#allocation5], 2048
        $region88: #{contrastive_module.6} parent=75 // pred_fallthru
          _
        // Predicated region
        $region89: #{contrastive_module.6} parent=75 // pred_check
          %p522 = pneg %p157
        $region90: #{contrastive_module.6} parent=75 // pred_check_branch
          %524 = sbr.rel (%p522) target = $region92
        $region91: #{contrastive_module.6} parent=75 // pred_region
          %525 = dma.done [#allocation8], 32
        $region92: #{contrastive_module.6} parent=75 // pred_fallthru
          _
        // Predicated region
        $region93: #{contrastive_module.6} parent=75 // pred_check
          %p526 = pneg %p178
        $region94: #{contrastive_module.6} parent=75 // pred_check_branch
          %528 = sbr.rel (%p526) target = $region96
        $region95: #{contrastive_module.6} parent=75 // pred_region
          %529 = dma.done [#allocation8], 2048
        $region96: #{contrastive_module.6} parent=75 // pred_fallthru
          _
        // Predicated region
        $region97: #{contrastive_module.6} parent=75 // pred_check
          %p530 = pneg %p199
        $region98: #{contrastive_module.6} parent=75 // pred_check_branch
          %532 = sbr.rel (%p530) target = $region100
        $region99: #{contrastive_module.6} parent=75 // pred_region
          %533 = dma.done [#allocation11], 16
        $region100: #{contrastive_module.6} parent=75 // pred_fallthru
          _
        // Predicated region
        $region101: #{contrastive_module.6} parent=75 // pred_check
          %p534 = pneg %p220
        $region102: #{contrastive_module.6} parent=75 // pred_check_branch
          %536 = sbr.rel (%p534) target = $region104
        $region103: #{contrastive_module.6} parent=75 // pred_region
          %537 = dma.done [#allocation11], 16
        $region104: #{contrastive_module.6} parent=75 // pred_fallthru
          _
        // Predicated region
        $region105: #{contrastive_module.6} parent=75 // pred_check
          %p538 = pneg %p241
        $region106: #{contrastive_module.6} parent=75 // pred_check_branch
          %540 = sbr.rel (%p538) target = $region108
        $region107: #{contrastive_module.6} parent=75 // pred_region
          %541 = dma.done [#allocation14], 16
        $region108: #{contrastive_module.6} parent=75 // pred_fallthru
          _
        // Predicated region
        $region109: #{contrastive_module.6} parent=75 // pred_check
          %p542 = pneg %p304
        $region110: #{contrastive_module.6} parent=75 // pred_check_branch
          %544 = sbr.rel (%p542) target = $region112
        $region111: #{contrastive_module.6} parent=75 // pred_region
          %545 = dma.done [#allocation14], 1024
        $region112: #{contrastive_module.6} parent=75 // pred_fallthru
          _
        // Predicated region
        $region113: #{contrastive_module.6} parent=75 // pred_check
          %p546 = pneg %p325
        $region114: #{contrastive_module.6} parent=75 // pred_check_branch
          %548 = sbr.rel (%p546) target = $region116
        $region115: #{contrastive_module.6} parent=75 // pred_region
          %549 = dma.done [#allocation17], 16
        $region116: #{contrastive_module.6} parent=75 // pred_fallthru
          _
        %p550 = scmp.lt.s32.totalorder %s31, 1
        %s551 = scalar_select %p550, %s31, 1
        %s552 = smul.addr %s551, 2
        %s553 = smul.addr %s552, 8
        %s554 = scalar_lea.vmem %s0, %s553
        %p555 = pneg %p52
        %p556 = pneg %p49
        %p557 = pneg %p73
        %p558 = pneg %p70
        %p559 = pneg %p94
        %p560 = pneg %p91
        %p561 = pneg %p115
        %p562 = pneg %p112
        %p563 = pneg %p136
        %p564 = pneg %p133
        %p565 = pneg %p157
        %p566 = pneg %p154
        %p567 = pneg %p178
        %p568 = pneg %p175
        %p569 = pneg %p199
        %p570 = pneg %p196
        %p571 = pneg %p220
        %p572 = pneg %p217
        %p573 = pneg %p241
        %p574 = pneg %p238
        %p575 = pneg %p262
        %p576 = pneg %p259
        %p577 = pneg %p283
        %p578 = pneg %p280
        %p579 = pneg %p304
        %p580 = pneg %p301
        %p581 = pneg %p325
        %p582 = pneg %p322
        %p583 = pneg %p351
        %p584 = pneg %p348
        %p585 = scmp.lt.s32.totalorder %s31, 1
        %s586 = scalar_select %p585, %s31, 1
        %s587 = smul.addr %s586, 2
        %s588 = smul.addr %s587, 8
        %s589 = scalar_lea.vmem %s14, %s588
        %p590 = scmp.lt.s32.totalorder %s31, 1
        %s591 = scalar_select %p590, %s31, 1
        %s592 = smul.addr %s591, 2
        %s593 = smul.addr %s592, 8
        %s594 = scalar_lea.vmem %s0, %s593
        %p595 = scmp.lt.s32.totalorder %s31, 1
        %s596 = scalar_select %p595, %s31, 1
        %s597 = smul.addr %s596, 2
        %s598 = smul.addr %s597, 8
        %s599 = scalar_lea.vmem %s14, %s598
        %v601 = vld [vmem:[%s594] sm:$0xff]
        %v602 = vld [vmem:[%s594 + $0x8] sm:$0xff]
        %v603 = vld [vmem:[#allocation2] sm:$0x1]
        %v604 = vld [vmem:[#allocation4] sm:$0x1]
        %605 = vadd.xlane.f32.xlu0 %v601
        %v606 = vpop.xlane.xlu0 %605
        %607 = vadd.xlane.f32.xlu0 %v602
        %v608 = vpop.xlane.xlu0 %607
        %v609 = vrcp.pop 128.0
        %v610 = vmul.f32 %v606, %v609
        %v611 = vmul.f32 %v608, %v609
        %v612 = vsub.f32 %v601, %v610
        %v613 = vsub.f32 %v602, %v611
        %v614 = vmul.f32 %v612, %v612
        %v615 = vmul.f32 %v613, %v613
        %616 = vadd.xlane.f32.xlu0 %v614
        %v617 = vpop.xlane.xlu0 %616
        %618 = vadd.xlane.f32.xlu0 %v615
        %v619 = vpop.xlane.xlu0 %618
        %v620 = vmul.f32 %v617, %v609
        %v621 = vmul.f32 %v619, %v609
        %v622 = vadd.f32 %v620, 1e-05
        %v623 = vadd.f32 %v621, 1e-05
        %v624 = vrsqrt.pop %v622
        %v625 = vrsqrt.pop %v623
        %v626 = vmul.f32 %v612, %v624
        %v627 = vmul.f32 %v613, %v625
        %v629 = vlaneseq
        %v630 = vshrl.u32 %v629, 7
        %v631 = vsub.s32 0, %v630
        %v632 = vrot.slane %v603, %v631
        %v634 = vmul.f32 %v626, %v632
        %v635 = vmul.f32 %v627, %v632
        %v637 = vlaneseq
        %v638 = vshrl.u32 %v637, 7
        %v639 = vsub.s32 0, %v638
        %v640 = vrot.slane %v604, %v639
        %v642 = vadd.f32 %v634, %v640
        %v643 = vadd.f32 %v635, %v640
        %v644 = vpack.c.bf16 %v643, %v642
        %v645 = vld [vmem:[#allocation6] sm:$0xff]
        %v646 = vld [vmem:[#allocation6 + $0x8] sm:$0xff]
        %v647 = vld [vmem:[#allocation6 + $0x10] sm:$0xff]
        %v648 = vld [vmem:[#allocation6 + $0x18] sm:$0xff]
        %v649 = vld [vmem:[#allocation6 + $0x20] sm:$0xff]
        %v650 = vld [vmem:[#allocation6 + $0x28] sm:$0xff]
        %v651 = vld [vmem:[#allocation6 + $0x30] sm:$0xff]
        %v652 = vld [vmem:[#allocation6 + $0x38] sm:$0xff]
        %v653 = vld [vmem:[#allocation6 + $0x40] sm:$0xff]
        %v654 = vld [vmem:[#allocation6 + $0x48] sm:$0xff]
        %v655 = vld [vmem:[#allocation6 + $0x50] sm:$0xff]
        %v656 = vld [vmem:[#allocation6 + $0x58] sm:$0xff]
        %v657 = vld [vmem:[#allocation6 + $0x60] sm:$0xff]
        %v658 = vld [vmem:[#allocation6 + $0x68] sm:$0xff]
        %v659 = vld [vmem:[#allocation6 + $0x70] sm:$0xff]
        %v660 = vld [vmem:[#allocation6 + $0x78] sm:$0xff]
        %v661 = vld [vmem:[#allocation7] sm:$0x3]
        %v663 = vlaneseq
        %v664 = vshrl.u32 %v663, 7
        %v665 = vsub.s32 0, %v664
        %v666 = vrot.slane %v661, %v665
        %v667 = vlaneseq
        %v668 = vshrl.u32 %v667, 7
        %v669 = vsub.s32 1, %v668
        %v670 = vrot.slane %v661, %v669
        %v689 = vunpack.c.l.b16 %v645
        %v690 = vunpack.c.h.b16 %v645
        %v691 = vunpack.c.l.b16 %v646
        %v692 = vunpack.c.h.b16 %v646
        %v693 = vunpack.c.l.b16 %v647
        %v694 = vunpack.c.h.b16 %v647
        %v695 = vunpack.c.l.b16 %v648
        %v696 = vunpack.c.h.b16 %v648
        %v697 = vunpack.c.l.b16 %v649
        %v698 = vunpack.c.h.b16 %v649
        %v699 = vunpack.c.l.b16 %v650
        %v700 = vunpack.c.h.b16 %v650
        %v701 = vunpack.c.l.b16 %v651
        %v702 = vunpack.c.h.b16 %v651
        %v703 = vunpack.c.l.b16 %v652
        %v704 = vunpack.c.h.b16 %v652
        %v705 = vunpack.c.l.b16 %v653
        %v706 = vunpack.c.h.b16 %v653
        %v707 = vunpack.c.l.b16 %v654
        %v708 = vunpack.c.h.b16 %v654
        %v709 = vunpack.c.l.b16 %v655
        %v710 = vunpack.c.h.b16 %v655
        %v711 = vunpack.c.l.b16 %v656
        %v712 = vunpack.c.h.b16 %v656
        %v713 = vunpack.c.l.b16 %v657
        %v714 = vunpack.c.h.b16 %v657
        %v715 = vunpack.c.l.b16 %v658
        %v716 = vunpack.c.h.b16 %v658
        %v717 = vunpack.c.l.b16 %v659
        %v718 = vunpack.c.h.b16 %v659
        %v719 = vunpack.c.l.b16 %v660
        %v720 = vunpack.c.h.b16 %v660
        %v721 = vpack.c.b16 %v691, %v689
        %v722 = vpack.c.b16 %v692, %v690
        %v723 = vpack.c.b16 %v695, %v693
        %v724 = vpack.c.b16 %v696, %v694
        %v725 = vpack.c.b16 %v699, %v697
        %v726 = vpack.c.b16 %v700, %v698
        %v727 = vpack.c.b16 %v703, %v701
        %v728 = vpack.c.b16 %v704, %v702
        %v729 = vpack.c.b16 %v707, %v705
        %v730 = vpack.c.b16 %v708, %v706
        %v731 = vpack.c.b16 %v711, %v709
        %v732 = vpack.c.b16 %v712, %v710
        %v733 = vpack.c.b16 %v715, %v713
        %v734 = vpack.c.b16 %v716, %v714
        %v735 = vpack.c.b16 %v719, %v717
        %v736 = vpack.c.b16 %v720, %v718
        %753 = vmatprep.subr.bf16.mxu0 %v736
        %754 = vmatpush1.bf16.msra.mxu0 %v735
        %755 = vmatprep.subr.bf16.mxu0 %v734
        %756 = vmatpush1.bf16.msra.mxu0 %v733
        %757 = vmatprep.subr.bf16.mxu0 %v732
        %758 = vmatpush1.bf16.msra.mxu0 %v731
        %759 = vmatprep.subr.bf16.mxu0 %v730
        %760 = vmatpush1.bf16.msra.mxu0 %v729
        %761 = vmatprep.subr.bf16.mxu0 %v728
        %762 = vmatpush1.bf16.msra.mxu0 %v727
        %763 = vmatprep.subr.bf16.mxu0 %v726
        %764 = vmatpush1.bf16.msra.mxu0 %v725
        %765 = vmatprep.subr.bf16.mxu0 %v724
        %766 = vmatpush1.bf16.msra.mxu0 %v723
        %767 = vmatprep.subr.bf16.mxu0 %v722
        %768 = vmatpush1.bf16.msra.mxu0 %v721
        %769 = vmatprep.subr.bf16.mxu0 0
        %770 = vmatpush2.bf16.msra.mxu0 0
        %771 = vmatprep.subr.bf16.mxu0 0
        %772 = vmatpush2.bf16.msra.mxu0 0
        %773 = vmatprep.subr.bf16.mxu0 0
        %774 = vmatpush2.bf16.msra.mxu0 0
        %775 = vmatprep.subr.bf16.mxu0 0
        %776 = vmatpush2.bf16.msra.mxu0 0
        %777 = vmatprep.subr.bf16.mxu0 0
        %778 = vmatpush2.bf16.msra.mxu0 0
        %779 = vmatprep.subr.bf16.mxu0 0
        %780 = vmatpush2.bf16.msra.mxu0 0
        %781 = vmatprep.subr.bf16.mxu0 0
        %782 = vmatpush2.bf16.msra.mxu0 0
        %783 = vmatprep.subr.bf16.mxu0 0
        %784 = vmatpush2.bf16.msra.mxu0 0
        %785 = vmatprep.mubr.bf16.mxu0 0
        %786 = vmatmul.mubr.bf16.gmra.mxu0 %v644
        %v787 = vpop.f32.mrf.mxu0
        %v788 = vadd.f32 %v666, %v787
        %v789 = vpop.f32.mrf.mxu0
        %v790 = vadd.f32 %v670, %v789
        %v791 = vpop.f32.mrf.mxu0
        %v792 = vadd.f32 %v666, %v791
        %v793 = vpop.f32.mrf.mxu0
        %v794 = vadd.f32 %v670, %v793
        %795 = vdwg.mxu0
        %v796 = vmul.f32 %v788, 0.5
        %v797 = vmul.f32 %v790, 0.5
        %v798 = vmul.f32 %v792, 0.5
        %v799 = vmul.f32 %v794, 0.5
        %v800 = vmul.f32 %v788, 0.044715
        %v801 = vmul.f32 %v790, 0.044715
        %v802 = vmul.f32 %v792, 0.044715
        %v803 = vmul.f32 %v794, 0.044715
        %v804 = vmul.f32 %v800, %v788
        %v805 = vmul.f32 %v801, %v790
        %v806 = vmul.f32 %v802, %v792
        %v807 = vmul.f32 %v803, %v794
        %v808 = vmul.f32 %v804, %v788
        %v809 = vmul.f32 %v805, %v790
        %v810 = vmul.f32 %v806, %v792
        %v811 = vmul.f32 %v807, %v794
        %v812 = vadd.f32 %v788, %v808
        %v813 = vadd.f32 %v790, %v809
        %v814 = vadd.f32 %v792, %v810
        %v815 = vadd.f32 %v794, %v811
        %v816 = vmul.f32 %v812, 0.7978846
        %v817 = vmul.f32 %v813, 0.7978846
        %v818 = vmul.f32 %v814, 0.7978846
        %v819 = vmul.f32 %v815, 0.7978846
        %v820 = vtanh.pop %v816
        %v821 = vtanh.pop %v817
        %v822 = vtanh.pop %v818
        %v823 = vtanh.pop %v819
        %v824 = vadd.f32 %v820, 1.0
        %v825 = vadd.f32 %v821, 1.0
        %v826 = vadd.f32 %v822, 1.0
        %v827 = vadd.f32 %v823, 1.0
        %v828 = vmul.f32 %v796, %v824
        %v829 = vmul.f32 %v797, %v825
        %v830 = vmul.f32 %v798, %v826
        %v831 = vmul.f32 %v799, %v827
        %v832 = vpack.c.bf16 %v830, %v828
        %v833 = vpack.c.bf16 %v831, %v829
        %v834 = vld [vmem:[#allocation9] sm:$0xf]
        %v835 = vld [vmem:[#allocation9 + $0x4] sm:$0xf]
        %v836 = vld [vmem:[#allocation9 + $0x8] sm:$0xf]
        %v837 = vld [vmem:[#allocation9 + $0xc] sm:$0xf]
        %v838 = vld [vmem:[#allocation9 + $0x10] sm:$0xf]
        %v839 = vld [vmem:[#allocation9 + $0x14] sm:$0xf]
        %v840 = vld [vmem:[#allocation9 + $0x18] sm:$0xf]
        %v841 = vld [vmem:[#allocation9 + $0x1c] sm:$0xf]
        %v842 = vld [vmem:[#allocation9 + $0x20] sm:$0xf]
        %v843 = vld [vmem:[#allocation9 + $0x24] sm:$0xf]
        %v844 = vld [vmem:[#allocation9 + $0x28] sm:$0xf]
        %v845 = vld [vmem:[#allocation9 + $0x2c] sm:$0xf]
        %v846 = vld [vmem:[#allocation9 + $0x30] sm:$0xf]
        %v847 = vld [vmem:[#allocation9 + $0x34] sm:$0xf]
        %v848 = vld [vmem:[#allocation9 + $0x38] sm:$0xf]
        %v849 = vld [vmem:[#allocation9 + $0x3c] sm:$0xf]
        %v850 = vld [vmem:[#allocation9 + $0x40] sm:$0xf]
        %v851 = vld [vmem:[#allocation9 + $0x44] sm:$0xf]
        %v852 = vld [vmem:[#allocation9 + $0x48] sm:$0xf]
        %v853 = vld [vmem:[#allocation9 + $0x4c] sm:$0xf]
        %v854 = vld [vmem:[#allocation9 + $0x50] sm:$0xf]
        %v855 = vld [vmem:[#allocation9 + $0x54] sm:$0xf]
        %v856 = vld [vmem:[#allocation9 + $0x58] sm:$0xf]
        %v857 = vld [vmem:[#allocation9 + $0x5c] sm:$0xf]
        %v858 = vld [vmem:[#allocation9 + $0x60] sm:$0xf]
        %v859 = vld [vmem:[#allocation9 + $0x64] sm:$0xf]
        %v860 = vld [vmem:[#allocation9 + $0x68] sm:$0xf]
        %v861 = vld [vmem:[#allocation9 + $0x6c] sm:$0xf]
        %v862 = vld [vmem:[#allocation9 + $0x70] sm:$0xf]
        %v863 = vld [vmem:[#allocation9 + $0x74] sm:$0xf]
        %v864 = vld [vmem:[#allocation9 + $0x78] sm:$0xf]
        %v865 = vld [vmem:[#allocation9 + $0x7c] sm:$0xf]
        %v866 = vld [vmem:[#allocation10] sm:$0x1]
        %v868 = vlaneseq
        %v869 = vshrl.u32 %v868, 7
        %v870 = vsub.s32 0, %v869
        %v871 = vrot.slane %v866, %v870
        %v905 = vunpack.c.l.b16 %v834
        %v906 = vunpack.c.l.b16 %v835
        %v907 = vunpack.c.l.b16 %v836
        %v908 = vunpack.c.l.b16 %v837
        %v909 = vunpack.c.l.b16 %v838
        %v910 = vunpack.c.l.b16 %v839
        %v911 = vunpack.c.l.b16 %v840
        %v912 = vunpack.c.l.b16 %v841
        %v913 = vunpack.c.l.b16 %v842
        %v914 = vunpack.c.l.b16 %v843
        %v915 = vunpack.c.l.b16 %v844
        %v916 = vunpack.c.l.b16 %v845
        %v917 = vunpack.c.l.b16 %v846
        %v918 = vunpack.c.l.b16 %v847
        %v919 = vunpack.c.l.b16 %v848
        %v920 = vunpack.c.l.b16 %v849
        %v921 = vunpack.c.l.b16 %v850
        %v922 = vunpack.c.l.b16 %v851
        %v923 = vunpack.c.l.b16 %v852
        %v924 = vunpack.c.l.b16 %v853
        %v925 = vunpack.c.l.b16 %v854
        %v926 = vunpack.c.l.b16 %v855
        %v927 = vunpack.c.l.b16 %v856
        %v928 = vunpack.c.l.b16 %v857
        %v929 = vunpack.c.l.b16 %v858
        %v930 = vunpack.c.l.b16 %v859
        %v931 = vunpack.c.l.b16 %v860
        %v932 = vunpack.c.l.b16 %v861
        %v933 = vunpack.c.l.b16 %v862
        %v934 = vunpack.c.l.b16 %v863
        %v935 = vunpack.c.l.b16 %v864
        %v936 = vunpack.c.l.b16 %v865
        %v937 = vpack.c.b16 %v906, %v905
        %v938 = vpack.c.b16 %v908, %v907
        %v939 = vpack.c.b16 %v910, %v909
        %v940 = vpack.c.b16 %v912, %v911
        %v941 = vpack.c.b16 %v914, %v913
        %v942 = vpack.c.b16 %v916, %v915
        %v943 = vpack.c.b16 %v918, %v917
        %v944 = vpack.c.b16 %v920, %v919
        %v945 = vpack.c.b16 %v922, %v921
        %v946 = vpack.c.b16 %v924, %v923
        %v947 = vpack.c.b16 %v926, %v925
        %v948 = vpack.c.b16 %v928, %v927
        %v949 = vpack.c.b16 %v930, %v929
        %v950 = vpack.c.b16 %v932, %v931
        %v951 = vpack.c.b16 %v934, %v933
        %v952 = vpack.c.b16 %v936, %v935
        %969 = vmatprep.subr.bf16.mxu0 0
        %970 = vmatpush1.bf16.msra.mxu0 %v944
        %971 = vmatprep.subr.bf16.mxu0 0
        %972 = vmatpush1.bf16.msra.mxu0 %v943
        %973 = vmatprep.subr.bf16.mxu0 0
        %974 = vmatpush1.bf16.msra.mxu0 %v942
        %975 = vmatprep.subr.bf16.mxu0 0
        %976 = vmatpush1.bf16.msra.mxu0 %v941
        %977 = vmatprep.subr.bf16.mxu0 0
        %978 = vmatpush1.bf16.msra.mxu0 %v940
        %979 = vmatprep.subr.bf16.mxu0 0
        %980 = vmatpush1.bf16.msra.mxu0 %v939
        %981 = vmatprep.subr.bf16.mxu0 0
        %982 = vmatpush1.bf16.msra.mxu0 %v938
        %983 = vmatprep.subr.bf16.mxu0 0
        %984 = vmatpush1.bf16.msra.mxu0 %v937
        %985 = vmatprep.subr.bf16.mxu0 0
        %986 = vmatpush2.bf16.msra.mxu0 %v952
        %987 = vmatprep.subr.bf16.mxu0 0
        %988 = vmatpush2.bf16.msra.mxu0 %v951
        %989 = vmatprep.subr.bf16.mxu0 0
        %990 = vmatpush2.bf16.msra.mxu0 %v950
        %991 = vmatprep.subr.bf16.mxu0 0
        %992 = vmatpush2.bf16.msra.mxu0 %v949
        %993 = vmatprep.subr.bf16.mxu0 0
        %994 = vmatpush2.bf16.msra.mxu0 %v948
        %995 = vmatprep.subr.bf16.mxu0 0
        %996 = vmatpush2.bf16.msra.mxu0 %v947
        %997 = vmatprep.subr.bf16.mxu0 0
        %998 = vmatpush2.bf16.msra.mxu0 %v946
        %999 = vmatprep.subr.bf16.mxu0 0
        %1000 = vmatpush2.bf16.msra.mxu0 %v945
        %1001 = vmatprep.mubr.bf16.mxu0 %v833
        %1002 = vmatmul.mubr.bf16.gmra.mxu0 %v832
        %v1003 = vpop.f32.mrf.mxu0
        %v1004 = vadd.f32 %v871, %v1003
        %v1005 = vpop.f32.mrf.mxu0
        %v1006 = vpop.f32.mrf.mxu0
        %v1007 = vadd.f32 %v871, %v1006
        %v1008 = vpop.f32.mrf.mxu0
        %1009 = vdwg.mxu0
        %v1010 = vmul.f32 %v1004, 0.5
        %v1011 = vmul.f32 %v1007, 0.5
        %v1012 = vadd.f32 %v601, %v1010
        %v1013 = vadd.f32 %v602, %v1011
        %v1014 = vld [vmem:[#allocation12] sm:$0x1]
        %v1015 = vld [vmem:[#allocation13] sm:$0x1]
        %1016 = vadd.xlane.f32.xlu0 %v1012
        %v1017 = vpop.xlane.xlu0 %1016
        %1018 = vadd.xlane.f32.xlu0 %v1013
        %v1019 = vpop.xlane.xlu0 %1018
        %v1020 = vmul.f32 %v1017, %v609
        %v1021 = vmul.f32 %v1019, %v609
        %v1022 = vsub.f32 %v1012, %v1020
        %v1023 = vsub.f32 %v1013, %v1021
        %v1024 = vmul.f32 %v1022, %v1022
        %v1025 = vmul.f32 %v1023, %v1023
        %1026 = vadd.xlane.f32.xlu0 %v1024
        %v1027 = vpop.xlane.xlu0 %1026
        %1028 = vadd.xlane.f32.xlu0 %v1025
        %v1029 = vpop.xlane.xlu0 %1028
        %v1030 = vmul.f32 %v1027, %v609
        %v1031 = vmul.f32 %v1029, %v609
        %v1032 = vadd.f32 %v1030, 1e-05
        %v1033 = vadd.f32 %v1031, 1e-05
        %v1034 = vrsqrt.pop %v1032
        %v1035 = vrsqrt.pop %v1033
        %v1036 = vmul.f32 %v1022, %v1034
        %v1037 = vmul.f32 %v1023, %v1035
        %v1039 = vlaneseq
        %v1040 = vshrl.u32 %v1039, 7
        %v1041 = vsub.s32 0, %v1040
        %v1042 = vrot.slane %v1014, %v1041
        %v1044 = vmul.f32 %v1036, %v1042
        %v1045 = vmul.f32 %v1037, %v1042
        %v1047 = vlaneseq
        %v1048 = vshrl.u32 %v1047, 7
        %v1049 = vsub.s32 0, %v1048
        %v1050 = vrot.slane %v1015, %v1049
        %v1052 = vadd.f32 %v1044, %v1050
        %v1053 = vadd.f32 %v1045, %v1050
        %v1054 = vld [vmem:[%s1] sm:$0xff]
        %v1055 = vld [vmem:[%s1 + $0x8] sm:$0xff]
        %v1056 = vadd.f32 %v1052, %v1054
        %v1057 = vadd.f32 %v1053, %v1055
        %v1058 = vpack.c.bf16 %v1057, %v1056
        %v1059 = vld [vmem:[%s10] sm:$0xff]
        %v1060 = vld [vmem:[%s10 + $0x8] sm:$0xf]
        %v1061 = vld [vmem:[%s10 + $0xc] sm:$0xff]
        %v1062 = vld [vmem:[%s10 + $0x14] sm:$0xf]
        %v1063 = vld [vmem:[%s10 + $0x18] sm:$0xff]
        %v1064 = vld [vmem:[%s10 + $0x20] sm:$0xf]
        %v1065 = vld [vmem:[%s10 + $0x24] sm:$0xff]
        %v1066 = vld [vmem:[%s10 + $0x2c] sm:$0xf]
        %v1067 = vld [vmem:[%s10 + $0x30] sm:$0xff]
        %v1068 = vld [vmem:[%s10 + $0x38] sm:$0xf]
        %v1069 = vld [vmem:[%s10 + $0x3c] sm:$0xff]
        %v1070 = vld [vmem:[%s10 + $0x44] sm:$0xf]
        %v1071 = vld [vmem:[%s10 + $0x48] sm:$0xff]
        %v1072 = vld [vmem:[%s10 + $0x50] sm:$0xf]
        %v1073 = vld [vmem:[%s10 + $0x54] sm:$0xff]
        %v1074 = vld [vmem:[%s10 + $0x5c] sm:$0xf]
        %v1075 = vld [vmem:[%s10 + $0x60] sm:$0xff]
        %v1076 = vld [vmem:[%s10 + $0x68] sm:$0xf]
        %v1077 = vld [vmem:[%s10 + $0x6c] sm:$0xff]
        %v1078 = vld [vmem:[%s10 + $0x74] sm:$0xf]
        %v1079 = vld [vmem:[%s10 + $0x78] sm:$0xff]
        %v1080 = vld [vmem:[%s10 + $0x80] sm:$0xf]
        %v1081 = vld [vmem:[%s10 + $0x84] sm:$0xff]
        %v1082 = vld [vmem:[%s10 + $0x8c] sm:$0xf]
        %v1083 = vld [vmem:[%s10 + $0x90] sm:$0xff]
        %v1084 = vld [vmem:[%s10 + $0x98] sm:$0xf]
        %v1085 = vld [vmem:[%s10 + $0x9c] sm:$0xff]
        %v1086 = vld [vmem:[%s10 + $0xa4] sm:$0xf]
        %v1087 = vld [vmem:[%s10 + $0xa8] sm:$0xff]
        %v1088 = vld [vmem:[%s10 + $0xb0] sm:$0xf]
        %v1089 = vld [vmem:[%s10 + $0xb4] sm:$0xff]
        %v1090 = vld [vmem:[%s10 + $0xbc] sm:$0xf]
        %v1091 = vld [vmem:[%s11] sm:$0x7]
        %v1093 = vlaneseq
        %v1094 = vshrl.u32 %v1093, 7
        %v1095 = vsub.s32 0, %v1094
        %v1096 = vrot.slane %v1091, %v1095
        %v1097 = vlaneseq
        %v1098 = vshrl.u32 %v1097, 7
        %v1099 = vsub.s32 1, %v1098
        %v1100 = vrot.slane %v1091, %v1099
        %v1101 = vlaneseq
        %v1102 = vshrl.u32 %v1101, 7
        %v1103 = vsub.s32 2, %v1102
        %v1104 = vrot.slane %v1091, %v1103
        %v1140 = vunpack.c.l.b16 %v1059
        %v1141 = vunpack.c.h.b16 %v1059
        %v1142 = vunpack.c.l.b16 %v1060
        %v1143 = vunpack.c.l.b16 %v1061
        %v1144 = vunpack.c.h.b16 %v1061
        %v1145 = vunpack.c.l.b16 %v1062
        %v1146 = vunpack.c.l.b16 %v1063
        %v1147 = vunpack.c.h.b16 %v1063
        %v1148 = vunpack.c.l.b16 %v1064
        %v1149 = vunpack.c.l.b16 %v1065
        %v1150 = vunpack.c.h.b16 %v1065
        %v1151 = vunpack.c.l.b16 %v1066
        %v1152 = vunpack.c.l.b16 %v1067
        %v1153 = vunpack.c.h.b16 %v1067
        %v1154 = vunpack.c.l.b16 %v1068
        %v1155 = vunpack.c.l.b16 %v1069
        %v1156 = vunpack.c.h.b16 %v1069
        %v1157 = vunpack.c.l.b16 %v1070
        %v1158 = vunpack.c.l.b16 %v1071
        %v1159 = vunpack.c.h.b16 %v1071
        %v1160 = vunpack.c.l.b16 %v1072
        %v1161 = vunpack.c.l.b16 %v1073
        %v1162 = vunpack.c.h.b16 %v1073
        %v1163 = vunpack.c.l.b16 %v1074
        %v1164 = vunpack.c.l.b16 %v1075
        %v1165 = vunpack.c.h.b16 %v1075
        %v1166 = vunpack.c.l.b16 %v1076
        %v1167 = vunpack.c.l.b16 %v1077
        %v1168 = vunpack.c.h.b16 %v1077
        %v1169 = vunpack.c.l.b16 %v1078
        %v1170 = vunpack.c.l.b16 %v1079
        %v1171 = vunpack.c.h.b16 %v1079
        %v1172 = vunpack.c.l.b16 %v1080
        %v1173 = vunpack.c.l.b16 %v1081
        %v1174 = vunpack.c.h.b16 %v1081
        %v1175 = vunpack.c.l.b16 %v1082
        %v1176 = vunpack.c.l.b16 %v1083
        %v1177 = vunpack.c.h.b16 %v1083
        %v1178 = vunpack.c.l.b16 %v1084
        %v1179 = vunpack.c.l.b16 %v1085
        %v1180 = vunpack.c.h.b16 %v1085
        %v1181 = vunpack.c.l.b16 %v1086
        %v1182 = vunpack.c.l.b16 %v1087
        %v1183 = vunpack.c.h.b16 %v1087
        %v1184 = vunpack.c.l.b16 %v1088
        %v1185 = vunpack.c.l.b16 %v1089
        %v1186 = vunpack.c.h.b16 %v1089
        %v1187 = vunpack.c.l.b16 %v1090
        %v1188 = vpack.c.b16 %v1143, %v1140
        %v1189 = vpack.c.b16 %v1144, %v1141
        %v1190 = vpack.c.b16 %v1145, %v1142
        %v1191 = vpack.c.b16 %v1149, %v1146
        %v1192 = vpack.c.b16 %v1150, %v1147
        %v1193 = vpack.c.b16 %v1151, %v1148
        %v1194 = vpack.c.b16 %v1155, %v1152
        %v1195 = vpack.c.b16 %v1156, %v1153
        %v1196 = vpack.c.b16 %v1157, %v1154
        %v1197 = vpack.c.b16 %v1161, %v1158
        %v1198 = vpack.c.b16 %v1162, %v1159
        %v1199 = vpack.c.b16 %v1163, %v1160
        %v1200 = vpack.c.b16 %v1167, %v1164
        %v1201 = vpack.c.b16 %v1168, %v1165
        %v1202 = vpack.c.b16 %v1169, %v1166
        %v1203 = vpack.c.b16 %v1173, %v1170
        %v1204 = vpack.c.b16 %v1174, %v1171
        %v1205 = vpack.c.b16 %v1175, %v1172
        %v1206 = vpack.c.b16 %v1179, %v1176
        %v1207 = vpack.c.b16 %v1180, %v1177
        %v1208 = vpack.c.b16 %v1181, %v1178
        %v1209 = vpack.c.b16 %v1185, %v1182
        %v1210 = vpack.c.b16 %v1186, %v1183
        %v1211 = vpack.c.b16 %v1187, %v1184
        %1236 = vmatprep.subr.bf16.mxu0 %v1210
        %1237 = vmatpush1.bf16.msra.mxu0 %v1209
        %1238 = vmatprep.subr.bf16.mxu0 %v1207
        %1239 = vmatpush1.bf16.msra.mxu0 %v1206
        %1240 = vmatprep.subr.bf16.mxu0 %v1204
        %1241 = vmatpush1.bf16.msra.mxu0 %v1203
        %1242 = vmatprep.subr.bf16.mxu0 %v1201
        %1243 = vmatpush1.bf16.msra.mxu0 %v1200
        %1244 = vmatprep.subr.bf16.mxu0 %v1198
        %1245 = vmatpush1.bf16.msra.mxu0 %v1197
        %1246 = vmatprep.subr.bf16.mxu0 %v1195
        %1247 = vmatpush1.bf16.msra.mxu0 %v1194
        %1248 = vmatprep.subr.bf16.mxu0 %v1192
        %1249 = vmatpush1.bf16.msra.mxu0 %v1191
        %1250 = vmatprep.subr.bf16.mxu0 %v1189
        %1251 = vmatpush1.bf16.msra.mxu0 %v1188
        %1252 = vmatprep.subr.bf16.mxu0 0
        %1253 = vmatpush2.bf16.msra.mxu0 0
        %1254 = vmatprep.subr.bf16.mxu0 0
        %1255 = vmatpush2.bf16.msra.mxu0 0
        %1256 = vmatprep.subr.bf16.mxu0 0
        %1257 = vmatpush2.bf16.msra.mxu0 0
        %1258 = vmatprep.subr.bf16.mxu0 0
        %1259 = vmatpush2.bf16.msra.mxu0 0
        %1260 = vmatprep.subr.bf16.mxu0 0
        %1261 = vmatpush2.bf16.msra.mxu0 0
        %1262 = vmatprep.subr.bf16.mxu0 0
        %1263 = vmatpush2.bf16.msra.mxu0 0
        %1264 = vmatprep.subr.bf16.mxu0 0
        %1265 = vmatpush2.bf16.msra.mxu0 0
        %1266 = vmatprep.subr.bf16.mxu0 0
        %1267 = vmatpush2.bf16.msra.mxu0 0
        %1268 = vmatprep.mubr.bf16.mxu0 0
        %1269 = vmatmul.mubr.bf16.gmra.mxu0 %v1058
        %v1270 = vpop.f32.mrf.mxu0
        %v1271 = vadd.f32 %v1096, %v1270
        %v1272 = vpop.f32.mrf.mxu0
        %v1273 = vadd.f32 %v1100, %v1272
        %v1274 = vpop.f32.mrf.mxu0
        %v1275 = vadd.f32 %v1096, %v1274
        %v1276 = vpop.f32.mrf.mxu0
        %v1277 = vadd.f32 %v1100, %v1276
        %1278 = vdwg.mxu0
        %1279 = vmatprep.subr.bf16.mxu0 0
        %1280 = vmatpush1.bf16.msra.mxu0 %v1211
        %1281 = vmatprep.subr.bf16.mxu0 0
        %1282 = vmatpush1.bf16.msra.mxu0 %v1208
        %1283 = vmatprep.subr.bf16.mxu0 0
        %1284 = vmatpush1.bf16.msra.mxu0 %v1205
        %1285 = vmatprep.subr.bf16.mxu0 0
        %1286 = vmatpush1.bf16.msra.mxu0 %v1202
        %1287 = vmatprep.subr.bf16.mxu0 0
        %1288 = vmatpush1.bf16.msra.mxu0 %v1199
        %1289 = vmatprep.subr.bf16.mxu0 0
        %1290 = vmatpush1.bf16.msra.mxu0 %v1196
        %1291 = vmatprep.subr.bf16.mxu0 0
        %1292 = vmatpush1.bf16.msra.mxu0 %v1193
        %1293 = vmatprep.subr.bf16.mxu0 0
        %1294 = vmatpush1.bf16.msra.mxu0 %v1190
        %1295 = vmatprep.subr.bf16.mxu0 0
        %1296 = vmatpush2.bf16.msra.mxu0 0
        %1297 = vmatprep.subr.bf16.mxu0 0
        %1298 = vmatpush2.bf16.msra.mxu0 0
        %1299 = vmatprep.subr.bf16.mxu0 0
        %1300 = vmatpush2.bf16.msra.mxu0 0
        %1301 = vmatprep.subr.bf16.mxu0 0
        %1302 = vmatpush2.bf16.msra.mxu0 0
        %1303 = vmatprep.subr.bf16.mxu0 0
        %1304 = vmatpush2.bf16.msra.mxu0 0
        %1305 = vmatprep.subr.bf16.mxu0 0
        %1306 = vmatpush2.bf16.msra.mxu0 0
        %1307 = vmatprep.subr.bf16.mxu0 0
        %1308 = vmatpush2.bf16.msra.mxu0 0
        %1309 = vmatprep.subr.bf16.mxu0 0
        %1310 = vmatpush2.bf16.msra.mxu0 0
        %1311 = vmatprep.mubr.bf16.mxu0 0
        %1312 = vmatmul.mubr.bf16.gmra.mxu0 %v1058
        %v1313 = vpop.f32.mrf.mxu0
        %v1314 = vadd.f32 %v1104, %v1313
        %v1315 = vpop.f32.mrf.mxu0
        %v1316 = vpop.f32.mrf.mxu0
        %v1317 = vadd.f32 %v1104, %v1316
        %v1318 = vpop.f32.mrf.mxu0
        %1319 = vdwg.mxu0
        %v1320 = vmul.f32 %v1271, 0.17677669
        %v1321 = vmul.f32 %v1275, 0.17677669
        %v1322 = vpack.c.bf16 %v1321, %v1320
        %v1323 = vpack.c.bf16 %v1277, %v1273
        %v1324 = vpack.c.bf16 %v1317, %v1314
        %vm1325 = vcmask 261120
        %v1327 = vsel %vm1325, %v1322, 0
        %v1330 = vsel %vm1325, %v1323, 0
        %1332 = vmatprep.subr.bf16.mxu0 0
        %1333 = vmatpush1.bf16.xpose.msra.mxu0 0
        %1334 = vmatprep.subr.bf16.mxu0 0
        %1335 = vmatpush1.bf16.xpose.msra.mxu0 0
        %1336 = vmatprep.subr.bf16.mxu0 0
        %1337 = vmatpush1.bf16.xpose.msra.mxu0 0
        %1338 = vmatprep.subr.bf16.mxu0 0
        %1339 = vmatpush1.bf16.xpose.msra.mxu0 0
        %1340 = vmatprep.subr.bf16.mxu0 0
        %1341 = vmatpush1.bf16.xpose.msra.mxu0 0
        %1342 = vmatprep.subr.bf16.mxu0 0
        %1343 = vmatpush1.bf16.xpose.msra.mxu0 0
        %1344 = vmatprep.subr.bf16.mxu0 0
        %1345 = vmatpush1.bf16.xpose.msra.mxu0 0
        %1346 = vmatprep.subr.bf16.mxu0 0
        %1347 = vmatpush1.bf16.xpose.msra.mxu0 %v1330
        %1348 = vmatprep.subr.bf16.mxu0 0
        %1349 = vmatpush2.bf16.xpose.msra.mxu0 0
        %1350 = vmatprep.subr.bf16.mxu0 0
        %1351 = vmatpush2.bf16.xpose.msra.mxu0 0
        %1352 = vmatprep.subr.bf16.mxu0 0
        %1353 = vmatpush2.bf16.xpose.msra.mxu0 0
        %1354 = vmatprep.subr.bf16.mxu0 0
        %1355 = vmatpush2.bf16.xpose.msra.mxu0 0
        %1356 = vmatprep.subr.bf16.mxu0 0
        %1357 = vmatpush2.bf16.xpose.msra.mxu0 0
        %1358 = vmatprep.subr.bf16.mxu0 0
        %1359 = vmatpush2.bf16.xpose.msra.mxu0 0
        %1360 = vmatprep.subr.bf16.mxu0 0
        %1361 = vmatpush2.bf16.xpose.msra.mxu0 0
        %1362 = vmatprep.subr.bf16.mxu0 0
        %1363 = vmatpush2.bf16.xpose.msra.mxu0 0
        %1364 = vmatprep.mubr.bf16.mxu0 0
        %1365 = vmatmul.mubr.bf16.gmra.mxu0 %v1327
        %v1366 = vpop.f32.mrf.mxu0
        %v1367 = vadd.f32 0.0, %v1366
        %v1368 = vpop.f32.mrf.mxu0
        %v1369 = vpop.f32.mrf.mxu0
        %v1370 = vadd.f32 0.0, %v1369
        %v1371 = vpop.f32.mrf.mxu0
        %1372 = vdwg.mxu0
        %vm1373 = vcmask 130048
        %v1374 = vsel %vm1373, %v1367, -inf
        %1375 = vmax.xlane.f32.xlu0 %v1374
        %v1376 = vpop.xlane.xlu0 %1375
        %v1377 = vsel %vm1373, %v1370, -inf
        %1378 = vmax.xlane.f32.xlu0 %v1377
        %v1379 = vpop.xlane.xlu0 %1378
        %v1380 = vsub.f32 %v1367, %v1376
        %v1381 = vsub.f32 %v1370, %v1379
        %v1382 = vmul.f32 %v1380, 1.442695
        %v1383 = vpow.pop %v1382
        %v1384 = vmul.f32 %v1381, 1.442695
        %v1385 = vpow.pop %v1384
        %v1386 = vsel %vm1373, %v1383, 0.0
        %1387 = vadd.xlane.f32.xlu0 %v1386
        %v1388 = vpop.xlane.xlu0 %1387
        %v1389 = vsel %vm1373, %v1385, 0.0
        %1390 = vadd.xlane.f32.xlu0 %v1389
        %v1391 = vpop.xlane.xlu0 %1390
        %v1392 = vrcp.pop %v1388
        %v1393 = vrcp.pop %v1391
        %v1394 = vmul.f32 %v1383, %v1392
        %v1395 = vmul.f32 %v1385, %v1393
        %v1396 = vpack.c.bf16 %v1395, %v1394
        %v1398 = vsel %vm1373, %v1396, 0
        %1400 = vmatprep.subr.bf16.mxu0 0
        %1401 = vmatpush1.bf16.msra.mxu0 0
        %1402 = vmatprep.subr.bf16.mxu0 0
        %1403 = vmatpush1.bf16.msra.mxu0 0
        %1404 = vmatprep.subr.bf16.mxu0 0
        %1405 = vmatpush1.bf16.msra.mxu0 0
        %1406 = vmatprep.subr.bf16.mxu0 0
        %1407 = vmatpush1.bf16.msra.mxu0 0
        %1408 = vmatprep.subr.bf16.mxu0 0
        %1409 = vmatpush1.bf16.msra.mxu0 0
        %1410 = vmatprep.subr.bf16.mxu0 0
        %1411 = vmatpush1.bf16.msra.mxu0 0
        %1412 = vmatprep.subr.bf16.mxu0 0
        %1413 = vmatpush1.bf16.msra.mxu0 0
        %1414 = vmatprep.subr.bf16.mxu0 0
        %1415 = vmatpush1.bf16.msra.mxu0 %v1324
        %1416 = vmatprep.subr.bf16.mxu0 0
        %1417 = vmatpush2.bf16.msra.mxu0 0
        %1418 = vmatprep.subr.bf16.mxu0 0
        %1419 = vmatpush2.bf16.msra.mxu0 0
        %1420 = vmatprep.subr.bf16.mxu0 0
        %1421 = vmatpush2.bf16.msra.mxu0 0
        %1422 = vmatprep.subr.bf16.mxu0 0
        %1423 = vmatpush2.bf16.msra.mxu0 0
        %1424 = vmatprep.subr.bf16.mxu0 0
        %1425 = vmatpush2.bf16.msra.mxu0 0
        %1426 = vmatprep.subr.bf16.mxu0 0
        %1427 = vmatpush2.bf16.msra.mxu0 0
        %1428 = vmatprep.subr.bf16.mxu0 0
        %1429 = vmatpush2.bf16.msra.mxu0 0
        %1430 = vmatprep.subr.bf16.mxu0 0
        %1431 = vmatpush2.bf16.msra.mxu0 0
        %1432 = vmatprep.mubr.bf16.mxu0 0
        %1433 = vmatmul.mubr.bf16.gmra.mxu0 %v1398
        %v1434 = vpop.f32.mrf.mxu0
        %v1435 = vadd.f32 0.0, %v1434
        %v1436 = vpop.f32.mrf.mxu0
        %v1437 = vpop.f32.mrf.mxu0
        %v1438 = vadd.f32 0.0, %v1437
        %v1439 = vpop.f32.mrf.mxu0
        %1440 = vdwg.mxu0
        %1442 = vrot.lane.b32.xlu0 %v1322, 96
        %v1443 = vpop.permute.xlu0 %1442
        %1445 = vrot.lane.b32.xlu0 %v1323, 96
        %v1446 = vpop.permute.xlu0 %1445
        %v1448 = vsel %vm1325, %v1443, 0
        %v1451 = vsel %vm1325, %v1446, 0
        %1453 = vmatprep.subr.bf16.mxu0 0
        %1454 = vmatpush1.bf16.xpose.msra.mxu0 0
        %1455 = vmatprep.subr.bf16.mxu0 0
        %1456 = vmatpush1.bf16.xpose.msra.mxu0 0
        %1457 = vmatprep.subr.bf16.mxu0 0
        %1458 = vmatpush1.bf16.xpose.msra.mxu0 0
        %1459 = vmatprep.subr.bf16.mxu0 0
        %1460 = vmatpush1.bf16.xpose.msra.mxu0 0
        %1461 = vmatprep.subr.bf16.mxu0 0
        %1462 = vmatpush1.bf16.xpose.msra.mxu0 0
        %1463 = vmatprep.subr.bf16.mxu0 0
        %1464 = vmatpush1.bf16.xpose.msra.mxu0 0
        %1465 = vmatprep.subr.bf16.mxu0 0
        %1466 = vmatpush1.bf16.xpose.msra.mxu0 0
        %1467 = vmatprep.subr.bf16.mxu0 0
        %1468 = vmatpush1.bf16.xpose.msra.mxu0 %v1451
        %1469 = vmatprep.subr.bf16.mxu0 0
        %1470 = vmatpush2.bf16.xpose.msra.mxu0 0
        %1471 = vmatprep.subr.bf16.mxu0 0
        %1472 = vmatpush2.bf16.xpose.msra.mxu0 0
        %1473 = vmatprep.subr.bf16.mxu0 0
        %1474 = vmatpush2.bf16.xpose.msra.mxu0 0
        %1475 = vmatprep.subr.bf16.mxu0 0
        %1476 = vmatpush2.bf16.xpose.msra.mxu0 0
        %1477 = vmatprep.subr.bf16.mxu0 0
        %1478 = vmatpush2.bf16.xpose.msra.mxu0 0
        %1479 = vmatprep.subr.bf16.mxu0 0
        %1480 = vmatpush2.bf16.xpose.msra.mxu0 0
        %1481 = vmatprep.subr.bf16.mxu0 0
        %1482 = vmatpush2.bf16.xpose.msra.mxu0 0
        %1483 = vmatprep.subr.bf16.mxu0 0
        %1484 = vmatpush2.bf16.xpose.msra.mxu0 0
        %1485 = vmatprep.mubr.bf16.mxu0 0
        %1486 = vmatmul.mubr.bf16.gmra.mxu0 %v1448
        %v1487 = vpop.f32.mrf.mxu0
        %v1488 = vadd.f32 0.0, %v1487
        %v1489 = vpop.f32.mrf.mxu0
        %v1490 = vpop.f32.mrf.mxu0
        %v1491 = vadd.f32 0.0, %v1490
        %v1492 = vpop.f32.mrf.mxu0
        %1493 = vdwg.mxu0
        %v1494 = vsel %vm1373, %v1488, -inf
        %1495 = vmax.xlane.f32.xlu0 %v1494
        %v1496 = vpop.xlane.xlu0 %1495
        %v1497 = vsel %vm1373, %v1491, -inf
        %1498 = vmax.xlane.f32.xlu0 %v1497
        %v1499 = vpop.xlane.xlu0 %1498
        %v1500 = vsub.f32 %v1488, %v1496
        %v1501 = vsub.f32 %v1491, %v1499
        %v1502 = vmul.f32 %v1500, 1.442695
        %v1503 = vpow.pop %v1502
        %v1504 = vmul.f32 %v1501, 1.442695
        %v1505 = vpow.pop %v1504
        %v1506 = vsel %vm1373, %v1503, 0.0
        %1507 = vadd.xlane.f32.xlu0 %v1506
        %v1508 = vpop.xlane.xlu0 %1507
        %v1509 = vsel %vm1373, %v1505, 0.0
        %1510 = vadd.xlane.f32.xlu0 %v1509
        %v1511 = vpop.xlane.xlu0 %1510
        %v1512 = vrcp.pop %v1508
        %v1513 = vrcp.pop %v1511
        %v1514 = vmul.f32 %v1503, %v1512
        %v1515 = vmul.f32 %v1505, %v1513
        %v1516 = vpack.c.bf16 %v1515, %v1514
        %1518 = vrot.lane.b32.xlu0 %v1324, 96
        %v1519 = vpop.permute.xlu0 %1518
        %v1522 = vsel %vm1373, %v1516, 0
        %1524 = vmatprep.subr.bf16.mxu0 0
        %1525 = vmatpush1.bf16.msra.mxu0 0
        %1526 = vmatprep.subr.bf16.mxu0 0
        %1527 = vmatpush1.bf16.msra.mxu0 0
        %1528 = vmatprep.subr.bf16.mxu0 0
        %1529 = vmatpush1.bf16.msra.mxu0 0
        %1530 = vmatprep.subr.bf16.mxu0 0
        %1531 = vmatpush1.bf16.msra.mxu0 0
        %1532 = vmatprep.subr.bf16.mxu0 0
        %1533 = vmatpush1.bf16.msra.mxu0 0
        %1534 = vmatprep.subr.bf16.mxu0 0
        %1535 = vmatpush1.bf16.msra.mxu0 0
        %1536 = vmatprep.subr.bf16.mxu0 0
        %1537 = vmatpush1.bf16.msra.mxu0 0
        %1538 = vmatprep.subr.bf16.mxu0 0
        %1539 = vmatpush1.bf16.msra.mxu0 %v1519
        %1540 = vmatprep.subr.bf16.mxu0 0
        %1541 = vmatpush2.bf16.msra.mxu0 0
        %1542 = vmatprep.subr.bf16.mxu0 0
        %1543 = vmatpush2.bf16.msra.mxu0 0
        %1544 = vmatprep.subr.bf16.mxu0 0
        %1545 = vmatpush2.bf16.msra.mxu0 0
        %1546 = vmatprep.subr.bf16.mxu0 0
        %1547 = vmatpush2.bf16.msra.mxu0 0
        %1548 = vmatprep.subr.bf16.mxu0 0
        %1549 = vmatpush2.bf16.msra.mxu0 0
        %1550 = vmatprep.subr.bf16.mxu0 0
        %1551 = vmatpush2.bf16.msra.mxu0 0
        %1552 = vmatprep.subr.bf16.mxu0 0
        %1553 = vmatpush2.bf16.msra.mxu0 0
        %1554 = vmatprep.subr.bf16.mxu0 0
        %1555 = vmatpush2.bf16.msra.mxu0 0
        %1556 = vmatprep.mubr.bf16.mxu0 0
        %1557 = vmatmul.mubr.bf16.gmra.mxu0 %v1522
        %v1558 = vpop.f32.mrf.mxu0
        %v1559 = vadd.f32 0.0, %v1558
        %v1560 = vpop.f32.mrf.mxu0
        %v1561 = vpop.f32.mrf.mxu0
        %v1562 = vadd.f32 0.0, %v1561
        %v1563 = vpop.f32.mrf.mxu0
        %1564 = vdwg.mxu0
        %1565 = vrot.lane.b32.xlu0 %v1322, 64
        %v1566 = vpop.permute.xlu0 %1565
        %1567 = vrot.lane.b32.xlu0 %v1323, 64
        %v1568 = vpop.permute.xlu0 %1567
        %v1570 = vsel %vm1325, %v1566, 0
        %v1573 = vsel %vm1325, %v1568, 0
        %1575 = vmatprep.subr.bf16.mxu0 0
        %1576 = vmatpush1.bf16.xpose.msra.mxu0 0
        %1577 = vmatprep.subr.bf16.mxu0 0
        %1578 = vmatpush1.bf16.xpose.msra.mxu0 0
        %1579 = vmatprep.subr.bf16.mxu0 0
        %1580 = vmatpush1.bf16.xpose.msra.mxu0 0
        %1581 = vmatprep.subr.bf16.mxu0 0
        %1582 = vmatpush1.bf16.xpose.msra.mxu0 0
        %1583 = vmatprep.subr.bf16.mxu0 0
        %1584 = vmatpush1.bf16.xpose.msra.mxu0 0
        %1585 = vmatprep.subr.bf16.mxu0 0
        %1586 = vmatpush1.bf16.xpose.msra.mxu0 0
        %1587 = vmatprep.subr.bf16.mxu0 0
        %1588 = vmatpush1.bf16.xpose.msra.mxu0 0
        %1589 = vmatprep.subr.bf16.mxu0 0
        %1590 = vmatpush1.bf16.xpose.msra.mxu0 %v1573
        %1591 = vmatprep.subr.bf16.mxu0 0
        %1592 = vmatpush2.bf16.xpose.msra.mxu0 0
        %1593 = vmatprep.subr.bf16.mxu0 0
        %1594 = vmatpush2.bf16.xpose.msra.mxu0 0
        %1595 = vmatprep.subr.bf16.mxu0 0
        %1596 = vmatpush2.bf16.xpose.msra.mxu0 0
        %1597 = vmatprep.subr.bf16.mxu0 0
        %1598 = vmatpush2.bf16.xpose.msra.mxu0 0
        %1599 = vmatprep.subr.bf16.mxu0 0
        %1600 = vmatpush2.bf16.xpose.msra.mxu0 0
        %1601 = vmatprep.subr.bf16.mxu0 0
        %1602 = vmatpush2.bf16.xpose.msra.mxu0 0
        %1603 = vmatprep.subr.bf16.mxu0 0
        %1604 = vmatpush2.bf16.xpose.msra.mxu0 0
        %1605 = vmatprep.subr.bf16.mxu0 0
        %1606 = vmatpush2.bf16.xpose.msra.mxu0 0
        %1607 = vmatprep.mubr.bf16.mxu0 0
        %1608 = vmatmul.mubr.bf16.gmra.mxu0 %v1570
        %v1609 = vpop.f32.mrf.mxu0
        %v1610 = vadd.f32 0.0, %v1609
        %v1611 = vpop.f32.mrf.mxu0
        %v1612 = vpop.f32.mrf.mxu0
        %v1613 = vadd.f32 0.0, %v1612
        %v1614 = vpop.f32.mrf.mxu0
        %1615 = vdwg.mxu0
        %v1616 = vsel %vm1373, %v1610, -inf
        %1617 = vmax.xlane.f32.xlu0 %v1616
        %v1618 = vpop.xlane.xlu0 %1617
        %v1619 = vsel %vm1373, %v1613, -inf
        %1620 = vmax.xlane.f32.xlu0 %v1619
        %v1621 = vpop.xlane.xlu0 %1620
        %v1622 = vsub.f32 %v1610, %v1618
        %v1623 = vsub.f32 %v1613, %v1621
        %v1624 = vmul.f32 %v1622, 1.442695
        %v1625 = vpow.pop %v1624
        %v1626 = vmul.f32 %v1623, 1.442695
        %v1627 = vpow.pop %v1626
        %v1628 = vsel %vm1373, %v1625, 0.0
        %1629 = vadd.xlane.f32.xlu0 %v1628
        %v1630 = vpop.xlane.xlu0 %1629
        %v1631 = vsel %vm1373, %v1627, 0.0
        %1632 = vadd.xlane.f32.xlu0 %v1631
        %v1633 = vpop.xlane.xlu0 %1632
        %v1634 = vrcp.pop %v1630
        %v1635 = vrcp.pop %v1633
        %v1636 = vmul.f32 %v1625, %v1634
        %v1637 = vmul.f32 %v1627, %v1635
        %v1638 = vpack.c.bf16 %v1637, %v1636
        %1639 = vrot.lane.b32.xlu0 %v1324, 64
        %v1640 = vpop.permute.xlu0 %1639
        %v1643 = vsel %vm1373, %v1638, 0
        %1645 = vmatprep.subr.bf16.mxu0 0
        %1646 = vmatpush1.bf16.msra.mxu0 0
        %1647 = vmatprep.subr.bf16.mxu0 0
        %1648 = vmatpush1.bf16.msra.mxu0 0
        %1649 = vmatprep.subr.bf16.mxu0 0
        %1650 = vmatpush1.bf16.msra.mxu0 0
        %1651 = vmatprep.subr.bf16.mxu0 0
        %1652 = vmatpush1.bf16.msra.mxu0 0
        %1653 = vmatprep.subr.bf16.mxu0 0
        %1654 = vmatpush1.bf16.msra.mxu0 0
        %1655 = vmatprep.subr.bf16.mxu0 0
        %1656 = vmatpush1.bf16.msra.mxu0 0
        %1657 = vmatprep.subr.bf16.mxu0 0
        %1658 = vmatpush1.bf16.msra.mxu0 0
        %1659 = vmatprep.subr.bf16.mxu0 0
        %1660 = vmatpush1.bf16.msra.mxu0 %v1640
        %1661 = vmatprep.subr.bf16.mxu0 0
        %1662 = vmatpush2.bf16.msra.mxu0 0
        %1663 = vmatprep.subr.bf16.mxu0 0
        %1664 = vmatpush2.bf16.msra.mxu0 0
        %1665 = vmatprep.subr.bf16.mxu0 0
        %1666 = vmatpush2.bf16.msra.mxu0 0
        %1667 = vmatprep.subr.bf16.mxu0 0
        %1668 = vmatpush2.bf16.msra.mxu0 0
        %1669 = vmatprep.subr.bf16.mxu0 0
        %1670 = vmatpush2.bf16.msra.mxu0 0
        %1671 = vmatprep.subr.bf16.mxu0 0
        %1672 = vmatpush2.bf16.msra.mxu0 0
        %1673 = vmatprep.subr.bf16.mxu0 0
        %1674 = vmatpush2.bf16.msra.mxu0 0
        %1675 = vmatprep.subr.bf16.mxu0 0
        %1676 = vmatpush2.bf16.msra.mxu0 0
        %1677 = vmatprep.mubr.bf16.mxu0 0
        %1678 = vmatmul.mubr.bf16.gmra.mxu0 %v1643
        %v1679 = vpop.f32.mrf.mxu0
        %v1680 = vadd.f32 0.0, %v1679
        %v1681 = vpop.f32.mrf.mxu0
        %v1682 = vpop.f32.mrf.mxu0
        %v1683 = vadd.f32 0.0, %v1682
        %v1684 = vpop.f32.mrf.mxu0
        %1685 = vdwg.mxu0
        %1686 = vrot.lane.b32.xlu0 %v1322, 32
        %v1687 = vpop.permute.xlu0 %1686
        %1688 = vrot.lane.b32.xlu0 %v1323, 32
        %v1689 = vpop.permute.xlu0 %1688
        %v1691 = vsel %vm1325, %v1687, 0
        %v1694 = vsel %vm1325, %v1689, 0
        %1696 = vmatprep.subr.bf16.mxu0 0
        %1697 = vmatpush1.bf16.xpose.msra.mxu0 0
        %1698 = vmatprep.subr.bf16.mxu0 0
        %1699 = vmatpush1.bf16.xpose.msra.mxu0 0
        %1700 = vmatprep.subr.bf16.mxu0 0
        %1701 = vmatpush1.bf16.xpose.msra.mxu0 0
        %1702 = vmatprep.subr.bf16.mxu0 0
        %1703 = vmatpush1.bf16.xpose.msra.mxu0 0
        %1704 = vmatprep.subr.bf16.mxu0 0
        %1705 = vmatpush1.bf16.xpose.msra.mxu0 0
        %1706 = vmatprep.subr.bf16.mxu0 0
        %1707 = vmatpush1.bf16.xpose.msra.mxu0 0
        %1708 = vmatprep.subr.bf16.mxu0 0
        %1709 = vmatpush1.bf16.xpose.msra.mxu0 0
        %1710 = vmatprep.subr.bf16.mxu0 0
        %1711 = vmatpush1.bf16.xpose.msra.mxu0 %v1694
        %1712 = vmatprep.subr.bf16.mxu0 0
        %1713 = vmatpush2.bf16.xpose.msra.mxu0 0
        %1714 = vmatprep.subr.bf16.mxu0 0
        %1715 = vmatpush2.bf16.xpose.msra.mxu0 0
        %1716 = vmatprep.subr.bf16.mxu0 0
        %1717 = vmatpush2.bf16.xpose.msra.mxu0 0
        %1718 = vmatprep.subr.bf16.mxu0 0
        %1719 = vmatpush2.bf16.xpose.msra.mxu0 0
        %1720 = vmatprep.subr.bf16.mxu0 0
        %1721 = vmatpush2.bf16.xpose.msra.mxu0 0
        %1722 = vmatprep.subr.bf16.mxu0 0
        %1723 = vmatpush2.bf16.xpose.msra.mxu0 0
        %1724 = vmatprep.subr.bf16.mxu0 0
        %1725 = vmatpush2.bf16.xpose.msra.mxu0 0
        %1726 = vmatprep.subr.bf16.mxu0 0
        %1727 = vmatpush2.bf16.xpose.msra.mxu0 0
        %1728 = vmatprep.mubr.bf16.mxu0 0
        %1729 = vmatmul.mubr.bf16.gmra.mxu0 %v1691
        %v1730 = vpop.f32.mrf.mxu0
        %v1731 = vadd.f32 0.0, %v1730
        %v1732 = vpop.f32.mrf.mxu0
        %v1733 = vpop.f32.mrf.mxu0
        %v1734 = vadd.f32 0.0, %v1733
        %v1735 = vpop.f32.mrf.mxu0
        %1736 = vdwg.mxu0
        %v1737 = vsel %vm1373, %v1731, -inf
        %1738 = vmax.xlane.f32.xlu0 %v1737
        %v1739 = vpop.xlane.xlu0 %1738
        %v1740 = vsel %vm1373, %v1734, -inf
        %1741 = vmax.xlane.f32.xlu0 %v1740
        %v1742 = vpop.xlane.xlu0 %1741
        %v1743 = vsub.f32 %v1731, %v1739
        %v1744 = vsub.f32 %v1734, %v1742
        %v1745 = vmul.f32 %v1743, 1.442695
        %v1746 = vpow.pop %v1745
        %v1747 = vmul.f32 %v1744, 1.442695
        %v1748 = vpow.pop %v1747
        %v1749 = vsel %vm1373, %v1746, 0.0
        %1750 = vadd.xlane.f32.xlu0 %v1749
        %v1751 = vpop.xlane.xlu0 %1750
        %v1752 = vsel %vm1373, %v1748, 0.0
        %1753 = vadd.xlane.f32.xlu0 %v1752
        %v1754 = vpop.xlane.xlu0 %1753
        %v1755 = vrcp.pop %v1751
        %v1756 = vrcp.pop %v1754
        %v1757 = vmul.f32 %v1746, %v1755
        %v1758 = vmul.f32 %v1748, %v1756
        %v1759 = vpack.c.bf16 %v1758, %v1757
        %1760 = vrot.lane.b32.xlu0 %v1324, 32
        %v1761 = vpop.permute.xlu0 %1760
        %v1764 = vsel %vm1373, %v1759, 0
        %1766 = vmatprep.subr.bf16.mxu0 0
        %1767 = vmatpush1.bf16.msra.mxu0 0
        %1768 = vmatprep.subr.bf16.mxu0 0
        %1769 = vmatpush1.bf16.msra.mxu0 0
        %1770 = vmatprep.subr.bf16.mxu0 0
        %1771 = vmatpush1.bf16.msra.mxu0 0
        %1772 = vmatprep.subr.bf16.mxu0 0
        %1773 = vmatpush1.bf16.msra.mxu0 0
        %1774 = vmatprep.subr.bf16.mxu0 0
        %1775 = vmatpush1.bf16.msra.mxu0 0
        %1776 = vmatprep.subr.bf16.mxu0 0
        %1777 = vmatpush1.bf16.msra.mxu0 0
        %1778 = vmatprep.subr.bf16.mxu0 0
        %1779 = vmatpush1.bf16.msra.mxu0 0
        %1780 = vmatprep.subr.bf16.mxu0 0
        %1781 = vmatpush1.bf16.msra.mxu0 %v1761
        %1782 = vmatprep.subr.bf16.mxu0 0
        %1783 = vmatpush2.bf16.msra.mxu0 0
        %1784 = vmatprep.subr.bf16.mxu0 0
        %1785 = vmatpush2.bf16.msra.mxu0 0
        %1786 = vmatprep.subr.bf16.mxu0 0
        %1787 = vmatpush2.bf16.msra.mxu0 0
        %1788 = vmatprep.subr.bf16.mxu0 0
        %1789 = vmatpush2.bf16.msra.mxu0 0
        %1790 = vmatprep.subr.bf16.mxu0 0
        %1791 = vmatpush2.bf16.msra.mxu0 0
        %1792 = vmatprep.subr.bf16.mxu0 0
        %1793 = vmatpush2.bf16.msra.mxu0 0
        %1794 = vmatprep.subr.bf16.mxu0 0
        %1795 = vmatpush2.bf16.msra.mxu0 0
        %1796 = vmatprep.subr.bf16.mxu0 0
        %1797 = vmatpush2.bf16.msra.mxu0 0
        %1798 = vmatprep.mubr.bf16.mxu0 0
        %1799 = vmatmul.mubr.bf16.gmra.mxu0 %v1764
        %v1800 = vpop.f32.mrf.mxu0
        %v1801 = vadd.f32 0.0, %v1800
        %v1802 = vpop.f32.mrf.mxu0
        %v1803 = vpop.f32.mrf.mxu0
        %v1804 = vadd.f32 0.0, %v1803
        %v1805 = vpop.f32.mrf.mxu0
        %1806 = vdwg.mxu0
        %1809 = vrot.lane.b32.xlu0 %v1559, 32
        %v1810 = vpop.permute.xlu0 %1809
        %1811 = vrot.lane.b32.xlu0 %v1562, 32
        %v1812 = vpop.permute.xlu0 %1811
        %1817 = vrot.lane.b32.xlu0 %v1680, 64
        %v1818 = vpop.permute.xlu0 %1817
        %1819 = vrot.lane.b32.xlu0 %v1683, 64
        %v1820 = vpop.permute.xlu0 %1819
        %1825 = vrot.lane.b32.xlu0 %v1801, 96
        %v1826 = vpop.permute.xlu0 %1825
        %1827 = vrot.lane.b32.xlu0 %v1804, 96
        %v1828 = vpop.permute.xlu0 %1827
        %v1831 = vsel %vm1325, %v1435, %v1810
        %v1832 = vsel %vm1325, %v1438, %v1812
        %vm1833 = vcmask 523264
        %v1834 = vsel %vm1833, %v1831, %v1818
        %v1835 = vsel %vm1833, %v1832, %v1820
        %vm1836 = vcmask 785408
        %v1837 = vsel %vm1836, %v1834, %v1826
        %v1838 = vsel %vm1836, %v1835, %v1828
        %v1839 = vpack.c.bf16 %v1838, %v1837
        %v1840 = vld [vmem:[#allocation15] sm:$0xf]
        %v1841 = vld [vmem:[#allocation15 + $0x4] sm:$0xf]
        %v1842 = vld [vmem:[#allocation15 + $0x8] sm:$0xf]
        %v1843 = vld [vmem:[#allocation15 + $0xc] sm:$0xf]
        %v1844 = vld [vmem:[#allocation15 + $0x10] sm:$0xf]
        %v1845 = vld [vmem:[#allocation15 + $0x14] sm:$0xf]
        %v1846 = vld [vmem:[#allocation15 + $0x18] sm:$0xf]
        %v1847 = vld [vmem:[#allocation15 + $0x1c] sm:$0xf]
        %v1848 = vld [vmem:[#allocation15 + $0x20] sm:$0xf]
        %v1849 = vld [vmem:[#allocation15 + $0x24] sm:$0xf]
        %v1850 = vld [vmem:[#allocation15 + $0x28] sm:$0xf]
        %v1851 = vld [vmem:[#allocation15 + $0x2c] sm:$0xf]
        %v1852 = vld [vmem:[#allocation15 + $0x30] sm:$0xf]
        %v1853 = vld [vmem:[#allocation15 + $0x34] sm:$0xf]
        %v1854 = vld [vmem:[#allocation15 + $0x38] sm:$0xf]
        %v1855 = vld [vmem:[#allocation15 + $0x3c] sm:$0xf]
        %v1856 = vld [vmem:[#allocation16] sm:$0x1]
        %v1858 = vlaneseq
        %v1859 = vshrl.u32 %v1858, 7
        %v1860 = vsub.s32 0, %v1859
        %v1861 = vrot.slane %v1856, %v1860
        %v1879 = vunpack.c.l.b16 %v1840
        %v1880 = vunpack.c.l.b16 %v1841
        %v1881 = vunpack.c.l.b16 %v1842
        %v1882 = vunpack.c.l.b16 %v1843
        %v1883 = vunpack.c.l.b16 %v1844
        %v1884 = vunpack.c.l.b16 %v1845
        %v1885 = vunpack.c.l.b16 %v1846
        %v1886 = vunpack.c.l.b16 %v1847
        %v1887 = vunpack.c.l.b16 %v1848
        %v1888 = vunpack.c.l.b16 %v1849
        %v1889 = vunpack.c.l.b16 %v1850
        %v1890 = vunpack.c.l.b16 %v1851
        %v1891 = vunpack.c.l.b16 %v1852
        %v1892 = vunpack.c.l.b16 %v1853
        %v1893 = vunpack.c.l.b16 %v1854
        %v1894 = vunpack.c.l.b16 %v1855
        %v1895 = vpack.c.b16 %v1880, %v1879
        %v1896 = vpack.c.b16 %v1882, %v1881
        %v1897 = vpack.c.b16 %v1884, %v1883
        %v1898 = vpack.c.b16 %v1886, %v1885
        %v1899 = vpack.c.b16 %v1888, %v1887
        %v1900 = vpack.c.b16 %v1890, %v1889
        %v1901 = vpack.c.b16 %v1892, %v1891
        %v1902 = vpack.c.b16 %v1894, %v1893
        %1911 = vmatprep.subr.bf16.mxu0 0
        %1912 = vmatpush1.bf16.msra.mxu0 %v1902
        %1913 = vmatprep.subr.bf16.mxu0 0
        %1914 = vmatpush1.bf16.msra.mxu0 %v1901
        %1915 = vmatprep.subr.bf16.mxu0 0
        %1916 = vmatpush1.bf16.msra.mxu0 %v1900
        %1917 = vmatprep.subr.bf16.mxu0 0
        %1918 = vmatpush1.bf16.msra.mxu0 %v1899
        %1919 = vmatprep.subr.bf16.mxu0 0
        %1920 = vmatpush1.bf16.msra.mxu0 %v1898
        %1921 = vmatprep.subr.bf16.mxu0 0
        %1922 = vmatpush1.bf16.msra.mxu0 %v1897
        %1923 = vmatprep.subr.bf16.mxu0 0
        %1924 = vmatpush1.bf16.msra.mxu0 %v1896
        %1925 = vmatprep.subr.bf16.mxu0 0
        %1926 = vmatpush1.bf16.msra.mxu0 %v1895
        %1927 = vmatprep.subr.bf16.mxu0 0
        %1928 = vmatpush2.bf16.msra.mxu0 0
        %1929 = vmatprep.subr.bf16.mxu0 0
        %1930 = vmatpush2.bf16.msra.mxu0 0
        %1931 = vmatprep.subr.bf16.mxu0 0
        %1932 = vmatpush2.bf16.msra.mxu0 0
        %1933 = vmatprep.subr.bf16.mxu0 0
        %1934 = vmatpush2.bf16.msra.mxu0 0
        %1935 = vmatprep.subr.bf16.mxu0 0
        %1936 = vmatpush2.bf16.msra.mxu0 0
        %1937 = vmatprep.subr.bf16.mxu0 0
        %1938 = vmatpush2.bf16.msra.mxu0 0
        %1939 = vmatprep.subr.bf16.mxu0 0
        %1940 = vmatpush2.bf16.msra.mxu0 0
        %1941 = vmatprep.subr.bf16.mxu0 0
        %1942 = vmatpush2.bf16.msra.mxu0 0
        %1943 = vmatprep.mubr.bf16.mxu0 0
        %1944 = vmatmul.mubr.bf16.gmra.mxu0 %v1839
        %v1945 = vpop.f32.mrf.mxu0
        %v1946 = vadd.f32 %v1861, %v1945
        %v1947 = vpop.f32.mrf.mxu0
        %v1948 = vpop.f32.mrf.mxu0
        %v1949 = vadd.f32 %v1861, %v1948
        %v1950 = vpop.f32.mrf.mxu0
        %1951 = vdwg.mxu0
        %v1952 = vadd.f32 %v1012, %v1946
        %v1953 = vadd.f32 %v1013, %v1949
        %1954 = vst [vmem:[%s599] sm:$0xff] %v1952
        %1955 = vst [vmem:[%s599 + $0x8] sm:$0xff] %v1953
        %p1956 = scmp.lt.s32.totalorder %s31, 1
        %s1957 = scalar_select %p1956, %s31, 1
        %s1958 = smul.addr %s1957, 2
        %s1959 = smul.addr %s1958, 8
        %s1960 = scalar_lea.vmem %s14, %s1959
        // Predicated region
        $region117: #{contrastive_module.6} parent=75 // pred_check
          %p1961 = pneg %p348
        $region118: #{contrastive_module.6} parent=75 // pred_check_branch
          %1963 = sbr.rel (%p1961) target = $region120
        $region119: #{contrastive_module.6} parent=75 // pred_region
          _
        $region120: #{contrastive_module.6} parent=75 // pred_fallthru
          _
      $region76: #{contrastive_module.6} parent=5 // pred_fallthru
        _
      %p1964 = scmp.le.s32.totalorder 2, %s26
      // Predicated region
      $region121: #{contrastive_module.6} parent=5 // pred_check
        %p1965 = pneg %p1964
      $region122: #{contrastive_module.6} parent=5 // pred_check_branch
        %1967 = sbr.rel (%p1965) target = $region124
      $region123: #{contrastive_module.6} parent=5 // pred_region
        %s1968 = ssub.s32 %s26, 2
        // Predicated region
        $region125: #{contrastive_module.6} parent=123 // pred_check
          %p1969 = pneg %p354
        $region126: #{contrastive_module.6} parent=123 // pred_check_branch
          %1971 = sbr.rel (%p1969) target = $region128
        $region127: #{contrastive_module.6} parent=123 // pred_region
          %p1972 = scmp.lt.s32.totalorder %s32, 1
          %s1973 = scalar_select %p1972, %s32, 1
          %s1974 = smul.addr %s1973, 2
          %s1975 = smul.addr %s1974, 8
          %s1976 = scalar_lea.vmem %s14, %s1975
        $region128: #{contrastive_module.6} parent=123 // pred_fallthru
          _
      $region124: #{contrastive_module.6} parent=5 // pred_fallthru
        _
    $region6: #{contrastive_module.6} parent=1 // loop_footer
      %s30 = sadd.s32 1, %s26
    $region7: #{contrastive_module.6} parent=1 // loop_footer_branch
      %25 = sbr.rel target = $region3
    $region8: #{contrastive_module.6} parent=1 // loop_exit
      _
    %1977 = vsyncpa [#allocation3], 1
    %s1978 = scalar_lea.sflag [#allocation3], 1
    %1979 = vsyncpa %s1978, 1
    %1980 = vsyncpa [#allocation5], 1
    %1981 = vsyncpa [#allocation8], 1
    %1982 = vsyncpa [#allocation11], 1
    %1983 = vsyncpa [#allocation14], 1
    %1984 = vsyncpa [#allocation17], 1

// kernel: contrastive_module.9
$region0: #{contrastive_module.9}
  #allocation0 [shape = 'u32[]', space=smem, size = 0x4, offset = 0x4, fixed_abs, tag = 'smem constant byte address 0x4 - core index']
  #allocation1 [shape = 'u32[144,128]{1,0:T(1,128)}', space=vmem, size = 0x12000, scoped, tag = 'internal scratch']
  %s0 = inlined_call_operand.vmem [shape: f32[32,128], index: 0, kind: input, shape index: {}]
  %s1 = inlined_call_operand.vmem [shape: f32[1,128], index: 1, kind: input, shape index: {}]
  %s2 = inlined_call_operand.vmem [shape: f32[1,128], index: 2, kind: input, shape index: {}]
  %s3 = inlined_call_operand.vmem [shape: bf16[128,256], index: 3, kind: input, shape index: {}]
  %s4 = inlined_call_operand.vmem [shape: f32[1,256], index: 4, kind: input, shape index: {}]
  %s5 = inlined_call_operand.vmem [shape: f32[1,256], index: 5, kind: input, shape index: {}]
  %s6 = inlined_call_operand.vmem [shape: f32[1,256], index: 6, kind: input, shape index: {}]
  %s7 = inlined_call_operand.vmem [shape: bf16[256,128], index: 7, kind: input, shape index: {}]
  %s8 = inlined_call_operand.vmem [shape: f32[1,128], index: 8, kind: input, shape index: {}]
  %s9 = inlined_call_operand.vmem [shape: f32[1,128], index: 9, kind: input, shape index: {}]
  %s10 = inlined_call_operand.vmem [shape: f32[1,128], index: 10, kind: input, shape index: {}]
  %s11 = inlined_call_operand.vmem [shape: bf16[128,256], index: 11, kind: input, shape index: {}]
  %s12 = inlined_call_operand.vmem [shape: f32[1,256], index: 12, kind: input, shape index: {}]
  %s13 = inlined_call_operand.vmem [shape: bf16[256,128], index: 13, kind: input, shape index: {}]
  %s14 = inlined_call_operand.vmem [shape: f32[1,128], index: 14, kind: input, shape index: {}]
  %s15 = inlined_call_operand.vmem [shape: f32[1,128], index: 15, kind: input, shape index: {}]
  %s16 = inlined_call_operand.vmem [shape: f32[1,128], index: 16, kind: input, shape index: {}]
  %s17 = inlined_call_operand.hbm [shape: f32[32,128], index: 17, kind: output, shape index: {}]
  %s18 = sld [smem:[#allocation0]]
  $region101: #{contrastive_module.9} parent=0
    _
  %s20 = ssub.s32 1, %s18
  %s21 = scalar_select 0, %s20, %s18
  $region1: #{contrastive_module.9} parent=0
    #allocation2 [shape = 'u8[16384]{0}', space=vmem, size = 0x4000, scoped, tag = 'output window, operand 0']
    #allocation3 [shape = 's32[2]{0}', space=sflag, size = 0x8, scoped, tag = 'scoped memory for contrastive_module.9']
    %22 = vsyncpa [#allocation3], 0
    %s23 = scalar_lea.sflag [#allocation3], 1
    %24 = vsyncpa %s23, 0
    loop: start=0, step=1, limit=4
    $region2: #{contrastive_module.9} parent=1 // loop_pre_header
      _
    $region3: #{contrastive_module.9} parent=1 // loop_header
      %s26 = sphi 0, %s30
      %p27 = scmp.ge.s32.totalorder %s26, 4
      %s36 = sphi 0, %s38
      %s39 = sphi 0, %s36
      %s40 = sphi 0, %s39
      %s56 = sphi 0, %s40
      %s60 = sphi 0, %s60
      %s62 = sphi 0, %s60
      %s63 = sphi 0, %s62
      %s77 = sphi 0, %s63
      %s81 = sphi 0, %s81
      %s83 = sphi 0, %s81
      %s84 = sphi 0, %s83
      %s98 = sphi 0, %s84
      %s102 = sphi 0, %s102
      %s104 = sphi 0, %s102
      %s105 = sphi 0, %s104
      %s119 = sphi 0, %s105
      %s123 = sphi 0, %s123
      %s125 = sphi 0, %s123
      %s126 = sphi 0, %s125
      %s140 = sphi 0, %s126
      %s144 = sphi 0, %s144
      %s146 = sphi 0, %s144
      %s147 = sphi 0, %s146
      %s161 = sphi 0, %s147
      %s165 = sphi 0, %s165
      %s167 = sphi 0, %s165
      %s168 = sphi 0, %s167
      %s182 = sphi 0, %s168
      %s186 = sphi 0, %s186
      %s188 = sphi 0, %s186
      %s189 = sphi 0, %s188
      %s203 = sphi 0, %s189
      %s207 = sphi 0, %s207
      %s209 = sphi 0, %s207
      %s210 = sphi 0, %s209
      %s224 = sphi 0, %s210
      %s228 = sphi 0, %s228
      %s230 = sphi 0, %s228
      %s231 = sphi 0, %s230
      %s245 = sphi 0, %s231
      %s249 = sphi 0, %s249
      %s251 = sphi 0, %s249
      %s252 = sphi 0, %s251
      %s266 = sphi 0, %s252
      %s270 = sphi 0, %s270
      %s272 = sphi 0, %s270
      %s273 = sphi 0, %s272
      %s287 = sphi 0, %s273
      %s291 = sphi 0, %s291
      %s293 = sphi 0, %s291
      %s294 = sphi 0, %s293
      %s308 = sphi 0, %s294
      %s312 = sphi 0, %s312
      %s314 = sphi 0, %s312
      %s315 = sphi 0, %s314
      %s329 = sphi 0, %s315
      %s333 = sphi 0, %s333
      %s335 = sphi 0, %s333
      %s336 = sphi 0, %s335
      %s350 = sphi 0, %s336
      %s354 = sphi 0, %s354
      %s356 = sphi 0, %s354
      %s357 = sphi 0, %s356
      %s371 = sphi 0, %s357
      %s375 = sphi 0, %s375
      %s377 = sphi 0, %s375
      %s378 = sphi 0, %s377
      %s392 = sphi 0, %s378
      %s398 = sphi 0, %s400
      %s401 = sphi 0, %s398
      %s402 = sphi 0, %s401
      %s418 = sphi 0, %s402
    $region4: #{contrastive_module.9} parent=1 // loop_header_branch
      %29 = sbr.rel (%p27) target = $region8
    $region5: #{contrastive_module.9} parent=1 // loop_body
      %s31 = ssub.s32 %s26, 1
      %s32 = ssub.s32 %s26, 2
      %s33 = sadd.s32 %s26, 1
      %s34 = ssub.s32 %s26, %s33
      %p35 = scmp.eq.s32.totalorder %s34, 0
      %s37 = sadd.s32 %s36, 1
      %s38 = scalar_select %p35, %s36, %s37
      %p41 = pneg %p35
      %p42 = scmp.eq.s32.totalorder %s26, 1
      %p43 = por %p41, %p42
      %p44 = scmp.ne.s32.totalorder %s36, %s39
      %p45 = scmp.eq.s32.totalorder %s26, 0
      %p46 = por %p44, %p45
      %p47 = scmp.ne.s32.totalorder %s36, %s39
      %p48 = scmp.eq.s32.totalorder %s31, 1
      %p49 = por %p47, %p48
      %p50 = scmp.ne.s32.totalorder %s39, %s40
      %p51 = scmp.eq.s32.totalorder %s31, 0
      %p52 = por %p50, %p51
      %p53 = scmp.ne.s32.totalorder %s39, %s40
      %p54 = scmp.eq.s32.totalorder %s32, 1
      %p55 = por %p53, %p54
      %p57 = scmp.ne.s32.totalorder %s40, %s56
      %p58 = scmp.eq.s32.totalorder %s32, 0
      %p59 = por %p57, %p58
      %s61 = sadd.s32 %s60, 1
      %p64 = scmp.eq.s32.totalorder %s26, 1
      %p65 = scmp.ne.s32.totalorder %s60, %s62
      %p66 = scmp.eq.s32.totalorder %s26, 0
      %p67 = por %p65, %p66
      %p68 = scmp.ne.s32.totalorder %s60, %s62
      %p69 = scmp.eq.s32.totalorder %s31, 1
      %p70 = por %p68, %p69
      %p71 = scmp.ne.s32.totalorder %s62, %s63
      %p72 = scmp.eq.s32.totalorder %s31, 0
      %p73 = por %p71, %p72
      %p74 = scmp.ne.s32.totalorder %s62, %s63
      %p75 = scmp.eq.s32.totalorder %s32, 1
      %p76 = por %p74, %p75
      %p78 = scmp.ne.s32.totalorder %s63, %s77
      %p79 = scmp.eq.s32.totalorder %s32, 0
      %p80 = por %p78, %p79
      %s82 = sadd.s32 %s81, 1
      %p85 = scmp.eq.s32.totalorder %s26, 1
      %p86 = scmp.ne.s32.totalorder %s81, %s83
      %p87 = scmp.eq.s32.totalorder %s26, 0
      %p88 = por %p86, %p87
      %p89 = scmp.ne.s32.totalorder %s81, %s83
      %p90 = scmp.eq.s32.totalorder %s31, 1
      %p91 = por %p89, %p90
      %p92 = scmp.ne.s32.totalorder %s83, %s84
      %p93 = scmp.eq.s32.totalorder %s31, 0
      %p94 = por %p92, %p93
      %p95 = scmp.ne.s32.totalorder %s83, %s84
      %p96 = scmp.eq.s32.totalorder %s32, 1
      %p97 = por %p95, %p96
      %p99 = scmp.ne.s32.totalorder %s84, %s98
      %p100 = scmp.eq.s32.totalorder %s32, 0
      %p101 = por %p99, %p100
      %s103 = sadd.s32 %s102, 1
      %p106 = scmp.eq.s32.totalorder %s26, 1
      %p107 = scmp.ne.s32.totalorder %s102, %s104
      %p108 = scmp.eq.s32.totalorder %s26, 0
      %p109 = por %p107, %p108
      %p110 = scmp.ne.s32.totalorder %s102, %s104
      %p111 = scmp.eq.s32.totalorder %s31, 1
      %p112 = por %p110, %p111
      %p113 = scmp.ne.s32.totalorder %s104, %s105
      %p114 = scmp.eq.s32.totalorder %s31, 0
      %p115 = por %p113, %p114
      %p116 = scmp.ne.s32.totalorder %s104, %s105
      %p117 = scmp.eq.s32.totalorder %s32, 1
      %p118 = por %p116, %p117
      %p120 = scmp.ne.s32.totalorder %s105, %s119
      %p121 = scmp.eq.s32.totalorder %s32, 0
      %p122 = por %p120, %p121
      %s124 = sadd.s32 %s123, 1
      %p127 = scmp.eq.s32.totalorder %s26, 1
      %p128 = scmp.ne.s32.totalorder %s123, %s125
      %p129 = scmp.eq.s32.totalorder %s26, 0
      %p130 = por %p128, %p129
      %p131 = scmp.ne.s32.totalorder %s123, %s125
      %p132 = scmp.eq.s32.totalorder %s31, 1
      %p133 = por %p131, %p132
      %p134 = scmp.ne.s32.totalorder %s125, %s126
      %p135 = scmp.eq.s32.totalorder %s31, 0
      %p136 = por %p134, %p135
      %p137 = scmp.ne.s32.totalorder %s125, %s126
      %p138 = scmp.eq.s32.totalorder %s32, 1
      %p139 = por %p137, %p138
      %p141 = scmp.ne.s32.totalorder %s126, %s140
      %p142 = scmp.eq.s32.totalorder %s32, 0
      %p143 = por %p141, %p142
      %s145 = sadd.s32 %s144, 1
      %p148 = scmp.eq.s32.totalorder %s26, 1
      %p149 = scmp.ne.s32.totalorder %s144, %s146
      %p150 = scmp.eq.s32.totalorder %s26, 0
      %p151 = por %p149, %p150
      %p152 = scmp.ne.s32.totalorder %s144, %s146
      %p153 = scmp.eq.s32.totalorder %s31, 1
      %p154 = por %p152, %p153
      %p155 = scmp.ne.s32.totalorder %s146, %s147
      %p156 = scmp.eq.s32.totalorder %s31, 0
      %p157 = por %p155, %p156
      %p158 = scmp.ne.s32.totalorder %s146, %s147
      %p159 = scmp.eq.s32.totalorder %s32, 1
      %p160 = por %p158, %p159
      %p162 = scmp.ne.s32.totalorder %s147, %s161
      %p163 = scmp.eq.s32.totalorder %s32, 0
      %p164 = por %p162, %p163
      %s166 = sadd.s32 %s165, 1
      %p169 = scmp.eq.s32.totalorder %s26, 1
      %p170 = scmp.ne.s32.totalorder %s165, %s167
      %p171 = scmp.eq.s32.totalorder %s26, 0
      %p172 = por %p170, %p171
      %p173 = scmp.ne.s32.totalorder %s165, %s167
      %p174 = scmp.eq.s32.totalorder %s31, 1
      %p175 = por %p173, %p174
      %p176 = scmp.ne.s32.totalorder %s167, %s168
      %p177 = scmp.eq.s32.totalorder %s31, 0
      %p178 = por %p176, %p177
      %p179 = scmp.ne.s32.totalorder %s167, %s168
      %p180 = scmp.eq.s32.totalorder %s32, 1
      %p181 = por %p179, %p180
      %p183 = scmp.ne.s32.totalorder %s168, %s182
      %p184 = scmp.eq.s32.totalorder %s32, 0
      %p185 = por %p183, %p184
      %s187 = sadd.s32 %s186, 1
      %p190 = scmp.eq.s32.totalorder %s26, 1
      %p191 = scmp.ne.s32.totalorder %s186, %s188
      %p192 = scmp.eq.s32.totalorder %s26, 0
      %p193 = por %p191, %p192
      %p194 = scmp.ne.s32.totalorder %s186, %s188
      %p195 = scmp.eq.s32.totalorder %s31, 1
      %p196 = por %p194, %p195
      %p197 = scmp.ne.s32.totalorder %s188, %s189
      %p198 = scmp.eq.s32.totalorder %s31, 0
      %p199 = por %p197, %p198
      %p200 = scmp.ne.s32.totalorder %s188, %s189
      %p201 = scmp.eq.s32.totalorder %s32, 1
      %p202 = por %p200, %p201
      %p204 = scmp.ne.s32.totalorder %s189, %s203
      %p205 = scmp.eq.s32.totalorder %s32, 0
      %p206 = por %p204, %p205
      %s208 = sadd.s32 %s207, 1
      %p211 = scmp.eq.s32.totalorder %s26, 1
      %p212 = scmp.ne.s32.totalorder %s207, %s209
      %p213 = scmp.eq.s32.totalorder %s26, 0
      %p214 = por %p212, %p213
      %p215 = scmp.ne.s32.totalorder %s207, %s209
      %p216 = scmp.eq.s32.totalorder %s31, 1
      %p217 = por %p215, %p216
      %p218 = scmp.ne.s32.totalorder %s209, %s210
      %p219 = scmp.eq.s32.totalorder %s31, 0
      %p220 = por %p218, %p219
      %p221 = scmp.ne.s32.totalorder %s209, %s210
      %p222 = scmp.eq.s32.totalorder %s32, 1
      %p223 = por %p221, %p222
      %p225 = scmp.ne.s32.totalorder %s210, %s224
      %p226 = scmp.eq.s32.totalorder %s32, 0
      %p227 = por %p225, %p226
      %s229 = sadd.s32 %s228, 1
      %p232 = scmp.eq.s32.totalorder %s26, 1
      %p233 = scmp.ne.s32.totalorder %s228, %s230
      %p234 = scmp.eq.s32.totalorder %s26, 0
      %p235 = por %p233, %p234
      %p236 = scmp.ne.s32.totalorder %s228, %s230
      %p237 = scmp.eq.s32.totalorder %s31, 1
      %p238 = por %p236, %p237
      %p239 = scmp.ne.s32.totalorder %s230, %s231
      %p240 = scmp.eq.s32.totalorder %s31, 0
      %p241 = por %p239, %p240
      %p242 = scmp.ne.s32.totalorder %s230, %s231
      %p243 = scmp.eq.s32.totalorder %s32, 1
      %p244 = por %p242, %p243
      %p246 = scmp.ne.s32.totalorder %s231, %s245
      %p247 = scmp.eq.s32.totalorder %s32, 0
      %p248 = por %p246, %p247
      %s250 = sadd.s32 %s249, 1
      %p253 = scmp.eq.s32.totalorder %s26, 1
      %p254 = scmp.ne.s32.totalorder %s249, %s251
      %p255 = scmp.eq.s32.totalorder %s26, 0
      %p256 = por %p254, %p255
      %p257 = scmp.ne.s32.totalorder %s249, %s251
      %p258 = scmp.eq.s32.totalorder %s31, 1
      %p259 = por %p257, %p258
      %p260 = scmp.ne.s32.totalorder %s251, %s252
      %p261 = scmp.eq.s32.totalorder %s31, 0
      %p262 = por %p260, %p261
      %p263 = scmp.ne.s32.totalorder %s251, %s252
      %p264 = scmp.eq.s32.totalorder %s32, 1
      %p265 = por %p263, %p264
      %p267 = scmp.ne.s32.totalorder %s252, %s266
      %p268 = scmp.eq.s32.totalorder %s32, 0
      %p269 = por %p267, %p268
      %s271 = sadd.s32 %s270, 1
      %p274 = scmp.eq.s32.totalorder %s26, 1
      %p275 = scmp.ne.s32.totalorder %s270, %s272
      %p276 = scmp.eq.s32.totalorder %s26, 0
      %p277 = por %p275, %p276
      %p278 = scmp.ne.s32.totalorder %s270, %s272
      %p279 = scmp.eq.s32.totalorder %s31, 1
      %p280 = por %p278, %p279
      %p281 = scmp.ne.s32.totalorder %s272, %s273
      %p282 = scmp.eq.s32.totalorder %s31, 0
      %p283 = por %p281, %p282
      %p284 = scmp.ne.s32.totalorder %s272, %s273
      %p285 = scmp.eq.s32.totalorder %s32, 1
      %p286 = por %p284, %p285
      %p288 = scmp.ne.s32.totalorder %s273, %s287
      %p289 = scmp.eq.s32.totalorder %s32, 0
      %p290 = por %p288, %p289
      %s292 = sadd.s32 %s291, 1
      %p295 = scmp.eq.s32.totalorder %s26, 1
      %p296 = scmp.ne.s32.totalorder %s291, %s293
      %p297 = scmp.eq.s32.totalorder %s26, 0
      %p298 = por %p296, %p297
      %p299 = scmp.ne.s32.totalorder %s291, %s293
      %p300 = scmp.eq.s32.totalorder %s31, 1
      %p301 = por %p299, %p300
      %p302 = scmp.ne.s32.totalorder %s293, %s294
      %p303 = scmp.eq.s32.totalorder %s31, 0
      %p304 = por %p302, %p303
      %p305 = scmp.ne.s32.totalorder %s293, %s294
      %p306 = scmp.eq.s32.totalorder %s32, 1
      %p307 = por %p305, %p306
      %p309 = scmp.ne.s32.totalorder %s294, %s308
      %p310 = scmp.eq.s32.totalorder %s32, 0
      %p311 = por %p309, %p310
      %s313 = sadd.s32 %s312, 1
      %p316 = scmp.eq.s32.totalorder %s26, 1
      %p317 = scmp.ne.s32.totalorder %s312, %s314
      %p318 = scmp.eq.s32.totalorder %s26, 0
      %p319 = por %p317, %p318
      %p320 = scmp.ne.s32.totalorder %s312, %s314
      %p321 = scmp.eq.s32.totalorder %s31, 1
      %p322 = por %p320, %p321
      %p323 = scmp.ne.s32.totalorder %s314, %s315
      %p324 = scmp.eq.s32.totalorder %s31, 0
      %p325 = por %p323, %p324
      %p326 = scmp.ne.s32.totalorder %s314, %s315
      %p327 = scmp.eq.s32.totalorder %s32, 1
      %p328 = por %p326, %p327
      %p330 = scmp.ne.s32.totalorder %s315, %s329
      %p331 = scmp.eq.s32.totalorder %s32, 0
      %p332 = por %p330, %p331
      %s334 = sadd.s32 %s333, 1
      %p337 = scmp.eq.s32.totalorder %s26, 1
      %p338 = scmp.ne.s32.totalorder %s333, %s335
      %p339 = scmp.eq.s32.totalorder %s26, 0
      %p340 = por %p338, %p339
      %p341 = scmp.ne.s32.totalorder %s333, %s335
      %p342 = scmp.eq.s32.totalorder %s31, 1
      %p343 = por %p341, %p342
      %p344 = scmp.ne.s32.totalorder %s335, %s336
      %p345 = scmp.eq.s32.totalorder %s31, 0
      %p346 = por %p344, %p345
      %p347 = scmp.ne.s32.totalorder %s335, %s336
      %p348 = scmp.eq.s32.totalorder %s32, 1
      %p349 = por %p347, %p348
      %p351 = scmp.ne.s32.totalorder %s336, %s350
      %p352 = scmp.eq.s32.totalorder %s32, 0
      %p353 = por %p351, %p352
      %s355 = sadd.s32 %s354, 1
      %p358 = scmp.eq.s32.totalorder %s26, 1
      %p359 = scmp.ne.s32.totalorder %s354, %s356
      %p360 = scmp.eq.s32.totalorder %s26, 0
      %p361 = por %p359, %p360
      %p362 = scmp.ne.s32.totalorder %s354, %s356
      %p363 = scmp.eq.s32.totalorder %s31, 1
      %p364 = por %p362, %p363
      %p365 = scmp.ne.s32.totalorder %s356, %s357
      %p366 = scmp.eq.s32.totalorder %s31, 0
      %p367 = por %p365, %p366
      %p368 = scmp.ne.s32.totalorder %s356, %s357
      %p369 = scmp.eq.s32.totalorder %s32, 1
      %p370 = por %p368, %p369
      %p372 = scmp.ne.s32.totalorder %s357, %s371
      %p373 = scmp.eq.s32.totalorder %s32, 0
      %p374 = por %p372, %p373
      %s376 = sadd.s32 %s375, 1
      %p379 = scmp.eq.s32.totalorder %s26, 1
      %p380 = scmp.ne.s32.totalorder %s375, %s377
      %p381 = scmp.eq.s32.totalorder %s26, 0
      %p382 = por %p380, %p381
      %p383 = scmp.ne.s32.totalorder %s375, %s377
      %p384 = scmp.eq.s32.totalorder %s31, 1
      %p385 = por %p383, %p384
      %p386 = scmp.ne.s32.totalorder %s377, %s378
      %p387 = scmp.eq.s32.totalorder %s31, 0
      %p388 = por %p386, %p387
      %p389 = scmp.ne.s32.totalorder %s377, %s378
      %p390 = scmp.eq.s32.totalorder %s32, 1
      %p391 = por %p389, %p390
      %p393 = scmp.ne.s32.totalorder %s378, %s392
      %p394 = scmp.eq.s32.totalorder %s32, 0
      %p395 = por %p393, %p394
      %s396 = ssub.s32 %s26, %s33
      %p397 = scmp.eq.s32.totalorder %s396, 0
      %s399 = sadd.s32 %s398, 1
      %s400 = scalar_select %p397, %s398, %s399
      %p403 = pneg %p397
      %p404 = scmp.eq.s32.totalorder %s26, 1
      %p405 = por %p403, %p404
      %p406 = scmp.ne.s32.totalorder %s398, %s401
      %p407 = scmp.eq.s32.totalorder %s26, 0
      %p408 = por %p406, %p407
      %p409 = scmp.ne.s32.totalorder %s398, %s401
      %p410 = scmp.eq.s32.totalorder %s31, 1
      %p411 = por %p409, %p410
      %p412 = scmp.ne.s32.totalorder %s401, %s402
      %p413 = scmp.eq.s32.totalorder %s31, 0
      %p414 = por %p412, %p413
      %p415 = scmp.ne.s32.totalorder %s401, %s402
      %p416 = scmp.eq.s32.totalorder %s32, 1
      %p417 = por %p415, %p416
      %p419 = scmp.ne.s32.totalorder %s402, %s418
      %p420 = scmp.eq.s32.totalorder %s32, 0
      %p421 = por %p419, %p420
      %p422 = scmp.le.s32.totalorder 1, %s26
      %p423 = scmp.lt.s32.totalorder %s26, 3
      %p424 = pnand %p422, %p423
      %p425 = pneg %p424
      // Predicated region
      $region9: #{contrastive_module.9} parent=5 // pred_check
        _
      $region10: #{contrastive_module.9} parent=5 // pred_check_branch
        %427 = sbr.rel (%p424) target = $region12
      $region11: #{contrastive_module.9} parent=5 // pred_region
        %s428 = ssub.s32 %s26, 1
        // Predicated region
        $region13: #{contrastive_module.9} parent=11 // pred_check
          %p429 = pneg %p73
        $region14: #{contrastive_module.9} parent=11 // pred_check_branch
          %431 = sbr.rel (%p429) target = $region16
        $region15: #{contrastive_module.9} parent=11 // pred_region
          _
        $region16: #{contrastive_module.9} parent=11 // pred_fallthru
          _
        // Predicated region
        $region17: #{contrastive_module.9} parent=11 // pred_check
          %p432 = pneg %p94
        $region18: #{contrastive_module.9} parent=11 // pred_check_branch
          %434 = sbr.rel (%p432) target = $region20
        $region19: #{contrastive_module.9} parent=11 // pred_region
          _
        $region20: #{contrastive_module.9} parent=11 // pred_fallthru
          _
        // Predicated region
        $region21: #{contrastive_module.9} parent=11 // pred_check
          %p435 = pneg %p115
        $region22: #{contrastive_module.9} parent=11 // pred_check_branch
          %437 = sbr.rel (%p435) target = $region24
        $region23: #{contrastive_module.9} parent=11 // pred_region
          _
        $region24: #{contrastive_module.9} parent=11 // pred_fallthru
          _
        // Predicated region
        $region25: #{contrastive_module.9} parent=11 // pred_check
          %p438 = pneg %p136
        $region26: #{contrastive_module.9} parent=11 // pred_check_branch
          %440 = sbr.rel (%p438) target = $region28
        $region27: #{contrastive_module.9} parent=11 // pred_region
          _
        $region28: #{contrastive_module.9} parent=11 // pred_fallthru
          _
        // Predicated region
        $region29: #{contrastive_module.9} parent=11 // pred_check
          %p441 = pneg %p157
        $region30: #{contrastive_module.9} parent=11 // pred_check_branch
          %443 = sbr.rel (%p441) target = $region32
        $region31: #{contrastive_module.9} parent=11 // pred_region
          _
        $region32: #{contrastive_module.9} parent=11 // pred_fallthru
          _
        // Predicated region
        $region33: #{contrastive_module.9} parent=11 // pred_check
          %p444 = pneg %p178
        $region34: #{contrastive_module.9} parent=11 // pred_check_branch
          %446 = sbr.rel (%p444) target = $region36
        $region35: #{contrastive_module.9} parent=11 // pred_region
          _
        $region36: #{contrastive_module.9} parent=11 // pred_fallthru
          _
        // Predicated region
        $region37: #{contrastive_module.9} parent=11 // pred_check
          %p447 = pneg %p199
        $region38: #{contrastive_module.9} parent=11 // pred_check_branch
          %449 = sbr.rel (%p447) target = $region40
        $region39: #{contrastive_module.9} parent=11 // pred_region
          _
        $region40: #{contrastive_module.9} parent=11 // pred_fallthru
          _
        // Predicated region
        $region41: #{contrastive_module.9} parent=11 // pred_check
          %p450 = pneg %p220
        $region42: #{contrastive_module.9} parent=11 // pred_check_branch
          %452 = sbr.rel (%p450) target = $region44
        $region43: #{contrastive_module.9} parent=11 // pred_region
          _
        $region44: #{contrastive_module.9} parent=11 // pred_fallthru
          _
        // Predicated region
        $region45: #{contrastive_module.9} parent=11 // pred_check
          %p453 = pneg %p241
        $region46: #{contrastive_module.9} parent=11 // pred_check_branch
          %455 = sbr.rel (%p453) target = $region48
        $region47: #{contrastive_module.9} parent=11 // pred_region
          _
        $region48: #{contrastive_module.9} parent=11 // pred_fallthru
          _
        // Predicated region
        $region49: #{contrastive_module.9} parent=11 // pred_check
          %p456 = pneg %p262
        $region50: #{contrastive_module.9} parent=11 // pred_check_branch
          %458 = sbr.rel (%p456) target = $region52
        $region51: #{contrastive_module.9} parent=11 // pred_region
          _
        $region52: #{contrastive_module.9} parent=11 // pred_fallthru
          _
        // Predicated region
        $region53: #{contrastive_module.9} parent=11 // pred_check
          %p459 = pneg %p283
        $region54: #{contrastive_module.9} parent=11 // pred_check_branch
          %461 = sbr.rel (%p459) target = $region56
        $region55: #{contrastive_module.9} parent=11 // pred_region
          _
        $region56: #{contrastive_module.9} parent=11 // pred_fallthru
          _
        // Predicated region
        $region57: #{contrastive_module.9} parent=11 // pred_check
          %p462 = pneg %p304
        $region58: #{contrastive_module.9} parent=11 // pred_check_branch
          %464 = sbr.rel (%p462) target = $region60
        $region59: #{contrastive_module.9} parent=11 // pred_region
          _
        $region60: #{contrastive_module.9} parent=11 // pred_fallthru
          _
        // Predicated region
        $region61: #{contrastive_module.9} parent=11 // pred_check
          %p465 = pneg %p325
        $region62: #{contrastive_module.9} parent=11 // pred_check_branch
          %467 = sbr.rel (%p465) target = $region64
        $region63: #{contrastive_module.9} parent=11 // pred_region
          _
        $region64: #{contrastive_module.9} parent=11 // pred_fallthru
          _
        // Predicated region
        $region65: #{contrastive_module.9} parent=11 // pred_check
          %p468 = pneg %p346
        $region66: #{contrastive_module.9} parent=11 // pred_check_branch
          %470 = sbr.rel (%p468) target = $region68
        $region67: #{contrastive_module.9} parent=11 // pred_region
          _
        $region68: #{contrastive_module.9} parent=11 // pred_fallthru
          _
        // Predicated region
        $region69: #{contrastive_module.9} parent=11 // pred_check
          %p471 = pneg %p367
        $region70: #{contrastive_module.9} parent=11 // pred_check_branch
          %473 = sbr.rel (%p471) target = $region72
        $region71: #{contrastive_module.9} parent=11 // pred_region
          _
        $region72: #{contrastive_module.9} parent=11 // pred_fallthru
          _
        // Predicated region
        $region73: #{contrastive_module.9} parent=11 // pred_check
          %p474 = pneg %p388
        $region74: #{contrastive_module.9} parent=11 // pred_check_branch
          %476 = sbr.rel (%p474) target = $region76
        $region75: #{contrastive_module.9} parent=11 // pred_region
          _
        $region76: #{contrastive_module.9} parent=11 // pred_fallthru
          _
      $region12: #{contrastive_module.9} parent=5 // pred_fallthru
        _
      %p477 = scmp.lt.s32.totalorder %s26, 2
      // Predicated region
      $region77: #{contrastive_module.9} parent=5 // pred_check
        %p478 = pneg %p477
      $region78: #{contrastive_module.9} parent=5 // pred_check_branch
        %480 = sbr.rel (%p478) target = $region80
      $region79: #{contrastive_module.9} parent=5 // pred_region
        // Predicated region
        $region81: #{contrastive_module.9} parent=79 // pred_check
          %p481 = pneg %p46
        $region82: #{contrastive_module.9} parent=79 // pred_check_branch
          %483 = sbr.rel (%p481) target = $region84
        $region83: #{contrastive_module.9} parent=79 // pred_region
          %s484 = smul.u32 2, %s26
          %p485 = scmp.lt.s32.totalorder %s484, 3
          %s486 = scalar_select %p485, %s484, 3
          %s487 = smul.addr %s486, 8
          %s488 = scalar_lea.vmem %s0, %s487
          %s489 = smul.u32 2, %s26
        $region84: #{contrastive_module.9} parent=79 // pred_fallthru
          _
      $region80: #{contrastive_module.9} parent=5 // pred_fallthru
        _
      %p490 = scmp.le.s32.totalorder 1, %s26
      %p491 = scmp.lt.s32.totalorder %s26, 3
      %p492 = pnand %p490, %p491
      %p493 = pneg %p492
      // Predicated region
      $region85: #{contrastive_module.9} parent=5 // pred_check
        _
      $region86: #{contrastive_module.9} parent=5 // pred_check_branch
        %495 = sbr.rel (%p492) target = $region88
      $region87: #{contrastive_module.9} parent=5 // pred_region
        %s496 = ssub.s32 %s26, 1
        %s497 = smul.u32 2, %s31
        %p498 = scmp.lt.s32.totalorder %s497, 3
        %s499 = scalar_select %p498, %s497, 3
        %s500 = smul.addr %s499, 8
        %s501 = scalar_lea.vmem %s0, %s500
        %p502 = pneg %p52
        %p503 = pneg %p49
        %p504 = pneg %p73
        %p505 = pneg %p70
        %p506 = pneg %p94
        %p507 = pneg %p91
        %p508 = pneg %p115
        %p509 = pneg %p112
        %p510 = pneg %p136
        %p511 = pneg %p133
        %p512 = pneg %p157
        %p513 = pneg %p154
        %p514 = pneg %p178
        %p515 = pneg %p175
        %p516 = pneg %p199
        %p517 = pneg %p196
        %p518 = pneg %p220
        %p519 = pneg %p217
        %p520 = pneg %p241
        %p521 = pneg %p238
        %p522 = pneg %p262
        %p523 = pneg %p259
        %p524 = pneg %p283
        %p525 = pneg %p280
        %p526 = pneg %p304
        %p527 = pneg %p301
        %p528 = pneg %p325
        %p529 = pneg %p322
        %p530 = pneg %p346
        %p531 = pneg %p343
        %p532 = pneg %p367
        %p533 = pneg %p364
        %p534 = pneg %p388
        %p535 = pneg %p385
        %p536 = pneg %p414
        %p537 = pneg %p411
        %s538 = sand.u32 %s401, 1
        %s539 = scalar_lea.sflag [#allocation3], %s538
        %s540 = sand.u32 %s401, 1
        %s541 = smul.addr %s540, 16
        %s542 = scalar_lea.vmem [#allocation2], %s541
        %s543 = smul.u32 2, %s31
        %p544 = scmp.lt.s32.totalorder %s543, 3
        %s545 = scalar_select %p544, %s543, 3
        %s546 = smul.addr %s545, 8
        %s547 = scalar_lea.vmem %s0, %s546
        %s548 = smul.u32 2, %s31
        %s549 = smul.u32 2, %s31
        %v551 = vld [vmem:[%s547] sm:$0xff]
        %v552 = vld [vmem:[%s547 + $0x8] sm:$0xff]
        %v553 = vld [vmem:[%s1] sm:$0x1]
        %v554 = vld [vmem:[%s2] sm:$0x1]
        %555 = vadd.xlane.f32.xlu0 %v551
        %v556 = vpop.xlane.xlu0 %555
        %557 = vadd.xlane.f32.xlu0 %v552
        %v558 = vpop.xlane.xlu0 %557
        %v559 = vrcp.pop 128.0
        %v560 = vmul.f32 %v556, %v559
        %v561 = vmul.f32 %v558, %v559
        %v562 = vsub.f32 %v551, %v560
        %v563 = vsub.f32 %v552, %v561
        %v564 = vmul.f32 %v562, %v562
        %v565 = vmul.f32 %v563, %v563
        %566 = vadd.xlane.f32.xlu0 %v564
        %v567 = vpop.xlane.xlu0 %566
        %568 = vadd.xlane.f32.xlu0 %v565
        %v569 = vpop.xlane.xlu0 %568
        %v570 = vmul.f32 %v567, %v559
        %v571 = vmul.f32 %v569, %v559
        %v572 = vadd.f32 %v570, 1e-05
        %v573 = vadd.f32 %v571, 1e-05
        %v574 = vrsqrt.pop %v572
        %v575 = vrsqrt.pop %v573
        %v576 = vmul.f32 %v562, %v574
        %v577 = vmul.f32 %v563, %v575
        %v579 = vlaneseq
        %v580 = vshrl.u32 %v579, 7
        %v581 = vsub.s32 0, %v580
        %v582 = vrot.slane %v553, %v581
        %v584 = vmul.f32 %v576, %v582
        %v585 = vmul.f32 %v577, %v582
        %v587 = vlaneseq
        %v588 = vshrl.u32 %v587, 7
        %v589 = vsub.s32 0, %v588
        %v590 = vrot.slane %v554, %v589
        %v592 = vadd.f32 %v584, %v590
        %v593 = vadd.f32 %v585, %v590
        %v594 = vpack.c.bf16 %v593, %v592
        %v595 = vld [vmem:[%s3] sm:$0xff]
        %v596 = vld [vmem:[%s3 + $0x8] sm:$0xff]
        %v597 = vld [vmem:[%s3 + $0x10] sm:$0xff]
        %v598 = vld [vmem:[%s3 + $0x18] sm:$0xff]
        %v599 = vld [vmem:[%s3 + $0x20] sm:$0xff]
        %v600 = vld [vmem:[%s3 + $0x28] sm:$0xff]
        %v601 = vld [vmem:[%s3 + $0x30] sm:$0xff]
        %v602 = vld [vmem:[%s3 + $0x38] sm:$0xff]
        %v603 = vld [vmem:[%s3 + $0x40] sm:$0xff]
        %v604 = vld [vmem:[%s3 + $0x48] sm:$0xff]
        %v605 = vld [vmem:[%s3 + $0x50] sm:$0xff]
        %v606 = vld [vmem:[%s3 + $0x58] sm:$0xff]
        %v607 = vld [vmem:[%s3 + $0x60] sm:$0xff]
        %v608 = vld [vmem:[%s3 + $0x68] sm:$0xff]
        %v609 = vld [vmem:[%s3 + $0x70] sm:$0xff]
        %v610 = vld [vmem:[%s3 + $0x78] sm:$0xff]
        %v611 = vld [vmem:[%s4] sm:$0x3]
        %v613 = vlaneseq
        %v614 = vshrl.u32 %v613, 7
        %v615 = vsub.s32 0, %v614
        %v616 = vrot.slane %v611, %v615
        %v617 = vlaneseq
        %v618 = vshrl.u32 %v617, 7
        %v619 = vsub.s32 1, %v618
        %v620 = vrot.slane %v611, %v619
        %v639 = vunpack.c.l.b16 %v595
        %v640 = vunpack.c.h.b16 %v595
        %v641 = vunpack.c.l.b16 %v596
        %v642 = vunpack.c.h.b16 %v596
        %v643 = vunpack.c.l.b16 %v597
        %v644 = vunpack.c.h.b16 %v597
        %v645 = vunpack.c.l.b16 %v598
        %v646 = vunpack.c.h.b16 %v598
        %v647 = vunpack.c.l.b16 %v599
        %v648 = vunpack.c.h.b16 %v599
        %v649 = vunpack.c.l.b16 %v600
        %v650 = vunpack.c.h.b16 %v600
        %v651 = vunpack.c.l.b16 %v601
        %v652 = vunpack.c.h.b16 %v601
        %v653 = vunpack.c.l.b16 %v602
        %v654 = vunpack.c.h.b16 %v602
        %v655 = vunpack.c.l.b16 %v603
        %v656 = vunpack.c.h.b16 %v603
        %v657 = vunpack.c.l.b16 %v604
        %v658 = vunpack.c.h.b16 %v604
        %v659 = vunpack.c.l.b16 %v605
        %v660 = vunpack.c.h.b16 %v605
        %v661 = vunpack.c.l.b16 %v606
        %v662 = vunpack.c.h.b16 %v606
        %v663 = vunpack.c.l.b16 %v607
        %v664 = vunpack.c.h.b16 %v607
        %v665 = vunpack.c.l.b16 %v608
        %v666 = vunpack.c.h.b16 %v608
        %v667 = vunpack.c.l.b16 %v609
        %v668 = vunpack.c.h.b16 %v609
        %v669 = vunpack.c.l.b16 %v610
        %v670 = vunpack.c.h.b16 %v610
        %v671 = vpack.c.b16 %v641, %v639
        %v672 = vpack.c.b16 %v642, %v640
        %v673 = vpack.c.b16 %v645, %v643
        %v674 = vpack.c.b16 %v646, %v644
        %v675 = vpack.c.b16 %v649, %v647
        %v676 = vpack.c.b16 %v650, %v648
        %v677 = vpack.c.b16 %v653, %v651
        %v678 = vpack.c.b16 %v654, %v652
        %v679 = vpack.c.b16 %v657, %v655
        %v680 = vpack.c.b16 %v658, %v656
        %v681 = vpack.c.b16 %v661, %v659
        %v682 = vpack.c.b16 %v662, %v660
        %v683 = vpack.c.b16 %v665, %v663
        %v684 = vpack.c.b16 %v666, %v664
        %v685 = vpack.c.b16 %v669, %v667
        %v686 = vpack.c.b16 %v670, %v668
        %703 = vmatprep.subr.bf16.mxu0 %v686
        %704 = vmatpush1.bf16.msra.mxu0 %v685
        %705 = vmatprep.subr.bf16.mxu0 %v684
        %706 = vmatpush1.bf16.msra.mxu0 %v683
        %707 = vmatprep.subr.bf16.mxu0 %v682
        %708 = vmatpush1.bf16.msra.mxu0 %v681
        %709 = vmatprep.subr.bf16.mxu0 %v680
        %710 = vmatpush1.bf16.msra.mxu0 %v679
        %711 = vmatprep.subr.bf16.mxu0 %v678
        %712 = vmatpush1.bf16.msra.mxu0 %v677
        %713 = vmatprep.subr.bf16.mxu0 %v676
        %714 = vmatpush1.bf16.msra.mxu0 %v675
        %715 = vmatprep.subr.bf16.mxu0 %v674
        %716 = vmatpush1.bf16.msra.mxu0 %v673
        %717 = vmatprep.subr.bf16.mxu0 %v672
        %718 = vmatpush1.bf16.msra.mxu0 %v671
        %719 = vmatprep.subr.bf16.mxu0 0
        %720 = vmatpush2.bf16.msra.mxu0 0
        %721 = vmatprep.subr.bf16.mxu0 0
        %722 = vmatpush2.bf16.msra.mxu0 0
        %723 = vmatprep.subr.bf16.mxu0 0
        %724 = vmatpush2.bf16.msra.mxu0 0
        %725 = vmatprep.subr.bf16.mxu0 0
        %726 = vmatpush2.bf16.msra.mxu0 0
        %727 = vmatprep.subr.bf16.mxu0 0
        %728 = vmatpush2.bf16.msra.mxu0 0
        %729 = vmatprep.subr.bf16.mxu0 0
        %730 = vmatpush2.bf16.msra.mxu0 0
        %731 = vmatprep.subr.bf16.mxu0 0
        %732 = vmatpush2.bf16.msra.mxu0 0
        %733 = vmatprep.subr.bf16.mxu0 0
        %734 = vmatpush2.bf16.msra.mxu0 0
        %735 = vmatprep.mubr.bf16.mxu0 0
        %736 = vmatmul.mubr.bf16.gmra.mxu0 %v594
        %v737 = vpop.f32.mrf.mxu0
        %v738 = vadd.f32 %v616, %v737
        %v739 = vpop.f32.mrf.mxu0
        %v740 = vadd.f32 %v620, %v739
        %v741 = vpop.f32.mrf.mxu0
        %v742 = vadd.f32 %v616, %v741
        %v743 = vpop.f32.mrf.mxu0
        %v744 = vadd.f32 %v620, %v743
        %745 = vdwg.mxu0
        %v746 = vmul.f32 %v738, 0.5
        %v747 = vmul.f32 %v740, 0.5
        %v748 = vmul.f32 %v742, 0.5
        %v749 = vmul.f32 %v744, 0.5
        %v750 = vmul.f32 %v738, 0.044715
        %v751 = vmul.f32 %v740, 0.044715
        %v752 = vmul.f32 %v742, 0.044715
        %v753 = vmul.f32 %v744, 0.044715
        %v754 = vmul.f32 %v750, %v738
        %v755 = vmul.f32 %v751, %v740
        %v756 = vmul.f32 %v752, %v742
        %v757 = vmul.f32 %v753, %v744
        %v758 = vmul.f32 %v754, %v738
        %v759 = vmul.f32 %v755, %v740
        %v760 = vmul.f32 %v756, %v742
        %v761 = vmul.f32 %v757, %v744
        %v762 = vadd.f32 %v738, %v758
        %v763 = vadd.f32 %v740, %v759
        %v764 = vadd.f32 %v742, %v760
        %v765 = vadd.f32 %v744, %v761
        %v766 = vmul.f32 %v762, 0.7978846
        %v767 = vmul.f32 %v763, 0.7978846
        %v768 = vmul.f32 %v764, 0.7978846
        %v769 = vmul.f32 %v765, 0.7978846
        %v770 = vtanh.pop %v766
        %v771 = vtanh.pop %v767
        %v772 = vtanh.pop %v768
        %v773 = vtanh.pop %v769
        %v774 = vadd.f32 %v770, 1.0
        %v775 = vadd.f32 %v771, 1.0
        %v776 = vadd.f32 %v772, 1.0
        %v777 = vadd.f32 %v773, 1.0
        %v778 = vmul.f32 %v746, %v774
        %v779 = vmul.f32 %v747, %v775
        %v780 = vmul.f32 %v748, %v776
        %v781 = vmul.f32 %v749, %v777
        %v782 = vld [vmem:[%s5] sm:$0x3]
        %v784 = vlaneseq
        %v785 = vshrl.u32 %v784, 7
        %v786 = vsub.s32 0, %v785
        %v787 = vrot.slane %v782, %v786
        %v788 = vlaneseq
        %v789 = vshrl.u32 %v788, 7
        %v790 = vsub.s32 1, %v789
        %v791 = vrot.slane %v782, %v790
        %v794 = vmul.f32 %v778, %v787
        %v795 = vmul.f32 %v779, %v791
        %v796 = vmul.f32 %v780, %v787
        %v797 = vmul.f32 %v781, %v791
        %v798 = vld [vmem:[%s6] sm:$0x3]
        %v800 = vlaneseq
        %v801 = vshrl.u32 %v800, 7
        %v802 = vsub.s32 0, %v801
        %v803 = vrot.slane %v798, %v802
        %v804 = vlaneseq
        %v805 = vshrl.u32 %v804, 7
        %v806 = vsub.s32 1, %v805
        %v807 = vrot.slane %v798, %v806
        %v810 = vadd.f32 %v794, %v803
        %v811 = vadd.f32 %v795, %v807
        %v812 = vadd.f32 %v796, %v803
        %v813 = vadd.f32 %v797, %v807
        %v814 = vmul.f32 %v810, 0.5
        %v815 = vmul.f32 %v811, 0.5
        %v816 = vmul.f32 %v812, 0.5
        %v817 = vmul.f32 %v813, 0.5
        %v818 = vmul.f32 %v810, 0.044715
        %v819 = vmul.f32 %v811, 0.044715
        %v820 = vmul.f32 %v812, 0.044715
        %v821 = vmul.f32 %v813, 0.044715
        %v822 = vmul.f32 %v818, %v810
        %v823 = vmul.f32 %v819, %v811
        %v824 = vmul.f32 %v820, %v812
        %v825 = vmul.f32 %v821, %v813
        %v826 = vmul.f32 %v822, %v810
        %v827 = vmul.f32 %v823, %v811
        %v828 = vmul.f32 %v824, %v812
        %v829 = vmul.f32 %v825, %v813
        %v830 = vadd.f32 %v810, %v826
        %v831 = vadd.f32 %v811, %v827
        %v832 = vadd.f32 %v812, %v828
        %v833 = vadd.f32 %v813, %v829
        %v834 = vmul.f32 %v830, 0.7978846
        %v835 = vmul.f32 %v831, 0.7978846
        %v836 = vmul.f32 %v832, 0.7978846
        %v837 = vmul.f32 %v833, 0.7978846
        %v838 = vtanh.pop %v834
        %v839 = vtanh.pop %v835
        %v840 = vtanh.pop %v836
        %v841 = vtanh.pop %v837
        %v842 = vadd.f32 %v838, 1.0
        %v843 = vadd.f32 %v839, 1.0
        %v844 = vadd.f32 %v840, 1.0
        %v845 = vadd.f32 %v841, 1.0
        %v846 = vmul.f32 %v814, %v842
        %v847 = vmul.f32 %v815, %v843
        %v848 = vmul.f32 %v816, %v844
        %v849 = vmul.f32 %v817, %v845
        %v850 = vpack.c.bf16 %v848, %v846
        %v851 = vpack.c.bf16 %v849, %v847
        %v852 = vld [vmem:[%s7] sm:$0xf]
        %v853 = vld [vmem:[%s7 + $0x4] sm:$0xf]
        %v854 = vld [vmem:[%s7 + $0x8] sm:$0xf]
        %v855 = vld [vmem:[%s7 + $0xc] sm:$0xf]
        %v856 = vld [vmem:[%s7 + $0x10] sm:$0xf]
        %v857 = vld [vmem:[%s7 + $0x14] sm:$0xf]
        %v858 = vld [vmem:[%s7 + $0x18] sm:$0xf]
        %v859 = vld [vmem:[%s7 + $0x1c] sm:$0xf]
        %v860 = vld [vmem:[%s7 + $0x20] sm:$0xf]
        %v861 = vld [vmem:[%s7 + $0x24] sm:$0xf]
        %v862 = vld [vmem:[%s7 + $0x28] sm:$0xf]
        %v863 = vld [vmem:[%s7 + $0x2c] sm:$0xf]
        %v864 = vld [vmem:[%s7 + $0x30] sm:$0xf]
        %v865 = vld [vmem:[%s7 + $0x34] sm:$0xf]
        %v866 = vld [vmem:[%s7 + $0x38] sm:$0xf]
        %v867 = vld [vmem:[%s7 + $0x3c] sm:$0xf]
        %v868 = vld [vmem:[%s7 + $0x40] sm:$0xf]
        %v869 = vld [vmem:[%s7 + $0x44] sm:$0xf]
        %v870 = vld [vmem:[%s7 + $0x48] sm:$0xf]
        %v871 = vld [vmem:[%s7 + $0x4c] sm:$0xf]
        %v872 = vld [vmem:[%s7 + $0x50] sm:$0xf]
        %v873 = vld [vmem:[%s7 + $0x54] sm:$0xf]
        %v874 = vld [vmem:[%s7 + $0x58] sm:$0xf]
        %v875 = vld [vmem:[%s7 + $0x5c] sm:$0xf]
        %v876 = vld [vmem:[%s7 + $0x60] sm:$0xf]
        %v877 = vld [vmem:[%s7 + $0x64] sm:$0xf]
        %v878 = vld [vmem:[%s7 + $0x68] sm:$0xf]
        %v879 = vld [vmem:[%s7 + $0x6c] sm:$0xf]
        %v880 = vld [vmem:[%s7 + $0x70] sm:$0xf]
        %v881 = vld [vmem:[%s7 + $0x74] sm:$0xf]
        %v882 = vld [vmem:[%s7 + $0x78] sm:$0xf]
        %v883 = vld [vmem:[%s7 + $0x7c] sm:$0xf]
        %v916 = vunpack.c.l.b16 %v852
        %v917 = vunpack.c.l.b16 %v853
        %v918 = vunpack.c.l.b16 %v854
        %v919 = vunpack.c.l.b16 %v855
        %v920 = vunpack.c.l.b16 %v856
        %v921 = vunpack.c.l.b16 %v857
        %v922 = vunpack.c.l.b16 %v858
        %v923 = vunpack.c.l.b16 %v859
        %v924 = vunpack.c.l.b16 %v860
        %v925 = vunpack.c.l.b16 %v861
        %v926 = vunpack.c.l.b16 %v862
        %v927 = vunpack.c.l.b16 %v863
        %v928 = vunpack.c.l.b16 %v864
        %v929 = vunpack.c.l.b16 %v865
        %v930 = vunpack.c.l.b16 %v866
        %v931 = vunpack.c.l.b16 %v867
        %v932 = vunpack.c.l.b16 %v868
        %v933 = vunpack.c.l.b16 %v869
        %v934 = vunpack.c.l.b16 %v870
        %v935 = vunpack.c.l.b16 %v871
        %v936 = vunpack.c.l.b16 %v872
        %v937 = vunpack.c.l.b16 %v873
        %v938 = vunpack.c.l.b16 %v874
        %v939 = vunpack.c.l.b16 %v875
        %v940 = vunpack.c.l.b16 %v876
        %v941 = vunpack.c.l.b16 %v877
        %v942 = vunpack.c.l.b16 %v878
        %v943 = vunpack.c.l.b16 %v879
        %v944 = vunpack.c.l.b16 %v880
        %v945 = vunpack.c.l.b16 %v881
        %v946 = vunpack.c.l.b16 %v882
        %v947 = vunpack.c.l.b16 %v883
        %v948 = vpack.c.b16 %v917, %v916
        %v949 = vpack.c.b16 %v919, %v918
        %v950 = vpack.c.b16 %v921, %v920
        %v951 = vpack.c.b16 %v923, %v922
        %v952 = vpack.c.b16 %v925, %v924
        %v953 = vpack.c.b16 %v927, %v926
        %v954 = vpack.c.b16 %v929, %v928
        %v955 = vpack.c.b16 %v931, %v930
        %v956 = vpack.c.b16 %v933, %v932
        %v957 = vpack.c.b16 %v935, %v934
        %v958 = vpack.c.b16 %v937, %v936
        %v959 = vpack.c.b16 %v939, %v938
        %v960 = vpack.c.b16 %v941, %v940
        %v961 = vpack.c.b16 %v943, %v942
        %v962 = vpack.c.b16 %v945, %v944
        %v963 = vpack.c.b16 %v947, %v946
        %980 = vmatprep.subr.bf16.mxu0 0
        %981 = vmatpush1.bf16.msra.mxu0 %v955
        %982 = vmatprep.subr.bf16.mxu0 0
        %983 = vmatpush1.bf16.msra.mxu0 %v954
        %984 = vmatprep.subr.bf16.mxu0 0
        %985 = vmatpush1.bf16.msra.mxu0 %v953
        %986 = vmatprep.subr.bf16.mxu0 0
        %987 = vmatpush1.bf16.msra.mxu0 %v952
        %988 = vmatprep.subr.bf16.mxu0 0
        %989 = vmatpush1.bf16.msra.mxu0 %v951
        %990 = vmatprep.subr.bf16.mxu0 0
        %991 = vmatpush1.bf16.msra.mxu0 %v950
        %992 = vmatprep.subr.bf16.mxu0 0
        %993 = vmatpush1.bf16.msra.mxu0 %v949
        %994 = vmatprep.subr.bf16.mxu0 0
        %995 = vmatpush1.bf16.msra.mxu0 %v948
        %996 = vmatprep.subr.bf16.mxu0 0
        %997 = vmatpush2.bf16.msra.mxu0 %v963
        %998 = vmatprep.subr.bf16.mxu0 0
        %999 = vmatpush2.bf16.msra.mxu0 %v962
        %1000 = vmatprep.subr.bf16.mxu0 0
        %1001 = vmatpush2.bf16.msra.mxu0 %v961
        %1002 = vmatprep.subr.bf16.mxu0 0
        %1003 = vmatpush2.bf16.msra.mxu0 %v960
        %1004 = vmatprep.subr.bf16.mxu0 0
        %1005 = vmatpush2.bf16.msra.mxu0 %v959
        %1006 = vmatprep.subr.bf16.mxu0 0
        %1007 = vmatpush2.bf16.msra.mxu0 %v958
        %1008 = vmatprep.subr.bf16.mxu0 0
        %1009 = vmatpush2.bf16.msra.mxu0 %v957
        %1010 = vmatprep.subr.bf16.mxu0 0
        %1011 = vmatpush2.bf16.msra.mxu0 %v956
        %1012 = vmatprep.mubr.bf16.mxu0 %v851
        %1013 = vmatmul.mubr.bf16.gmra.mxu0 %v850
        %v1014 = vpop.f32.mrf.mxu0
        %v1015 = vadd.f32 0.0, %v1014
        %v1016 = vpop.f32.mrf.mxu0
        %v1017 = vpop.f32.mrf.mxu0
        %v1018 = vadd.f32 0.0, %v1017
        %v1019 = vpop.f32.mrf.mxu0
        %1020 = vdwg.mxu0
        %v1021 = vadd.f32 %v551, %v1015
        %v1022 = vadd.f32 %v552, %v1018
        %v1023 = vld [vmem:[%s8] sm:$0x1]
        %v1025 = vlaneseq
        %v1026 = vshrl.u32 %v1025, 7
        %v1027 = vsub.s32 0, %v1026
        %v1028 = vrot.slane %v1023, %v1027
        %v1030 = vadd.f32 %v1021, %v1028
        %v1031 = vadd.f32 %v1022, %v1028
        %v1032 = vld [vmem:[%s9] sm:$0x1]
        %v1033 = vld [vmem:[%s10] sm:$0x1]
        %1034 = vadd.xlane.f32.xlu0 %v1030
        %v1035 = vpop.xlane.xlu0 %1034
        %1036 = vadd.xlane.f32.xlu0 %v1031
        %v1037 = vpop.xlane.xlu0 %1036
        %v1038 = vmul.f32 %v1035, %v559
        %v1039 = vmul.f32 %v1037, %v559
        %v1040 = vsub.f32 %v1030, %v1038
        %v1041 = vsub.f32 %v1031, %v1039
        %v1042 = vmul.f32 %v1040, %v1040
        %v1043 = vmul.f32 %v1041, %v1041
        %1044 = vadd.xlane.f32.xlu0 %v1042
        %v1045 = vpop.xlane.xlu0 %1044
        %1046 = vadd.xlane.f32.xlu0 %v1043
        %v1047 = vpop.xlane.xlu0 %1046
        %v1048 = vmul.f32 %v1045, %v559
        %v1049 = vmul.f32 %v1047, %v559
        %v1050 = vadd.f32 %v1048, 1e-05
        %v1051 = vadd.f32 %v1049, 1e-05
        %v1052 = vrsqrt.pop %v1050
        %v1053 = vrsqrt.pop %v1051
        %v1054 = vmul.f32 %v1040, %v1052
        %v1055 = vmul.f32 %v1041, %v1053
        %v1057 = vlaneseq
        %v1058 = vshrl.u32 %v1057, 7
        %v1059 = vsub.s32 0, %v1058
        %v1060 = vrot.slane %v1032, %v1059
        %v1062 = vmul.f32 %v1054, %v1060
        %v1063 = vmul.f32 %v1055, %v1060
        %v1065 = vlaneseq
        %v1066 = vshrl.u32 %v1065, 7
        %v1067 = vsub.s32 0, %v1066
        %v1068 = vrot.slane %v1033, %v1067
        %v1070 = vadd.f32 %v1062, %v1068
        %v1071 = vadd.f32 %v1063, %v1068
        %v1072 = vpack.c.bf16 %v1071, %v1070
        %v1073 = vld [vmem:[%s11] sm:$0xff]
        %v1074 = vld [vmem:[%s11 + $0x8] sm:$0xff]
        %v1075 = vld [vmem:[%s11 + $0x10] sm:$0xff]
        %v1076 = vld [vmem:[%s11 + $0x18] sm:$0xff]
        %v1077 = vld [vmem:[%s11 + $0x20] sm:$0xff]
        %v1078 = vld [vmem:[%s11 + $0x28] sm:$0xff]
        %v1079 = vld [vmem:[%s11 + $0x30] sm:$0xff]
        %v1080 = vld [vmem:[%s11 + $0x38] sm:$0xff]
        %v1081 = vld [vmem:[%s11 + $0x40] sm:$0xff]
        %v1082 = vld [vmem:[%s11 + $0x48] sm:$0xff]
        %v1083 = vld [vmem:[%s11 + $0x50] sm:$0xff]
        %v1084 = vld [vmem:[%s11 + $0x58] sm:$0xff]
        %v1085 = vld [vmem:[%s11 + $0x60] sm:$0xff]
        %v1086 = vld [vmem:[%s11 + $0x68] sm:$0xff]
        %v1087 = vld [vmem:[%s11 + $0x70] sm:$0xff]
        %v1088 = vld [vmem:[%s11 + $0x78] sm:$0xff]
        %v1089 = vld [vmem:[%s12] sm:$0x3]
        %v1091 = vlaneseq
        %v1092 = vshrl.u32 %v1091, 7
        %v1093 = vsub.s32 0, %v1092
        %v1094 = vrot.slane %v1089, %v1093
        %v1095 = vlaneseq
        %v1096 = vshrl.u32 %v1095, 7
        %v1097 = vsub.s32 1, %v1096
        %v1098 = vrot.slane %v1089, %v1097
        %v1117 = vunpack.c.l.b16 %v1073
        %v1118 = vunpack.c.h.b16 %v1073
        %v1119 = vunpack.c.l.b16 %v1074
        %v1120 = vunpack.c.h.b16 %v1074
        %v1121 = vunpack.c.l.b16 %v1075
        %v1122 = vunpack.c.h.b16 %v1075
        %v1123 = vunpack.c.l.b16 %v1076
        %v1124 = vunpack.c.h.b16 %v1076
        %v1125 = vunpack.c.l.b16 %v1077
        %v1126 = vunpack.c.h.b16 %v1077
        %v1127 = vunpack.c.l.b16 %v1078
        %v1128 = vunpack.c.h.b16 %v1078
        %v1129 = vunpack.c.l.b16 %v1079
        %v1130 = vunpack.c.h.b16 %v1079
        %v1131 = vunpack.c.l.b16 %v1080
        %v1132 = vunpack.c.h.b16 %v1080
        %v1133 = vunpack.c.l.b16 %v1081
        %v1134 = vunpack.c.h.b16 %v1081
        %v1135 = vunpack.c.l.b16 %v1082
        %v1136 = vunpack.c.h.b16 %v1082
        %v1137 = vunpack.c.l.b16 %v1083
        %v1138 = vunpack.c.h.b16 %v1083
        %v1139 = vunpack.c.l.b16 %v1084
        %v1140 = vunpack.c.h.b16 %v1084
        %v1141 = vunpack.c.l.b16 %v1085
        %v1142 = vunpack.c.h.b16 %v1085
        %v1143 = vunpack.c.l.b16 %v1086
        %v1144 = vunpack.c.h.b16 %v1086
        %v1145 = vunpack.c.l.b16 %v1087
        %v1146 = vunpack.c.h.b16 %v1087
        %v1147 = vunpack.c.l.b16 %v1088
        %v1148 = vunpack.c.h.b16 %v1088
        %v1149 = vpack.c.b16 %v1119, %v1117
        %v1150 = vpack.c.b16 %v1120, %v1118
        %v1151 = vpack.c.b16 %v1123, %v1121
        %v1152 = vpack.c.b16 %v1124, %v1122
        %v1153 = vpack.c.b16 %v1127, %v1125
        %v1154 = vpack.c.b16 %v1128, %v1126
        %v1155 = vpack.c.b16 %v1131, %v1129
        %v1156 = vpack.c.b16 %v1132, %v1130
        %v1157 = vpack.c.b16 %v1135, %v1133
        %v1158 = vpack.c.b16 %v1136, %v1134
        %v1159 = vpack.c.b16 %v1139, %v1137
        %v1160 = vpack.c.b16 %v1140, %v1138
        %v1161 = vpack.c.b16 %v1143, %v1141
        %v1162 = vpack.c.b16 %v1144, %v1142
        %v1163 = vpack.c.b16 %v1147, %v1145
        %v1164 = vpack.c.b16 %v1148, %v1146
        %1181 = vmatprep.subr.bf16.mxu0 %v1164
        %1182 = vmatpush1.bf16.msra.mxu0 %v1163
        %1183 = vmatprep.subr.bf16.mxu0 %v1162
        %1184 = vmatpush1.bf16.msra.mxu0 %v1161
        %1185 = vmatprep.subr.bf16.mxu0 %v1160
        %1186 = vmatpush1.bf16.msra.mxu0 %v1159
        %1187 = vmatprep.subr.bf16.mxu0 %v1158
        %1188 = vmatpush1.bf16.msra.mxu0 %v1157
        %1189 = vmatprep.subr.bf16.mxu0 %v1156
        %1190 = vmatpush1.bf16.msra.mxu0 %v1155
        %1191 = vmatprep.subr.bf16.mxu0 %v1154
        %1192 = vmatpush1.bf16.msra.mxu0 %v1153
        %1193 = vmatprep.subr.bf16.mxu0 %v1152
        %1194 = vmatpush1.bf16.msra.mxu0 %v1151
        %1195 = vmatprep.subr.bf16.mxu0 %v1150
        %1196 = vmatpush1.bf16.msra.mxu0 %v1149
        %1197 = vmatprep.subr.bf16.mxu0 0
        %1198 = vmatpush2.bf16.msra.mxu0 0
        %1199 = vmatprep.subr.bf16.mxu0 0
        %1200 = vmatpush2.bf16.msra.mxu0 0
        %1201 = vmatprep.subr.bf16.mxu0 0
        %1202 = vmatpush2.bf16.msra.mxu0 0
        %1203 = vmatprep.subr.bf16.mxu0 0
        %1204 = vmatpush2.bf16.msra.mxu0 0
        %1205 = vmatprep.subr.bf16.mxu0 0
        %1206 = vmatpush2.bf16.msra.mxu0 0
        %1207 = vmatprep.subr.bf16.mxu0 0
        %1208 = vmatpush2.bf16.msra.mxu0 0
        %1209 = vmatprep.subr.bf16.mxu0 0
        %1210 = vmatpush2.bf16.msra.mxu0 0
        %1211 = vmatprep.subr.bf16.mxu0 0
        %1212 = vmatpush2.bf16.msra.mxu0 0
        %1213 = vmatprep.mubr.bf16.mxu0 0
        %1214 = vmatmul.mubr.bf16.gmra.mxu0 %v1072
        %v1215 = vpop.f32.mrf.mxu0
        %v1216 = vadd.f32 %v1094, %v1215
        %v1217 = vpop.f32.mrf.mxu0
        %v1218 = vadd.f32 %v1098, %v1217
        %v1219 = vpop.f32.mrf.mxu0
        %v1220 = vadd.f32 %v1094, %v1219
        %v1221 = vpop.f32.mrf.mxu0
        %v1222 = vadd.f32 %v1098, %v1221
        %1223 = vdwg.mxu0
        %v1224 = vmul.f32 %v1216, 0.5
        %v1225 = vmul.f32 %v1218, 0.5
        %v1226 = vmul.f32 %v1220, 0.5
        %v1227 = vmul.f32 %v1222, 0.5
        %v1228 = vmul.f32 %v1216, 0.044715
        %v1229 = vmul.f32 %v1218, 0.044715
        %v1230 = vmul.f32 %v1220, 0.044715
        %v1231 = vmul.f32 %v1222, 0.044715
        %v1232 = vmul.f32 %v1228, %v1216
        %v1233 = vmul.f32 %v1229, %v1218
        %v1234 = vmul.f32 %v1230, %v1220
        %v1235 = vmul.f32 %v1231, %v1222
        %v1236 = vmul.f32 %v1232, %v1216
        %v1237 = vmul.f32 %v1233, %v1218
        %v1238 = vmul.f32 %v1234, %v1220
        %v1239 = vmul.f32 %v1235, %v1222
        %v1240 = vadd.f32 %v1216, %v1236
        %v1241 = vadd.f32 %v1218, %v1237
        %v1242 = vadd.f32 %v1220, %v1238
        %v1243 = vadd.f32 %v1222, %v1239
        %v1244 = vmul.f32 %v1240, 0.7978846
        %v1245 = vmul.f32 %v1241, 0.7978846
        %v1246 = vmul.f32 %v1242, 0.7978846
        %v1247 = vmul.f32 %v1243, 0.7978846
        %v1248 = vtanh.pop %v1244
        %v1249 = vtanh.pop %v1245
        %v1250 = vtanh.pop %v1246
        %v1251 = vtanh.pop %v1247
        %v1252 = vadd.f32 %v1248, 1.0
        %v1253 = vadd.f32 %v1249, 1.0
        %v1254 = vadd.f32 %v1250, 1.0
        %v1255 = vadd.f32 %v1251, 1.0
        %v1256 = vmul.f32 %v1224, %v1252
        %v1257 = vmul.f32 %v1225, %v1253
        %v1258 = vmul.f32 %v1226, %v1254
        %v1259 = vmul.f32 %v1227, %v1255
        %v1260 = vpack.c.bf16 %v1258, %v1256
        %v1261 = vpack.c.bf16 %v1259, %v1257
        %v1262 = vld [vmem:[%s13] sm:$0xf]
        %v1263 = vld [vmem:[%s13 + $0x4] sm:$0xf]
        %v1264 = vld [vmem:[%s13 + $0x8] sm:$0xf]
        %v1265 = vld [vmem:[%s13 + $0xc] sm:$0xf]
        %v1266 = vld [vmem:[%s13 + $0x10] sm:$0xf]
        %v1267 = vld [vmem:[%s13 + $0x14] sm:$0xf]
        %v1268 = vld [vmem:[%s13 + $0x18] sm:$0xf]
        %v1269 = vld [vmem:[%s13 + $0x1c] sm:$0xf]
        %v1270 = vld [vmem:[%s13 + $0x20] sm:$0xf]
        %v1271 = vld [vmem:[%s13 + $0x24] sm:$0xf]
        %v1272 = vld [vmem:[%s13 + $0x28] sm:$0xf]
        %v1273 = vld [vmem:[%s13 + $0x2c] sm:$0xf]
        %v1274 = vld [vmem:[%s13 + $0x30] sm:$0xf]
        %v1275 = vld [vmem:[%s13 + $0x34] sm:$0xf]
        %v1276 = vld [vmem:[%s13 + $0x38] sm:$0xf]
        %v1277 = vld [vmem:[%s13 + $0x3c] sm:$0xf]
        %v1278 = vld [vmem:[%s13 + $0x40] sm:$0xf]
        %v1279 = vld [vmem:[%s13 + $0x44] sm:$0xf]
        %v1280 = vld [vmem:[%s13 + $0x48] sm:$0xf]
        %v1281 = vld [vmem:[%s13 + $0x4c] sm:$0xf]
        %v1282 = vld [vmem:[%s13 + $0x50] sm:$0xf]
        %v1283 = vld [vmem:[%s13 + $0x54] sm:$0xf]
        %v1284 = vld [vmem:[%s13 + $0x58] sm:$0xf]
        %v1285 = vld [vmem:[%s13 + $0x5c] sm:$0xf]
        %v1286 = vld [vmem:[%s13 + $0x60] sm:$0xf]
        %v1287 = vld [vmem:[%s13 + $0x64] sm:$0xf]
        %v1288 = vld [vmem:[%s13 + $0x68] sm:$0xf]
        %v1289 = vld [vmem:[%s13 + $0x6c] sm:$0xf]
        %v1290 = vld [vmem:[%s13 + $0x70] sm:$0xf]
        %v1291 = vld [vmem:[%s13 + $0x74] sm:$0xf]
        %v1292 = vld [vmem:[%s13 + $0x78] sm:$0xf]
        %v1293 = vld [vmem:[%s13 + $0x7c] sm:$0xf]
        %v1294 = vld [vmem:[%s14] sm:$0x1]
        %v1296 = vlaneseq
        %v1297 = vshrl.u32 %v1296, 7
        %v1298 = vsub.s32 0, %v1297
        %v1299 = vrot.slane %v1294, %v1298
        %v1333 = vunpack.c.l.b16 %v1262
        %v1334 = vunpack.c.l.b16 %v1263
        %v1335 = vunpack.c.l.b16 %v1264
        %v1336 = vunpack.c.l.b16 %v1265
        %v1337 = vunpack.c.l.b16 %v1266
        %v1338 = vunpack.c.l.b16 %v1267
        %v1339 = vunpack.c.l.b16 %v1268
        %v1340 = vunpack.c.l.b16 %v1269
        %v1341 = vunpack.c.l.b16 %v1270
        %v1342 = vunpack.c.l.b16 %v1271
        %v1343 = vunpack.c.l.b16 %v1272
        %v1344 = vunpack.c.l.b16 %v1273
        %v1345 = vunpack.c.l.b16 %v1274
        %v1346 = vunpack.c.l.b16 %v1275
        %v1347 = vunpack.c.l.b16 %v1276
        %v1348 = vunpack.c.l.b16 %v1277
        %v1349 = vunpack.c.l.b16 %v1278
        %v1350 = vunpack.c.l.b16 %v1279
        %v1351 = vunpack.c.l.b16 %v1280
        %v1352 = vunpack.c.l.b16 %v1281
        %v1353 = vunpack.c.l.b16 %v1282
        %v1354 = vunpack.c.l.b16 %v1283
        %v1355 = vunpack.c.l.b16 %v1284
        %v1356 = vunpack.c.l.b16 %v1285
        %v1357 = vunpack.c.l.b16 %v1286
        %v1358 = vunpack.c.l.b16 %v1287
        %v1359 = vunpack.c.l.b16 %v1288
        %v1360 = vunpack.c.l.b16 %v1289
        %v1361 = vunpack.c.l.b16 %v1290
        %v1362 = vunpack.c.l.b16 %v1291
        %v1363 = vunpack.c.l.b16 %v1292
        %v1364 = vunpack.c.l.b16 %v1293
        %v1365 = vpack.c.b16 %v1334, %v1333
        %v1366 = vpack.c.b16 %v1336, %v1335
        %v1367 = vpack.c.b16 %v1338, %v1337
        %v1368 = vpack.c.b16 %v1340, %v1339
        %v1369 = vpack.c.b16 %v1342, %v1341
        %v1370 = vpack.c.b16 %v1344, %v1343
        %v1371 = vpack.c.b16 %v1346, %v1345
        %v1372 = vpack.c.b16 %v1348, %v1347
        %v1373 = vpack.c.b16 %v1350, %v1349
        %v1374 = vpack.c.b16 %v1352, %v1351
        %v1375 = vpack.c.b16 %v1354, %v1353
        %v1376 = vpack.c.b16 %v1356, %v1355
        %v1377 = vpack.c.b16 %v1358, %v1357
        %v1378 = vpack.c.b16 %v1360, %v1359
        %v1379 = vpack.c.b16 %v1362, %v1361
        %v1380 = vpack.c.b16 %v1364, %v1363
        %1397 = vmatprep.subr.bf16.mxu0 0
        %1398 = vmatpush1.bf16.msra.mxu0 %v1372
        %1399 = vmatprep.subr.bf16.mxu0 0
        %1400 = vmatpush1.bf16.msra.mxu0 %v1371
        %1401 = vmatprep.subr.bf16.mxu0 0
        %1402 = vmatpush1.bf16.msra.mxu0 %v1370
        %1403 = vmatprep.subr.bf16.mxu0 0
        %1404 = vmatpush1.bf16.msra.mxu0 %v1369
        %1405 = vmatprep.subr.bf16.mxu0 0
        %1406 = vmatpush1.bf16.msra.mxu0 %v1368
        %1407 = vmatprep.subr.bf16.mxu0 0
        %1408 = vmatpush1.bf16.msra.mxu0 %v1367
        %1409 = vmatprep.subr.bf16.mxu0 0
        %1410 = vmatpush1.bf16.msra.mxu0 %v1366
        %1411 = vmatprep.subr.bf16.mxu0 0
        %1412 = vmatpush1.bf16.msra.mxu0 %v1365
        %1413 = vmatprep.subr.bf16.mxu0 0
        %1414 = vmatpush2.bf16.msra.mxu0 %v1380
        %1415 = vmatprep.subr.bf16.mxu0 0
        %1416 = vmatpush2.bf16.msra.mxu0 %v1379
        %1417 = vmatprep.subr.bf16.mxu0 0
        %1418 = vmatpush2.bf16.msra.mxu0 %v1378
        %1419 = vmatprep.subr.bf16.mxu0 0
        %1420 = vmatpush2.bf16.msra.mxu0 %v1377
        %1421 = vmatprep.subr.bf16.mxu0 0
        %1422 = vmatpush2.bf16.msra.mxu0 %v1376
        %1423 = vmatprep.subr.bf16.mxu0 0
        %1424 = vmatpush2.bf16.msra.mxu0 %v1375
        %1425 = vmatprep.subr.bf16.mxu0 0
        %1426 = vmatpush2.bf16.msra.mxu0 %v1374
        %1427 = vmatprep.subr.bf16.mxu0 0
        %1428 = vmatpush2.bf16.msra.mxu0 %v1373
        %1429 = vmatprep.mubr.bf16.mxu0 %v1261
        %1430 = vmatmul.mubr.bf16.gmra.mxu0 %v1260
        %v1431 = vpop.f32.mrf.mxu0
        %v1432 = vadd.f32 %v1299, %v1431
        %v1433 = vpop.f32.mrf.mxu0
        %v1434 = vpop.f32.mrf.mxu0
        %v1435 = vadd.f32 %v1299, %v1434
        %v1436 = vpop.f32.mrf.mxu0
        %1437 = vdwg.mxu0
        %v1438 = vmul.f32 %v1432, 0.5
        %v1439 = vmul.f32 %v1435, 0.5
        %v1440 = vadd.f32 %v1030, %v1438
        %v1441 = vadd.f32 %v1031, %v1439
        %v1442 = vld [vmem:[%s15] sm:$0x1]
        %v1443 = vld [vmem:[%s16] sm:$0x1]
        %1444 = vadd.xlane.f32.xlu0 %v1440
        %v1445 = vpop.xlane.xlu0 %1444
        %1446 = vadd.xlane.f32.xlu0 %v1441
        %v1447 = vpop.xlane.xlu0 %1446
        %v1448 = vmul.f32 %v1445, %v559
        %v1449 = vmul.f32 %v1447, %v559
        %v1450 = vsub.f32 %v1440, %v1448
        %v1451 = vsub.f32 %v1441, %v1449
        %v1452 = vmul.f32 %v1450, %v1450
        %v1453 = vmul.f32 %v1451, %v1451
        %1454 = vadd.xlane.f32.xlu0 %v1452
        %v1455 = vpop.xlane.xlu0 %1454
        %1456 = vadd.xlane.f32.xlu0 %v1453
        %v1457 = vpop.xlane.xlu0 %1456
        %v1458 = vmul.f32 %v1455, %v559
        %v1459 = vmul.f32 %v1457, %v559
        %v1460 = vadd.f32 %v1458, 1e-05
        %v1461 = vadd.f32 %v1459, 1e-05
        %v1462 = vrsqrt.pop %v1460
        %v1463 = vrsqrt.pop %v1461
        %v1464 = vmul.f32 %v1450, %v1462
        %v1465 = vmul.f32 %v1451, %v1463
        %v1467 = vlaneseq
        %v1468 = vshrl.u32 %v1467, 7
        %v1469 = vsub.s32 0, %v1468
        %v1470 = vrot.slane %v1442, %v1469
        %v1472 = vmul.f32 %v1464, %v1470
        %v1473 = vmul.f32 %v1465, %v1470
        %v1475 = vlaneseq
        %v1476 = vshrl.u32 %v1475, 7
        %v1477 = vsub.s32 0, %v1476
        %v1478 = vrot.slane %v1443, %v1477
        %v1480 = vadd.f32 %v1472, %v1478
        %v1481 = vadd.f32 %v1473, %v1478
        %1482 = vst [vmem:[%s542] sm:$0xff] %v1480
        %1483 = vst [vmem:[%s542 + $0x8] sm:$0xff] %v1481
        %s1484 = sand.u32 %s401, 1
        %s1485 = scalar_lea.sflag [#allocation3], %s1484
        %s1486 = sand.u32 %s401, 1
        %s1487 = smul.addr %s1486, 16
        %s1488 = scalar_lea.vmem [#allocation2], %s1487
        // Predicated region
        $region89: #{contrastive_module.9} parent=87 // pred_check
          %p1489 = pneg %p411
        $region90: #{contrastive_module.9} parent=87 // pred_check_branch
          %1491 = sbr.rel (%p1489) target = $region92
        $region91: #{contrastive_module.9} parent=87 // pred_region
          %s1492 = smul.u32 2, %s31
          %s1494 = ssub.s32 256, 256
          %1495 = vsyncadd %s1485, %s1494
          %s1496 = smul.addr %s1492, 128
          %s1497 = scalar_lea.hbm %s17, %s1496
          %s1498 = sshll.u32 %s1488, 4
          %s1499 = int_to_ptr.vmem [resolvable:$true] %s1498
          %1504 = dma.vmem_to_hbm [thread:$0]  %s1499, 256, %s1497, %s1485, 128, 128, 8
        $region92: #{contrastive_module.9} parent=87 // pred_fallthru
          _
      $region88: #{contrastive_module.9} parent=5 // pred_fallthru
        _
      %p1505 = scmp.le.s32.totalorder 2, %s26
      // Predicated region
      $region93: #{contrastive_module.9} parent=5 // pred_check
        %p1506 = pneg %p1505
      $region94: #{contrastive_module.9} parent=5 // pred_check_branch
        %1508 = sbr.rel (%p1506) target = $region96
      $region95: #{contrastive_module.9} parent=5 // pred_region
        %s1509 = ssub.s32 %s26, 2
        // Predicated region
        $region97: #{contrastive_module.9} parent=95 // pred_check
          %p1510 = pneg %p417
        $region98: #{contrastive_module.9} parent=95 // pred_check_branch
          %1512 = sbr.rel (%p1510) target = $region100
        $region99: #{contrastive_module.9} parent=95 // pred_region
          %s1513 = sand.u32 %s402, 1
          %s1514 = scalar_lea.sflag [#allocation3], %s1513
          %s1515 = sand.u32 %s402, 1
          %s1516 = smul.addr %s1515, 16
          %s1517 = scalar_lea.vmem [#allocation2], %s1516
          %1518 = dma.done %s1514, 256
        $region100: #{contrastive_module.9} parent=95 // pred_fallthru
          _
      $region96: #{contrastive_module.9} parent=5 // pred_fallthru
        _
    $region6: #{contrastive_module.9} parent=1 // loop_footer
      %s30 = sadd.s32 1, %s26
    $region7: #{contrastive_module.9} parent=1 // loop_footer_branch
      %25 = sbr.rel target = $region3
    $region8: #{contrastive_module.9} parent=1 // loop_exit
      _
    %1519 = vsyncpa [#allocation3], 1
    %s1520 = scalar_lea.sflag [#allocation3], 1
    %1521 = vsyncpa %s1520, 1

// kernel: contrastive_module.8
$region0: #{contrastive_module.8}
  #allocation0 [shape = 'u32[]', space=smem, size = 0x4, offset = 0x4, fixed_abs, tag = 'smem constant byte address 0x4 - core index']
  #allocation1 [shape = 'u32[144,128]{1,0:T(1,128)}', space=vmem, size = 0x12000, scoped, tag = 'internal scratch']
  %s0 = inlined_call_operand.vmem [shape: f32[2,16,128], index: 0, kind: input, shape index: {}]
  %s1 = inlined_call_operand.vmem [shape: f32[16,128], index: 1, kind: input, shape index: {}]
  %s2 = inlined_call_operand.vmem [shape: f32[1,128], index: 2, kind: input, shape index: {}]
  %s3 = inlined_call_operand.vmem [shape: f32[1,128], index: 3, kind: input, shape index: {}]
  %s4 = inlined_call_operand.vmem [shape: bf16[128,256], index: 4, kind: input, shape index: {}]
  %s5 = inlined_call_operand.vmem [shape: f32[1,256], index: 5, kind: input, shape index: {}]
  %s6 = inlined_call_operand.vmem [shape: bf16[256,128], index: 6, kind: input, shape index: {}]
  %s7 = inlined_call_operand.vmem [shape: f32[1,128], index: 7, kind: input, shape index: {}]
  %s8 = inlined_call_operand.hbm [shape: f32[1,128], index: 8, kind: input, shape index: {}]
  %s9 = inlined_call_operand.hbm [shape: f32[1,128], index: 9, kind: input, shape index: {}]
  %s10 = inlined_call_operand.vmem [shape: bf16[128,384], index: 10, kind: input, shape index: {}]
  %s11 = inlined_call_operand.vmem [shape: f32[1,384], index: 11, kind: input, shape index: {}]
  %s12 = inlined_call_operand.vmem [shape: bf16[128,128], index: 12, kind: input, shape index: {}]
  %s13 = inlined_call_operand.hbm [shape: f32[1,128], index: 13, kind: input, shape index: {}]
  %s14 = inlined_call_operand.vmem [shape: f32[2,16,128], index: 14, kind: output, shape index: {}]
  %s15 = sld [smem:[#allocation0]]
  $region101: #{contrastive_module.8} parent=0
    _
  %s17 = ssub.s32 1, %s15
  %s18 = scalar_select 0, %s17, %s15
  $region1: #{contrastive_module.8} parent=0
    #allocation2 [shape = 'u8[512]{0}', space=vmem, size = 0x400, scoped, tag = 'input window, operand 8, single buffered']
    #allocation3 [shape = 's32[2]{0}', space=sflag, size = 0x8, scoped, tag = 'scoped memory for contrastive_module.8']
    #allocation4 [shape = 'u8[512]{0}', space=vmem, size = 0x400, scoped, tag = 'input window, operand 9, single buffered']
    #allocation5 [shape = 's32[1]{0}', space=sflag, size = 0x4, scoped, tag = 'scoped memory for contrastive_module.8']
    #allocation6 [shape = 'u8[512]{0}', space=vmem, size = 0x400, scoped, tag = 'input window, operand 13, single buffered']
    %19 = vsyncpa [#allocation3], 0
    %20 = vsyncpa [#allocation5], 0
    loop: start=0, step=1, limit=4
    $region2: #{contrastive_module.8} parent=1 // loop_pre_header
      _
    $region3: #{contrastive_module.8} parent=1 // loop_header
      %s22 = sphi 0, %s26
      %p23 = scmp.ge.s32.totalorder %s22, 4
      %s32 = sphi 0, %s34
      %s35 = sphi 0, %s32
      %s36 = sphi 0, %s35
      %s52 = sphi 0, %s36
      %s56 = sphi 0, %s56
      %s58 = sphi 0, %s56
      %s59 = sphi 0, %s58
      %s73 = sphi 0, %s59
      %s77 = sphi 0, %s77
      %s79 = sphi 0, %s77
      %s80 = sphi 0, %s79
      %s94 = sphi 0, %s80
      %s98 = sphi 0, %s98
      %s100 = sphi 0, %s98
      %s101 = sphi 0, %s100
      %s115 = sphi 0, %s101
      %s119 = sphi 0, %s119
      %s121 = sphi 0, %s119
      %s122 = sphi 0, %s121
      %s136 = sphi 0, %s122
      %s140 = sphi 0, %s140
      %s142 = sphi 0, %s140
      %s143 = sphi 0, %s142
      %s157 = sphi 0, %s143
      %s161 = sphi 0, %s161
      %s163 = sphi 0, %s161
      %s164 = sphi 0, %s163
      %s178 = sphi 0, %s164
      %s182 = sphi 0, %s182
      %s184 = sphi 0, %s182
      %s185 = sphi 0, %s184
      %s199 = sphi 0, %s185
      %s203 = sphi 0, %s203
      %s205 = sphi 0, %s203
      %s206 = sphi 0, %s205
      %s220 = sphi 0, %s206
      %s224 = sphi 0, %s224
      %s226 = sphi 0, %s224
      %s227 = sphi 0, %s226
      %s241 = sphi 0, %s227
      %s245 = sphi 0, %s245
      %s247 = sphi 0, %s245
      %s248 = sphi 0, %s247
      %s262 = sphi 0, %s248
      %s266 = sphi 0, %s266
      %s268 = sphi 0, %s266
      %s269 = sphi 0, %s268
      %s283 = sphi 0, %s269
      %s287 = sphi 0, %s287
      %s289 = sphi 0, %s287
      %s290 = sphi 0, %s289
      %s304 = sphi 0, %s290
      %s308 = sphi 0, %s308
      %s310 = sphi 0, %s308
      %s311 = sphi 0, %s310
      %s325 = sphi 0, %s311
      %s331 = sphi 0, %s333
      %s334 = sphi 0, %s331
      %s335 = sphi 0, %s334
      %s351 = sphi 0, %s335
    $region4: #{contrastive_module.8} parent=1 // loop_header_branch
      %25 = sbr.rel (%p23) target = $region8
    $region5: #{contrastive_module.8} parent=1 // loop_body
      %s27 = ssub.s32 %s22, 1
      %s28 = ssub.s32 %s22, 2
      %s29 = sadd.s32 %s22, 1
      %s30 = ssub.s32 %s22, %s29
      %p31 = scmp.eq.s32.totalorder %s30, 0
      %s33 = sadd.s32 %s32, 1
      %s34 = scalar_select %p31, %s32, %s33
      %p37 = pneg %p31
      %p38 = scmp.eq.s32.totalorder %s22, 1
      %p39 = por %p37, %p38
      %p40 = scmp.ne.s32.totalorder %s32, %s35
      %p41 = scmp.eq.s32.totalorder %s22, 0
      %p42 = por %p40, %p41
      %p43 = scmp.ne.s32.totalorder %s32, %s35
      %p44 = scmp.eq.s32.totalorder %s27, 1
      %p45 = por %p43, %p44
      %p46 = scmp.ne.s32.totalorder %s35, %s36
      %p47 = scmp.eq.s32.totalorder %s27, 0
      %p48 = por %p46, %p47
      %p49 = scmp.ne.s32.totalorder %s35, %s36
      %p50 = scmp.eq.s32.totalorder %s28, 1
      %p51 = por %p49, %p50
      %p53 = scmp.ne.s32.totalorder %s36, %s52
      %p54 = scmp.eq.s32.totalorder %s28, 0
      %p55 = por %p53, %p54
      %s57 = sadd.s32 %s56, 1
      %p60 = scmp.eq.s32.totalorder %s22, 1
      %p61 = scmp.ne.s32.totalorder %s56, %s58
      %p62 = scmp.eq.s32.totalorder %s22, 0
      %p63 = por %p61, %p62
      %p64 = scmp.ne.s32.totalorder %s56, %s58
      %p65 = scmp.eq.s32.totalorder %s27, 1
      %p66 = por %p64, %p65
      %p67 = scmp.ne.s32.totalorder %s58, %s59
      %p68 = scmp.eq.s32.totalorder %s27, 0
      %p69 = por %p67, %p68
      %p70 = scmp.ne.s32.totalorder %s58, %s59
      %p71 = scmp.eq.s32.totalorder %s28, 1
      %p72 = por %p70, %p71
      %p74 = scmp.ne.s32.totalorder %s59, %s73
      %p75 = scmp.eq.s32.totalorder %s28, 0
      %p76 = por %p74, %p75
      %s78 = sadd.s32 %s77, 1
      %p81 = scmp.eq.s32.totalorder %s22, 1
      %p82 = scmp.ne.s32.totalorder %s77, %s79
      %p83 = scmp.eq.s32.totalorder %s22, 0
      %p84 = por %p82, %p83
      %p85 = scmp.ne.s32.totalorder %s77, %s79
      %p86 = scmp.eq.s32.totalorder %s27, 1
      %p87 = por %p85, %p86
      %p88 = scmp.ne.s32.totalorder %s79, %s80
      %p89 = scmp.eq.s32.totalorder %s27, 0
      %p90 = por %p88, %p89
      %p91 = scmp.ne.s32.totalorder %s79, %s80
      %p92 = scmp.eq.s32.totalorder %s28, 1
      %p93 = por %p91, %p92
      %p95 = scmp.ne.s32.totalorder %s80, %s94
      %p96 = scmp.eq.s32.totalorder %s28, 0
      %p97 = por %p95, %p96
      %s99 = sadd.s32 %s98, 1
      %p102 = scmp.eq.s32.totalorder %s22, 1
      %p103 = scmp.ne.s32.totalorder %s98, %s100
      %p104 = scmp.eq.s32.totalorder %s22, 0
      %p105 = por %p103, %p104
      %p106 = scmp.ne.s32.totalorder %s98, %s100
      %p107 = scmp.eq.s32.totalorder %s27, 1
      %p108 = por %p106, %p107
      %p109 = scmp.ne.s32.totalorder %s100, %s101
      %p110 = scmp.eq.s32.totalorder %s27, 0
      %p111 = por %p109, %p110
      %p112 = scmp.ne.s32.totalorder %s100, %s101
      %p113 = scmp.eq.s32.totalorder %s28, 1
      %p114 = por %p112, %p113
      %p116 = scmp.ne.s32.totalorder %s101, %s115
      %p117 = scmp.eq.s32.totalorder %s28, 0
      %p118 = por %p116, %p117
      %s120 = sadd.s32 %s119, 1
      %p123 = scmp.eq.s32.totalorder %s22, 1
      %p124 = scmp.ne.s32.totalorder %s119, %s121
      %p125 = scmp.eq.s32.totalorder %s22, 0
      %p126 = por %p124, %p125
      %p127 = scmp.ne.s32.totalorder %s119, %s121
      %p128 = scmp.eq.s32.totalorder %s27, 1
      %p129 = por %p127, %p128
      %p130 = scmp.ne.s32.totalorder %s121, %s122
      %p131 = scmp.eq.s32.totalorder %s27, 0
      %p132 = por %p130, %p131
      %p133 = scmp.ne.s32.totalorder %s121, %s122
      %p134 = scmp.eq.s32.totalorder %s28, 1
      %p135 = por %p133, %p134
      %p137 = scmp.ne.s32.totalorder %s122, %s136
      %p138 = scmp.eq.s32.totalorder %s28, 0
      %p139 = por %p137, %p138
      %s141 = sadd.s32 %s140, 1
      %p144 = scmp.eq.s32.totalorder %s22, 1
      %p145 = scmp.ne.s32.totalorder %s140, %s142
      %p146 = scmp.eq.s32.totalorder %s22, 0
      %p147 = por %p145, %p146
      %p148 = scmp.ne.s32.totalorder %s140, %s142
      %p149 = scmp.eq.s32.totalorder %s27, 1
      %p150 = por %p148, %p149
      %p151 = scmp.ne.s32.totalorder %s142, %s143
      %p152 = scmp.eq.s32.totalorder %s27, 0
      %p153 = por %p151, %p152
      %p154 = scmp.ne.s32.totalorder %s142, %s143
      %p155 = scmp.eq.s32.totalorder %s28, 1
      %p156 = por %p154, %p155
      %p158 = scmp.ne.s32.totalorder %s143, %s157
      %p159 = scmp.eq.s32.totalorder %s28, 0
      %p160 = por %p158, %p159
      %s162 = sadd.s32 %s161, 1
      %p165 = scmp.eq.s32.totalorder %s22, 1
      %p166 = scmp.ne.s32.totalorder %s161, %s163
      %p167 = scmp.eq.s32.totalorder %s22, 0
      %p168 = por %p166, %p167
      %p169 = scmp.ne.s32.totalorder %s161, %s163
      %p170 = scmp.eq.s32.totalorder %s27, 1
      %p171 = por %p169, %p170
      %p172 = scmp.ne.s32.totalorder %s163, %s164
      %p173 = scmp.eq.s32.totalorder %s27, 0
      %p174 = por %p172, %p173
      %p175 = scmp.ne.s32.totalorder %s163, %s164
      %p176 = scmp.eq.s32.totalorder %s28, 1
      %p177 = por %p175, %p176
      %p179 = scmp.ne.s32.totalorder %s164, %s178
      %p180 = scmp.eq.s32.totalorder %s28, 0
      %p181 = por %p179, %p180
      %s183 = sadd.s32 %s182, 1
      %p186 = scmp.eq.s32.totalorder %s22, 1
      %p187 = scmp.ne.s32.totalorder %s182, %s184
      %p188 = scmp.eq.s32.totalorder %s22, 0
      %p189 = por %p187, %p188
      %p190 = scmp.ne.s32.totalorder %s182, %s184
      %p191 = scmp.eq.s32.totalorder %s27, 1
      %p192 = por %p190, %p191
      %p193 = scmp.ne.s32.totalorder %s184, %s185
      %p194 = scmp.eq.s32.totalorder %s27, 0
      %p195 = por %p193, %p194
      %p196 = scmp.ne.s32.totalorder %s184, %s185
      %p197 = scmp.eq.s32.totalorder %s28, 1
      %p198 = por %p196, %p197
      %p200 = scmp.ne.s32.totalorder %s185, %s199
      %p201 = scmp.eq.s32.totalorder %s28, 0
      %p202 = por %p200, %p201
      %s204 = sadd.s32 %s203, 1
      %p207 = scmp.eq.s32.totalorder %s22, 1
      %p208 = scmp.ne.s32.totalorder %s203, %s205
      %p209 = scmp.eq.s32.totalorder %s22, 0
      %p210 = por %p208, %p209
      %p211 = scmp.ne.s32.totalorder %s203, %s205
      %p212 = scmp.eq.s32.totalorder %s27, 1
      %p213 = por %p211, %p212
      %p214 = scmp.ne.s32.totalorder %s205, %s206
      %p215 = scmp.eq.s32.totalorder %s27, 0
      %p216 = por %p214, %p215
      %p217 = scmp.ne.s32.totalorder %s205, %s206
      %p218 = scmp.eq.s32.totalorder %s28, 1
      %p219 = por %p217, %p218
      %p221 = scmp.ne.s32.totalorder %s206, %s220
      %p222 = scmp.eq.s32.totalorder %s28, 0
      %p223 = por %p221, %p222
      %s225 = sadd.s32 %s224, 1
      %p228 = scmp.eq.s32.totalorder %s22, 1
      %p229 = scmp.ne.s32.totalorder %s224, %s226
      %p230 = scmp.eq.s32.totalorder %s22, 0
      %p231 = por %p229, %p230
      %p232 = scmp.ne.s32.totalorder %s224, %s226
      %p233 = scmp.eq.s32.totalorder %s27, 1
      %p234 = por %p232, %p233
      %p235 = scmp.ne.s32.totalorder %s226, %s227
      %p236 = scmp.eq.s32.totalorder %s27, 0
      %p237 = por %p235, %p236
      %p238 = scmp.ne.s32.totalorder %s226, %s227
      %p239 = scmp.eq.s32.totalorder %s28, 1
      %p240 = por %p238, %p239
      %p242 = scmp.ne.s32.totalorder %s227, %s241
      %p243 = scmp.eq.s32.totalorder %s28, 0
      %p244 = por %p242, %p243
      %s246 = sadd.s32 %s245, 1
      %p249 = scmp.eq.s32.totalorder %s22, 1
      %p250 = scmp.ne.s32.totalorder %s245, %s247
      %p251 = scmp.eq.s32.totalorder %s22, 0
      %p252 = por %p250, %p251
      %p253 = scmp.ne.s32.totalorder %s245, %s247
      %p254 = scmp.eq.s32.totalorder %s27, 1
      %p255 = por %p253, %p254
      %p256 = scmp.ne.s32.totalorder %s247, %s248
      %p257 = scmp.eq.s32.totalorder %s27, 0
      %p258 = por %p256, %p257
      %p259 = scmp.ne.s32.totalorder %s247, %s248
      %p260 = scmp.eq.s32.totalorder %s28, 1
      %p261 = por %p259, %p260
      %p263 = scmp.ne.s32.totalorder %s248, %s262
      %p264 = scmp.eq.s32.totalorder %s28, 0
      %p265 = por %p263, %p264
      %s267 = sadd.s32 %s266, 1
      %p270 = scmp.eq.s32.totalorder %s22, 1
      %p271 = scmp.ne.s32.totalorder %s266, %s268
      %p272 = scmp.eq.s32.totalorder %s22, 0
      %p273 = por %p271, %p272
      %p274 = scmp.ne.s32.totalorder %s266, %s268
      %p275 = scmp.eq.s32.totalorder %s27, 1
      %p276 = por %p274, %p275
      %p277 = scmp.ne.s32.totalorder %s268, %s269
      %p278 = scmp.eq.s32.totalorder %s27, 0
      %p279 = por %p277, %p278
      %p280 = scmp.ne.s32.totalorder %s268, %s269
      %p281 = scmp.eq.s32.totalorder %s28, 1
      %p282 = por %p280, %p281
      %p284 = scmp.ne.s32.totalorder %s269, %s283
      %p285 = scmp.eq.s32.totalorder %s28, 0
      %p286 = por %p284, %p285
      %s288 = sadd.s32 %s287, 1
      %p291 = scmp.eq.s32.totalorder %s22, 1
      %p292 = scmp.ne.s32.totalorder %s287, %s289
      %p293 = scmp.eq.s32.totalorder %s22, 0
      %p294 = por %p292, %p293
      %p295 = scmp.ne.s32.totalorder %s287, %s289
      %p296 = scmp.eq.s32.totalorder %s27, 1
      %p297 = por %p295, %p296
      %p298 = scmp.ne.s32.totalorder %s289, %s290
      %p299 = scmp.eq.s32.totalorder %s27, 0
      %p300 = por %p298, %p299
      %p301 = scmp.ne.s32.totalorder %s289, %s290
      %p302 = scmp.eq.s32.totalorder %s28, 1
      %p303 = por %p301, %p302
      %p305 = scmp.ne.s32.totalorder %s290, %s304
      %p306 = scmp.eq.s32.totalorder %s28, 0
      %p307 = por %p305, %p306
      %s309 = sadd.s32 %s308, 1
      %p312 = scmp.eq.s32.totalorder %s22, 1
      %p313 = scmp.ne.s32.totalorder %s308, %s310
      %p314 = scmp.eq.s32.totalorder %s22, 0
      %p315 = por %p313, %p314
      %p316 = scmp.ne.s32.totalorder %s308, %s310
      %p317 = scmp.eq.s32.totalorder %s27, 1
      %p318 = por %p316, %p317
      %p319 = scmp.ne.s32.totalorder %s310, %s311
      %p320 = scmp.eq.s32.totalorder %s27, 0
      %p321 = por %p319, %p320
      %p322 = scmp.ne.s32.totalorder %s310, %s311
      %p323 = scmp.eq.s32.totalorder %s28, 1
      %p324 = por %p322, %p323
      %p326 = scmp.ne.s32.totalorder %s311, %s325
      %p327 = scmp.eq.s32.totalorder %s28, 0
      %p328 = por %p326, %p327
      %s329 = ssub.s32 %s22, %s29
      %p330 = scmp.eq.s32.totalorder %s329, 0
      %s332 = sadd.s32 %s331, 1
      %s333 = scalar_select %p330, %s331, %s332
      %p336 = pneg %p330
      %p337 = scmp.eq.s32.totalorder %s22, 1
      %p338 = por %p336, %p337
      %p339 = scmp.ne.s32.totalorder %s331, %s334
      %p340 = scmp.eq.s32.totalorder %s22, 0
      %p341 = por %p339, %p340
      %p342 = scmp.ne.s32.totalorder %s331, %s334
      %p343 = scmp.eq.s32.totalorder %s27, 1
      %p344 = por %p342, %p343
      %p345 = scmp.ne.s32.totalorder %s334, %s335
      %p346 = scmp.eq.s32.totalorder %s27, 0
      %p347 = por %p345, %p346
      %p348 = scmp.ne.s32.totalorder %s334, %s335
      %p349 = scmp.eq.s32.totalorder %s28, 1
      %p350 = por %p348, %p349
      %p352 = scmp.ne.s32.totalorder %s335, %s351
      %p353 = scmp.eq.s32.totalorder %s28, 0
      %p354 = por %p352, %p353
      %p355 = scmp.le.s32.totalorder 1, %s22
      %p356 = scmp.lt.s32.totalorder %s22, 3
      %p357 = pnand %p355, %p356
      %p358 = pneg %p357
      // Predicated region
      $region9: #{contrastive_module.8} parent=5 // pred_check
        _
      $region10: #{contrastive_module.8} parent=5 // pred_check_branch
        %360 = sbr.rel (%p357) target = $region12
      $region11: #{contrastive_module.8} parent=5 // pred_region
        %s361 = ssub.s32 %s22, 1
        // Predicated region
        $region13: #{contrastive_module.8} parent=11 // pred_check
          %p362 = pneg %p69
        $region14: #{contrastive_module.8} parent=11 // pred_check_branch
          %364 = sbr.rel (%p362) target = $region16
        $region15: #{contrastive_module.8} parent=11 // pred_region
          _
        $region16: #{contrastive_module.8} parent=11 // pred_fallthru
          _
        // Predicated region
        $region17: #{contrastive_module.8} parent=11 // pred_check
          %p365 = pneg %p90
        $region18: #{contrastive_module.8} parent=11 // pred_check_branch
          %367 = sbr.rel (%p365) target = $region20
        $region19: #{contrastive_module.8} parent=11 // pred_region
          _
        $region20: #{contrastive_module.8} parent=11 // pred_fallthru
          _
        // Predicated region
        $region21: #{contrastive_module.8} parent=11 // pred_check
          %p368 = pneg %p111
        $region22: #{contrastive_module.8} parent=11 // pred_check_branch
          %370 = sbr.rel (%p368) target = $region24
        $region23: #{contrastive_module.8} parent=11 // pred_region
          _
        $region24: #{contrastive_module.8} parent=11 // pred_fallthru
          _
        // Predicated region
        $region25: #{contrastive_module.8} parent=11 // pred_check
          %p371 = pneg %p132
        $region26: #{contrastive_module.8} parent=11 // pred_check_branch
          %373 = sbr.rel (%p371) target = $region28
        $region27: #{contrastive_module.8} parent=11 // pred_region
          _
        $region28: #{contrastive_module.8} parent=11 // pred_fallthru
          _
        // Predicated region
        $region29: #{contrastive_module.8} parent=11 // pred_check
          %p374 = pneg %p153
        $region30: #{contrastive_module.8} parent=11 // pred_check_branch
          %376 = sbr.rel (%p374) target = $region32
        $region31: #{contrastive_module.8} parent=11 // pred_region
          _
        $region32: #{contrastive_module.8} parent=11 // pred_fallthru
          _
        // Predicated region
        $region33: #{contrastive_module.8} parent=11 // pred_check
          %p377 = pneg %p174
        $region34: #{contrastive_module.8} parent=11 // pred_check_branch
          %379 = sbr.rel (%p377) target = $region36
        $region35: #{contrastive_module.8} parent=11 // pred_region
          _
        $region36: #{contrastive_module.8} parent=11 // pred_fallthru
          _
        // Predicated region
        $region37: #{contrastive_module.8} parent=11 // pred_check
          %p380 = pneg %p195
        $region38: #{contrastive_module.8} parent=11 // pred_check_branch
          %382 = sbr.rel (%p380) target = $region40
        $region39: #{contrastive_module.8} parent=11 // pred_region
          _
        $region40: #{contrastive_module.8} parent=11 // pred_fallthru
          _
        // Predicated region
        $region41: #{contrastive_module.8} parent=11 // pred_check
          %p383 = pneg %p216
        $region42: #{contrastive_module.8} parent=11 // pred_check_branch
          %385 = sbr.rel (%p383) target = $region44
        $region43: #{contrastive_module.8} parent=11 // pred_region
          %s387 = ssub.s32 16, 16
          %388 = vsyncadd [#allocation3], %s387
          %s390 = sshll.u32 [#allocation2], 4
          %s391 = int_to_ptr.vmem [resolvable:$true] %s390
          %393 = dma.hbm_to_vmem [thread:$0]  %s8, 16, %s391, [#allocation3]
        $region44: #{contrastive_module.8} parent=11 // pred_fallthru
          _
        // Predicated region
        $region45: #{contrastive_module.8} parent=11 // pred_check
          %p394 = pneg %p237
        $region46: #{contrastive_module.8} parent=11 // pred_check_branch
          %396 = sbr.rel (%p394) target = $region48
        $region47: #{contrastive_module.8} parent=11 // pred_region
          %s398 = ssub.s32 16, 16
          %399 = vsyncadd [#allocation5], %s398
          %s401 = sshll.u32 [#allocation4], 4
          %s402 = int_to_ptr.vmem [resolvable:$true] %s401
          %404 = dma.hbm_to_vmem [thread:$0]  %s9, 16, %s402, [#allocation5]
        $region48: #{contrastive_module.8} parent=11 // pred_fallthru
          _
        // Predicated region
        $region49: #{contrastive_module.8} parent=11 // pred_check
          %p405 = pneg %p258
        $region50: #{contrastive_module.8} parent=11 // pred_check_branch
          %407 = sbr.rel (%p405) target = $region52
        $region51: #{contrastive_module.8} parent=11 // pred_region
          _
        $region52: #{contrastive_module.8} parent=11 // pred_fallthru
          _
        // Predicated region
        $region53: #{contrastive_module.8} parent=11 // pred_check
          %p408 = pneg %p279
        $region54: #{contrastive_module.8} parent=11 // pred_check_branch
          %410 = sbr.rel (%p408) target = $region56
        $region55: #{contrastive_module.8} parent=11 // pred_region
          _
        $region56: #{contrastive_module.8} parent=11 // pred_fallthru
          _
        // Predicated region
        $region57: #{contrastive_module.8} parent=11 // pred_check
          %p411 = pneg %p300
        $region58: #{contrastive_module.8} parent=11 // pred_check_branch
          %413 = sbr.rel (%p411) target = $region60
        $region59: #{contrastive_module.8} parent=11 // pred_region
          _
        $region60: #{contrastive_module.8} parent=11 // pred_fallthru
          _
        // Predicated region
        $region61: #{contrastive_module.8} parent=11 // pred_check
          %p414 = pneg %p321
        $region62: #{contrastive_module.8} parent=11 // pred_check_branch
          %416 = sbr.rel (%p414) target = $region64
        $region63: #{contrastive_module.8} parent=11 // pred_region
          %s418 = ssub.s32 16, 16
          %419 = vsyncadd [#allocation5], %s418
          %s421 = sshll.u32 [#allocation6], 4
          %s422 = int_to_ptr.vmem [resolvable:$true] %s421
          %424 = dma.hbm_to_vmem [thread:$0]  %s13, 16, %s422, [#allocation5]
        $region64: #{contrastive_module.8} parent=11 // pred_fallthru
          _
      $region12: #{contrastive_module.8} parent=5 // pred_fallthru
        _
      %p425 = scmp.lt.s32.totalorder %s22, 2
      // Predicated region
      $region65: #{contrastive_module.8} parent=5 // pred_check
        %p426 = pneg %p425
      $region66: #{contrastive_module.8} parent=5 // pred_check_branch
        %428 = sbr.rel (%p426) target = $region68
      $region67: #{contrastive_module.8} parent=5 // pred_region
        // Predicated region
        $region69: #{contrastive_module.8} parent=67 // pred_check
          %p429 = pneg %p42
        $region70: #{contrastive_module.8} parent=67 // pred_check_branch
          %431 = sbr.rel (%p429) target = $region72
        $region71: #{contrastive_module.8} parent=67 // pred_region
          %p432 = scmp.lt.s32.totalorder %s22, 1
          %s433 = scalar_select %p432, %s22, 1
          %s434 = smul.addr %s433, 2
          %s435 = smul.addr %s434, 8
          %s436 = scalar_lea.vmem %s0, %s435
        $region72: #{contrastive_module.8} parent=67 // pred_fallthru
          _
      $region68: #{contrastive_module.8} parent=5 // pred_fallthru
        _
      %p437 = scmp.le.s32.totalorder 1, %s22
      %p438 = scmp.lt.s32.totalorder %s22, 3
      %p439 = pnand %p437, %p438
      %p440 = pneg %p439
      // Predicated region
      $region73: #{contrastive_module.8} parent=5 // pred_check
        _
      $region74: #{contrastive_module.8} parent=5 // pred_check_branch
        %442 = sbr.rel (%p439) target = $region76
      $region75: #{contrastive_module.8} parent=5 // pred_region
        %s443 = ssub.s32 %s22, 1
        // Predicated region
        $region77: #{contrastive_module.8} parent=75 // pred_check
          %p444 = pneg %p216
        $region78: #{contrastive_module.8} parent=75 // pred_check_branch
          %446 = sbr.rel (%p444) target = $region80
        $region79: #{contrastive_module.8} parent=75 // pred_region
          %447 = dma.done [#allocation3], 16
        $region80: #{contrastive_module.8} parent=75 // pred_fallthru
          _
        // Predicated region
        $region81: #{contrastive_module.8} parent=75 // pred_check
          %p448 = pneg %p237
        $region82: #{contrastive_module.8} parent=75 // pred_check_branch
          %450 = sbr.rel (%p448) target = $region84
        $region83: #{contrastive_module.8} parent=75 // pred_region
          %451 = dma.done [#allocation5], 16
        $region84: #{contrastive_module.8} parent=75 // pred_fallthru
          _
        // Predicated region
        $region85: #{contrastive_module.8} parent=75 // pred_check
          %p452 = pneg %p321
        $region86: #{contrastive_module.8} parent=75 // pred_check_branch
          %454 = sbr.rel (%p452) target = $region88
        $region87: #{contrastive_module.8} parent=75 // pred_region
          %455 = dma.done [#allocation5], 16
        $region88: #{contrastive_module.8} parent=75 // pred_fallthru
          _
        %p456 = scmp.lt.s32.totalorder %s27, 1
        %s457 = scalar_select %p456, %s27, 1
        %s458 = smul.addr %s457, 2
        %s459 = smul.addr %s458, 8
        %s460 = scalar_lea.vmem %s0, %s459
        %p461 = pneg %p48
        %p462 = pneg %p45
        %p463 = pneg %p69
        %p464 = pneg %p66
        %p465 = pneg %p90
        %p466 = pneg %p87
        %p467 = pneg %p111
        %p468 = pneg %p108
        %p469 = pneg %p132
        %p470 = pneg %p129
        %p471 = pneg %p153
        %p472 = pneg %p150
        %p473 = pneg %p174
        %p474 = pneg %p171
        %p475 = pneg %p195
        %p476 = pneg %p192
        %p477 = pneg %p216
        %p478 = pneg %p213
        %p479 = pneg %p237
        %p480 = pneg %p234
        %p481 = pneg %p258
        %p482 = pneg %p255
        %p483 = pneg %p279
        %p484 = pneg %p276
        %p485 = pneg %p300
        %p486 = pneg %p297
        %p487 = pneg %p321
        %p488 = pneg %p318
        %p489 = pneg %p347
        %p490 = pneg %p344
        %p491 = scmp.lt.s32.totalorder %s27, 1
        %s492 = scalar_select %p491, %s27, 1
        %s493 = smul.addr %s492, 2
        %s494 = smul.addr %s493, 8
        %s495 = scalar_lea.vmem %s14, %s494
        %p496 = scmp.lt.s32.totalorder %s27, 1
        %s497 = scalar_select %p496, %s27, 1
        %s498 = smul.addr %s497, 2
        %s499 = smul.addr %s498, 8
        %s500 = scalar_lea.vmem %s0, %s499
        %p501 = scmp.lt.s32.totalorder %s27, 1
        %s502 = scalar_select %p501, %s27, 1
        %s503 = smul.addr %s502, 2
        %s504 = smul.addr %s503, 8
        %s505 = scalar_lea.vmem %s14, %s504
        %v507 = vld [vmem:[%s500] sm:$0xff]
        %v508 = vld [vmem:[%s500 + $0x8] sm:$0xff]
        %v509 = vld [vmem:[%s2] sm:$0x1]
        %v510 = vld [vmem:[%s3] sm:$0x1]
        %511 = vadd.xlane.f32.xlu0 %v507
        %v512 = vpop.xlane.xlu0 %511
        %513 = vadd.xlane.f32.xlu0 %v508
        %v514 = vpop.xlane.xlu0 %513
        %v515 = vrcp.pop 128.0
        %v516 = vmul.f32 %v512, %v515
        %v517 = vmul.f32 %v514, %v515
        %v518 = vsub.f32 %v507, %v516
        %v519 = vsub.f32 %v508, %v517
        %v520 = vmul.f32 %v518, %v518
        %v521 = vmul.f32 %v519, %v519
        %522 = vadd.xlane.f32.xlu0 %v520
        %v523 = vpop.xlane.xlu0 %522
        %524 = vadd.xlane.f32.xlu0 %v521
        %v525 = vpop.xlane.xlu0 %524
        %v526 = vmul.f32 %v523, %v515
        %v527 = vmul.f32 %v525, %v515
        %v528 = vadd.f32 %v526, 1e-05
        %v529 = vadd.f32 %v527, 1e-05
        %v530 = vrsqrt.pop %v528
        %v531 = vrsqrt.pop %v529
        %v532 = vmul.f32 %v518, %v530
        %v533 = vmul.f32 %v519, %v531
        %v535 = vlaneseq
        %v536 = vshrl.u32 %v535, 7
        %v537 = vsub.s32 0, %v536
        %v538 = vrot.slane %v509, %v537
        %v540 = vmul.f32 %v532, %v538
        %v541 = vmul.f32 %v533, %v538
        %v543 = vlaneseq
        %v544 = vshrl.u32 %v543, 7
        %v545 = vsub.s32 0, %v544
        %v546 = vrot.slane %v510, %v545
        %v548 = vadd.f32 %v540, %v546
        %v549 = vadd.f32 %v541, %v546
        %v550 = vpack.c.bf16 %v549, %v548
        %v551 = vld [vmem:[%s4] sm:$0xff]
        %v552 = vld [vmem:[%s4 + $0x8] sm:$0xff]
        %v553 = vld [vmem:[%s4 + $0x10] sm:$0xff]
        %v554 = vld [vmem:[%s4 + $0x18] sm:$0xff]
        %v555 = vld [vmem:[%s4 + $0x20] sm:$0xff]
        %v556 = vld [vmem:[%s4 + $0x28] sm:$0xff]
        %v557 = vld [vmem:[%s4 + $0x30] sm:$0xff]
        %v558 = vld [vmem:[%s4 + $0x38] sm:$0xff]
        %v559 = vld [vmem:[%s4 + $0x40] sm:$0xff]
        %v560 = vld [vmem:[%s4 + $0x48] sm:$0xff]
        %v561 = vld [vmem:[%s4 + $0x50] sm:$0xff]
        %v562 = vld [vmem:[%s4 + $0x58] sm:$0xff]
        %v563 = vld [vmem:[%s4 + $0x60] sm:$0xff]
        %v564 = vld [vmem:[%s4 + $0x68] sm:$0xff]
        %v565 = vld [vmem:[%s4 + $0x70] sm:$0xff]
        %v566 = vld [vmem:[%s4 + $0x78] sm:$0xff]
        %v567 = vld [vmem:[%s5] sm:$0x3]
        %v569 = vlaneseq
        %v570 = vshrl.u32 %v569, 7
        %v571 = vsub.s32 0, %v570
        %v572 = vrot.slane %v567, %v571
        %v573 = vlaneseq
        %v574 = vshrl.u32 %v573, 7
        %v575 = vsub.s32 1, %v574
        %v576 = vrot.slane %v567, %v575
        %v595 = vunpack.c.l.b16 %v551
        %v596 = vunpack.c.h.b16 %v551
        %v597 = vunpack.c.l.b16 %v552
        %v598 = vunpack.c.h.b16 %v552
        %v599 = vunpack.c.l.b16 %v553
        %v600 = vunpack.c.h.b16 %v553
        %v601 = vunpack.c.l.b16 %v554
        %v602 = vunpack.c.h.b16 %v554
        %v603 = vunpack.c.l.b16 %v555
        %v604 = vunpack.c.h.b16 %v555
        %v605 = vunpack.c.l.b16 %v556
        %v606 = vunpack.c.h.b16 %v556
        %v607 = vunpack.c.l.b16 %v557
        %v608 = vunpack.c.h.b16 %v557
        %v609 = vunpack.c.l.b16 %v558
        %v610 = vunpack.c.h.b16 %v558
        %v611 = vunpack.c.l.b16 %v559
        %v612 = vunpack.c.h.b16 %v559
        %v613 = vunpack.c.l.b16 %v560
        %v614 = vunpack.c.h.b16 %v560
        %v615 = vunpack.c.l.b16 %v561
        %v616 = vunpack.c.h.b16 %v561
        %v617 = vunpack.c.l.b16 %v562
        %v618 = vunpack.c.h.b16 %v562
        %v619 = vunpack.c.l.b16 %v563
        %v620 = vunpack.c.h.b16 %v563
        %v621 = vunpack.c.l.b16 %v564
        %v622 = vunpack.c.h.b16 %v564
        %v623 = vunpack.c.l.b16 %v565
        %v624 = vunpack.c.h.b16 %v565
        %v625 = vunpack.c.l.b16 %v566
        %v626 = vunpack.c.h.b16 %v566
        %v627 = vpack.c.b16 %v597, %v595
        %v628 = vpack.c.b16 %v598, %v596
        %v629 = vpack.c.b16 %v601, %v599
        %v630 = vpack.c.b16 %v602, %v600
        %v631 = vpack.c.b16 %v605, %v603
        %v632 = vpack.c.b16 %v606, %v604
        %v633 = vpack.c.b16 %v609, %v607
        %v634 = vpack.c.b16 %v610, %v608
        %v635 = vpack.c.b16 %v613, %v611
        %v636 = vpack.c.b16 %v614, %v612
        %v637 = vpack.c.b16 %v617, %v615
        %v638 = vpack.c.b16 %v618, %v616
        %v639 = vpack.c.b16 %v621, %v619
        %v640 = vpack.c.b16 %v622, %v620
        %v641 = vpack.c.b16 %v625, %v623
        %v642 = vpack.c.b16 %v626, %v624
        %659 = vmatprep.subr.bf16.mxu0 %v642
        %660 = vmatpush1.bf16.msra.mxu0 %v641
        %661 = vmatprep.subr.bf16.mxu0 %v640
        %662 = vmatpush1.bf16.msra.mxu0 %v639
        %663 = vmatprep.subr.bf16.mxu0 %v638
        %664 = vmatpush1.bf16.msra.mxu0 %v637
        %665 = vmatprep.subr.bf16.mxu0 %v636
        %666 = vmatpush1.bf16.msra.mxu0 %v635
        %667 = vmatprep.subr.bf16.mxu0 %v634
        %668 = vmatpush1.bf16.msra.mxu0 %v633
        %669 = vmatprep.subr.bf16.mxu0 %v632
        %670 = vmatpush1.bf16.msra.mxu0 %v631
        %671 = vmatprep.subr.bf16.mxu0 %v630
        %672 = vmatpush1.bf16.msra.mxu0 %v629
        %673 = vmatprep.subr.bf16.mxu0 %v628
        %674 = vmatpush1.bf16.msra.mxu0 %v627
        %675 = vmatprep.subr.bf16.mxu0 0
        %676 = vmatpush2.bf16.msra.mxu0 0
        %677 = vmatprep.subr.bf16.mxu0 0
        %678 = vmatpush2.bf16.msra.mxu0 0
        %679 = vmatprep.subr.bf16.mxu0 0
        %680 = vmatpush2.bf16.msra.mxu0 0
        %681 = vmatprep.subr.bf16.mxu0 0
        %682 = vmatpush2.bf16.msra.mxu0 0
        %683 = vmatprep.subr.bf16.mxu0 0
        %684 = vmatpush2.bf16.msra.mxu0 0
        %685 = vmatprep.subr.bf16.mxu0 0
        %686 = vmatpush2.bf16.msra.mxu0 0
        %687 = vmatprep.subr.bf16.mxu0 0
        %688 = vmatpush2.bf16.msra.mxu0 0
        %689 = vmatprep.subr.bf16.mxu0 0
        %690 = vmatpush2.bf16.msra.mxu0 0
        %691 = vmatprep.mubr.bf16.mxu0 0
        %692 = vmatmul.mubr.bf16.gmra.mxu0 %v550
        %v693 = vpop.f32.mrf.mxu0
        %v694 = vadd.f32 %v572, %v693
        %v695 = vpop.f32.mrf.mxu0
        %v696 = vadd.f32 %v576, %v695
        %v697 = vpop.f32.mrf.mxu0
        %v698 = vadd.f32 %v572, %v697
        %v699 = vpop.f32.mrf.mxu0
        %v700 = vadd.f32 %v576, %v699
        %701 = vdwg.mxu0
        %v702 = vmul.f32 %v694, 0.5
        %v703 = vmul.f32 %v696, 0.5
        %v704 = vmul.f32 %v698, 0.5
        %v705 = vmul.f32 %v700, 0.5
        %v706 = vmul.f32 %v694, 0.044715
        %v707 = vmul.f32 %v696, 0.044715
        %v708 = vmul.f32 %v698, 0.044715
        %v709 = vmul.f32 %v700, 0.044715
        %v710 = vmul.f32 %v706, %v694
        %v711 = vmul.f32 %v707, %v696
        %v712 = vmul.f32 %v708, %v698
        %v713 = vmul.f32 %v709, %v700
        %v714 = vmul.f32 %v710, %v694
        %v715 = vmul.f32 %v711, %v696
        %v716 = vmul.f32 %v712, %v698
        %v717 = vmul.f32 %v713, %v700
        %v718 = vadd.f32 %v694, %v714
        %v719 = vadd.f32 %v696, %v715
        %v720 = vadd.f32 %v698, %v716
        %v721 = vadd.f32 %v700, %v717
        %v722 = vmul.f32 %v718, 0.7978846
        %v723 = vmul.f32 %v719, 0.7978846
        %v724 = vmul.f32 %v720, 0.7978846
        %v725 = vmul.f32 %v721, 0.7978846
        %v726 = vtanh.pop %v722
        %v727 = vtanh.pop %v723
        %v728 = vtanh.pop %v724
        %v729 = vtanh.pop %v725
        %v730 = vadd.f32 %v726, 1.0
        %v731 = vadd.f32 %v727, 1.0
        %v732 = vadd.f32 %v728, 1.0
        %v733 = vadd.f32 %v729, 1.0
        %v734 = vmul.f32 %v702, %v730
        %v735 = vmul.f32 %v703, %v731
        %v736 = vmul.f32 %v704, %v732
        %v737 = vmul.f32 %v705, %v733
        %v738 = vpack.c.bf16 %v736, %v734
        %v739 = vpack.c.bf16 %v737, %v735
        %v740 = vld [vmem:[%s6] sm:$0xf]
        %v741 = vld [vmem:[%s6 + $0x4] sm:$0xf]
        %v742 = vld [vmem:[%s6 + $0x8] sm:$0xf]
        %v743 = vld [vmem:[%s6 + $0xc] sm:$0xf]
        %v744 = vld [vmem:[%s6 + $0x10] sm:$0xf]
        %v745 = vld [vmem:[%s6 + $0x14] sm:$0xf]
        %v746 = vld [vmem:[%s6 + $0x18] sm:$0xf]
        %v747 = vld [vmem:[%s6 + $0x1c] sm:$0xf]
        %v748 = vld [vmem:[%s6 + $0x20] sm:$0xf]
        %v749 = vld [vmem:[%s6 + $0x24] sm:$0xf]
        %v750 = vld [vmem:[%s6 + $0x28] sm:$0xf]
        %v751 = vld [vmem:[%s6 + $0x2c] sm:$0xf]
        %v752 = vld [vmem:[%s6 + $0x30] sm:$0xf]
        %v753 = vld [vmem:[%s6 + $0x34] sm:$0xf]
        %v754 = vld [vmem:[%s6 + $0x38] sm:$0xf]
        %v755 = vld [vmem:[%s6 + $0x3c] sm:$0xf]
        %v756 = vld [vmem:[%s6 + $0x40] sm:$0xf]
        %v757 = vld [vmem:[%s6 + $0x44] sm:$0xf]
        %v758 = vld [vmem:[%s6 + $0x48] sm:$0xf]
        %v759 = vld [vmem:[%s6 + $0x4c] sm:$0xf]
        %v760 = vld [vmem:[%s6 + $0x50] sm:$0xf]
        %v761 = vld [vmem:[%s6 + $0x54] sm:$0xf]
        %v762 = vld [vmem:[%s6 + $0x58] sm:$0xf]
        %v763 = vld [vmem:[%s6 + $0x5c] sm:$0xf]
        %v764 = vld [vmem:[%s6 + $0x60] sm:$0xf]
        %v765 = vld [vmem:[%s6 + $0x64] sm:$0xf]
        %v766 = vld [vmem:[%s6 + $0x68] sm:$0xf]
        %v767 = vld [vmem:[%s6 + $0x6c] sm:$0xf]
        %v768 = vld [vmem:[%s6 + $0x70] sm:$0xf]
        %v769 = vld [vmem:[%s6 + $0x74] sm:$0xf]
        %v770 = vld [vmem:[%s6 + $0x78] sm:$0xf]
        %v771 = vld [vmem:[%s6 + $0x7c] sm:$0xf]
        %v772 = vld [vmem:[%s7] sm:$0x1]
        %v774 = vlaneseq
        %v775 = vshrl.u32 %v774, 7
        %v776 = vsub.s32 0, %v775
        %v777 = vrot.slane %v772, %v776
        %v811 = vunpack.c.l.b16 %v740
        %v812 = vunpack.c.l.b16 %v741
        %v813 = vunpack.c.l.b16 %v742
        %v814 = vunpack.c.l.b16 %v743
        %v815 = vunpack.c.l.b16 %v744
        %v816 = vunpack.c.l.b16 %v745
        %v817 = vunpack.c.l.b16 %v746
        %v818 = vunpack.c.l.b16 %v747
        %v819 = vunpack.c.l.b16 %v748
        %v820 = vunpack.c.l.b16 %v749
        %v821 = vunpack.c.l.b16 %v750
        %v822 = vunpack.c.l.b16 %v751
        %v823 = vunpack.c.l.b16 %v752
        %v824 = vunpack.c.l.b16 %v753
        %v825 = vunpack.c.l.b16 %v754
        %v826 = vunpack.c.l.b16 %v755
        %v827 = vunpack.c.l.b16 %v756
        %v828 = vunpack.c.l.b16 %v757
        %v829 = vunpack.c.l.b16 %v758
        %v830 = vunpack.c.l.b16 %v759
        %v831 = vunpack.c.l.b16 %v760
        %v832 = vunpack.c.l.b16 %v761
        %v833 = vunpack.c.l.b16 %v762
        %v834 = vunpack.c.l.b16 %v763
        %v835 = vunpack.c.l.b16 %v764
        %v836 = vunpack.c.l.b16 %v765
        %v837 = vunpack.c.l.b16 %v766
        %v838 = vunpack.c.l.b16 %v767
        %v839 = vunpack.c.l.b16 %v768
        %v840 = vunpack.c.l.b16 %v769
        %v841 = vunpack.c.l.b16 %v770
        %v842 = vunpack.c.l.b16 %v771
        %v843 = vpack.c.b16 %v812, %v811
        %v844 = vpack.c.b16 %v814, %v813
        %v845 = vpack.c.b16 %v816, %v815
        %v846 = vpack.c.b16 %v818, %v817
        %v847 = vpack.c.b16 %v820, %v819
        %v848 = vpack.c.b16 %v822, %v821
        %v849 = vpack.c.b16 %v824, %v823
        %v850 = vpack.c.b16 %v826, %v825
        %v851 = vpack.c.b16 %v828, %v827
        %v852 = vpack.c.b16 %v830, %v829
        %v853 = vpack.c.b16 %v832, %v831
        %v854 = vpack.c.b16 %v834, %v833
        %v855 = vpack.c.b16 %v836, %v835
        %v856 = vpack.c.b16 %v838, %v837
        %v857 = vpack.c.b16 %v840, %v839
        %v858 = vpack.c.b16 %v842, %v841
        %875 = vmatprep.subr.bf16.mxu0 0
        %876 = vmatpush1.bf16.msra.mxu0 %v850
        %877 = vmatprep.subr.bf16.mxu0 0
        %878 = vmatpush1.bf16.msra.mxu0 %v849
        %879 = vmatprep.subr.bf16.mxu0 0
        %880 = vmatpush1.bf16.msra.mxu0 %v848
        %881 = vmatprep.subr.bf16.mxu0 0
        %882 = vmatpush1.bf16.msra.mxu0 %v847
        %883 = vmatprep.subr.bf16.mxu0 0
        %884 = vmatpush1.bf16.msra.mxu0 %v846
        %885 = vmatprep.subr.bf16.mxu0 0
        %886 = vmatpush1.bf16.msra.mxu0 %v845
        %887 = vmatprep.subr.bf16.mxu0 0
        %888 = vmatpush1.bf16.msra.mxu0 %v844
        %889 = vmatprep.subr.bf16.mxu0 0
        %890 = vmatpush1.bf16.msra.mxu0 %v843
        %891 = vmatprep.subr.bf16.mxu0 0
        %892 = vmatpush2.bf16.msra.mxu0 %v858
        %893 = vmatprep.subr.bf16.mxu0 0
        %894 = vmatpush2.bf16.msra.mxu0 %v857
        %895 = vmatprep.subr.bf16.mxu0 0
        %896 = vmatpush2.bf16.msra.mxu0 %v856
        %897 = vmatprep.subr.bf16.mxu0 0
        %898 = vmatpush2.bf16.msra.mxu0 %v855
        %899 = vmatprep.subr.bf16.mxu0 0
        %900 = vmatpush2.bf16.msra.mxu0 %v854
        %901 = vmatprep.subr.bf16.mxu0 0
        %902 = vmatpush2.bf16.msra.mxu0 %v853
        %903 = vmatprep.subr.bf16.mxu0 0
        %904 = vmatpush2.bf16.msra.mxu0 %v852
        %905 = vmatprep.subr.bf16.mxu0 0
        %906 = vmatpush2.bf16.msra.mxu0 %v851
        %907 = vmatprep.mubr.bf16.mxu0 %v739
        %908 = vmatmul.mubr.bf16.gmra.mxu0 %v738
        %v909 = vpop.f32.mrf.mxu0
        %v910 = vadd.f32 %v777, %v909
        %v911 = vpop.f32.mrf.mxu0
        %v912 = vpop.f32.mrf.mxu0
        %v913 = vadd.f32 %v777, %v912
        %v914 = vpop.f32.mrf.mxu0
        %915 = vdwg.mxu0
        %v916 = vmul.f32 %v910, 0.5
        %v917 = vmul.f32 %v913, 0.5
        %v918 = vadd.f32 %v507, %v916
        %v919 = vadd.f32 %v508, %v917
        %v920 = vld [vmem:[#allocation2] sm:$0x1]
        %v921 = vld [vmem:[#allocation4] sm:$0x1]
        %922 = vadd.xlane.f32.xlu0 %v918
        %v923 = vpop.xlane.xlu0 %922
        %924 = vadd.xlane.f32.xlu0 %v919
        %v925 = vpop.xlane.xlu0 %924
        %v926 = vmul.f32 %v923, %v515
        %v927 = vmul.f32 %v925, %v515
        %v928 = vsub.f32 %v918, %v926
        %v929 = vsub.f32 %v919, %v927
        %v930 = vmul.f32 %v928, %v928
        %v931 = vmul.f32 %v929, %v929
        %932 = vadd.xlane.f32.xlu0 %v930
        %v933 = vpop.xlane.xlu0 %932
        %934 = vadd.xlane.f32.xlu0 %v931
        %v935 = vpop.xlane.xlu0 %934
        %v936 = vmul.f32 %v933, %v515
        %v937 = vmul.f32 %v935, %v515
        %v938 = vadd.f32 %v936, 1e-05
        %v939 = vadd.f32 %v937, 1e-05
        %v940 = vrsqrt.pop %v938
        %v941 = vrsqrt.pop %v939
        %v942 = vmul.f32 %v928, %v940
        %v943 = vmul.f32 %v929, %v941
        %v945 = vlaneseq
        %v946 = vshrl.u32 %v945, 7
        %v947 = vsub.s32 0, %v946
        %v948 = vrot.slane %v920, %v947
        %v950 = vmul.f32 %v942, %v948
        %v951 = vmul.f32 %v943, %v948
        %v953 = vlaneseq
        %v954 = vshrl.u32 %v953, 7
        %v955 = vsub.s32 0, %v954
        %v956 = vrot.slane %v921, %v955
        %v958 = vadd.f32 %v950, %v956
        %v959 = vadd.f32 %v951, %v956
        %v960 = vld [vmem:[%s1] sm:$0xff]
        %v961 = vld [vmem:[%s1 + $0x8] sm:$0xff]
        %v962 = vadd.f32 %v958, %v960
        %v963 = vadd.f32 %v959, %v961
        %v964 = vpack.c.bf16 %v963, %v962
        %v965 = vld [vmem:[%s10] sm:$0xff]
        %v966 = vld [vmem:[%s10 + $0x8] sm:$0xf]
        %v967 = vld [vmem:[%s10 + $0xc] sm:$0xff]
        %v968 = vld [vmem:[%s10 + $0x14] sm:$0xf]
        %v969 = vld [vmem:[%s10 + $0x18] sm:$0xff]
        %v970 = vld [vmem:[%s10 + $0x20] sm:$0xf]
        %v971 = vld [vmem:[%s10 + $0x24] sm:$0xff]
        %v972 = vld [vmem:[%s10 + $0x2c] sm:$0xf]
        %v973 = vld [vmem:[%s10 + $0x30] sm:$0xff]
        %v974 = vld [vmem:[%s10 + $0x38] sm:$0xf]
        %v975 = vld [vmem:[%s10 + $0x3c] sm:$0xff]
        %v976 = vld [vmem:[%s10 + $0x44] sm:$0xf]
        %v977 = vld [vmem:[%s10 + $0x48] sm:$0xff]
        %v978 = vld [vmem:[%s10 + $0x50] sm:$0xf]
        %v979 = vld [vmem:[%s10 + $0x54] sm:$0xff]
        %v980 = vld [vmem:[%s10 + $0x5c] sm:$0xf]
        %v981 = vld [vmem:[%s10 + $0x60] sm:$0xff]
        %v982 = vld [vmem:[%s10 + $0x68] sm:$0xf]
        %v983 = vld [vmem:[%s10 + $0x6c] sm:$0xff]
        %v984 = vld [vmem:[%s10 + $0x74] sm:$0xf]
        %v985 = vld [vmem:[%s10 + $0x78] sm:$0xff]
        %v986 = vld [vmem:[%s10 + $0x80] sm:$0xf]
        %v987 = vld [vmem:[%s10 + $0x84] sm:$0xff]
        %v988 = vld [vmem:[%s10 + $0x8c] sm:$0xf]
        %v989 = vld [vmem:[%s10 + $0x90] sm:$0xff]
        %v990 = vld [vmem:[%s10 + $0x98] sm:$0xf]
        %v991 = vld [vmem:[%s10 + $0x9c] sm:$0xff]
        %v992 = vld [vmem:[%s10 + $0xa4] sm:$0xf]
        %v993 = vld [vmem:[%s10 + $0xa8] sm:$0xff]
        %v994 = vld [vmem:[%s10 + $0xb0] sm:$0xf]
        %v995 = vld [vmem:[%s10 + $0xb4] sm:$0xff]
        %v996 = vld [vmem:[%s10 + $0xbc] sm:$0xf]
        %v997 = vld [vmem:[%s11] sm:$0x7]
        %v999 = vlaneseq
        %v1000 = vshrl.u32 %v999, 7
        %v1001 = vsub.s32 0, %v1000
        %v1002 = vrot.slane %v997, %v1001
        %v1003 = vlaneseq
        %v1004 = vshrl.u32 %v1003, 7
        %v1005 = vsub.s32 1, %v1004
        %v1006 = vrot.slane %v997, %v1005
        %v1007 = vlaneseq
        %v1008 = vshrl.u32 %v1007, 7
        %v1009 = vsub.s32 2, %v1008
        %v1010 = vrot.slane %v997, %v1009
        %v1046 = vunpack.c.l.b16 %v965
        %v1047 = vunpack.c.h.b16 %v965
        %v1048 = vunpack.c.l.b16 %v966
        %v1049 = vunpack.c.l.b16 %v967
        %v1050 = vunpack.c.h.b16 %v967
        %v1051 = vunpack.c.l.b16 %v968
        %v1052 = vunpack.c.l.b16 %v969
        %v1053 = vunpack.c.h.b16 %v969
        %v1054 = vunpack.c.l.b16 %v970
        %v1055 = vunpack.c.l.b16 %v971
        %v1056 = vunpack.c.h.b16 %v971
        %v1057 = vunpack.c.l.b16 %v972
        %v1058 = vunpack.c.l.b16 %v973
        %v1059 = vunpack.c.h.b16 %v973
        %v1060 = vunpack.c.l.b16 %v974
        %v1061 = vunpack.c.l.b16 %v975
        %v1062 = vunpack.c.h.b16 %v975
        %v1063 = vunpack.c.l.b16 %v976
        %v1064 = vunpack.c.l.b16 %v977
        %v1065 = vunpack.c.h.b16 %v977
        %v1066 = vunpack.c.l.b16 %v978
        %v1067 = vunpack.c.l.b16 %v979
        %v1068 = vunpack.c.h.b16 %v979
        %v1069 = vunpack.c.l.b16 %v980
        %v1070 = vunpack.c.l.b16 %v981
        %v1071 = vunpack.c.h.b16 %v981
        %v1072 = vunpack.c.l.b16 %v982
        %v1073 = vunpack.c.l.b16 %v983
        %v1074 = vunpack.c.h.b16 %v983
        %v1075 = vunpack.c.l.b16 %v984
        %v1076 = vunpack.c.l.b16 %v985
        %v1077 = vunpack.c.h.b16 %v985
        %v1078 = vunpack.c.l.b16 %v986
        %v1079 = vunpack.c.l.b16 %v987
        %v1080 = vunpack.c.h.b16 %v987
        %v1081 = vunpack.c.l.b16 %v988
        %v1082 = vunpack.c.l.b16 %v989
        %v1083 = vunpack.c.h.b16 %v989
        %v1084 = vunpack.c.l.b16 %v990
        %v1085 = vunpack.c.l.b16 %v991
        %v1086 = vunpack.c.h.b16 %v991
        %v1087 = vunpack.c.l.b16 %v992
        %v1088 = vunpack.c.l.b16 %v993
        %v1089 = vunpack.c.h.b16 %v993
        %v1090 = vunpack.c.l.b16 %v994
        %v1091 = vunpack.c.l.b16 %v995
        %v1092 = vunpack.c.h.b16 %v995
        %v1093 = vunpack.c.l.b16 %v996
        %v1094 = vpack.c.b16 %v1049, %v1046
        %v1095 = vpack.c.b16 %v1050, %v1047
        %v1096 = vpack.c.b16 %v1051, %v1048
        %v1097 = vpack.c.b16 %v1055, %v1052
        %v1098 = vpack.c.b16 %v1056, %v1053
        %v1099 = vpack.c.b16 %v1057, %v1054
        %v1100 = vpack.c.b16 %v1061, %v1058
        %v1101 = vpack.c.b16 %v1062, %v1059
        %v1102 = vpack.c.b16 %v1063, %v1060
        %v1103 = vpack.c.b16 %v1067, %v1064
        %v1104 = vpack.c.b16 %v1068, %v1065
        %v1105 = vpack.c.b16 %v1069, %v1066
        %v1106 = vpack.c.b16 %v1073, %v1070
        %v1107 = vpack.c.b16 %v1074, %v1071
        %v1108 = vpack.c.b16 %v1075, %v1072
        %v1109 = vpack.c.b16 %v1079, %v1076
        %v1110 = vpack.c.b16 %v1080, %v1077
        %v1111 = vpack.c.b16 %v1081, %v1078
        %v1112 = vpack.c.b16 %v1085, %v1082
        %v1113 = vpack.c.b16 %v1086, %v1083
        %v1114 = vpack.c.b16 %v1087, %v1084
        %v1115 = vpack.c.b16 %v1091, %v1088
        %v1116 = vpack.c.b16 %v1092, %v1089
        %v1117 = vpack.c.b16 %v1093, %v1090
        %1142 = vmatprep.subr.bf16.mxu0 %v1116
        %1143 = vmatpush1.bf16.msra.mxu0 %v1115
        %1144 = vmatprep.subr.bf16.mxu0 %v1113
        %1145 = vmatpush1.bf16.msra.mxu0 %v1112
        %1146 = vmatprep.subr.bf16.mxu0 %v1110
        %1147 = vmatpush1.bf16.msra.mxu0 %v1109
        %1148 = vmatprep.subr.bf16.mxu0 %v1107
        %1149 = vmatpush1.bf16.msra.mxu0 %v1106
        %1150 = vmatprep.subr.bf16.mxu0 %v1104
        %1151 = vmatpush1.bf16.msra.mxu0 %v1103
        %1152 = vmatprep.subr.bf16.mxu0 %v1101
        %1153 = vmatpush1.bf16.msra.mxu0 %v1100
        %1154 = vmatprep.subr.bf16.mxu0 %v1098
        %1155 = vmatpush1.bf16.msra.mxu0 %v1097
        %1156 = vmatprep.subr.bf16.mxu0 %v1095
        %1157 = vmatpush1.bf16.msra.mxu0 %v1094
        %1158 = vmatprep.subr.bf16.mxu0 0
        %1159 = vmatpush2.bf16.msra.mxu0 0
        %1160 = vmatprep.subr.bf16.mxu0 0
        %1161 = vmatpush2.bf16.msra.mxu0 0
        %1162 = vmatprep.subr.bf16.mxu0 0
        %1163 = vmatpush2.bf16.msra.mxu0 0
        %1164 = vmatprep.subr.bf16.mxu0 0
        %1165 = vmatpush2.bf16.msra.mxu0 0
        %1166 = vmatprep.subr.bf16.mxu0 0
        %1167 = vmatpush2.bf16.msra.mxu0 0
        %1168 = vmatprep.subr.bf16.mxu0 0
        %1169 = vmatpush2.bf16.msra.mxu0 0
        %1170 = vmatprep.subr.bf16.mxu0 0
        %1171 = vmatpush2.bf16.msra.mxu0 0
        %1172 = vmatprep.subr.bf16.mxu0 0
        %1173 = vmatpush2.bf16.msra.mxu0 0
        %1174 = vmatprep.mubr.bf16.mxu0 0
        %1175 = vmatmul.mubr.bf16.gmra.mxu0 %v964
        %v1176 = vpop.f32.mrf.mxu0
        %v1177 = vadd.f32 %v1002, %v1176
        %v1178 = vpop.f32.mrf.mxu0
        %v1179 = vadd.f32 %v1006, %v1178
        %v1180 = vpop.f32.mrf.mxu0
        %v1181 = vadd.f32 %v1002, %v1180
        %v1182 = vpop.f32.mrf.mxu0
        %v1183 = vadd.f32 %v1006, %v1182
        %1184 = vdwg.mxu0
        %1185 = vmatprep.subr.bf16.mxu0 0
        %1186 = vmatpush1.bf16.msra.mxu0 %v1117
        %1187 = vmatprep.subr.bf16.mxu0 0
        %1188 = vmatpush1.bf16.msra.mxu0 %v1114
        %1189 = vmatprep.subr.bf16.mxu0 0
        %1190 = vmatpush1.bf16.msra.mxu0 %v1111
        %1191 = vmatprep.subr.bf16.mxu0 0
        %1192 = vmatpush1.bf16.msra.mxu0 %v1108
        %1193 = vmatprep.subr.bf16.mxu0 0
        %1194 = vmatpush1.bf16.msra.mxu0 %v1105
        %1195 = vmatprep.subr.bf16.mxu0 0
        %1196 = vmatpush1.bf16.msra.mxu0 %v1102
        %1197 = vmatprep.subr.bf16.mxu0 0
        %1198 = vmatpush1.bf16.msra.mxu0 %v1099
        %1199 = vmatprep.subr.bf16.mxu0 0
        %1200 = vmatpush1.bf16.msra.mxu0 %v1096
        %1201 = vmatprep.subr.bf16.mxu0 0
        %1202 = vmatpush2.bf16.msra.mxu0 0
        %1203 = vmatprep.subr.bf16.mxu0 0
        %1204 = vmatpush2.bf16.msra.mxu0 0
        %1205 = vmatprep.subr.bf16.mxu0 0
        %1206 = vmatpush2.bf16.msra.mxu0 0
        %1207 = vmatprep.subr.bf16.mxu0 0
        %1208 = vmatpush2.bf16.msra.mxu0 0
        %1209 = vmatprep.subr.bf16.mxu0 0
        %1210 = vmatpush2.bf16.msra.mxu0 0
        %1211 = vmatprep.subr.bf16.mxu0 0
        %1212 = vmatpush2.bf16.msra.mxu0 0
        %1213 = vmatprep.subr.bf16.mxu0 0
        %1214 = vmatpush2.bf16.msra.mxu0 0
        %1215 = vmatprep.subr.bf16.mxu0 0
        %1216 = vmatpush2.bf16.msra.mxu0 0
        %1217 = vmatprep.mubr.bf16.mxu0 0
        %1218 = vmatmul.mubr.bf16.gmra.mxu0 %v964
        %v1219 = vpop.f32.mrf.mxu0
        %v1220 = vadd.f32 %v1010, %v1219
        %v1221 = vpop.f32.mrf.mxu0
        %v1222 = vpop.f32.mrf.mxu0
        %v1223 = vadd.f32 %v1010, %v1222
        %v1224 = vpop.f32.mrf.mxu0
        %1225 = vdwg.mxu0
        %v1226 = vmul.f32 %v1177, 0.17677669
        %v1227 = vmul.f32 %v1181, 0.17677669
        %v1228 = vpack.c.bf16 %v1227, %v1226
        %v1229 = vpack.c.bf16 %v1183, %v1179
        %v1230 = vpack.c.bf16 %v1223, %v1220
        %vm1231 = vcmask 261120
        %v1233 = vsel %vm1231, %v1228, 0
        %v1236 = vsel %vm1231, %v1229, 0
        %1238 = vmatprep.subr.bf16.mxu0 0
        %1239 = vmatpush1.bf16.xpose.msra.mxu0 0
        %1240 = vmatprep.subr.bf16.mxu0 0
        %1241 = vmatpush1.bf16.xpose.msra.mxu0 0
        %1242 = vmatprep.subr.bf16.mxu0 0
        %1243 = vmatpush1.bf16.xpose.msra.mxu0 0
        %1244 = vmatprep.subr.bf16.mxu0 0
        %1245 = vmatpush1.bf16.xpose.msra.mxu0 0
        %1246 = vmatprep.subr.bf16.mxu0 0
        %1247 = vmatpush1.bf16.xpose.msra.mxu0 0
        %1248 = vmatprep.subr.bf16.mxu0 0
        %1249 = vmatpush1.bf16.xpose.msra.mxu0 0
        %1250 = vmatprep.subr.bf16.mxu0 0
        %1251 = vmatpush1.bf16.xpose.msra.mxu0 0
        %1252 = vmatprep.subr.bf16.mxu0 0
        %1253 = vmatpush1.bf16.xpose.msra.mxu0 %v1236
        %1254 = vmatprep.subr.bf16.mxu0 0
        %1255 = vmatpush2.bf16.xpose.msra.mxu0 0
        %1256 = vmatprep.subr.bf16.mxu0 0
        %1257 = vmatpush2.bf16.xpose.msra.mxu0 0
        %1258 = vmatprep.subr.bf16.mxu0 0
        %1259 = vmatpush2.bf16.xpose.msra.mxu0 0
        %1260 = vmatprep.subr.bf16.mxu0 0
        %1261 = vmatpush2.bf16.xpose.msra.mxu0 0
        %1262 = vmatprep.subr.bf16.mxu0 0
        %1263 = vmatpush2.bf16.xpose.msra.mxu0 0
        %1264 = vmatprep.subr.bf16.mxu0 0
        %1265 = vmatpush2.bf16.xpose.msra.mxu0 0
        %1266 = vmatprep.subr.bf16.mxu0 0
        %1267 = vmatpush2.bf16.xpose.msra.mxu0 0
        %1268 = vmatprep.subr.bf16.mxu0 0
        %1269 = vmatpush2.bf16.xpose.msra.mxu0 0
        %1270 = vmatprep.mubr.bf16.mxu0 0
        %1271 = vmatmul.mubr.bf16.gmra.mxu0 %v1233
        %v1272 = vpop.f32.mrf.mxu0
        %v1273 = vadd.f32 0.0, %v1272
        %v1274 = vpop.f32.mrf.mxu0
        %v1275 = vpop.f32.mrf.mxu0
        %v1276 = vadd.f32 0.0, %v1275
        %v1277 = vpop.f32.mrf.mxu0
        %1278 = vdwg.mxu0
        %vm1279 = vcmask 130048
        %v1280 = vsel %vm1279, %v1273, -inf
        %1281 = vmax.xlane.f32.xlu0 %v1280
        %v1282 = vpop.xlane.xlu0 %1281
        %v1283 = vsel %vm1279, %v1276, -inf
        %1284 = vmax.xlane.f32.xlu0 %v1283
        %v1285 = vpop.xlane.xlu0 %1284
        %v1286 = vsub.f32 %v1273, %v1282
        %v1287 = vsub.f32 %v1276, %v1285
        %v1288 = vmul.f32 %v1286, 1.442695
        %v1289 = vpow.pop %v1288
        %v1290 = vmul.f32 %v1287, 1.442695
        %v1291 = vpow.pop %v1290
        %v1292 = vsel %vm1279, %v1289, 0.0
        %1293 = vadd.xlane.f32.xlu0 %v1292
        %v1294 = vpop.xlane.xlu0 %1293
        %v1295 = vsel %vm1279, %v1291, 0.0
        %1296 = vadd.xlane.f32.xlu0 %v1295
        %v1297 = vpop.xlane.xlu0 %1296
        %v1298 = vrcp.pop %v1294
        %v1299 = vrcp.pop %v1297
        %v1300 = vmul.f32 %v1289, %v1298
        %v1301 = vmul.f32 %v1291, %v1299
        %v1302 = vpack.c.bf16 %v1301, %v1300
        %v1304 = vsel %vm1279, %v1302, 0
        %1306 = vmatprep.subr.bf16.mxu0 0
        %1307 = vmatpush1.bf16.msra.mxu0 0
        %1308 = vmatprep.subr.bf16.mxu0 0
        %1309 = vmatpush1.bf16.msra.mxu0 0
        %1310 = vmatprep.subr.bf16.mxu0 0
        %1311 = vmatpush1.bf16.msra.mxu0 0
        %1312 = vmatprep.subr.bf16.mxu0 0
        %1313 = vmatpush1.bf16.msra.mxu0 0
        %1314 = vmatprep.subr.bf16.mxu0 0
        %1315 = vmatpush1.bf16.msra.mxu0 0
        %1316 = vmatprep.subr.bf16.mxu0 0
        %1317 = vmatpush1.bf16.msra.mxu0 0
        %1318 = vmatprep.subr.bf16.mxu0 0
        %1319 = vmatpush1.bf16.msra.mxu0 0
        %1320 = vmatprep.subr.bf16.mxu0 0
        %1321 = vmatpush1.bf16.msra.mxu0 %v1230
        %1322 = vmatprep.subr.bf16.mxu0 0
        %1323 = vmatpush2.bf16.msra.mxu0 0
        %1324 = vmatprep.subr.bf16.mxu0 0
        %1325 = vmatpush2.bf16.msra.mxu0 0
        %1326 = vmatprep.subr.bf16.mxu0 0
        %1327 = vmatpush2.bf16.msra.mxu0 0
        %1328 = vmatprep.subr.bf16.mxu0 0
        %1329 = vmatpush2.bf16.msra.mxu0 0
        %1330 = vmatprep.subr.bf16.mxu0 0
        %1331 = vmatpush2.bf16.msra.mxu0 0
        %1332 = vmatprep.subr.bf16.mxu0 0
        %1333 = vmatpush2.bf16.msra.mxu0 0
        %1334 = vmatprep.subr.bf16.mxu0 0
        %1335 = vmatpush2.bf16.msra.mxu0 0
        %1336 = vmatprep.subr.bf16.mxu0 0
        %1337 = vmatpush2.bf16.msra.mxu0 0
        %1338 = vmatprep.mubr.bf16.mxu0 0
        %1339 = vmatmul.mubr.bf16.gmra.mxu0 %v1304
        %v1340 = vpop.f32.mrf.mxu0
        %v1341 = vadd.f32 0.0, %v1340
        %v1342 = vpop.f32.mrf.mxu0
        %v1343 = vpop.f32.mrf.mxu0
        %v1344 = vadd.f32 0.0, %v1343
        %v1345 = vpop.f32.mrf.mxu0
        %1346 = vdwg.mxu0
        %1348 = vrot.lane.b32.xlu0 %v1228, 96
        %v1349 = vpop.permute.xlu0 %1348
        %1351 = vrot.lane.b32.xlu0 %v1229, 96
        %v1352 = vpop.permute.xlu0 %1351
        %v1354 = vsel %vm1231, %v1349, 0
        %v1357 = vsel %vm1231, %v1352, 0
        %1359 = vmatprep.subr.bf16.mxu0 0
        %1360 = vmatpush1.bf16.xpose.msra.mxu0 0
        %1361 = vmatprep.subr.bf16.mxu0 0
        %1362 = vmatpush1.bf16.xpose.msra.mxu0 0
        %1363 = vmatprep.subr.bf16.mxu0 0
        %1364 = vmatpush1.bf16.xpose.msra.mxu0 0
        %1365 = vmatprep.subr.bf16.mxu0 0
        %1366 = vmatpush1.bf16.xpose.msra.mxu0 0
        %1367 = vmatprep.subr.bf16.mxu0 0
        %1368 = vmatpush1.bf16.xpose.msra.mxu0 0
        %1369 = vmatprep.subr.bf16.mxu0 0
        %1370 = vmatpush1.bf16.xpose.msra.mxu0 0
        %1371 = vmatprep.subr.bf16.mxu0 0
        %1372 = vmatpush1.bf16.xpose.msra.mxu0 0
        %1373 = vmatprep.subr.bf16.mxu0 0
        %1374 = vmatpush1.bf16.xpose.msra.mxu0 %v1357
        %1375 = vmatprep.subr.bf16.mxu0 0
        %1376 = vmatpush2.bf16.xpose.msra.mxu0 0
        %1377 = vmatprep.subr.bf16.mxu0 0
        %1378 = vmatpush2.bf16.xpose.msra.mxu0 0
        %1379 = vmatprep.subr.bf16.mxu0 0
        %1380 = vmatpush2.bf16.xpose.msra.mxu0 0
        %1381 = vmatprep.subr.bf16.mxu0 0
        %1382 = vmatpush2.bf16.xpose.msra.mxu0 0
        %1383 = vmatprep.subr.bf16.mxu0 0
        %1384 = vmatpush2.bf16.xpose.msra.mxu0 0
        %1385 = vmatprep.subr.bf16.mxu0 0
        %1386 = vmatpush2.bf16.xpose.msra.mxu0 0
        %1387 = vmatprep.subr.bf16.mxu0 0
        %1388 = vmatpush2.bf16.xpose.msra.mxu0 0
        %1389 = vmatprep.subr.bf16.mxu0 0
        %1390 = vmatpush2.bf16.xpose.msra.mxu0 0
        %1391 = vmatprep.mubr.bf16.mxu0 0
        %1392 = vmatmul.mubr.bf16.gmra.mxu0 %v1354
        %v1393 = vpop.f32.mrf.mxu0
        %v1394 = vadd.f32 0.0, %v1393
        %v1395 = vpop.f32.mrf.mxu0
        %v1396 = vpop.f32.mrf.mxu0
        %v1397 = vadd.f32 0.0, %v1396
        %v1398 = vpop.f32.mrf.mxu0
        %1399 = vdwg.mxu0
        %v1400 = vsel %vm1279, %v1394, -inf
        %1401 = vmax.xlane.f32.xlu0 %v1400
        %v1402 = vpop.xlane.xlu0 %1401
        %v1403 = vsel %vm1279, %v1397, -inf
        %1404 = vmax.xlane.f32.xlu0 %v1403
        %v1405 = vpop.xlane.xlu0 %1404
        %v1406 = vsub.f32 %v1394, %v1402
        %v1407 = vsub.f32 %v1397, %v1405
        %v1408 = vmul.f32 %v1406, 1.442695
        %v1409 = vpow.pop %v1408
        %v1410 = vmul.f32 %v1407, 1.442695
        %v1411 = vpow.pop %v1410
        %v1412 = vsel %vm1279, %v1409, 0.0
        %1413 = vadd.xlane.f32.xlu0 %v1412
        %v1414 = vpop.xlane.xlu0 %1413
        %v1415 = vsel %vm1279, %v1411, 0.0
        %1416 = vadd.xlane.f32.xlu0 %v1415
        %v1417 = vpop.xlane.xlu0 %1416
        %v1418 = vrcp.pop %v1414
        %v1419 = vrcp.pop %v1417
        %v1420 = vmul.f32 %v1409, %v1418
        %v1421 = vmul.f32 %v1411, %v1419
        %v1422 = vpack.c.bf16 %v1421, %v1420
        %1424 = vrot.lane.b32.xlu0 %v1230, 96
        %v1425 = vpop.permute.xlu0 %1424
        %v1428 = vsel %vm1279, %v1422, 0
        %1430 = vmatprep.subr.bf16.mxu0 0
        %1431 = vmatpush1.bf16.msra.mxu0 0
        %1432 = vmatprep.subr.bf16.mxu0 0
        %1433 = vmatpush1.bf16.msra.mxu0 0
        %1434 = vmatprep.subr.bf16.mxu0 0
        %1435 = vmatpush1.bf16.msra.mxu0 0
        %1436 = vmatprep.subr.bf16.mxu0 0
        %1437 = vmatpush1.bf16.msra.mxu0 0
        %1438 = vmatprep.subr.bf16.mxu0 0
        %1439 = vmatpush1.bf16.msra.mxu0 0
        %1440 = vmatprep.subr.bf16.mxu0 0
        %1441 = vmatpush1.bf16.msra.mxu0 0
        %1442 = vmatprep.subr.bf16.mxu0 0
        %1443 = vmatpush1.bf16.msra.mxu0 0
        %1444 = vmatprep.subr.bf16.mxu0 0
        %1445 = vmatpush1.bf16.msra.mxu0 %v1425
        %1446 = vmatprep.subr.bf16.mxu0 0
        %1447 = vmatpush2.bf16.msra.mxu0 0
        %1448 = vmatprep.subr.bf16.mxu0 0
        %1449 = vmatpush2.bf16.msra.mxu0 0
        %1450 = vmatprep.subr.bf16.mxu0 0
        %1451 = vmatpush2.bf16.msra.mxu0 0
        %1452 = vmatprep.subr.bf16.mxu0 0
        %1453 = vmatpush2.bf16.msra.mxu0 0
        %1454 = vmatprep.subr.bf16.mxu0 0
        %1455 = vmatpush2.bf16.msra.mxu0 0
        %1456 = vmatprep.subr.bf16.mxu0 0
        %1457 = vmatpush2.bf16.msra.mxu0 0
        %1458 = vmatprep.subr.bf16.mxu0 0
        %1459 = vmatpush2.bf16.msra.mxu0 0
        %1460 = vmatprep.subr.bf16.mxu0 0
        %1461 = vmatpush2.bf16.msra.mxu0 0
        %1462 = vmatprep.mubr.bf16.mxu0 0
        %1463 = vmatmul.mubr.bf16.gmra.mxu0 %v1428
        %v1464 = vpop.f32.mrf.mxu0
        %v1465 = vadd.f32 0.0, %v1464
        %v1466 = vpop.f32.mrf.mxu0
        %v1467 = vpop.f32.mrf.mxu0
        %v1468 = vadd.f32 0.0, %v1467
        %v1469 = vpop.f32.mrf.mxu0
        %1470 = vdwg.mxu0
        %1471 = vrot.lane.b32.xlu0 %v1228, 64
        %v1472 = vpop.permute.xlu0 %1471
        %1473 = vrot.lane.b32.xlu0 %v1229, 64
        %v1474 = vpop.permute.xlu0 %1473
        %v1476 = vsel %vm1231, %v1472, 0
        %v1479 = vsel %vm1231, %v1474, 0
        %1481 = vmatprep.subr.bf16.mxu0 0
        %1482 = vmatpush1.bf16.xpose.msra.mxu0 0
        %1483 = vmatprep.subr.bf16.mxu0 0
        %1484 = vmatpush1.bf16.xpose.msra.mxu0 0
        %1485 = vmatprep.subr.bf16.mxu0 0
        %1486 = vmatpush1.bf16.xpose.msra.mxu0 0
        %1487 = vmatprep.subr.bf16.mxu0 0
        %1488 = vmatpush1.bf16.xpose.msra.mxu0 0
        %1489 = vmatprep.subr.bf16.mxu0 0
        %1490 = vmatpush1.bf16.xpose.msra.mxu0 0
        %1491 = vmatprep.subr.bf16.mxu0 0
        %1492 = vmatpush1.bf16.xpose.msra.mxu0 0
        %1493 = vmatprep.subr.bf16.mxu0 0
        %1494 = vmatpush1.bf16.xpose.msra.mxu0 0
        %1495 = vmatprep.subr.bf16.mxu0 0
        %1496 = vmatpush1.bf16.xpose.msra.mxu0 %v1479
        %1497 = vmatprep.subr.bf16.mxu0 0
        %1498 = vmatpush2.bf16.xpose.msra.mxu0 0
        %1499 = vmatprep.subr.bf16.mxu0 0
        %1500 = vmatpush2.bf16.xpose.msra.mxu0 0
        %1501 = vmatprep.subr.bf16.mxu0 0
        %1502 = vmatpush2.bf16.xpose.msra.mxu0 0
        %1503 = vmatprep.subr.bf16.mxu0 0
        %1504 = vmatpush2.bf16.xpose.msra.mxu0 0
        %1505 = vmatprep.subr.bf16.mxu0 0
        %1506 = vmatpush2.bf16.xpose.msra.mxu0 0
        %1507 = vmatprep.subr.bf16.mxu0 0
        %1508 = vmatpush2.bf16.xpose.msra.mxu0 0
        %1509 = vmatprep.subr.bf16.mxu0 0
        %1510 = vmatpush2.bf16.xpose.msra.mxu0 0
        %1511 = vmatprep.subr.bf16.mxu0 0
        %1512 = vmatpush2.bf16.xpose.msra.mxu0 0
        %1513 = vmatprep.mubr.bf16.mxu0 0
        %1514 = vmatmul.mubr.bf16.gmra.mxu0 %v1476
        %v1515 = vpop.f32.mrf.mxu0
        %v1516 = vadd.f32 0.0, %v1515
        %v1517 = vpop.f32.mrf.mxu0
        %v1518 = vpop.f32.mrf.mxu0
        %v1519 = vadd.f32 0.0, %v1518
        %v1520 = vpop.f32.mrf.mxu0
        %1521 = vdwg.mxu0
        %v1522 = vsel %vm1279, %v1516, -inf
        %1523 = vmax.xlane.f32.xlu0 %v1522
        %v1524 = vpop.xlane.xlu0 %1523
        %v1525 = vsel %vm1279, %v1519, -inf
        %1526 = vmax.xlane.f32.xlu0 %v1525
        %v1527 = vpop.xlane.xlu0 %1526
        %v1528 = vsub.f32 %v1516, %v1524
        %v1529 = vsub.f32 %v1519, %v1527
        %v1530 = vmul.f32 %v1528, 1.442695
        %v1531 = vpow.pop %v1530
        %v1532 = vmul.f32 %v1529, 1.442695
        %v1533 = vpow.pop %v1532
        %v1534 = vsel %vm1279, %v1531, 0.0
        %1535 = vadd.xlane.f32.xlu0 %v1534
        %v1536 = vpop.xlane.xlu0 %1535
        %v1537 = vsel %vm1279, %v1533, 0.0
        %1538 = vadd.xlane.f32.xlu0 %v1537
        %v1539 = vpop.xlane.xlu0 %1538
        %v1540 = vrcp.pop %v1536
        %v1541 = vrcp.pop %v1539
        %v1542 = vmul.f32 %v1531, %v1540
        %v1543 = vmul.f32 %v1533, %v1541
        %v1544 = vpack.c.bf16 %v1543, %v1542
        %1545 = vrot.lane.b32.xlu0 %v1230, 64
        %v1546 = vpop.permute.xlu0 %1545
        %v1549 = vsel %vm1279, %v1544, 0
        %1551 = vmatprep.subr.bf16.mxu0 0
        %1552 = vmatpush1.bf16.msra.mxu0 0
        %1553 = vmatprep.subr.bf16.mxu0 0
        %1554 = vmatpush1.bf16.msra.mxu0 0
        %1555 = vmatprep.subr.bf16.mxu0 0
        %1556 = vmatpush1.bf16.msra.mxu0 0
        %1557 = vmatprep.subr.bf16.mxu0 0
        %1558 = vmatpush1.bf16.msra.mxu0 0
        %1559 = vmatprep.subr.bf16.mxu0 0
        %1560 = vmatpush1.bf16.msra.mxu0 0
        %1561 = vmatprep.subr.bf16.mxu0 0
        %1562 = vmatpush1.bf16.msra.mxu0 0
        %1563 = vmatprep.subr.bf16.mxu0 0
        %1564 = vmatpush1.bf16.msra.mxu0 0
        %1565 = vmatprep.subr.bf16.mxu0 0
        %1566 = vmatpush1.bf16.msra.mxu0 %v1546
        %1567 = vmatprep.subr.bf16.mxu0 0
        %1568 = vmatpush2.bf16.msra.mxu0 0
        %1569 = vmatprep.subr.bf16.mxu0 0
        %1570 = vmatpush2.bf16.msra.mxu0 0
        %1571 = vmatprep.subr.bf16.mxu0 0
        %1572 = vmatpush2.bf16.msra.mxu0 0
        %1573 = vmatprep.subr.bf16.mxu0 0
        %1574 = vmatpush2.bf16.msra.mxu0 0
        %1575 = vmatprep.subr.bf16.mxu0 0
        %1576 = vmatpush2.bf16.msra.mxu0 0
        %1577 = vmatprep.subr.bf16.mxu0 0
        %1578 = vmatpush2.bf16.msra.mxu0 0
        %1579 = vmatprep.subr.bf16.mxu0 0
        %1580 = vmatpush2.bf16.msra.mxu0 0
        %1581 = vmatprep.subr.bf16.mxu0 0
        %1582 = vmatpush2.bf16.msra.mxu0 0
        %1583 = vmatprep.mubr.bf16.mxu0 0
        %1584 = vmatmul.mubr.bf16.gmra.mxu0 %v1549
        %v1585 = vpop.f32.mrf.mxu0
        %v1586 = vadd.f32 0.0, %v1585
        %v1587 = vpop.f32.mrf.mxu0
        %v1588 = vpop.f32.mrf.mxu0
        %v1589 = vadd.f32 0.0, %v1588
        %v1590 = vpop.f32.mrf.mxu0
        %1591 = vdwg.mxu0
        %1592 = vrot.lane.b32.xlu0 %v1228, 32
        %v1593 = vpop.permute.xlu0 %1592
        %1594 = vrot.lane.b32.xlu0 %v1229, 32
        %v1595 = vpop.permute.xlu0 %1594
        %v1597 = vsel %vm1231, %v1593, 0
        %v1600 = vsel %vm1231, %v1595, 0
        %1602 = vmatprep.subr.bf16.mxu0 0
        %1603 = vmatpush1.bf16.xpose.msra.mxu0 0
        %1604 = vmatprep.subr.bf16.mxu0 0
        %1605 = vmatpush1.bf16.xpose.msra.mxu0 0
        %1606 = vmatprep.subr.bf16.mxu0 0
        %1607 = vmatpush1.bf16.xpose.msra.mxu0 0
        %1608 = vmatprep.subr.bf16.mxu0 0
        %1609 = vmatpush1.bf16.xpose.msra.mxu0 0
        %1610 = vmatprep.subr.bf16.mxu0 0
        %1611 = vmatpush1.bf16.xpose.msra.mxu0 0
        %1612 = vmatprep.subr.bf16.mxu0 0
        %1613 = vmatpush1.bf16.xpose.msra.mxu0 0
        %1614 = vmatprep.subr.bf16.mxu0 0
        %1615 = vmatpush1.bf16.xpose.msra.mxu0 0
        %1616 = vmatprep.subr.bf16.mxu0 0
        %1617 = vmatpush1.bf16.xpose.msra.mxu0 %v1600
        %1618 = vmatprep.subr.bf16.mxu0 0
        %1619 = vmatpush2.bf16.xpose.msra.mxu0 0
        %1620 = vmatprep.subr.bf16.mxu0 0
        %1621 = vmatpush2.bf16.xpose.msra.mxu0 0
        %1622 = vmatprep.subr.bf16.mxu0 0
        %1623 = vmatpush2.bf16.xpose.msra.mxu0 0
        %1624 = vmatprep.subr.bf16.mxu0 0
        %1625 = vmatpush2.bf16.xpose.msra.mxu0 0
        %1626 = vmatprep.subr.bf16.mxu0 0
        %1627 = vmatpush2.bf16.xpose.msra.mxu0 0
        %1628 = vmatprep.subr.bf16.mxu0 0
        %1629 = vmatpush2.bf16.xpose.msra.mxu0 0
        %1630 = vmatprep.subr.bf16.mxu0 0
        %1631 = vmatpush2.bf16.xpose.msra.mxu0 0
        %1632 = vmatprep.subr.bf16.mxu0 0
        %1633 = vmatpush2.bf16.xpose.msra.mxu0 0
        %1634 = vmatprep.mubr.bf16.mxu0 0
        %1635 = vmatmul.mubr.bf16.gmra.mxu0 %v1597
        %v1636 = vpop.f32.mrf.mxu0
        %v1637 = vadd.f32 0.0, %v1636
        %v1638 = vpop.f32.mrf.mxu0
        %v1639 = vpop.f32.mrf.mxu0
        %v1640 = vadd.f32 0.0, %v1639
        %v1641 = vpop.f32.mrf.mxu0
        %1642 = vdwg.mxu0
        %v1643 = vsel %vm1279, %v1637, -inf
        %1644 = vmax.xlane.f32.xlu0 %v1643
        %v1645 = vpop.xlane.xlu0 %1644
        %v1646 = vsel %vm1279, %v1640, -inf
        %1647 = vmax.xlane.f32.xlu0 %v1646
        %v1648 = vpop.xlane.xlu0 %1647
        %v1649 = vsub.f32 %v1637, %v1645
        %v1650 = vsub.f32 %v1640, %v1648
        %v1651 = vmul.f32 %v1649, 1.442695
        %v1652 = vpow.pop %v1651
        %v1653 = vmul.f32 %v1650, 1.442695
        %v1654 = vpow.pop %v1653
        %v1655 = vsel %vm1279, %v1652, 0.0
        %1656 = vadd.xlane.f32.xlu0 %v1655
        %v1657 = vpop.xlane.xlu0 %1656
        %v1658 = vsel %vm1279, %v1654, 0.0
        %1659 = vadd.xlane.f32.xlu0 %v1658
        %v1660 = vpop.xlane.xlu0 %1659
        %v1661 = vrcp.pop %v1657
        %v1662 = vrcp.pop %v1660
        %v1663 = vmul.f32 %v1652, %v1661
        %v1664 = vmul.f32 %v1654, %v1662
        %v1665 = vpack.c.bf16 %v1664, %v1663
        %1666 = vrot.lane.b32.xlu0 %v1230, 32
        %v1667 = vpop.permute.xlu0 %1666
        %v1670 = vsel %vm1279, %v1665, 0
        %1672 = vmatprep.subr.bf16.mxu0 0
        %1673 = vmatpush1.bf16.msra.mxu0 0
        %1674 = vmatprep.subr.bf16.mxu0 0
        %1675 = vmatpush1.bf16.msra.mxu0 0
        %1676 = vmatprep.subr.bf16.mxu0 0
        %1677 = vmatpush1.bf16.msra.mxu0 0
        %1678 = vmatprep.subr.bf16.mxu0 0
        %1679 = vmatpush1.bf16.msra.mxu0 0
        %1680 = vmatprep.subr.bf16.mxu0 0
        %1681 = vmatpush1.bf16.msra.mxu0 0
        %1682 = vmatprep.subr.bf16.mxu0 0
        %1683 = vmatpush1.bf16.msra.mxu0 0
        %1684 = vmatprep.subr.bf16.mxu0 0
        %1685 = vmatpush1.bf16.msra.mxu0 0
        %1686 = vmatprep.subr.bf16.mxu0 0
        %1687 = vmatpush1.bf16.msra.mxu0 %v1667
        %1688 = vmatprep.subr.bf16.mxu0 0
        %1689 = vmatpush2.bf16.msra.mxu0 0
        %1690 = vmatprep.subr.bf16.mxu0 0
        %1691 = vmatpush2.bf16.msra.mxu0 0
        %1692 = vmatprep.subr.bf16.mxu0 0
        %1693 = vmatpush2.bf16.msra.mxu0 0
        %1694 = vmatprep.subr.bf16.mxu0 0
        %1695 = vmatpush2.bf16.msra.mxu0 0
        %1696 = vmatprep.subr.bf16.mxu0 0
        %1697 = vmatpush2.bf16.msra.mxu0 0
        %1698 = vmatprep.subr.bf16.mxu0 0
        %1699 = vmatpush2.bf16.msra.mxu0 0
        %1700 = vmatprep.subr.bf16.mxu0 0
        %1701 = vmatpush2.bf16.msra.mxu0 0
        %1702 = vmatprep.subr.bf16.mxu0 0
        %1703 = vmatpush2.bf16.msra.mxu0 0
        %1704 = vmatprep.mubr.bf16.mxu0 0
        %1705 = vmatmul.mubr.bf16.gmra.mxu0 %v1670
        %v1706 = vpop.f32.mrf.mxu0
        %v1707 = vadd.f32 0.0, %v1706
        %v1708 = vpop.f32.mrf.mxu0
        %v1709 = vpop.f32.mrf.mxu0
        %v1710 = vadd.f32 0.0, %v1709
        %v1711 = vpop.f32.mrf.mxu0
        %1712 = vdwg.mxu0
        %1715 = vrot.lane.b32.xlu0 %v1465, 32
        %v1716 = vpop.permute.xlu0 %1715
        %1717 = vrot.lane.b32.xlu0 %v1468, 32
        %v1718 = vpop.permute.xlu0 %1717
        %1723 = vrot.lane.b32.xlu0 %v1586, 64
        %v1724 = vpop.permute.xlu0 %1723
        %1725 = vrot.lane.b32.xlu0 %v1589, 64
        %v1726 = vpop.permute.xlu0 %1725
        %1731 = vrot.lane.b32.xlu0 %v1707, 96
        %v1732 = vpop.permute.xlu0 %1731
        %1733 = vrot.lane.b32.xlu0 %v1710, 96
        %v1734 = vpop.permute.xlu0 %1733
        %v1737 = vsel %vm1231, %v1341, %v1716
        %v1738 = vsel %vm1231, %v1344, %v1718
        %vm1739 = vcmask 523264
        %v1740 = vsel %vm1739, %v1737, %v1724
        %v1741 = vsel %vm1739, %v1738, %v1726
        %vm1742 = vcmask 785408
        %v1743 = vsel %vm1742, %v1740, %v1732
        %v1744 = vsel %vm1742, %v1741, %v1734
        %v1745 = vpack.c.bf16 %v1744, %v1743
        %v1746 = vld [vmem:[%s12] sm:$0xf]
        %v1747 = vld [vmem:[%s12 + $0x4] sm:$0xf]
        %v1748 = vld [vmem:[%s12 + $0x8] sm:$0xf]
        %v1749 = vld [vmem:[%s12 + $0xc] sm:$0xf]
        %v1750 = vld [vmem:[%s12 + $0x10] sm:$0xf]
        %v1751 = vld [vmem:[%s12 + $0x14] sm:$0xf]
        %v1752 = vld [vmem:[%s12 + $0x18] sm:$0xf]
        %v1753 = vld [vmem:[%s12 + $0x1c] sm:$0xf]
        %v1754 = vld [vmem:[%s12 + $0x20] sm:$0xf]
        %v1755 = vld [vmem:[%s12 + $0x24] sm:$0xf]
        %v1756 = vld [vmem:[%s12 + $0x28] sm:$0xf]
        %v1757 = vld [vmem:[%s12 + $0x2c] sm:$0xf]
        %v1758 = vld [vmem:[%s12 + $0x30] sm:$0xf]
        %v1759 = vld [vmem:[%s12 + $0x34] sm:$0xf]
        %v1760 = vld [vmem:[%s12 + $0x38] sm:$0xf]
        %v1761 = vld [vmem:[%s12 + $0x3c] sm:$0xf]
        %v1762 = vld [vmem:[#allocation6] sm:$0x1]
        %v1764 = vlaneseq
        %v1765 = vshrl.u32 %v1764, 7
        %v1766 = vsub.s32 0, %v1765
        %v1767 = vrot.slane %v1762, %v1766
        %v1785 = vunpack.c.l.b16 %v1746
        %v1786 = vunpack.c.l.b16 %v1747
        %v1787 = vunpack.c.l.b16 %v1748
        %v1788 = vunpack.c.l.b16 %v1749
        %v1789 = vunpack.c.l.b16 %v1750
        %v1790 = vunpack.c.l.b16 %v1751
        %v1791 = vunpack.c.l.b16 %v1752
        %v1792 = vunpack.c.l.b16 %v1753
        %v1793 = vunpack.c.l.b16 %v1754
        %v1794 = vunpack.c.l.b16 %v1755
        %v1795 = vunpack.c.l.b16 %v1756
        %v1796 = vunpack.c.l.b16 %v1757
        %v1797 = vunpack.c.l.b16 %v1758
        %v1798 = vunpack.c.l.b16 %v1759
        %v1799 = vunpack.c.l.b16 %v1760
        %v1800 = vunpack.c.l.b16 %v1761
        %v1801 = vpack.c.b16 %v1786, %v1785
        %v1802 = vpack.c.b16 %v1788, %v1787
        %v1803 = vpack.c.b16 %v1790, %v1789
        %v1804 = vpack.c.b16 %v1792, %v1791
        %v1805 = vpack.c.b16 %v1794, %v1793
        %v1806 = vpack.c.b16 %v1796, %v1795
        %v1807 = vpack.c.b16 %v1798, %v1797
        %v1808 = vpack.c.b16 %v1800, %v1799
        %1817 = vmatprep.subr.bf16.mxu0 0
        %1818 = vmatpush1.bf16.msra.mxu0 %v1808
        %1819 = vmatprep.subr.bf16.mxu0 0
        %1820 = vmatpush1.bf16.msra.mxu0 %v1807
        %1821 = vmatprep.subr.bf16.mxu0 0
        %1822 = vmatpush1.bf16.msra.mxu0 %v1806
        %1823 = vmatprep.subr.bf16.mxu0 0
        %1824 = vmatpush1.bf16.msra.mxu0 %v1805
        %1825 = vmatprep.subr.bf16.mxu0 0
        %1826 = vmatpush1.bf16.msra.mxu0 %v1804
        %1827 = vmatprep.subr.bf16.mxu0 0
        %1828 = vmatpush1.bf16.msra.mxu0 %v1803
        %1829 = vmatprep.subr.bf16.mxu0 0
        %1830 = vmatpush1.bf16.msra.mxu0 %v1802
        %1831 = vmatprep.subr.bf16.mxu0 0
        %1832 = vmatpush1.bf16.msra.mxu0 %v1801
        %1833 = vmatprep.subr.bf16.mxu0 0
        %1834 = vmatpush2.bf16.msra.mxu0 0
        %1835 = vmatprep.subr.bf16.mxu0 0
        %1836 = vmatpush2.bf16.msra.mxu0 0
        %1837 = vmatprep.subr.bf16.mxu0 0
        %1838 = vmatpush2.bf16.msra.mxu0 0
        %1839 = vmatprep.subr.bf16.mxu0 0
        %1840 = vmatpush2.bf16.msra.mxu0 0
        %1841 = vmatprep.subr.bf16.mxu0 0
        %1842 = vmatpush2.bf16.msra.mxu0 0
        %1843 = vmatprep.subr.bf16.mxu0 0
        %1844 = vmatpush2.bf16.msra.mxu0 0
        %1845 = vmatprep.subr.bf16.mxu0 0
        %1846 = vmatpush2.bf16.msra.mxu0 0
        %1847 = vmatprep.subr.bf16.mxu0 0
        %1848 = vmatpush2.bf16.msra.mxu0 0
        %1849 = vmatprep.mubr.bf16.mxu0 0
        %1850 = vmatmul.mubr.bf16.gmra.mxu0 %v1745
        %v1851 = vpop.f32.mrf.mxu0
        %v1852 = vadd.f32 %v1767, %v1851
        %v1853 = vpop.f32.mrf.mxu0
        %v1854 = vpop.f32.mrf.mxu0
        %v1855 = vadd.f32 %v1767, %v1854
        %v1856 = vpop.f32.mrf.mxu0
        %1857 = vdwg.mxu0
        %v1858 = vadd.f32 %v918, %v1852
        %v1859 = vadd.f32 %v919, %v1855
        %1860 = vst [vmem:[%s505] sm:$0xff] %v1858
        %1861 = vst [vmem:[%s505 + $0x8] sm:$0xff] %v1859
        %p1862 = scmp.lt.s32.totalorder %s27, 1
        %s1863 = scalar_select %p1862, %s27, 1
        %s1864 = smul.addr %s1863, 2
        %s1865 = smul.addr %s1864, 8
        %s1866 = scalar_lea.vmem %s14, %s1865
        // Predicated region
        $region89: #{contrastive_module.8} parent=75 // pred_check
          %p1867 = pneg %p344
        $region90: #{contrastive_module.8} parent=75 // pred_check_branch
          %1869 = sbr.rel (%p1867) target = $region92
        $region91: #{contrastive_module.8} parent=75 // pred_region
          _
        $region92: #{contrastive_module.8} parent=75 // pred_fallthru
          _
      $region76: #{contrastive_module.8} parent=5 // pred_fallthru
        _
      %p1870 = scmp.le.s32.totalorder 2, %s22
      // Predicated region
      $region93: #{contrastive_module.8} parent=5 // pred_check
        %p1871 = pneg %p1870
      $region94: #{contrastive_module.8} parent=5 // pred_check_branch
        %1873 = sbr.rel (%p1871) target = $region96
      $region95: #{contrastive_module.8} parent=5 // pred_region
        %s1874 = ssub.s32 %s22, 2
        // Predicated region
        $region97: #{contrastive_module.8} parent=95 // pred_check
          %p1875 = pneg %p350
        $region98: #{contrastive_module.8} parent=95 // pred_check_branch
          %1877 = sbr.rel (%p1875) target = $region100
        $region99: #{contrastive_module.8} parent=95 // pred_region
          %p1878 = scmp.lt.s32.totalorder %s28, 1
          %s1879 = scalar_select %p1878, %s28, 1
          %s1880 = smul.addr %s1879, 2
          %s1881 = smul.addr %s1880, 8
          %s1882 = scalar_lea.vmem %s14, %s1881
        $region100: #{contrastive_module.8} parent=95 // pred_fallthru
          _
      $region96: #{contrastive_module.8} parent=5 // pred_fallthru
        _
    $region6: #{contrastive_module.8} parent=1 // loop_footer
      %s26 = sadd.s32 1, %s22
    $region7: #{contrastive_module.8} parent=1 // loop_footer_branch
      %21 = sbr.rel target = $region3
    $region8: #{contrastive_module.8} parent=1 // loop_exit
      _
    %1883 = vsyncpa [#allocation3], 1
    %s1884 = scalar_lea.sflag [#allocation3], 1
    %1885 = vsyncpa %s1884, 1
    %1886 = vsyncpa [#allocation5], 1

</llo_original>
